<compile_context>
chip_gen: v6e
topology: v6e:2x2x1
jax: 0.10.0
libtpu: 0.0.40
codegen_flags: <defaults>
</compile_context>

<pallas_src>
import functools

import jax
import jax.numpy as jnp
import numpy as np
from jax.experimental import pallas as pl
from jax.experimental.pallas import tpu as pltpu

EPS = 1e-5
_F32_MAX = float(np.finfo(np.float32).max)


def _round_up(v, m):
    return (v + m - 1) // m * m


def _encoder_bn_kernel(
    x_ref,
    w1_ref, g1_ref, be1_ref,
    w2_ref, g2_ref, be2_ref,
    w3_ref, g3_ref, be3_ref,
    fw1_ref, fg1_ref, fbe1_ref,
    fw2_ref, fg2_ref, fbe2_ref,
    out_ref,
    s1_sum, s1_sq, s2_sum, s2_sq, s3_sum, s3_sq, mx3, mn3,
    *, batch, n_points, tile_n, eps,
):
    p = pl.program_id(0)        # pass: 0=bn1 stats, 1=bn2 stats, 2=bn3 stats + max
    b = pl.program_id(1)        # batch sample
    t = pl.program_id(2)        # point tile within the sample
    n_tiles = pl.num_programs(2)
    inv_r = 1.0 / float(batch * n_points)

    # ---- init accumulators at the very first grid step ---------------------
    @pl.when((p == 0) & (b == 0) & (t == 0))
    def _init():
        s1_sum[...] = jnp.zeros_like(s1_sum)
        s1_sq[...] = jnp.zeros_like(s1_sq)
        s2_sum[...] = jnp.zeros_like(s2_sum)
        s2_sq[...] = jnp.zeros_like(s2_sq)
        s3_sum[...] = jnp.zeros_like(s3_sum)
        s3_sq[...] = jnp.zeros_like(s3_sq)
        mx3[...] = jnp.full(mx3.shape, -_F32_MAX, jnp.float32)
        mn3[...] = jnp.full(mn3.shape, _F32_MAX, jnp.float32)

    # ---- row-validity mask (only when N is not a multiple of the tile) -----
    if (n_points % tile_n) != 0:
        row_ids = t * tile_n + jax.lax.broadcasted_iota(jnp.int32, (tile_n, 1), 0)
        valid = row_ids < n_points                      # (tile_n, 1) bool
        maskf = valid.astype(jnp.float32)
    else:
        valid = None
        maskf = None

    def _masked(h):
        return h if maskf is None else h * maskf

    # ---- conv1 (k=1, Cin=3) on the VPU: three broadcast FMAs ----------------
    x = x_ref[0]                                        # (tile_n, 8); lanes 3..7 zero
    h1 = (x[:, 0:1] * w1_ref[0:1, :]
          + x[:, 1:2] * w1_ref[1:2, :]
          + x[:, 2:3] * w1_ref[2:3, :])                 # (tile_n, 64) f32

    def _affine(sum_ref, sq_ref, g_ref, be_ref):
        # fold train-mode BN (biased variance) into one per-channel scale/shift
        mean = sum_ref[...] * inv_r
        var = jnp.maximum(sq_ref[...] * inv_r - mean * mean, 0.0)
        scale = g_ref[...] * jax.lax.rsqrt(var + eps)
        shift = be_ref[...] - mean * scale
        return scale, shift

    # ---- pass 0: conv1 batch statistics -------------------------------------
    @pl.when(p == 0)
    def _pass0():
        h1m = _masked(h1)
        s1_sum[...] += jnp.sum(h1m, axis=0, keepdims=True)
        s1_sq[...] += jnp.sum(h1m * h1, axis=0, keepdims=True)

    # ---- pass 1: bn1+relu -> conv2, conv2 batch statistics ------------------
    @pl.when(p == 1)
    def _pass1():
        sc1, sh1 = _affine(s1_sum, s1_sq, g1_ref, be1_ref)
        a1 = _masked(jnp.maximum(h1 * sc1 + sh1, 0.0))          # invalid rows -> 0
        h2 = jnp.dot(a1.astype(w2_ref.dtype), w2_ref[...],
                     preferred_element_type=jnp.float32)        # (tile_n, 128)
        s2_sum[...] += jnp.sum(h2, axis=0, keepdims=True)
        s2_sq[...] += jnp.sum(h2 * h2, axis=0, keepdims=True)

    # ---- pass 2: bn2+relu -> conv3, conv3 stats + per-batch running max/min -
    @pl.when(p == 2)
    def _pass2():
        sc1, sh1 = _affine(s1_sum, s1_sq, g1_ref, be1_ref)
        a1 = jnp.maximum(h1 * sc1 + sh1, 0.0)
        h2 = jnp.dot(a1.astype(w2_ref.dtype), w2_ref[...],
                     preferred_element_type=jnp.float32)
        sc2, sh2 = _affine(s2_sum, s2_sq, g2_ref, be2_ref)
        a2 = _masked(jnp.maximum(h2 * sc2 + sh2, 0.0))          # invalid rows -> 0
        h3 = jnp.dot(a2.astype(w3_ref.dtype), w3_ref[...],
                     preferred_element_type=jnp.float32)        # (tile_n, 1024)

        # invalid rows are exactly zero -> contribute nothing to the sums
        s3_sum[...] += jnp.sum(h3, axis=0, keepdims=True)
        s3_sq[...] += jnp.sum(h3 * h3, axis=0, keepdims=True)

        if valid is None:
            h3_mx, h3_mn = h3, h3
        else:
            h3_mx = jnp.where(valid, h3, -_F32_MAX)
            h3_mn = jnp.where(valid, h3, _F32_MAX)
        tile_max = jnp.max(h3_mx, axis=0, keepdims=True)        # (1, 1024)
        tile_min = jnp.min(h3_mn, axis=0, keepdims=True)

        # update row `b` of the running max/min via a broadcast select
        rows = jax.lax.broadcasted_iota(jnp.int32, (mx3.shape[0], 1), 0)
        sel = rows == b
        mx3[...] = jnp.where(sel, jnp.maximum(mx3[...], tile_max), mx3[...])
        mn3[...] = jnp.where(sel, jnp.minimum(mn3[...], tile_min), mn3[...])

    # ---- final grid step: BN3-commuted max pool + fc head -------------------
    @pl.when((p == 2) & (b == batch - 1) & (t == n_tiles - 1))
    def _finalize():
        sc3, sh3 = _affine(s3_sum, s3_sq, g3_ref, be3_ref)
        # max over points commutes with the per-channel affine + ReLU
        pooled = jnp.where(sc3 > 0.0,
                           sc3 * mx3[...] + sh3,
                           sc3 * mn3[...] + sh3)                # (b_pad, 1024)
        g = jnp.maximum(pooled, 0.0)[:batch, :]                 # (B, 1024)

        def _bn_relu_rows(h, gamma, beta):
            mu = jnp.mean(h, axis=0, keepdims=True)
            c = h - mu                                          # reuse centered value
            var = jnp.mean(c * c, axis=0, keepdims=True)
            sc = gamma * jax.lax.rsqrt(var + eps)
            return jnp.maximum(c * sc + beta, 0.0)

        f1 = jnp.dot(g, fw1_ref[...], preferred_element_type=jnp.float32)   # (B, 512)
        f1 = _bn_relu_rows(f1, fg1_ref[...], fbe1_ref[...])
        f2 = jnp.dot(f1, fw2_ref[...], preferred_element_type=jnp.float32)  # (B, 128)
        out_ref[...] = _bn_relu_rows(f2, fg2_ref[...], fbe2_ref[...])


# kernel input order (biases intentionally absent: cancelled by train-mode BN)
PARAM_ORDER = ("w1", "g1", "be1",
               "w2", "g2", "be2",
               "w3", "g3", "be3",
               "fw1", "fg1", "fbe1",
               "fw2", "fg2", "fbe2")


def encoder_bn_forward(x_ncw, params, *, tile_n=256, matmul_dtype=jnp.float32):
    """x_ncw: (B, 3, N) float32, same layout as the PyTorch module input.

    matmul_dtype: dtype the conv2/conv3 matmul operands are cast to.  bf16 is
    the MXU-native mode on v5e/v6e/v7x and halves weight residency; the fc
    head stays f32 (B-row matmuls are free and its 2-sample train-mode BN is
    numerically fragile).
    """
    B, cin, N = x_ncw.shape
    assert cin == 3
    assert tile_n % 8 == 0

    tn = min(tile_n, _round_up(N, 8))
    n_pad = _round_up(N, tn)
    n_tiles = n_pad // tn
    b_pad = _round_up(B, 8)

    # channels-last, lane-pad Cin 3 -> 8, zero-pad points to a tile multiple
    x = jnp.transpose(x_ncw, (0, 2, 1)).astype(jnp.float32)     # (B, N, 3)
    x = jnp.pad(x, ((0, 0), (0, n_pad - N), (0, 8 - cin)))      # (B, n_pad, 8)

    w1 = jnp.pad(params["w1"].astype(jnp.float32), ((0, 8 - cin), (0, 0)))  # (8, 64)

    def prep(name):
        v = params[name]
        if name in ("w2", "w3"):
            return v.astype(matmul_dtype)
        return v.astype(jnp.float32)

    flat = [w1 if name == "w1" else prep(name) for name in PARAM_ORDER]

    def const_spec(shape):
        zeros = (0,) * len(shape)
        return pl.BlockSpec(shape, lambda p, b, t, _z=zeros: _z)

    in_specs = [pl.BlockSpec((1, tn, 8), lambda p, b, t: (b, t, 0))]
    in_specs += [const_spec(v.shape) for v in flat]

    kernel = functools.partial(
        _encoder_bn_kernel, batch=B, n_points=N, tile_n=tn, eps=EPS)

    grid_spec = pltpu.PrefetchScalarGridSpec(
        num_scalar_prefetch=0,
        grid=(3, B, n_tiles),
        in_specs=in_specs,
        out_specs=pl.BlockSpec((B, 128), lambda p, b, t: (0, 0)),
        scratch_shapes=[
            pltpu.VMEM((1, 64), jnp.float32),        # s1_sum
            pltpu.VMEM((1, 64), jnp.float32),        # s1_sq
            pltpu.VMEM((1, 128), jnp.float32),       # s2_sum
            pltpu.VMEM((1, 128), jnp.float32),       # s2_sq
            pltpu.VMEM((1, 1024), jnp.float32),      # s3_sum
            pltpu.VMEM((1, 1024), jnp.float32),      # s3_sq
            pltpu.VMEM((b_pad, 1024), jnp.float32),  # running max of pre-BN conv3
            pltpu.VMEM((b_pad, 1024), jnp.float32),  # running min of pre-BN conv3
        ],
    )

    return pl.pallas_call(
        kernel,
        out_shape=jax.ShapeDtypeStruct((B, 128), jnp.float32),
        grid_spec=grid_spec,
        compiler_params=pltpu.CompilerParams(
            # All three grid axes carry cross-tile BN-statistic reductions, so
            # they must remain sequential ("arbitrary").
            # TODO(synk): v7x megacore would need per-core partial stats plus a
            # combine step before the batch/tile axes can be marked "parallel".
            dimension_semantics=("arbitrary", "arbitrary", "arbitrary"),
            vmem_limit_bytes=32 * 1024 * 1024,
        ),
    )(x, *flat)


def init_params(key):
    """Deterministic synthetic parameters (shapes from encoder_BN.__init__).

    Conv/fc biases are generated and used by the reference but *not* by the
    kernel: train-mode BatchNorm cancels them exactly.
    """
    ks = iter(jax.random.split(key, 32))

    def rnd(shape, scale):
        return (scale * jax.random.normal(next(ks), shape)).astype(jnp.float32)

    def layer(cin, cout):
        # weight as (in, out); bias / BN gamma / BN beta as (1, out)
        return (rnd((cin, cout), 1.0 / np.sqrt(cin)),
                rnd((1, cout), 0.1),
                (1.0 + rnd((1, cout), 0.1)).astype(jnp.float32),
                rnd((1, cout), 0.1))

    p = {}
    p["w1"], p["b1"], p["g1"], p["be1"] = layer(3, 64)           # conv1 + bn1
    p["w2"], p["b2"], p["g2"], p["be2"] = layer(64, 128)         # conv2 + bn2
    p["w3"], p["b3"], p["g3"], p["be3"] = layer(128, 1024)       # conv3 + bn3
    p["fw1"], p["fb1"], p["fg1"], p["fbe1"] = layer(1024, 512)   # fc1 + bn4
    p["fw2"], p["fb2"], p["fg2"], p["fbe2"] = layer(512, 128)    # fc2 + bn5
    return p


def reference_forward(x_ncw, params):
    """Plain-JAX f32 reference mirroring the PyTorch forward (train-mode BN,
    biased variance, conv/fc biases included)."""
    def bn_relu(h, g, b, axes):
        m = jnp.mean(h, axis=axes, keepdims=True)
        c = h - m
        v = jnp.mean(c * c, axis=axes, keepdims=True)
        return jnp.maximum(c * jax.lax.rsqrt(v + EPS) * g + b, 0.0)

    x = jnp.transpose(x_ncw, (0, 2, 1))                           # (B, N, 3)
    h = bn_relu(x @ params["w1"] + params["b1"], params["g1"], params["be1"], (0, 1))
    h = bn_relu(h @ params["w2"] + params["b2"], params["g2"], params["be2"], (0, 1))
    h = bn_relu(h @ params["w3"] + params["b3"], params["g3"], params["be3"], (0, 1))
    g = jnp.max(h, axis=1)                                        # (B, 1024)
    f = bn_relu(g @ params["fw1"] + params["fb1"], params["fg1"], params["fbe1"], (0,))
    f = bn_relu(f @ params["fw2"] + params["fb2"], params["fg2"], params["fbe2"], (0,))
    return f


if __name__ == "__main__":
    key = jax.random.PRNGKey(0)
    k_x, k_p = jax.random.split(key)

    # small point cloud; N deliberately NOT a multiple of the tile so the
    # masking / multi-tile / multi-batch paths are exercised.
    B, Cin, N = 2, 3, 200
    x = jax.random.normal(k_x, (B, Cin, N), dtype=jnp.float32)
    params = init_params(k_p)

    # f32 path: exact PyTorch-train semantics, compared against the reference.
    fwd = jax.jit(functools.partial(encoder_bn_forward, tile_n=128))
    out = jax.block_until_ready(fwd(x, params))
    ref = jax.block_until_ready(reference_forward(x, params))
    assert out.shape == (B, 128)
    assert bool(jnp.all(jnp.isfinite(out)))
    np.testing.assert_allclose(np.asarray(out), np.asarray(ref), rtol=2e-2, atol=2e-2)

    # bf16 conv2/conv3 feeds (MXU-native mode): check it compiles, runs and is
    # finite.  An element-wise comparison against the f32 reference is not
    # meaningful here: train-mode BN over the 2-sample fc batch saturates to
    # ~±gamma and amplifies bf16 rounding of near-tied channels to O(1).
    fwd_bf16 = jax.jit(functools.partial(
        encoder_bn_forward, tile_n=128, matmul_dtype=jnp.bfloat16))
    out_bf16 = jax.block_until_ready(fwd_bf16(x, params))
    assert out_bf16.shape == (B, 128)
    assert bool(jnp.all(jnp.isfinite(out_bf16)))

    print("KERNEL_OK")
</pallas_src>

<mosaic_0001>
module attributes {stable_mosaic.version = 11 : i64} {
  func.func @_encoder_bn_kernel(%arg0: i32, %arg1: i32, %arg2: i32, %arg3: memref<1x128x8xf32, #tpu.memory_space<vmem>>, %arg4: memref<8x64xf32, #tpu.memory_space<vmem>>, %arg5: memref<1x64xf32, #tpu.memory_space<vmem>>, %arg6: memref<1x64xf32, #tpu.memory_space<vmem>>, %arg7: memref<64x128xf32, #tpu.memory_space<vmem>>, %arg8: memref<1x128xf32, #tpu.memory_space<vmem>>, %arg9: memref<1x128xf32, #tpu.memory_space<vmem>>, %arg10: memref<128x1024xf32, #tpu.memory_space<vmem>>, %arg11: memref<1x1024xf32, #tpu.memory_space<vmem>>, %arg12: memref<1x1024xf32, #tpu.memory_space<vmem>>, %arg13: memref<1024x512xf32, #tpu.memory_space<vmem>>, %arg14: memref<1x512xf32, #tpu.memory_space<vmem>>, %arg15: memref<1x512xf32, #tpu.memory_space<vmem>>, %arg16: memref<512x128xf32, #tpu.memory_space<vmem>>, %arg17: memref<1x128xf32, #tpu.memory_space<vmem>>, %arg18: memref<1x128xf32, #tpu.memory_space<vmem>>, %arg19: memref<2x128xf32, #tpu.memory_space<vmem>>, %arg20: memref<1x64xf32, #tpu.memory_space<vmem>>, %arg21: memref<1x64xf32, #tpu.memory_space<vmem>>, %arg22: memref<1x128xf32, #tpu.memory_space<vmem>>, %arg23: memref<1x128xf32, #tpu.memory_space<vmem>>, %arg24: memref<1x1024xf32, #tpu.memory_space<vmem>>, %arg25: memref<1x1024xf32, #tpu.memory_space<vmem>>, %arg26: memref<8x1024xf32, #tpu.memory_space<vmem>>, %arg27: memref<8x1024xf32, #tpu.memory_space<vmem>>) attributes {dimension_semantics = [#tpu.dimension_semantics<arbitrary>, #tpu.dimension_semantics<arbitrary>, #tpu.dimension_semantics<arbitrary>], iteration_bounds = array<i64: 3, 2, 2>, scalar_prefetch = 0 : i64, scratch_operands = 8 : i64, tpu.core_type = #tpu.core_type<tc>, window_params = [{transform_indices = @transform_0, window_bounds = array<i64: 1, 128, 8>}, {pipeline_mode = #tpu.pipeline_mode<synchronous>, transform_indices = @transform_1, window_bounds = array<i64: 8, 64>}, {pipeline_mode = #tpu.pipeline_mode<synchronous>, transform_indices = @transform_2, window_bounds = array<i64: 1, 64>}, {pipeline_mode = #tpu.pipeline_mode<synchronous>, transform_indices = @transform_3, window_bounds = array<i64: 1, 64>}, {pipeline_mode = #tpu.pipeline_mode<synchronous>, transform_indices = @transform_4, window_bounds = array<i64: 64, 128>}, {pipeline_mode = #tpu.pipeline_mode<synchronous>, transform_indices = @transform_5, window_bounds = array<i64: 1, 128>}, {pipeline_mode = #tpu.pipeline_mode<synchronous>, transform_indices = @transform_6, window_bounds = array<i64: 1, 128>}, {pipeline_mode = #tpu.pipeline_mode<synchronous>, transform_indices = @transform_7, window_bounds = array<i64: 128, 1024>}, {pipeline_mode = #tpu.pipeline_mode<synchronous>, transform_indices = @transform_8, window_bounds = array<i64: 1, 1024>}, {pipeline_mode = #tpu.pipeline_mode<synchronous>, transform_indices = @transform_9, window_bounds = array<i64: 1, 1024>}, {pipeline_mode = #tpu.pipeline_mode<synchronous>, transform_indices = @transform_10, window_bounds = array<i64: 1024, 512>}, {pipeline_mode = #tpu.pipeline_mode<synchronous>, transform_indices = @transform_11, window_bounds = array<i64: 1, 512>}, {pipeline_mode = #tpu.pipeline_mode<synchronous>, transform_indices = @transform_12, window_bounds = array<i64: 1, 512>}, {pipeline_mode = #tpu.pipeline_mode<synchronous>, transform_indices = @transform_13, window_bounds = array<i64: 512, 128>}, {pipeline_mode = #tpu.pipeline_mode<synchronous>, transform_indices = @transform_14, window_bounds = array<i64: 1, 128>}, {pipeline_mode = #tpu.pipeline_mode<synchronous>, transform_indices = @transform_15, window_bounds = array<i64: 1, 128>}, {pipeline_mode = #tpu.pipeline_mode<synchronous>, transform_indices = @transform_16, window_bounds = array<i64: 2, 128>}]} {
    %c0_i32 = arith.constant 0 : i32
    %0 = arith.cmpi eq, %arg0, %c0_i32 : i32
    %c0_i32_0 = arith.constant 0 : i32
    %1 = arith.cmpi eq, %arg1, %c0_i32_0 : i32
    %2 = arith.andi %0, %1 : i1
    %c0_i32_1 = arith.constant 0 : i32
    %3 = arith.cmpi eq, %arg2, %c0_i32_1 : i32
    %4 = arith.andi %2, %3 : i1
    %5 = arith.extui %4 : i1 to i32
    %c0_i32_2 = arith.constant 0 : i32
    %6 = arith.cmpi ne, %5, %c0_i32_2 : i32
    scf.if %6 {
      %cst = arith.constant 0.000000e+00 : f32
      %50 = vector.broadcast %cst : f32 to vector<1x64xf32>
      %c0_17 = arith.constant 0 : index
      %c0_18 = arith.constant 0 : index
      %51 = vector.load %arg20[%c0_17, %c0_18] : memref<1x64xf32, #tpu.memory_space<vmem>>, vector<1x64xf32>
      tpu.vector_store %arg20[%c0_17, %c0_18], %50 {strides = array<i32>} : memref<1x64xf32, #tpu.memory_space<vmem>>, vector<1x64xf32>,
      %cst_19 = arith.constant 0.000000e+00 : f32
      %52 = vector.broadcast %cst_19 : f32 to vector<1x64xf32>
      %c0_20 = arith.constant 0 : index
      %c0_21 = arith.constant 0 : index
      %53 = vector.load %arg21[%c0_20, %c0_21] : memref<1x64xf32, #tpu.memory_space<vmem>>, vector<1x64xf32>
      tpu.vector_store %arg21[%c0_20, %c0_21], %52 {strides = array<i32>} : memref<1x64xf32, #tpu.memory_space<vmem>>, vector<1x64xf32>,
      %cst_22 = arith.constant 0.000000e+00 : f32
      %54 = vector.broadcast %cst_22 : f32 to vector<1x128xf32>
      %c0_23 = arith.constant 0 : index
      %c0_24 = arith.constant 0 : index
      %55 = vector.load %arg22[%c0_23, %c0_24] : memref<1x128xf32, #tpu.memory_space<vmem>>, vector<1x128xf32>
      tpu.vector_store %arg22[%c0_23, %c0_24], %54 {strides = array<i32>} : memref<1x128xf32, #tpu.memory_space<vmem>>, vector<1x128xf32>,
      %cst_25 = arith.constant 0.000000e+00 : f32
      %56 = vector.broadcast %cst_25 : f32 to vector<1x128xf32>
      %c0_26 = arith.constant 0 : index
      %c0_27 = arith.constant 0 : index
      %57 = vector.load %arg23[%c0_26, %c0_27] : memref<1x128xf32, #tpu.memory_space<vmem>>, vector<1x128xf32>
      tpu.vector_store %arg23[%c0_26, %c0_27], %56 {strides = array<i32>} : memref<1x128xf32, #tpu.memory_space<vmem>>, vector<1x128xf32>,
      %cst_28 = arith.constant 0.000000e+00 : f32
      %58 = vector.broadcast %cst_28 : f32 to vector<1x1024xf32>
      %c0_29 = arith.constant 0 : index
      %c0_30 = arith.constant 0 : index
      %59 = vector.load %arg24[%c0_29, %c0_30] : memref<1x1024xf32, #tpu.memory_space<vmem>>, vector<1x1024xf32>
      tpu.vector_store %arg24[%c0_29, %c0_30], %58 {strides = array<i32>} : memref<1x1024xf32, #tpu.memory_space<vmem>>, vector<1x1024xf32>,
      %cst_31 = arith.constant 0.000000e+00 : f32
      %60 = vector.broadcast %cst_31 : f32 to vector<1x1024xf32>
      %c0_32 = arith.constant 0 : index
      %c0_33 = arith.constant 0 : index
      %61 = vector.load %arg25[%c0_32, %c0_33] : memref<1x1024xf32, #tpu.memory_space<vmem>>, vector<1x1024xf32>
      tpu.vector_store %arg25[%c0_32, %c0_33], %60 {strides = array<i32>} : memref<1x1024xf32, #tpu.memory_space<vmem>>, vector<1x1024xf32>,
      %cst_34 = arith.constant -3.40282347E+38 : f32
      %62 = vector.broadcast %cst_34 : f32 to vector<8x1024xf32>
      %c0_35 = arith.constant 0 : index
      %c0_36 = arith.constant 0 : index
      %63 = vector.load %arg26[%c0_35, %c0_36] : memref<8x1024xf32, #tpu.memory_space<vmem>>, vector<8x1024xf32>
      tpu.vector_store %arg26[%c0_35, %c0_36], %62 {strides = array<i32>} : memref<8x1024xf32, #tpu.memory_space<vmem>>, vector<8x1024xf32>,
      %cst_37 = arith.constant 3.40282347E+38 : f32
      %64 = vector.broadcast %cst_37 : f32 to vector<8x1024xf32>
      %c0_38 = arith.constant 0 : index
      %c0_39 = arith.constant 0 : index
      %65 = vector.load %arg27[%c0_38, %c0_39] : memref<8x1024xf32, #tpu.memory_space<vmem>>, vector<8x1024xf32>
      tpu.vector_store %arg27[%c0_38, %c0_39], %64 {strides = array<i32>} : memref<8x1024xf32, #tpu.memory_space<vmem>>, vector<8x1024xf32>,
    } else {
    }
    %c128_i32 = arith.constant 128 : i32
    %7 = arith.muli %arg2, %c128_i32 : i32
    %8 = tpu.iota {dimensions = array<i32: 0>} : vector<128x1xi32>
    %9 = vector.broadcast %7 : i32 to vector<128x1xi32>
    %10 = arith.addi %9, %8 : vector<128x1xi32>
    %c200_i32 = arith.constant 200 : i32
    %11 = vector.broadcast %c200_i32 : i32 to vector<128x1xi32>
    %12 = arith.cmpi slt, %10, %11 : vector<128x1xi32>
    %13 = arith.extui %12 : vector<128x1xi1> to vector<128x1xi32>
    %14 = arith.sitofp %13 : vector<128x1xi32> to vector<128x1xf32>
    %c0 = arith.constant 0 : index
    %c0_3 = arith.constant 0 : index
    %c0_4 = arith.constant 0 : index
    %15 = vector.load %arg3[%c0, %c0_3, %c0_4] : memref<1x128x8xf32, #tpu.memory_space<vmem>>, vector<1x128x8xf32>
    %16 = vector.shape_cast %15 : vector<1x128x8xf32> to vector<128x8xf32>
    %17 = vector.extract_strided_slice %16 {offsets = [0, 0], sizes = [128, 1], strides = [1, 1]} : vector<128x8xf32> to vector<128x1xf32>
    %c0_5 = arith.constant 0 : index
    %c0_6 = arith.constant 0 : index
    %18 = vector.load %arg4[%c0_5, %c0_6] : memref<8x64xf32, #tpu.memory_space<vmem>>, vector<1x64xf32>
    %19 = vector.broadcast %17 : vector<128x1xf32> to vector<128x64xf32>
    %20 = vector.broadcast %18 : vector<1x64xf32> to vector<128x64xf32>
    %21 = arith.mulf %19, %20 : vector<128x64xf32>
    %22 = vector.extract_strided_slice %16 {offsets = [0, 1], sizes = [128, 1], strides = [1, 1]} : vector<128x8xf32> to vector<128x1xf32>
    %c1 = arith.constant 1 : index
    %c0_7 = arith.constant 0 : index
    %23 = vector.load %arg4[%c1, %c0_7] : memref<8x64xf32, #tpu.memory_space<vmem>>, vector<1x64xf32>
    %24 = vector.broadcast %22 : vector<128x1xf32> to vector<128x64xf32>
    %25 = vector.broadcast %23 : vector<1x64xf32> to vector<128x64xf32>
    %26 = arith.mulf %24, %25 : vector<128x64xf32>
    %27 = arith.addf %21, %26 : vector<128x64xf32>
    %28 = vector.extract_strided_slice %16 {offsets = [0, 2], sizes = [128, 1], strides = [1, 1]} : vector<128x8xf32> to vector<128x1xf32>
    %c2 = arith.constant 2 : index
    %c0_8 = arith.constant 0 : index
    %29 = vector.load %arg4[%c2, %c0_8] : memref<8x64xf32, #tpu.memory_space<vmem>>, vector<1x64xf32>
    %30 = vector.broadcast %28 : vector<128x1xf32> to vector<128x64xf32>
    %31 = vector.broadcast %29 : vector<1x64xf32> to vector<128x64xf32>
    %32 = arith.mulf %30, %31 : vector<128x64xf32>
    %33 = arith.addf %27, %32 : vector<128x64xf32>
    %c0_i32_9 = arith.constant 0 : i32
    %34 = arith.cmpi eq, %arg0, %c0_i32_9 : i32
    %35 = arith.extui %34 : i1 to i32
    %c0_i32_10 = arith.constant 0 : i32
    %36 = arith.cmpi ne, %35, %c0_i32_10 : i32
    scf.if %36 {
      %50 = vector.broadcast %14 : vector<128x1xf32> to vector<128x64xf32>
      %51 = arith.mulf %33, %50 : vector<128x64xf32>
      %c0_17 = arith.constant 0 : index
      %c0_18 = arith.constant 0 : index
      %52 = vector.load %arg20[%c0_17, %c0_18] : memref<1x64xf32, #tpu.memory_space<vmem>>, vector<1x64xf32>
      %cst = arith.constant dense<0.000000e+00> : vector<64xf32>
      %53 = vector.multi_reduction <add>, %51, %cst [0] : vector<128x64xf32> to vector<64xf32>
      %54 = vector.shape_cast %53 : vector<64xf32> to vector<1x64xf32>
      %55 = arith.addf %52, %54 : vector<1x64xf32>
      %c0_19 = arith.constant 0 : index
      %c0_20 = arith.constant 0 : index
      %56 = vector.load %arg20[%c0_19, %c0_20] : memref<1x64xf32, #tpu.memory_space<vmem>>, vector<1x64xf32>
      tpu.vector_store %arg20[%c0_19, %c0_20], %55 {strides = array<i32>} : memref<1x64xf32, #tpu.memory_space<vmem>>, vector<1x64xf32>,
      %c0_21 = arith.constant 0 : index
      %c0_22 = arith.constant 0 : index
      %57 = vector.load %arg21[%c0_21, %c0_22] : memref<1x64xf32, #tpu.memory_space<vmem>>, vector<1x64xf32>
      %58 = arith.mulf %51, %33 : vector<128x64xf32>
      %cst_23 = arith.constant dense<0.000000e+00> : vector<64xf32>
      %59 = vector.multi_reduction <add>, %58, %cst_23 [0] : vector<128x64xf32> to vector<64xf32>
      %60 = vector.shape_cast %59 : vector<64xf32> to vector<1x64xf32>
      %61 = arith.addf %57, %60 : vector<1x64xf32>
      %c0_24 = arith.constant 0 : index
      %c0_25 = arith.constant 0 : index
      %62 = vector.load %arg21[%c0_24, %c0_25] : memref<1x64xf32, #tpu.memory_space<vmem>>, vector<1x64xf32>
      tpu.vector_store %arg21[%c0_24, %c0_25], %61 {strides = array<i32>} : memref<1x64xf32, #tpu.memory_space<vmem>>, vector<1x64xf32>,
    } else {
    }
    %c1_i32 = arith.constant 1 : i32
    %37 = arith.cmpi eq, %arg0, %c1_i32 : i32
    %38 = arith.extui %37 : i1 to i32
    %c0_i32_11 = arith.constant 0 : i32
    %39 = arith.cmpi ne, %38, %c0_i32_11 : i32
    scf.if %39 {
      %c0_17 = arith.constant 0 : index
      %c0_18 = arith.constant 0 : index
      %50 = vector.load %arg20[%c0_17, %c0_18] : memref<1x64xf32, #tpu.memory_space<vmem>>, vector<1x64xf32>
      %cst = arith.constant 2.500000e-03 : f32
      %51 = vector.broadcast %cst : f32 to vector<1x64xf32>
      %52 = arith.mulf %50, %51 : vector<1x64xf32>
      %c0_19 = arith.constant 0 : index
      %c0_20 = arith.constant 0 : index
      %53 = vector.load %arg21[%c0_19, %c0_20] : memref<1x64xf32, #tpu.memory_space<vmem>>, vector<1x64xf32>
      %cst_21 = arith.constant 2.500000e-03 : f32
      %54 = vector.broadcast %cst_21 : f32 to vector<1x64xf32>
      %55 = arith.mulf %53, %54 : vector<1x64xf32>
      %56 = arith.mulf %52, %52 : vector<1x64xf32>
      %57 = arith.subf %55, %56 : vector<1x64xf32>
      %cst_22 = arith.constant 0.000000e+00 : f32
      %58 = vector.broadcast %cst_22 : f32 to vector<1x64xf32>
      %59 = arith.maximumf %57, %58 : vector<1x64xf32>
      %c0_23 = arith.constant 0 : index
      %c0_24 = arith.constant 0 : index
      %60 = vector.load %arg5[%c0_23, %c0_24] : memref<1x64xf32, #tpu.memory_space<vmem>>, vector<1x64xf32>
      %cst_25 = arith.constant 9.99999974E-6 : f32
      %61 = vector.broadcast %cst_25 : f32 to vector<1x64xf32>
      %62 = arith.addf %59, %61 : vector<1x64xf32>
      %63 = math.rsqrt %62 : vector<1x64xf32>
      %64 = arith.mulf %60, %63 : vector<1x64xf32>
      %c0_26 = arith.constant 0 : index
      %c0_27 = arith.constant 0 : index
      %65 = vector.load %arg6[%c0_26, %c0_27] : memref<1x64xf32, #tpu.memory_space<vmem>>, vector<1x64xf32>
      %66 = arith.mulf %52, %64 : vector<1x64xf32>
      %67 = arith.subf %65, %66 : vector<1x64xf32>
      %68 = vector.broadcast %64 : vector<1x64xf32> to vector<128x64xf32>
      %69 = arith.mulf %33, %68 : vector<128x64xf32>
      %70 = vector.broadcast %67 : vector<1x64xf32> to vector<128x64xf32>
      %71 = arith.addf %69, %70 : vector<128x64xf32>
      %cst_28 = arith.constant 0.000000e+00 : f32
      %72 = vector.broadcast %cst_28 : f32 to vector<128x64xf32>
      %73 = arith.maximumf %71, %72 : vector<128x64xf32>
      %74 = vector.broadcast %14 : vector<128x1xf32> to vector<128x64xf32>
      %75 = arith.mulf %73, %74 : vector<128x64xf32>
      %c0_29 = arith.constant 0 : index
      %c0_30 = arith.constant 0 : index
      %76 = vector.load %arg7[%c0_29, %c0_30] : memref<64x128xf32, #tpu.memory_space<vmem>>, vector<64x128xf32>
      %cst_31 = arith.constant dense<0.000000e+00> : vector<128x128xf32>
      %77 = tpu.matmul %75, %76, %cst_31 {dimension_numbers = #tpu.dot_dimension_numbers<[1], [0], [0], [1], [0, 0, 1, 1], [], []>} : vector<128x64xf32>, vector<64x128xf32>, vector<128x128xf32> -> vector<128x128xf32>
      %c0_32 = arith.constant 0 : index
      %c0_33 = arith.constant 0 : index
      %78 = vector.load %arg22[%c0_32, %c0_33] : memref<1x128xf32, #tpu.memory_space<vmem>>, vector<1x128xf32>
      %cst_34 = arith.constant dense<0.000000e+00> : vector<128xf32>
      %79 = vector.multi_reduction <add>, %77, %cst_34 [0] : vector<128x128xf32> to vector<128xf32>
      %80 = vector.shape_cast %79 : vector<128xf32> to vector<1x128xf32>
      %81 = arith.addf %78, %80 : vector<1x128xf32>
      %c0_35 = arith.constant 0 : index
      %c0_36 = arith.constant 0 : index
      %82 = vector.load %arg22[%c0_35, %c0_36] : memref<1x128xf32, #tpu.memory_space<vmem>>, vector<1x128xf32>
      tpu.vector_store %arg22[%c0_35, %c0_36], %81 {strides = array<i32>} : memref<1x128xf32, #tpu.memory_space<vmem>>, vector<1x128xf32>,
      %c0_37 = arith.constant 0 : index
      %c0_38 = arith.constant 0 : index
      %83 = vector.load %arg23[%c0_37, %c0_38] : memref<1x128xf32, #tpu.memory_space<vmem>>, vector<1x128xf32>
      %84 = arith.mulf %77, %77 : vector<128x128xf32>
      %cst_39 = arith.constant dense<0.000000e+00> : vector<128xf32>
      %85 = vector.multi_reduction <add>, %84, %cst_39 [0] : vector<128x128xf32> to vector<128xf32>
      %86 = vector.shape_cast %85 : vector<128xf32> to vector<1x128xf32>
      %87 = arith.addf %83, %86 : vector<1x128xf32>
      %c0_40 = arith.constant 0 : index
      %c0_41 = arith.constant 0 : index
      %88 = vector.load %arg23[%c0_40, %c0_41] : memref<1x128xf32, #tpu.memory_space<vmem>>, vector<1x128xf32>
      tpu.vector_store %arg23[%c0_40, %c0_41], %87 {strides = array<i32>} : memref<1x128xf32, #tpu.memory_space<vmem>>, vector<1x128xf32>,
    } else {
    }
    %c2_i32 = arith.constant 2 : i32
    %40 = arith.cmpi eq, %arg0, %c2_i32 : i32
    %41 = arith.extui %40 : i1 to i32
    %c0_i32_12 = arith.constant 0 : i32
    %42 = arith.cmpi ne, %41, %c0_i32_12 : i32
    scf.if %42 {
      %c0_17 = arith.constant 0 : index
      %c0_18 = arith.constant 0 : index
      %50 = vector.load %arg20[%c0_17, %c0_18] : memref<1x64xf32, #tpu.memory_space<vmem>>, vector<1x64xf32>
      %cst = arith.constant 2.500000e-03 : f32
      %51 = vector.broadcast %cst : f32 to vector<1x64xf32>
      %52 = arith.mulf %50, %51 : vector<1x64xf32>
      %c0_19 = arith.constant 0 : index
      %c0_20 = arith.constant 0 : index
      %53 = vector.load %arg21[%c0_19, %c0_20] : memref<1x64xf32, #tpu.memory_space<vmem>>, vector<1x64xf32>
      %cst_21 = arith.constant 2.500000e-03 : f32
      %54 = vector.broadcast %cst_21 : f32 to vector<1x64xf32>
      %55 = arith.mulf %53, %54 : vector<1x64xf32>
      %56 = arith.mulf %52, %52 : vector<1x64xf32>
      %57 = arith.subf %55, %56 : vector<1x64xf32>
      %cst_22 = arith.constant 0.000000e+00 : f32
      %58 = vector.broadcast %cst_22 : f32 to vector<1x64xf32>
      %59 = arith.maximumf %57, %58 : vector<1x64xf32>
      %c0_23 = arith.constant 0 : index
      %c0_24 = arith.constant 0 : index
      %60 = vector.load %arg5[%c0_23, %c0_24] : memref<1x64xf32, #tpu.memory_space<vmem>>, vector<1x64xf32>
      %cst_25 = arith.constant 9.99999974E-6 : f32
      %61 = vector.broadcast %cst_25 : f32 to vector<1x64xf32>
      %62 = arith.addf %59, %61 : vector<1x64xf32>
      %63 = math.rsqrt %62 : vector<1x64xf32>
      %64 = arith.mulf %60, %63 : vector<1x64xf32>
      %c0_26 = arith.constant 0 : index
      %c0_27 = arith.constant 0 : index
      %65 = vector.load %arg6[%c0_26, %c0_27] : memref<1x64xf32, #tpu.memory_space<vmem>>, vector<1x64xf32>
      %66 = arith.mulf %52, %64 : vector<1x64xf32>
      %67 = arith.subf %65, %66 : vector<1x64xf32>
      %68 = vector.broadcast %64 : vector<1x64xf32> to vector<128x64xf32>
      %69 = arith.mulf %33, %68 : vector<128x64xf32>
      %70 = vector.broadcast %67 : vector<1x64xf32> to vector<128x64xf32>
      %71 = arith.addf %69, %70 : vector<128x64xf32>
      %cst_28 = arith.constant 0.000000e+00 : f32
      %72 = vector.broadcast %cst_28 : f32 to vector<128x64xf32>
      %73 = arith.maximumf %71, %72 : vector<128x64xf32>
      %c0_29 = arith.constant 0 : index
      %c0_30 = arith.constant 0 : index
      %74 = vector.load %arg7[%c0_29, %c0_30] : memref<64x128xf32, #tpu.memory_space<vmem>>, vector<64x128xf32>
      %cst_31 = arith.constant dense<0.000000e+00> : vector<128x128xf32>
      %75 = tpu.matmul %73, %74, %cst_31 {dimension_numbers = #tpu.dot_dimension_numbers<[1], [0], [0], [1], [0, 0, 1, 1], [], []>} : vector<128x64xf32>, vector<64x128xf32>, vector<128x128xf32> -> vector<128x128xf32>
      %c0_32 = arith.constant 0 : index
      %c0_33 = arith.constant 0 : index
      %76 = vector.load %arg22[%c0_32, %c0_33] : memref<1x128xf32, #tpu.memory_space<vmem>>, vector<1x128xf32>
      %cst_34 = arith.constant 2.500000e-03 : f32
      %77 = vector.broadcast %cst_34 : f32 to vector<1x128xf32>
      %78 = arith.mulf %76, %77 : vector<1x128xf32>
      %c0_35 = arith.constant 0 : index
      %c0_36 = arith.constant 0 : index
      %79 = vector.load %arg23[%c0_35, %c0_36] : memref<1x128xf32, #tpu.memory_space<vmem>>, vector<1x128xf32>
      %cst_37 = arith.constant 2.500000e-03 : f32
      %80 = vector.broadcast %cst_37 : f32 to vector<1x128xf32>
      %81 = arith.mulf %79, %80 : vector<1x128xf32>
      %82 = arith.mulf %78, %78 : vector<1x128xf32>
      %83 = arith.subf %81, %82 : vector<1x128xf32>
      %cst_38 = arith.constant 0.000000e+00 : f32
      %84 = vector.broadcast %cst_38 : f32 to vector<1x128xf32>
      %85 = arith.maximumf %83, %84 : vector<1x128xf32>
      %c0_39 = arith.constant 0 : index
      %c0_40 = arith.constant 0 : index
      %86 = vector.load %arg8[%c0_39, %c0_40] : memref<1x128xf32, #tpu.memory_space<vmem>>, vector<1x128xf32>
      %cst_41 = arith.constant 9.99999974E-6 : f32
      %87 = vector.broadcast %cst_41 : f32 to vector<1x128xf32>
      %88 = arith.addf %85, %87 : vector<1x128xf32>
      %89 = math.rsqrt %88 : vector<1x128xf32>
      %90 = arith.mulf %86, %89 : vector<1x128xf32>
      %c0_42 = arith.constant 0 : index
      %c0_43 = arith.constant 0 : index
      %91 = vector.load %arg9[%c0_42, %c0_43] : memref<1x128xf32, #tpu.memory_space<vmem>>, vector<1x128xf32>
      %92 = arith.mulf %78, %90 : vector<1x128xf32>
      %93 = arith.subf %91, %92 : vector<1x128xf32>
      %94 = vector.broadcast %90 : vector<1x128xf32> to vector<128x128xf32>
      %95 = arith.mulf %75, %94 : vector<128x128xf32>
      %96 = vector.broadcast %93 : vector<1x128xf32> to vector<128x128xf32>
      %97 = arith.addf %95, %96 : vector<128x128xf32>
      %cst_44 = arith.constant 0.000000e+00 : f32
      %98 = vector.broadcast %cst_44 : f32 to vector<128x128xf32>
      %99 = arith.maximumf %97, %98 : vector<128x128xf32>
      %100 = vector.broadcast %14 : vector<128x1xf32> to vector<128x128xf32>
      %101 = arith.mulf %99, %100 : vector<128x128xf32>
      %c0_45 = arith.constant 0 : index
      %c0_46 = arith.constant 0 : index
      %102 = vector.load %arg10[%c0_45, %c0_46] : memref<128x1024xf32, #tpu.memory_space<vmem>>, vector<128x1024xf32>
      %cst_47 = arith.constant dense<0.000000e+00> : vector<128x1024xf32>
      %103 = tpu.matmul %101, %102, %cst_47 {dimension_numbers = #tpu.dot_dimension_numbers<[1], [0], [0], [1], [0, 0, 1, 1], [], []>} : vector<128x128xf32>, vector<128x1024xf32>, vector<128x1024xf32> -> vector<128x1024xf32>
      %c0_48 = arith.constant 0 : index
      %c0_49 = arith.constant 0 : index
      %104 = vector.load %arg24[%c0_48, %c0_49] : memref<1x1024xf32, #tpu.memory_space<vmem>>, vector<1x1024xf32>
      %cst_50 = arith.constant dense<0.000000e+00> : vector<1024xf32>
      %105 = vector.multi_reduction <add>, %103, %cst_50 [0] : vector<128x1024xf32> to vector<1024xf32>
      %106 = vector.shape_cast %105 : vector<1024xf32> to vector<1x1024xf32>
      %107 = arith.addf %104, %106 : vector<1x1024xf32>
      %c0_51 = arith.constant 0 : index
      %c0_52 = arith.constant 0 : index
      %108 = vector.load %arg24[%c0_51, %c0_52] : memref<1x1024xf32, #tpu.memory_space<vmem>>, vector<1x1024xf32>
      tpu.vector_store %arg24[%c0_51, %c0_52], %107 {strides = array<i32>} : memref<1x1024xf32, #tpu.memory_space<vmem>>, vector<1x1024xf32>,
      %c0_53 = arith.constant 0 : index
      %c0_54 = arith.constant 0 : index
      %109 = vector.load %arg25[%c0_53, %c0_54] : memref<1x1024xf32, #tpu.memory_space<vmem>>, vector<1x1024xf32>
      %110 = arith.mulf %103, %103 : vector<128x1024xf32>
      %cst_55 = arith.constant dense<0.000000e+00> : vector<1024xf32>
      %111 = vector.multi_reduction <add>, %110, %cst_55 [0] : vector<128x1024xf32> to vector<1024xf32>
      %112 = vector.shape_cast %111 : vector<1024xf32> to vector<1x1024xf32>
      %113 = arith.addf %109, %112 : vector<1x1024xf32>
      %c0_56 = arith.constant 0 : index
      %c0_57 = arith.constant 0 : index
      %114 = vector.load %arg25[%c0_56, %c0_57] : memref<1x1024xf32, #tpu.memory_space<vmem>>, vector<1x1024xf32>
      tpu.vector_store %arg25[%c0_56, %c0_57], %113 {strides = array<i32>} : memref<1x1024xf32, #tpu.memory_space<vmem>>, vector<1x1024xf32>,
      %cst_58 = arith.constant -3.40282347E+38 : f32
      %115 = vector.shape_cast %12 : vector<128x1xi1> to vector<128x1xi1>
      %116 = vector.broadcast %115 : vector<128x1xi1> to vector<128x1024xi1>
      %117 = vector.broadcast %cst_58 : f32 to vector<128x1024xf32>
      %118 = arith.select %116, %103, %117 : vector<128x1024xi1>, vector<128x1024xf32>
      %cst_59 = arith.constant 3.40282347E+38 : f32
      %119 = vector.shape_cast %12 : vector<128x1xi1> to vector<128x1xi1>
      %120 = vector.broadcast %119 : vector<128x1xi1> to vector<128x1024xi1>
      %121 = vector.broadcast %cst_59 : f32 to vector<128x1024xf32>
      %122 = arith.select %120, %103, %121 : vector<128x1024xi1>, vector<128x1024xf32>
      %cst_60 = arith.constant dense<0xFF800000> : vector<1024xf32>
      %123 = vector.multi_reduction <maximumf>, %118, %cst_60 [0] : vector<128x1024xf32> to vector<1024xf32>
      %124 = vector.shape_cast %123 : vector<1024xf32> to vector<1x1024xf32>
      %cst_61 = arith.constant dense<0x7F800000> : vector<1024xf32>
      %125 = vector.multi_reduction <minimumf>, %122, %cst_61 [0] : vector<128x1024xf32> to vector<1024xf32>
      %126 = vector.shape_cast %125 : vector<1024xf32> to vector<1x1024xf32>
      %127 = tpu.iota {dimensions = array<i32: 0>} : vector<8x1xi32>
      %128 = vector.broadcast %arg1 : i32 to vector<8x1xi32>
      %129 = arith.cmpi eq, %127, %128 : vector<8x1xi32>
      %c0_62 = arith.constant 0 : index
      %c0_63 = arith.constant 0 : index
      %130 = vector.load %arg26[%c0_62, %c0_63] : memref<8x1024xf32, #tpu.memory_space<vmem>>, vector<8x1024xf32>
      %131 = vector.broadcast %124 : vector<1x1024xf32> to vector<8x1024xf32>
      %132 = arith.maximumf %130, %131 : vector<8x1024xf32>
      %c0_64 = arith.constant 0 : index
      %c0_65 = arith.constant 0 : index
      %133 = vector.load %arg26[%c0_64, %c0_65] : memref<8x1024xf32, #tpu.memory_space<vmem>>, vector<8x1024xf32>
      %134 = vector.shape_cast %129 : vector<8x1xi1> to vector<8x1xi1>
      %135 = vector.broadcast %134 : vector<8x1xi1> to vector<8x1024xi1>
      %136 = arith.select %135, %132, %133 : vector<8x1024xi1>, vector<8x1024xf32>
      %c0_66 = arith.constant 0 : index
      %c0_67 = arith.constant 0 : index
      %137 = vector.load %arg26[%c0_66, %c0_67] : memref<8x1024xf32, #tpu.memory_space<vmem>>, vector<8x1024xf32>
      tpu.vector_store %arg26[%c0_66, %c0_67], %136 {strides = array<i32>} : memref<8x1024xf32, #tpu.memory_space<vmem>>, vector<8x1024xf32>,
      %c0_68 = arith.constant 0 : index
      %c0_69 = arith.constant 0 : index
      %138 = vector.load %arg27[%c0_68, %c0_69] : memref<8x1024xf32, #tpu.memory_space<vmem>>, vector<8x1024xf32>
      %139 = vector.broadcast %126 : vector<1x1024xf32> to vector<8x1024xf32>
      %140 = arith.minimumf %138, %139 : vector<8x1024xf32>
      %c0_70 = arith.constant 0 : index
      %c0_71 = arith.constant 0 : index
      %141 = vector.load %arg27[%c0_70, %c0_71] : memref<8x1024xf32, #tpu.memory_space<vmem>>, vector<8x1024xf32>
      %142 = vector.shape_cast %129 : vector<8x1xi1> to vector<8x1xi1>
      %143 = vector.broadcast %142 : vector<8x1xi1> to vector<8x1024xi1>
      %144 = arith.select %143, %140, %141 : vector<8x1024xi1>, vector<8x1024xf32>
      %c0_72 = arith.constant 0 : index
      %c0_73 = arith.constant 0 : index
      %145 = vector.load %arg27[%c0_72, %c0_73] : memref<8x1024xf32, #tpu.memory_space<vmem>>, vector<8x1024xf32>
      tpu.vector_store %arg27[%c0_72, %c0_73], %144 {strides = array<i32>} : memref<8x1024xf32, #tpu.memory_space<vmem>>, vector<8x1024xf32>,
    } else {
    }
    %c2_i32_13 = arith.constant 2 : i32
    %43 = arith.cmpi eq, %arg0, %c2_i32_13 : i32
    %c1_i32_14 = arith.constant 1 : i32
    %44 = arith.cmpi eq, %arg1, %c1_i32_14 : i32
    %45 = arith.andi %43, %44 : i1
    %c1_i32_15 = arith.constant 1 : i32
    %46 = arith.cmpi eq, %arg2, %c1_i32_15 : i32
    %47 = arith.andi %45, %46 : i1
    %48 = arith.extui %47 : i1 to i32
    %c0_i32_16 = arith.constant 0 : i32
    %49 = arith.cmpi ne, %48, %c0_i32_16 : i32
    scf.if %49 {
      %c0_17 = arith.constant 0 : index
      %c0_18 = arith.constant 0 : index
      %50 = vector.load %arg24[%c0_17, %c0_18] : memref<1x1024xf32, #tpu.memory_space<vmem>>, vector<1x1024xf32>
      %cst = arith.constant 2.500000e-03 : f32
      %51 = vector.broadcast %cst : f32 to vector<1x1024xf32>
      %52 = arith.mulf %50, %51 : vector<1x1024xf32>
      %c0_19 = arith.constant 0 : index
      %c0_20 = arith.constant 0 : index
      %53 = vector.load %arg25[%c0_19, %c0_20] : memref<1x1024xf32, #tpu.memory_space<vmem>>, vector<1x1024xf32>
      %cst_21 = arith.constant 2.500000e-03 : f32
      %54 = vector.broadcast %cst_21 : f32 to vector<1x1024xf32>
      %55 = arith.mulf %53, %54 : vector<1x1024xf32>
      %56 = arith.mulf %52, %52 : vector<1x1024xf32>
      %57 = arith.subf %55, %56 : vector<1x1024xf32>
      %cst_22 = arith.constant 0.000000e+00 : f32
      %58 = vector.broadcast %cst_22 : f32 to vector<1x1024xf32>
      %59 = arith.maximumf %57, %58 : vector<1x1024xf32>
      %c0_23 = arith.constant 0 : index
      %c0_24 = arith.constant 0 : index
      %60 = vector.load %arg11[%c0_23, %c0_24] : memref<1x1024xf32, #tpu.memory_space<vmem>>, vector<1x1024xf32>
      %cst_25 = arith.constant 9.99999974E-6 : f32
      %61 = vector.broadcast %cst_25 : f32 to vector<1x1024xf32>
      %62 = arith.addf %59, %61 : vector<1x1024xf32>
      %63 = math.rsqrt %62 : vector<1x1024xf32>
      %64 = arith.mulf %60, %63 : vector<1x1024xf32>
      %c0_26 = arith.constant 0 : index
      %c0_27 = arith.constant 0 : index
      %65 = vector.load %arg12[%c0_26, %c0_27] : memref<1x1024xf32, #tpu.memory_space<vmem>>, vector<1x1024xf32>
      %66 = arith.mulf %52, %64 : vector<1x1024xf32>
      %67 = arith.subf %65, %66 : vector<1x1024xf32>
      %cst_28 = arith.constant 0.000000e+00 : f32
      %68 = vector.broadcast %cst_28 : f32 to vector<1x1024xf32>
      %69 = arith.cmpf ogt, %64, %68 : vector<1x1024xf32>
      %c0_29 = arith.constant 0 : index
      %c0_30 = arith.constant 0 : index
      %70 = vector.load %arg26[%c0_29, %c0_30] : memref<8x1024xf32, #tpu.memory_space<vmem>>, vector<8x1024xf32>
      %71 = vector.broadcast %64 : vector<1x1024xf32> to vector<8x1024xf32>
      %72 = arith.mulf %71, %70 : vector<8x1024xf32>
      %73 = vector.broadcast %67 : vector<1x1024xf32> to vector<8x1024xf32>
      %74 = arith.addf %72, %73 : vector<8x1024xf32>
      %c0_31 = arith.constant 0 : index
      %c0_32 = arith.constant 0 : index
      %75 = vector.load %arg27[%c0_31, %c0_32] : memref<8x1024xf32, #tpu.memory_space<vmem>>, vector<8x1024xf32>
      %76 = vector.broadcast %64 : vector<1x1024xf32> to vector<8x1024xf32>
      %77 = arith.mulf %76, %75 : vector<8x1024xf32>
      %78 = vector.broadcast %67 : vector<1x1024xf32> to vector<8x1024xf32>
      %79 = arith.addf %77, %78 : vector<8x1024xf32>
      %80 = vector.shape_cast %69 : vector<1x1024xi1> to vector<1x1024xi1>
      %81 = vector.broadcast %80 : vector<1x1024xi1> to vector<8x1024xi1>
      %82 = arith.select %81, %74, %79 : vector<8x1024xi1>, vector<8x1024xf32>
      %cst_33 = arith.constant 0.000000e+00 : f32
      %83 = vector.broadcast %cst_33 : f32 to vector<8x1024xf32>
      %84 = arith.maximumf %82, %83 : vector<8x1024xf32>
      %85 = vector.extract_strided_slice %84 {offsets = [0, 0], sizes = [2, 1024], strides = [1, 1]} : vector<8x1024xf32> to vector<2x1024xf32>
      %c0_34 = arith.constant 0 : index
      %c0_35 = arith.constant 0 : index
      %86 = vector.load %arg13[%c0_34, %c0_35] : memref<1024x512xf32, #tpu.memory_space<vmem>>, vector<1024x512xf32>
      %cst_36 = arith.constant dense<0.000000e+00> : vector<2x512xf32>
      %87 = tpu.matmul %85, %86, %cst_36 {dimension_numbers = #tpu.dot_dimension_numbers<[1], [0], [0], [1], [0, 0, 1, 1], [], []>} : vector<2x1024xf32>, vector<1024x512xf32>, vector<2x512xf32> -> vector<2x512xf32>
      %c0_37 = arith.constant 0 : index
      %c0_38 = arith.constant 0 : index
      %88 = vector.load %arg14[%c0_37, %c0_38] : memref<1x512xf32, #tpu.memory_space<vmem>>, vector<1x512xf32>
      %c0_39 = arith.constant 0 : index
      %c0_40 = arith.constant 0 : index
      %89 = vector.load %arg15[%c0_39, %c0_40] : memref<1x512xf32, #tpu.memory_space<vmem>>, vector<1x512xf32>
      %cst_41 = arith.constant dense<0.000000e+00> : vector<512xf32>
      %90 = vector.multi_reduction <add>, %87, %cst_41 [0] : vector<2x512xf32> to vector<512xf32>
      %91 = vector.shape_cast %90 : vector<512xf32> to vector<1x512xf32>
      %cst_42 = arith.constant 2.000000e+00 : f32
      %92 = vector.broadcast %cst_42 : f32 to vector<1x512xf32>
      %93 = arith.divf %91, %92 : vector<1x512xf32>
      %94 = vector.broadcast %93 : vector<1x512xf32> to vector<2x512xf32>
      %95 = arith.subf %87, %94 : vector<2x512xf32>
      %96 = arith.mulf %95, %95 : vector<2x512xf32>
      %cst_43 = arith.constant dense<0.000000e+00> : vector<512xf32>
      %97 = vector.multi_reduction <add>, %96, %cst_43 [0] : vector<2x512xf32> to vector<512xf32>
      %98 = vector.shape_cast %97 : vector<512xf32> to vector<1x512xf32>
      %cst_44 = arith.constant 2.000000e+00 : f32
      %99 = vector.broadcast %cst_44 : f32 to vector<1x512xf32>
      %100 = arith.divf %98, %99 : vector<1x512xf32>
      %cst_45 = arith.constant 9.99999974E-6 : f32
      %101 = vector.broadcast %cst_45 : f32 to vector<1x512xf32>
      %102 = arith.addf %100, %101 : vector<1x512xf32>
      %103 = math.rsqrt %102 : vector<1x512xf32>
      %104 = arith.mulf %88, %103 : vector<1x512xf32>
      %105 = vector.broadcast %104 : vector<1x512xf32> to vector<2x512xf32>
      %106 = arith.mulf %95, %105 : vector<2x512xf32>
      %107 = vector.broadcast %89 : vector<1x512xf32> to vector<2x512xf32>
      %108 = arith.addf %106, %107 : vector<2x512xf32>
      %cst_46 = arith.constant 0.000000e+00 : f32
      %109 = vector.broadcast %cst_46 : f32 to vector<2x512xf32>
      %110 = arith.maximumf %108, %109 : vector<2x512xf32>
      %c0_47 = arith.constant 0 : index
      %c0_48 = arith.constant 0 : index
      %111 = vector.load %arg16[%c0_47, %c0_48] : memref<512x128xf32, #tpu.memory_space<vmem>>, vector<512x128xf32>
      %cst_49 = arith.constant dense<0.000000e+00> : vector<2x128xf32>
      %112 = tpu.matmul %110, %111, %cst_49 {dimension_numbers = #tpu.dot_dimension_numbers<[1], [0], [0], [1], [0, 0, 1, 1], [], []>} : vector<2x512xf32>, vector<512x128xf32>, vector<2x128xf32> -> vector<2x128xf32>
      %c0_50 = arith.constant 0 : index
      %c0_51 = arith.constant 0 : index
      %113 = vector.load %arg17[%c0_50, %c0_51] : memref<1x128xf32, #tpu.memory_space<vmem>>, vector<1x128xf32>
      %c0_52 = arith.constant 0 : index
      %c0_53 = arith.constant 0 : index
      %114 = vector.load %arg18[%c0_52, %c0_53] : memref<1x128xf32, #tpu.memory_space<vmem>>, vector<1x128xf32>
      %cst_54 = arith.constant dense<0.000000e+00> : vector<128xf32>
      %115 = vector.multi_reduction <add>, %112, %cst_54 [0] : vector<2x128xf32> to vector<128xf32>
      %116 = vector.shape_cast %115 : vector<128xf32> to vector<1x128xf32>
      %cst_55 = arith.constant 2.000000e+00 : f32
      %117 = vector.broadcast %cst_55 : f32 to vector<1x128xf32>
      %118 = arith.divf %116, %117 : vector<1x128xf32>
      %119 = vector.broadcast %118 : vector<1x128xf32> to vector<2x128xf32>
      %120 = arith.subf %112, %119 : vector<2x128xf32>
      %121 = arith.mulf %120, %120 : vector<2x128xf32>
      %cst_56 = arith.constant dense<0.000000e+00> : vector<128xf32>
      %122 = vector.multi_reduction <add>, %121, %cst_56 [0] : vector<2x128xf32> to vector<128xf32>
      %123 = vector.shape_cast %122 : vector<128xf32> to vector<1x128xf32>
      %cst_57 = arith.constant 2.000000e+00 : f32
      %124 = vector.broadcast %cst_57 : f32 to vector<1x128xf32>
      %125 = arith.divf %123, %124 : vector<1x128xf32>
      %cst_58 = arith.constant 9.99999974E-6 : f32
      %126 = vector.broadcast %cst_58 : f32 to vector<1x128xf32>
      %127 = arith.addf %125, %126 : vector<1x128xf32>
      %128 = math.rsqrt %127 : vector<1x128xf32>
      %129 = arith.mulf %113, %128 : vector<1x128xf32>
      %130 = vector.broadcast %129 : vector<1x128xf32> to vector<2x128xf32>
      %131 = arith.mulf %120, %130 : vector<2x128xf32>
      %132 = vector.broadcast %114 : vector<1x128xf32> to vector<2x128xf32>
      %133 = arith.addf %131, %132 : vector<2x128xf32>
      %cst_59 = arith.constant 0.000000e+00 : f32
      %134 = vector.broadcast %cst_59 : f32 to vector<2x128xf32>
      %135 = arith.maximumf %133, %134 : vector<2x128xf32>
      %c0_60 = arith.constant 0 : index
      %c0_61 = arith.constant 0 : index
      %136 = vector.load %arg19[%c0_60, %c0_61] : memref<2x128xf32, #tpu.memory_space<vmem>>, vector<2x128xf32>
      tpu.vector_store %arg19[%c0_60, %c0_61], %135 {strides = array<i32>} : memref<2x128xf32, #tpu.memory_space<vmem>>, vector<2x128xf32>,
    } else {
    }
    return
  }
  func.func @transform_0(%arg0: i32, %arg1: i32, %arg2: i32) -> (i32, i32, i32) {
    %c0_i32 = arith.constant 0 : i32
    %c0_i32_0 = arith.constant 0 : i32
    return %arg1, %arg2, %c0_i32 : i32, i32, i32
  }
  func.func @transform_1(%arg0: i32, %arg1: i32, %arg2: i32) -> (i32, i32) {
    %c0_i32 = arith.constant 0 : i32
    %c0_i32_0 = arith.constant 0 : i32
    %c0_i32_1 = arith.constant 0 : i32
    return %c0_i32, %c0_i32_0 : i32, i32
  }
  func.func @transform_2(%arg0: i32, %arg1: i32, %arg2: i32) -> (i32, i32) {
    %c0_i32 = arith.constant 0 : i32
    %c0_i32_0 = arith.constant 0 : i32
    %c0_i32_1 = arith.constant 0 : i32
    return %c0_i32, %c0_i32_0 : i32, i32
  }
  func.func @transform_3(%arg0: i32, %arg1: i32, %arg2: i32) -> (i32, i32) {
    %c0_i32 = arith.constant 0 : i32
    %c0_i32_0 = arith.constant 0 : i32
    %c0_i32_1 = arith.constant 0 : i32
    return %c0_i32, %c0_i32_0 : i32, i32
  }
  func.func @transform_4(%arg0: i32, %arg1: i32, %arg2: i32) -> (i32, i32) {
    %c0_i32 = arith.constant 0 : i32
    %c0_i32_0 = arith.constant 0 : i32
    %c0_i32_1 = arith.constant 0 : i32
    return %c0_i32, %c0_i32_0 : i32, i32
  }
  func.func @transform_5(%arg0: i32, %arg1: i32, %arg2: i32) -> (i32, i32) {
    %c0_i32 = arith.constant 0 : i32
    %c0_i32_0 = arith.constant 0 : i32
    %c0_i32_1 = arith.constant 0 : i32
    return %c0_i32, %c0_i32_0 : i32, i32
  }
  func.func @transform_6(%arg0: i32, %arg1: i32, %arg2: i32) -> (i32, i32) {
    %c0_i32 = arith.constant 0 : i32
    %c0_i32_0 = arith.constant 0 : i32
    %c0_i32_1 = arith.constant 0 : i32
    return %c0_i32, %c0_i32_0 : i32, i32
  }
  func.func @transform_7(%arg0: i32, %arg1: i32, %arg2: i32) -> (i32, i32) {
    %c0_i32 = arith.constant 0 : i32
    %c0_i32_0 = arith.constant 0 : i32
    %c0_i32_1 = arith.constant 0 : i32
    return %c0_i32, %c0_i32_0 : i32, i32
  }
  func.func @transform_8(%arg0: i32, %arg1: i32, %arg2: i32) -> (i32, i32) {
    %c0_i32 = arith.constant 0 : i32
    %c0_i32_0 = arith.constant 0 : i32
    %c0_i32_1 = arith.constant 0 : i32
    return %c0_i32, %c0_i32_0 : i32, i32
  }
  func.func @transform_9(%arg0: i32, %arg1: i32, %arg2: i32) -> (i32, i32) {
    %c0_i32 = arith.constant 0 : i32
    %c0_i32_0 = arith.constant 0 : i32
    %c0_i32_1 = arith.constant 0 : i32
    return %c0_i32, %c0_i32_0 : i32, i32
  }
  func.func @transform_10(%arg0: i32, %arg1: i32, %arg2: i32) -> (i32, i32) {
    %c0_i32 = arith.constant 0 : i32
    %c0_i32_0 = arith.constant 0 : i32
    %c0_i32_1 = arith.constant 0 : i32
    return %c0_i32, %c0_i32_0 : i32, i32
  }
  func.func @transform_11(%arg0: i32, %arg1: i32, %arg2: i32) -> (i32, i32) {
    %c0_i32 = arith.constant 0 : i32
    %c0_i32_0 = arith.constant 0 : i32
    %c0_i32_1 = arith.constant 0 : i32
    return %c0_i32, %c0_i32_0 : i32, i32
  }
  func.func @transform_12(%arg0: i32, %arg1: i32, %arg2: i32) -> (i32, i32) {
    %c0_i32 = arith.constant 0 : i32
    %c0_i32_0 = arith.constant 0 : i32
    %c0_i32_1 = arith.constant 0 : i32
    return %c0_i32, %c0_i32_0 : i32, i32
  }
  func.func @transform_13(%arg0: i32, %arg1: i32, %arg2: i32) -> (i32, i32) {
    %c0_i32 = arith.constant 0 : i32
    %c0_i32_0 = arith.constant 0 : i32
    %c0_i32_1 = arith.constant 0 : i32
    return %c0_i32, %c0_i32_0 : i32, i32
  }
  func.func @transform_14(%arg0: i32, %arg1: i32, %arg2: i32) -> (i32, i32) {
    %c0_i32 = arith.constant 0 : i32
    %c0_i32_0 = arith.constant 0 : i32
    %c0_i32_1 = arith.constant 0 : i32
    return %c0_i32, %c0_i32_0 : i32, i32
  }
  func.func @transform_15(%arg0: i32, %arg1: i32, %arg2: i32) -> (i32, i32) {
    %c0_i32 = arith.constant 0 : i32
    %c0_i32_0 = arith.constant 0 : i32
    %c0_i32_1 = arith.constant 0 : i32
    return %c0_i32, %c0_i32_0 : i32, i32
  }
  func.func @transform_16(%arg0: i32, %arg1: i32, %arg2: i32) -> (i32, i32) {
    %c0_i32 = arith.constant 0 : i32
    %c0_i32_0 = arith.constant 0 : i32
    %c0_i32_1 = arith.constant 0 : i32
    return %c0_i32, %c0_i32_0 : i32, i32
  }
}

</mosaic_0001>

<llo_original>
// kernel: encoder_bn_forward.1
$region0: #{encoder_bn_forward.1}
  #allocation0 [shape = 'u32[]', space=smem, size = 0x4, offset = 0x4, fixed_abs, tag = 'smem constant byte address 0x4 - core index']
  #allocation1 [shape = 'u32[144,128]{1,0:T(1,128)}', space=vmem, size = 0x12000, scoped, tag = 'internal scratch']
  #allocation2 [shape = 'f32[1,64]{1,0:T(1,128)}', space=vmem, size = 0x200, scoped, tag = 'scratch operand']
  #allocation3 [shape = 'f32[1,64]{1,0:T(1,128)}', space=vmem, size = 0x200, scoped, tag = 'scratch operand']
  #allocation4 [shape = 'f32[1,128]{1,0:T(1,128)}', space=vmem, size = 0x200, scoped, tag = 'scratch operand']
  #allocation5 [shape = 'f32[1,128]{1,0:T(1,128)}', space=vmem, size = 0x200, scoped, tag = 'scratch operand']
  #allocation6 [shape = 'f32[1,1024]{1,0:T(1,128)}', space=vmem, size = 0x1000, scoped, tag = 'scratch operand']
  #allocation7 [shape = 'f32[1,1024]{1,0:T(1,128)}', space=vmem, size = 0x1000, scoped, tag = 'scratch operand']
  #allocation8 [shape = 'f32[8,1024]{1,0:T(8,128)}', space=vmem, size = 0x8000, scoped, tag = 'scratch operand']
  #allocation9 [shape = 'f32[8,1024]{1,0:T(8,128)}', space=vmem, size = 0x8000, scoped, tag = 'scratch operand']
  %s0 = inlined_call_operand.vmem [shape: f32[2,256,8], index: 0, kind: input, shape index: {}]
  %s1 = inlined_call_operand.vmem [shape: f32[8,64], index: 1, kind: input, shape index: {}]
  %s2 = inlined_call_operand.hbm [shape: f32[1,64], index: 2, kind: input, shape index: {}]
  %s3 = inlined_call_operand.hbm [shape: f32[1,64], index: 3, kind: input, shape index: {}]
  %s4 = inlined_call_operand.hbm [shape: f32[64,128], index: 4, kind: input, shape index: {}]
  %s5 = inlined_call_operand.hbm [shape: f32[1,128], index: 5, kind: input, shape index: {}]
  %s6 = inlined_call_operand.hbm [shape: f32[1,128], index: 6, kind: input, shape index: {}]
  %s7 = inlined_call_operand.hbm [shape: f32[128,1024], index: 7, kind: input, shape index: {}]
  %s8 = inlined_call_operand.hbm [shape: f32[1,1024], index: 8, kind: input, shape index: {}]
  %s9 = inlined_call_operand.hbm [shape: f32[1,1024], index: 9, kind: input, shape index: {}]
  %s10 = inlined_call_operand.hbm [shape: f32[1024,512], index: 10, kind: input, shape index: {}]
  %s11 = inlined_call_operand.hbm [shape: f32[1,512], index: 11, kind: input, shape index: {}]
  %s12 = inlined_call_operand.hbm [shape: f32[1,512], index: 12, kind: input, shape index: {}]
  %s13 = inlined_call_operand.hbm [shape: f32[512,128], index: 13, kind: input, shape index: {}]
  %s14 = inlined_call_operand.hbm [shape: f32[1,128], index: 14, kind: input, shape index: {}]
  %s15 = inlined_call_operand.hbm [shape: f32[1,128], index: 15, kind: input, shape index: {}]
  %s16 = inlined_call_operand.hbm [shape: f32[2,128], index: 16, kind: output, shape index: {}]
  %s17 = sld [smem:[#allocation0]]
  $region173: #{encoder_bn_forward.1} parent=0
    _
  %s19 = ssub.s32 1, %s17
  %s20 = scalar_select 0, %s19, %s17
  $region1: #{encoder_bn_forward.1} parent=0
    #allocation10 [shape = 'u8[512]{0}', space=vmem, size = 0x400, scoped, tag = 'input window, operand 2, single buffered']
    #allocation11 [shape = 's32[2]{0}', space=sflag, size = 0x8, scoped, tag = 'scoped memory for encoder_bn_forward.1']
    #allocation12 [shape = 's32[2]{0}', space=sflag, size = 0x8, scoped, tag = 'scoped memory for encoder_bn_forward.1']
    #allocation13 [shape = 'u8[512]{0}', space=vmem, size = 0x400, scoped, tag = 'input window, operand 3, single buffered']
    #allocation14 [shape = 's32[1]{0}', space=sflag, size = 0x4, scoped, tag = 'scoped memory for encoder_bn_forward.1']
    #allocation15 [shape = 'u8[32768]{0}', space=vmem, size = 0x8000, scoped, tag = 'input window, operand 4, single buffered']
    #allocation16 [shape = 'u8[512]{0}', space=vmem, size = 0x400, scoped, tag = 'input window, operand 5, single buffered']
    #allocation17 [shape = 's32[1]{0}', space=sflag, size = 0x4, scoped, tag = 'scoped memory for encoder_bn_forward.1']
    #allocation18 [shape = 'u8[512]{0}', space=vmem, size = 0x400, scoped, tag = 'input window, operand 6, single buffered']
    #allocation19 [shape = 'u8[524288]{0}', space=vmem, size = 0x80000, scoped, tag = 'input window, operand 7, single buffered']
    #allocation20 [shape = 's32[1]{0}', space=sflag, size = 0x4, scoped, tag = 'scoped memory for encoder_bn_forward.1']
    #allocation21 [shape = 'u8[4096]{0}', space=vmem, size = 0x1000, scoped, tag = 'input window, operand 8, single buffered']
    #allocation22 [shape = 'u8[4096]{0}', space=vmem, size = 0x1000, scoped, tag = 'input window, operand 9, single buffered']
    #allocation23 [shape = 's32[1]{0}', space=sflag, size = 0x4, scoped, tag = 'scoped memory for encoder_bn_forward.1']
    #allocation24 [shape = 'u8[2097152]{0}', space=vmem, size = 0x200000, scoped, tag = 'input window, operand 10, single buffered']
    #allocation25 [shape = 'u8[2048]{0}', space=vmem, size = 0x800, scoped, tag = 'input window, operand 11, single buffered']
    #allocation26 [shape = 's32[1]{0}', space=sflag, size = 0x4, scoped, tag = 'scoped memory for encoder_bn_forward.1']
    #allocation27 [shape = 'u8[2048]{0}', space=vmem, size = 0x800, scoped, tag = 'input window, operand 12, single buffered']
    #allocation28 [shape = 'u8[262144]{0}', space=vmem, size = 0x40000, scoped, tag = 'input window, operand 13, single buffered']
    #allocation29 [shape = 's32[1]{0}', space=sflag, size = 0x4, scoped, tag = 'scoped memory for encoder_bn_forward.1']
    #allocation30 [shape = 'u8[512]{0}', space=vmem, size = 0x400, scoped, tag = 'input window, operand 14, single buffered']
    #allocation31 [shape = 'u8[512]{0}', space=vmem, size = 0x400, scoped, tag = 'input window, operand 15, single buffered']
    #allocation32 [shape = 's32[1]{0}', space=sflag, size = 0x4, scoped, tag = 'scoped memory for encoder_bn_forward.1']
    #allocation33 [shape = 'u8[1024]{0}', space=vmem, size = 0x400, scoped, tag = 'output window, operand 0, single buffered']
    %21 = vsyncpa [#allocation11], 0
    %22 = vsyncpa [#allocation14], 0
    %23 = vsyncpa [#allocation17], 0
    %24 = vsyncpa [#allocation20], 0
    %25 = vsyncpa [#allocation23], 0
    %26 = vsyncpa [#allocation26], 0
    %27 = vsyncpa [#allocation29], 0
    %28 = vsyncpa [#allocation32], 0
    %29 = vsyncpa [#allocation12], 0
    loop: start=0, step=1, limit=14
    $region2: #{encoder_bn_forward.1} parent=1 // loop_pre_header
      _
    $region3: #{encoder_bn_forward.1} parent=1 // loop_header
      %s31 = sphi 0, %s35
      %p32 = scmp.ge.s32.totalorder %s31, 14
      %s38 = sphi 0, %s57
      %s39 = sphi 0, %s53
      %s40 = sphi 0, %s49
      %s41 = sphi 0, %s38
      %s42 = sphi 0, %s39
      %s43 = sphi 0, %s40
      %s44 = sphi 0, %s41
      %s45 = sphi 0, %s42
      %s46 = sphi 0, %s43
      %s62 = sphi 0, %s64
      %s65 = sphi 0, %s62
      %s66 = sphi 0, %s65
      %s82 = sphi 0, %s66
      %s86 = sphi 0, %s86
      %s88 = sphi 0, %s86
      %s89 = sphi 0, %s88
      %s103 = sphi 0, %s89
      %s107 = sphi 0, %s107
      %s109 = sphi 0, %s107
      %s110 = sphi 0, %s109
      %s124 = sphi 0, %s110
      %s128 = sphi 0, %s128
      %s130 = sphi 0, %s128
      %s131 = sphi 0, %s130
      %s145 = sphi 0, %s131
      %s149 = sphi 0, %s149
      %s151 = sphi 0, %s149
      %s152 = sphi 0, %s151
      %s166 = sphi 0, %s152
      %s170 = sphi 0, %s170
      %s172 = sphi 0, %s170
      %s173 = sphi 0, %s172
      %s187 = sphi 0, %s173
      %s191 = sphi 0, %s191
      %s193 = sphi 0, %s191
      %s194 = sphi 0, %s193
      %s208 = sphi 0, %s194
      %s212 = sphi 0, %s212
      %s214 = sphi 0, %s212
      %s215 = sphi 0, %s214
      %s229 = sphi 0, %s215
      %s233 = sphi 0, %s233
      %s235 = sphi 0, %s233
      %s236 = sphi 0, %s235
      %s250 = sphi 0, %s236
      %s254 = sphi 0, %s254
      %s256 = sphi 0, %s254
      %s257 = sphi 0, %s256
      %s271 = sphi 0, %s257
      %s275 = sphi 0, %s275
      %s277 = sphi 0, %s275
      %s278 = sphi 0, %s277
      %s292 = sphi 0, %s278
      %s296 = sphi 0, %s296
      %s298 = sphi 0, %s296
      %s299 = sphi 0, %s298
      %s313 = sphi 0, %s299
      %s317 = sphi 0, %s317
      %s319 = sphi 0, %s317
      %s320 = sphi 0, %s319
      %s334 = sphi 0, %s320
      %s338 = sphi 0, %s338
      %s340 = sphi 0, %s338
      %s341 = sphi 0, %s340
      %s355 = sphi 0, %s341
      %s359 = sphi 0, %s359
      %s361 = sphi 0, %s359
      %s362 = sphi 0, %s361
      %s376 = sphi 0, %s362
      %s380 = sphi 0, %s380
      %s382 = sphi 0, %s380
      %s383 = sphi 0, %s382
      %s397 = sphi 0, %s383
      %s401 = sphi 0, %s401
      %s403 = sphi 0, %s401
      %s404 = sphi 0, %s403
      %s418 = sphi 0, %s404
    $region4: #{encoder_bn_forward.1} parent=1 // loop_header_branch
      %34 = sbr.rel (%p32) target = $region8
    $region5: #{encoder_bn_forward.1} parent=1 // loop_body
      %s36 = ssub.s32 %s31, 1
      %s37 = ssub.s32 %s31, 2
      %s47 = sadd.s32 1, %s40
      %p48 = scmp.ge.s32.totalorder %s47, 2
      %s49 = scalar_select %p48, 0, %s47
      %s50 = sadd.s32 1, %s39
      %s51 = scalar_select %p48, %s50, %s39
      %p52 = scmp.ge.s32.totalorder %s51, 2
      %s53 = scalar_select %p52, 0, %s51
      %s54 = sadd.s32 1, %s38
      %s55 = scalar_select %p52, %s54, %s38
      %p56 = scmp.ge.s32.totalorder %s55, 3
      %s57 = scalar_select %p56, 0, %s55
      %s58 = ssub.s32 %s39, %s53
      %s59 = ssub.s32 %s40, %s49
      %s60 = sor.u32 %s58, %s59
      %p61 = scmp.eq.s32.totalorder %s60, 0
      %s63 = sadd.s32 %s62, 1
      %s64 = scalar_select %p61, %s62, %s63
      %p67 = pneg %p61
      %p68 = scmp.eq.s32.totalorder %s31, 11
      %p69 = por %p67, %p68
      %p70 = scmp.ne.s32.totalorder %s62, %s65
      %p71 = scmp.eq.s32.totalorder %s31, 0
      %p72 = por %p70, %p71
      %p73 = scmp.ne.s32.totalorder %s62, %s65
      %p74 = scmp.eq.s32.totalorder %s36, 11
      %p75 = por %p73, %p74
      %p76 = scmp.ne.s32.totalorder %s65, %s66
      %p77 = scmp.eq.s32.totalorder %s36, 0
      %p78 = por %p76, %p77
      %p79 = scmp.ne.s32.totalorder %s65, %s66
      %p80 = scmp.eq.s32.totalorder %s37, 11
      %p81 = por %p79, %p80
      %p83 = scmp.ne.s32.totalorder %s66, %s82
      %p84 = scmp.eq.s32.totalorder %s37, 0
      %p85 = por %p83, %p84
      %s87 = sadd.s32 %s86, 1
      %p90 = scmp.eq.s32.totalorder %s31, 11
      %p91 = scmp.ne.s32.totalorder %s86, %s88
      %p92 = scmp.eq.s32.totalorder %s31, 0
      %p93 = por %p91, %p92
      %p94 = scmp.ne.s32.totalorder %s86, %s88
      %p95 = scmp.eq.s32.totalorder %s36, 11
      %p96 = por %p94, %p95
      %p97 = scmp.ne.s32.totalorder %s88, %s89
      %p98 = scmp.eq.s32.totalorder %s36, 0
      %p99 = por %p97, %p98
      %p100 = scmp.ne.s32.totalorder %s88, %s89
      %p101 = scmp.eq.s32.totalorder %s37, 11
      %p102 = por %p100, %p101
      %p104 = scmp.ne.s32.totalorder %s89, %s103
      %p105 = scmp.eq.s32.totalorder %s37, 0
      %p106 = por %p104, %p105
      %s108 = sadd.s32 %s107, 1
      %p111 = scmp.eq.s32.totalorder %s31, 11
      %p112 = scmp.ne.s32.totalorder %s107, %s109
      %p113 = scmp.eq.s32.totalorder %s31, 0
      %p114 = por %p112, %p113
      %p115 = scmp.ne.s32.totalorder %s107, %s109
      %p116 = scmp.eq.s32.totalorder %s36, 11
      %p117 = por %p115, %p116
      %p118 = scmp.ne.s32.totalorder %s109, %s110
      %p119 = scmp.eq.s32.totalorder %s36, 0
      %p120 = por %p118, %p119
      %p121 = scmp.ne.s32.totalorder %s109, %s110
      %p122 = scmp.eq.s32.totalorder %s37, 11
      %p123 = por %p121, %p122
      %p125 = scmp.ne.s32.totalorder %s110, %s124
      %p126 = scmp.eq.s32.totalorder %s37, 0
      %p127 = por %p125, %p126
      %s129 = sadd.s32 %s128, 1
      %p132 = scmp.eq.s32.totalorder %s31, 11
      %p133 = scmp.ne.s32.totalorder %s128, %s130
      %p134 = scmp.eq.s32.totalorder %s31, 0
      %p135 = por %p133, %p134
      %p136 = scmp.ne.s32.totalorder %s128, %s130
      %p137 = scmp.eq.s32.totalorder %s36, 11
      %p138 = por %p136, %p137
      %p139 = scmp.ne.s32.totalorder %s130, %s131
      %p140 = scmp.eq.s32.totalorder %s36, 0
      %p141 = por %p139, %p140
      %p142 = scmp.ne.s32.totalorder %s130, %s131
      %p143 = scmp.eq.s32.totalorder %s37, 11
      %p144 = por %p142, %p143
      %p146 = scmp.ne.s32.totalorder %s131, %s145
      %p147 = scmp.eq.s32.totalorder %s37, 0
      %p148 = por %p146, %p147
      %s150 = sadd.s32 %s149, 1
      %p153 = scmp.eq.s32.totalorder %s31, 11
      %p154 = scmp.ne.s32.totalorder %s149, %s151
      %p155 = scmp.eq.s32.totalorder %s31, 0
      %p156 = por %p154, %p155
      %p157 = scmp.ne.s32.totalorder %s149, %s151
      %p158 = scmp.eq.s32.totalorder %s36, 11
      %p159 = por %p157, %p158
      %p160 = scmp.ne.s32.totalorder %s151, %s152
      %p161 = scmp.eq.s32.totalorder %s36, 0
      %p162 = por %p160, %p161
      %p163 = scmp.ne.s32.totalorder %s151, %s152
      %p164 = scmp.eq.s32.totalorder %s37, 11
      %p165 = por %p163, %p164
      %p167 = scmp.ne.s32.totalorder %s152, %s166
      %p168 = scmp.eq.s32.totalorder %s37, 0
      %p169 = por %p167, %p168
      %s171 = sadd.s32 %s170, 1
      %p174 = scmp.eq.s32.totalorder %s31, 11
      %p175 = scmp.ne.s32.totalorder %s170, %s172
      %p176 = scmp.eq.s32.totalorder %s31, 0
      %p177 = por %p175, %p176
      %p178 = scmp.ne.s32.totalorder %s170, %s172
      %p179 = scmp.eq.s32.totalorder %s36, 11
      %p180 = por %p178, %p179
      %p181 = scmp.ne.s32.totalorder %s172, %s173
      %p182 = scmp.eq.s32.totalorder %s36, 0
      %p183 = por %p181, %p182
      %p184 = scmp.ne.s32.totalorder %s172, %s173
      %p185 = scmp.eq.s32.totalorder %s37, 11
      %p186 = por %p184, %p185
      %p188 = scmp.ne.s32.totalorder %s173, %s187
      %p189 = scmp.eq.s32.totalorder %s37, 0
      %p190 = por %p188, %p189
      %s192 = sadd.s32 %s191, 1
      %p195 = scmp.eq.s32.totalorder %s31, 11
      %p196 = scmp.ne.s32.totalorder %s191, %s193
      %p197 = scmp.eq.s32.totalorder %s31, 0
      %p198 = por %p196, %p197
      %p199 = scmp.ne.s32.totalorder %s191, %s193
      %p200 = scmp.eq.s32.totalorder %s36, 11
      %p201 = por %p199, %p200
      %p202 = scmp.ne.s32.totalorder %s193, %s194
      %p203 = scmp.eq.s32.totalorder %s36, 0
      %p204 = por %p202, %p203
      %p205 = scmp.ne.s32.totalorder %s193, %s194
      %p206 = scmp.eq.s32.totalorder %s37, 11
      %p207 = por %p205, %p206
      %p209 = scmp.ne.s32.totalorder %s194, %s208
      %p210 = scmp.eq.s32.totalorder %s37, 0
      %p211 = por %p209, %p210
      %s213 = sadd.s32 %s212, 1
      %p216 = scmp.eq.s32.totalorder %s31, 11
      %p217 = scmp.ne.s32.totalorder %s212, %s214
      %p218 = scmp.eq.s32.totalorder %s31, 0
      %p219 = por %p217, %p218
      %p220 = scmp.ne.s32.totalorder %s212, %s214
      %p221 = scmp.eq.s32.totalorder %s36, 11
      %p222 = por %p220, %p221
      %p223 = scmp.ne.s32.totalorder %s214, %s215
      %p224 = scmp.eq.s32.totalorder %s36, 0
      %p225 = por %p223, %p224
      %p226 = scmp.ne.s32.totalorder %s214, %s215
      %p227 = scmp.eq.s32.totalorder %s37, 11
      %p228 = por %p226, %p227
      %p230 = scmp.ne.s32.totalorder %s215, %s229
      %p231 = scmp.eq.s32.totalorder %s37, 0
      %p232 = por %p230, %p231
      %s234 = sadd.s32 %s233, 1
      %p237 = scmp.eq.s32.totalorder %s31, 11
      %p238 = scmp.ne.s32.totalorder %s233, %s235
      %p239 = scmp.eq.s32.totalorder %s31, 0
      %p240 = por %p238, %p239
      %p241 = scmp.ne.s32.totalorder %s233, %s235
      %p242 = scmp.eq.s32.totalorder %s36, 11
      %p243 = por %p241, %p242
      %p244 = scmp.ne.s32.totalorder %s235, %s236
      %p245 = scmp.eq.s32.totalorder %s36, 0
      %p246 = por %p244, %p245
      %p247 = scmp.ne.s32.totalorder %s235, %s236
      %p248 = scmp.eq.s32.totalorder %s37, 11
      %p249 = por %p247, %p248
      %p251 = scmp.ne.s32.totalorder %s236, %s250
      %p252 = scmp.eq.s32.totalorder %s37, 0
      %p253 = por %p251, %p252
      %s255 = sadd.s32 %s254, 1
      %p258 = scmp.eq.s32.totalorder %s31, 11
      %p259 = scmp.ne.s32.totalorder %s254, %s256
      %p260 = scmp.eq.s32.totalorder %s31, 0
      %p261 = por %p259, %p260
      %p262 = scmp.ne.s32.totalorder %s254, %s256
      %p263 = scmp.eq.s32.totalorder %s36, 11
      %p264 = por %p262, %p263
      %p265 = scmp.ne.s32.totalorder %s256, %s257
      %p266 = scmp.eq.s32.totalorder %s36, 0
      %p267 = por %p265, %p266
      %p268 = scmp.ne.s32.totalorder %s256, %s257
      %p269 = scmp.eq.s32.totalorder %s37, 11
      %p270 = por %p268, %p269
      %p272 = scmp.ne.s32.totalorder %s257, %s271
      %p273 = scmp.eq.s32.totalorder %s37, 0
      %p274 = por %p272, %p273
      %s276 = sadd.s32 %s275, 1
      %p279 = scmp.eq.s32.totalorder %s31, 11
      %p280 = scmp.ne.s32.totalorder %s275, %s277
      %p281 = scmp.eq.s32.totalorder %s31, 0
      %p282 = por %p280, %p281
      %p283 = scmp.ne.s32.totalorder %s275, %s277
      %p284 = scmp.eq.s32.totalorder %s36, 11
      %p285 = por %p283, %p284
      %p286 = scmp.ne.s32.totalorder %s277, %s278
      %p287 = scmp.eq.s32.totalorder %s36, 0
      %p288 = por %p286, %p287
      %p289 = scmp.ne.s32.totalorder %s277, %s278
      %p290 = scmp.eq.s32.totalorder %s37, 11
      %p291 = por %p289, %p290
      %p293 = scmp.ne.s32.totalorder %s278, %s292
      %p294 = scmp.eq.s32.totalorder %s37, 0
      %p295 = por %p293, %p294
      %s297 = sadd.s32 %s296, 1
      %p300 = scmp.eq.s32.totalorder %s31, 11
      %p301 = scmp.ne.s32.totalorder %s296, %s298
      %p302 = scmp.eq.s32.totalorder %s31, 0
      %p303 = por %p301, %p302
      %p304 = scmp.ne.s32.totalorder %s296, %s298
      %p305 = scmp.eq.s32.totalorder %s36, 11
      %p306 = por %p304, %p305
      %p307 = scmp.ne.s32.totalorder %s298, %s299
      %p308 = scmp.eq.s32.totalorder %s36, 0
      %p309 = por %p307, %p308
      %p310 = scmp.ne.s32.totalorder %s298, %s299
      %p311 = scmp.eq.s32.totalorder %s37, 11
      %p312 = por %p310, %p311
      %p314 = scmp.ne.s32.totalorder %s299, %s313
      %p315 = scmp.eq.s32.totalorder %s37, 0
      %p316 = por %p314, %p315
      %s318 = sadd.s32 %s317, 1
      %p321 = scmp.eq.s32.totalorder %s31, 11
      %p322 = scmp.ne.s32.totalorder %s317, %s319
      %p323 = scmp.eq.s32.totalorder %s31, 0
      %p324 = por %p322, %p323
      %p325 = scmp.ne.s32.totalorder %s317, %s319
      %p326 = scmp.eq.s32.totalorder %s36, 11
      %p327 = por %p325, %p326
      %p328 = scmp.ne.s32.totalorder %s319, %s320
      %p329 = scmp.eq.s32.totalorder %s36, 0
      %p330 = por %p328, %p329
      %p331 = scmp.ne.s32.totalorder %s319, %s320
      %p332 = scmp.eq.s32.totalorder %s37, 11
      %p333 = por %p331, %p332
      %p335 = scmp.ne.s32.totalorder %s320, %s334
      %p336 = scmp.eq.s32.totalorder %s37, 0
      %p337 = por %p335, %p336
      %s339 = sadd.s32 %s338, 1
      %p342 = scmp.eq.s32.totalorder %s31, 11
      %p343 = scmp.ne.s32.totalorder %s338, %s340
      %p344 = scmp.eq.s32.totalorder %s31, 0
      %p345 = por %p343, %p344
      %p346 = scmp.ne.s32.totalorder %s338, %s340
      %p347 = scmp.eq.s32.totalorder %s36, 11
      %p348 = por %p346, %p347
      %p349 = scmp.ne.s32.totalorder %s340, %s341
      %p350 = scmp.eq.s32.totalorder %s36, 0
      %p351 = por %p349, %p350
      %p352 = scmp.ne.s32.totalorder %s340, %s341
      %p353 = scmp.eq.s32.totalorder %s37, 11
      %p354 = por %p352, %p353
      %p356 = scmp.ne.s32.totalorder %s341, %s355
      %p357 = scmp.eq.s32.totalorder %s37, 0
      %p358 = por %p356, %p357
      %s360 = sadd.s32 %s359, 1
      %p363 = scmp.eq.s32.totalorder %s31, 11
      %p364 = scmp.ne.s32.totalorder %s359, %s361
      %p365 = scmp.eq.s32.totalorder %s31, 0
      %p366 = por %p364, %p365
      %p367 = scmp.ne.s32.totalorder %s359, %s361
      %p368 = scmp.eq.s32.totalorder %s36, 11
      %p369 = por %p367, %p368
      %p370 = scmp.ne.s32.totalorder %s361, %s362
      %p371 = scmp.eq.s32.totalorder %s36, 0
      %p372 = por %p370, %p371
      %p373 = scmp.ne.s32.totalorder %s361, %s362
      %p374 = scmp.eq.s32.totalorder %s37, 11
      %p375 = por %p373, %p374
      %p377 = scmp.ne.s32.totalorder %s362, %s376
      %p378 = scmp.eq.s32.totalorder %s37, 0
      %p379 = por %p377, %p378
      %s381 = sadd.s32 %s380, 1
      %p384 = scmp.eq.s32.totalorder %s31, 11
      %p385 = scmp.ne.s32.totalorder %s380, %s382
      %p386 = scmp.eq.s32.totalorder %s31, 0
      %p387 = por %p385, %p386
      %p388 = scmp.ne.s32.totalorder %s380, %s382
      %p389 = scmp.eq.s32.totalorder %s36, 11
      %p390 = por %p388, %p389
      %p391 = scmp.ne.s32.totalorder %s382, %s383
      %p392 = scmp.eq.s32.totalorder %s36, 0
      %p393 = por %p391, %p392
      %p394 = scmp.ne.s32.totalorder %s382, %s383
      %p395 = scmp.eq.s32.totalorder %s37, 11
      %p396 = por %p394, %p395
      %p398 = scmp.ne.s32.totalorder %s383, %s397
      %p399 = scmp.eq.s32.totalorder %s37, 0
      %p400 = por %p398, %p399
      %s402 = sadd.s32 %s401, 1
      %p405 = scmp.eq.s32.totalorder %s31, 11
      %p406 = scmp.ne.s32.totalorder %s401, %s403
      %p407 = scmp.eq.s32.totalorder %s31, 0
      %p408 = por %p406, %p407
      %p409 = scmp.ne.s32.totalorder %s401, %s403
      %p410 = scmp.eq.s32.totalorder %s36, 11
      %p411 = por %p409, %p410
      %p412 = scmp.ne.s32.totalorder %s403, %s404
      %p413 = scmp.eq.s32.totalorder %s36, 0
      %p414 = por %p412, %p413
      %p415 = scmp.ne.s32.totalorder %s403, %s404
      %p416 = scmp.eq.s32.totalorder %s37, 11
      %p417 = por %p415, %p416
      %p419 = scmp.ne.s32.totalorder %s404, %s418
      %p420 = scmp.eq.s32.totalorder %s37, 0
      %p421 = por %p419, %p420
      %p422 = scmp.le.s32.totalorder 1, %s31
      %p423 = scmp.lt.s32.totalorder %s31, 13
      %p424 = pnand %p422, %p423
      %p425 = pneg %p424
      // Predicated region
      $region9: #{encoder_bn_forward.1} parent=5 // pred_check
        _
      $region10: #{encoder_bn_forward.1} parent=5 // pred_check_branch
        %427 = sbr.rel (%p424) target = $region12
      $region11: #{encoder_bn_forward.1} parent=5 // pred_region
        %s428 = ssub.s32 %s31, 1
        // Predicated region
        $region13: #{encoder_bn_forward.1} parent=11 // pred_check
          %p429 = pneg %p99
        $region14: #{encoder_bn_forward.1} parent=11 // pred_check_branch
          %431 = sbr.rel (%p429) target = $region16
        $region15: #{encoder_bn_forward.1} parent=11 // pred_region
          _
        $region16: #{encoder_bn_forward.1} parent=11 // pred_fallthru
          _
        // Predicated region
        $region17: #{encoder_bn_forward.1} parent=11 // pred_check
          %p432 = pneg %p120
        $region18: #{encoder_bn_forward.1} parent=11 // pred_check_branch
          %434 = sbr.rel (%p432) target = $region20
        $region19: #{encoder_bn_forward.1} parent=11 // pred_region
          %s436 = ssub.s32 16, 16
          %437 = vsyncadd [#allocation11], %s436
          %s439 = sshll.u32 [#allocation10], 4
          %s440 = int_to_ptr.vmem [resolvable:$true] %s439
          %442 = dma.hbm_to_vmem [thread:$0]  %s2, 16, %s440, [#allocation11]
        $region20: #{encoder_bn_forward.1} parent=11 // pred_fallthru
          _
        // Predicated region
        $region21: #{encoder_bn_forward.1} parent=11 // pred_check
          %p443 = pneg %p141
        $region22: #{encoder_bn_forward.1} parent=11 // pred_check_branch
          %445 = sbr.rel (%p443) target = $region24
        $region23: #{encoder_bn_forward.1} parent=11 // pred_region
          %s447 = ssub.s32 16, 16
          %448 = vsyncadd [#allocation14], %s447
          %s450 = sshll.u32 [#allocation13], 4
          %s451 = int_to_ptr.vmem [resolvable:$true] %s450
          %453 = dma.hbm_to_vmem [thread:$0]  %s3, 16, %s451, [#allocation14]
        $region24: #{encoder_bn_forward.1} parent=11 // pred_fallthru
          _
        // Predicated region
        $region25: #{encoder_bn_forward.1} parent=11 // pred_check
          %p454 = pneg %p162
        $region26: #{encoder_bn_forward.1} parent=11 // pred_check_branch
          %456 = sbr.rel (%p454) target = $region28
        $region27: #{encoder_bn_forward.1} parent=11 // pred_region
          %s458 = ssub.s32 1024, 1024
          %459 = vsyncadd [#allocation14], %s458
          %s460 = sshll.u32 [#allocation15], 4
          %s461 = int_to_ptr.vmem [resolvable:$true] %s460
          %466 = dma.hbm_to_vmem [thread:$0]  %s4, 1024, %s461, [#allocation14], 128, 128, 8
        $region28: #{encoder_bn_forward.1} parent=11 // pred_fallthru
          _
        // Predicated region
        $region29: #{encoder_bn_forward.1} parent=11 // pred_check
          %p467 = pneg %p183
        $region30: #{encoder_bn_forward.1} parent=11 // pred_check_branch
          %469 = sbr.rel (%p467) target = $region32
        $region31: #{encoder_bn_forward.1} parent=11 // pred_region
          %s471 = ssub.s32 16, 16
          %472 = vsyncadd [#allocation17], %s471
          %s474 = sshll.u32 [#allocation16], 4
          %s475 = int_to_ptr.vmem [resolvable:$true] %s474
          %477 = dma.hbm_to_vmem [thread:$0]  %s5, 16, %s475, [#allocation17]
        $region32: #{encoder_bn_forward.1} parent=11 // pred_fallthru
          _
        // Predicated region
        $region33: #{encoder_bn_forward.1} parent=11 // pred_check
          %p478 = pneg %p204
        $region34: #{encoder_bn_forward.1} parent=11 // pred_check_branch
          %480 = sbr.rel (%p478) target = $region36
        $region35: #{encoder_bn_forward.1} parent=11 // pred_region
          %s482 = ssub.s32 16, 16
          %483 = vsyncadd [#allocation17], %s482
          %s485 = sshll.u32 [#allocation18], 4
          %s486 = int_to_ptr.vmem [resolvable:$true] %s485
          %488 = dma.hbm_to_vmem [thread:$0]  %s6, 16, %s486, [#allocation17]
        $region36: #{encoder_bn_forward.1} parent=11 // pred_fallthru
          _
        // Predicated region
        $region37: #{encoder_bn_forward.1} parent=11 // pred_check
          %p489 = pneg %p225
        $region38: #{encoder_bn_forward.1} parent=11 // pred_check_branch
          %491 = sbr.rel (%p489) target = $region40
        $region39: #{encoder_bn_forward.1} parent=11 // pred_region
          %s493 = ssub.s32 16384, 16384
          %494 = vsyncadd [#allocation20], %s493
          %s495 = sshll.u32 [#allocation19], 4
          %s496 = int_to_ptr.vmem [resolvable:$true] %s495
          %501 = dma.hbm_to_vmem [thread:$0]  %s7, 16384, %s496, [#allocation20], 1024, 1024, 64
        $region40: #{encoder_bn_forward.1} parent=11 // pred_fallthru
          _
        // Predicated region
        $region41: #{encoder_bn_forward.1} parent=11 // pred_check
          %p502 = pneg %p246
        $region42: #{encoder_bn_forward.1} parent=11 // pred_check_branch
          %504 = sbr.rel (%p502) target = $region44
        $region43: #{encoder_bn_forward.1} parent=11 // pred_region
          %s506 = ssub.s32 128, 128
          %507 = vsyncadd [#allocation20], %s506
          %s509 = sshll.u32 [#allocation21], 4
          %s510 = int_to_ptr.vmem [resolvable:$true] %s509
          %512 = dma.hbm_to_vmem [thread:$0]  %s8, 128, %s510, [#allocation20]
        $region44: #{encoder_bn_forward.1} parent=11 // pred_fallthru
          _
        // Predicated region
        $region45: #{encoder_bn_forward.1} parent=11 // pred_check
          %p513 = pneg %p267
        $region46: #{encoder_bn_forward.1} parent=11 // pred_check_branch
          %515 = sbr.rel (%p513) target = $region48
        $region47: #{encoder_bn_forward.1} parent=11 // pred_region
          %s517 = ssub.s32 128, 128
          %518 = vsyncadd [#allocation23], %s517
          %s520 = sshll.u32 [#allocation22], 4
          %s521 = int_to_ptr.vmem [resolvable:$true] %s520
          %523 = dma.hbm_to_vmem [thread:$0]  %s9, 128, %s521, [#allocation23]
        $region48: #{encoder_bn_forward.1} parent=11 // pred_fallthru
          _
        // Predicated region
        $region49: #{encoder_bn_forward.1} parent=11 // pred_check
          %p524 = pneg %p288
        $region50: #{encoder_bn_forward.1} parent=11 // pred_check_branch
          %526 = sbr.rel (%p524) target = $region52
        $region51: #{encoder_bn_forward.1} parent=11 // pred_region
          %s528 = ssub.s32 65536, 65536
          %529 = vsyncadd [#allocation23], %s528
          %s530 = sshll.u32 [#allocation24], 4
          %s531 = int_to_ptr.vmem [resolvable:$true] %s530
          %536 = dma.hbm_to_vmem [thread:$0]  %s10, 65536, %s531, [#allocation23], 512, 512, 32
        $region52: #{encoder_bn_forward.1} parent=11 // pred_fallthru
          _
        // Predicated region
        $region53: #{encoder_bn_forward.1} parent=11 // pred_check
          %p537 = pneg %p309
        $region54: #{encoder_bn_forward.1} parent=11 // pred_check_branch
          %539 = sbr.rel (%p537) target = $region56
        $region55: #{encoder_bn_forward.1} parent=11 // pred_region
          %s541 = ssub.s32 64, 64
          %542 = vsyncadd [#allocation26], %s541
          %s544 = sshll.u32 [#allocation25], 4
          %s545 = int_to_ptr.vmem [resolvable:$true] %s544
          %547 = dma.hbm_to_vmem [thread:$0]  %s11, 64, %s545, [#allocation26]
        $region56: #{encoder_bn_forward.1} parent=11 // pred_fallthru
          _
        // Predicated region
        $region57: #{encoder_bn_forward.1} parent=11 // pred_check
          %p548 = pneg %p330
        $region58: #{encoder_bn_forward.1} parent=11 // pred_check_branch
          %550 = sbr.rel (%p548) target = $region60
        $region59: #{encoder_bn_forward.1} parent=11 // pred_region
          %s552 = ssub.s32 64, 64
          %553 = vsyncadd [#allocation26], %s552
          %s555 = sshll.u32 [#allocation27], 4
          %s556 = int_to_ptr.vmem [resolvable:$true] %s555
          %558 = dma.hbm_to_vmem [thread:$0]  %s12, 64, %s556, [#allocation26]
        $region60: #{encoder_bn_forward.1} parent=11 // pred_fallthru
          _
        // Predicated region
        $region61: #{encoder_bn_forward.1} parent=11 // pred_check
          %p559 = pneg %p351
        $region62: #{encoder_bn_forward.1} parent=11 // pred_check_branch
          %561 = sbr.rel (%p559) target = $region64
        $region63: #{encoder_bn_forward.1} parent=11 // pred_region
          %s563 = ssub.s32 8192, 8192
          %564 = vsyncadd [#allocation29], %s563
          %s565 = sshll.u32 [#allocation28], 4
          %s566 = int_to_ptr.vmem [resolvable:$true] %s565
          %571 = dma.hbm_to_vmem [thread:$0]  %s13, 8192, %s566, [#allocation29], 128, 128, 8
        $region64: #{encoder_bn_forward.1} parent=11 // pred_fallthru
          _
        // Predicated region
        $region65: #{encoder_bn_forward.1} parent=11 // pred_check
          %p572 = pneg %p372
        $region66: #{encoder_bn_forward.1} parent=11 // pred_check_branch
          %574 = sbr.rel (%p572) target = $region68
        $region67: #{encoder_bn_forward.1} parent=11 // pred_region
          %s576 = ssub.s32 16, 16
          %577 = vsyncadd [#allocation29], %s576
          %s579 = sshll.u32 [#allocation30], 4
          %s580 = int_to_ptr.vmem [resolvable:$true] %s579
          %582 = dma.hbm_to_vmem [thread:$0]  %s14, 16, %s580, [#allocation29]
        $region68: #{encoder_bn_forward.1} parent=11 // pred_fallthru
          _
        // Predicated region
        $region69: #{encoder_bn_forward.1} parent=11 // pred_check
          %p583 = pneg %p393
        $region70: #{encoder_bn_forward.1} parent=11 // pred_check_branch
          %585 = sbr.rel (%p583) target = $region72
        $region71: #{encoder_bn_forward.1} parent=11 // pred_region
          %s587 = ssub.s32 16, 16
          %588 = vsyncadd [#allocation32], %s587
          %s590 = sshll.u32 [#allocation31], 4
          %s591 = int_to_ptr.vmem [resolvable:$true] %s590
          %593 = dma.hbm_to_vmem [thread:$0]  %s15, 16, %s591, [#allocation32]
        $region72: #{encoder_bn_forward.1} parent=11 // pred_fallthru
          _
      $region12: #{encoder_bn_forward.1} parent=5 // pred_fallthru
        _
      %p594 = scmp.lt.s32.totalorder %s31, 12
      // Predicated region
      $region73: #{encoder_bn_forward.1} parent=5 // pred_check
        %p595 = pneg %p594
      $region74: #{encoder_bn_forward.1} parent=5 // pred_check_branch
        %597 = sbr.rel (%p595) target = $region76
      $region75: #{encoder_bn_forward.1} parent=5 // pred_region
        // Predicated region
        $region77: #{encoder_bn_forward.1} parent=75 // pred_check
          %p598 = pneg %p72
        $region78: #{encoder_bn_forward.1} parent=75 // pred_check_branch
          %600 = sbr.rel (%p598) target = $region80
        $region79: #{encoder_bn_forward.1} parent=75 // pred_region
          %s601 = smul.u32 16, %s40
          %p602 = scmp.lt.s32.totalorder %s39, 1
          %s603 = scalar_select %p602, %s39, 1
          %p604 = scmp.lt.s32.totalorder %s601, 31
          %s605 = scalar_select %p604, %s601, 31
          %s606 = smul.addr %s603, 32
          %s607 = sadd.s32 %s605, %s606
          %s608 = smul.addr %s607, 8
          %s609 = scalar_lea.vmem %s0, %s608
          %s610 = smul.u32 16, %s40
        $region80: #{encoder_bn_forward.1} parent=75 // pred_fallthru
          _
      $region76: #{encoder_bn_forward.1} parent=5 // pred_fallthru
        _
      %p611 = scmp.le.s32.totalorder 1, %s31
      %p612 = scmp.lt.s32.totalorder %s31, 13
      %p613 = pnand %p611, %p612
      %p614 = pneg %p613
      // Predicated region
      $region81: #{encoder_bn_forward.1} parent=5 // pred_check
        _
      $region82: #{encoder_bn_forward.1} parent=5 // pred_check_branch
        %616 = sbr.rel (%p613) target = $region84
      $region83: #{encoder_bn_forward.1} parent=5 // pred_region
        %s617 = ssub.s32 %s31, 1
        // Predicated region
        $region85: #{encoder_bn_forward.1} parent=83 // pred_check
          %p618 = pneg %p120
        $region86: #{encoder_bn_forward.1} parent=83 // pred_check_branch
          %620 = sbr.rel (%p618) target = $region88
        $region87: #{encoder_bn_forward.1} parent=83 // pred_region
          %621 = dma.done [#allocation11], 16
        $region88: #{encoder_bn_forward.1} parent=83 // pred_fallthru
          _
        // Predicated region
        $region89: #{encoder_bn_forward.1} parent=83 // pred_check
          %p622 = pneg %p141
        $region90: #{encoder_bn_forward.1} parent=83 // pred_check_branch
          %624 = sbr.rel (%p622) target = $region92
        $region91: #{encoder_bn_forward.1} parent=83 // pred_region
          %625 = dma.done [#allocation14], 16
        $region92: #{encoder_bn_forward.1} parent=83 // pred_fallthru
          _
        // Predicated region
        $region93: #{encoder_bn_forward.1} parent=83 // pred_check
          %p626 = pneg %p162
        $region94: #{encoder_bn_forward.1} parent=83 // pred_check_branch
          %628 = sbr.rel (%p626) target = $region96
        $region95: #{encoder_bn_forward.1} parent=83 // pred_region
          %629 = dma.done [#allocation14], 1024
        $region96: #{encoder_bn_forward.1} parent=83 // pred_fallthru
          _
        // Predicated region
        $region97: #{encoder_bn_forward.1} parent=83 // pred_check
          %p630 = pneg %p183
        $region98: #{encoder_bn_forward.1} parent=83 // pred_check_branch
          %632 = sbr.rel (%p630) target = $region100
        $region99: #{encoder_bn_forward.1} parent=83 // pred_region
          %633 = dma.done [#allocation17], 16
        $region100: #{encoder_bn_forward.1} parent=83 // pred_fallthru
          _
        // Predicated region
        $region101: #{encoder_bn_forward.1} parent=83 // pred_check
          %p634 = pneg %p204
        $region102: #{encoder_bn_forward.1} parent=83 // pred_check_branch
          %636 = sbr.rel (%p634) target = $region104
        $region103: #{encoder_bn_forward.1} parent=83 // pred_region
          %637 = dma.done [#allocation17], 16
        $region104: #{encoder_bn_forward.1} parent=83 // pred_fallthru
          _
        // Predicated region
        $region105: #{encoder_bn_forward.1} parent=83 // pred_check
          %p638 = pneg %p225
        $region106: #{encoder_bn_forward.1} parent=83 // pred_check_branch
          %640 = sbr.rel (%p638) target = $region108
        $region107: #{encoder_bn_forward.1} parent=83 // pred_region
          %641 = dma.done [#allocation20], 16384
        $region108: #{encoder_bn_forward.1} parent=83 // pred_fallthru
          _
        // Predicated region
        $region109: #{encoder_bn_forward.1} parent=83 // pred_check
          %p642 = pneg %p246
        $region110: #{encoder_bn_forward.1} parent=83 // pred_check_branch
          %644 = sbr.rel (%p642) target = $region112
        $region111: #{encoder_bn_forward.1} parent=83 // pred_region
          %645 = dma.done [#allocation20], 128
        $region112: #{encoder_bn_forward.1} parent=83 // pred_fallthru
          _
        // Predicated region
        $region113: #{encoder_bn_forward.1} parent=83 // pred_check
          %p646 = pneg %p267
        $region114: #{encoder_bn_forward.1} parent=83 // pred_check_branch
          %648 = sbr.rel (%p646) target = $region116
        $region115: #{encoder_bn_forward.1} parent=83 // pred_region
          %649 = dma.done [#allocation23], 128
        $region116: #{encoder_bn_forward.1} parent=83 // pred_fallthru
          _
        // Predicated region
        $region117: #{encoder_bn_forward.1} parent=83 // pred_check
          %p650 = pneg %p288
        $region118: #{encoder_bn_forward.1} parent=83 // pred_check_branch
          %652 = sbr.rel (%p650) target = $region120
        $region119: #{encoder_bn_forward.1} parent=83 // pred_region
          %653 = dma.done [#allocation23], 65536
        $region120: #{encoder_bn_forward.1} parent=83 // pred_fallthru
          _
        // Predicated region
        $region121: #{encoder_bn_forward.1} parent=83 // pred_check
          %p654 = pneg %p309
        $region122: #{encoder_bn_forward.1} parent=83 // pred_check_branch
          %656 = sbr.rel (%p654) target = $region124
        $region123: #{encoder_bn_forward.1} parent=83 // pred_region
          %657 = dma.done [#allocation26], 64
        $region124: #{encoder_bn_forward.1} parent=83 // pred_fallthru
          _
        // Predicated region
        $region125: #{encoder_bn_forward.1} parent=83 // pred_check
          %p658 = pneg %p330
        $region126: #{encoder_bn_forward.1} parent=83 // pred_check_branch
          %660 = sbr.rel (%p658) target = $region128
        $region127: #{encoder_bn_forward.1} parent=83 // pred_region
          %661 = dma.done [#allocation26], 64
        $region128: #{encoder_bn_forward.1} parent=83 // pred_fallthru
          _
        // Predicated region
        $region129: #{encoder_bn_forward.1} parent=83 // pred_check
          %p662 = pneg %p351
        $region130: #{encoder_bn_forward.1} parent=83 // pred_check_branch
          %664 = sbr.rel (%p662) target = $region132
        $region131: #{encoder_bn_forward.1} parent=83 // pred_region
          %665 = dma.done [#allocation29], 8192
        $region132: #{encoder_bn_forward.1} parent=83 // pred_fallthru
          _
        // Predicated region
        $region133: #{encoder_bn_forward.1} parent=83 // pred_check
          %p666 = pneg %p372
        $region134: #{encoder_bn_forward.1} parent=83 // pred_check_branch
          %668 = sbr.rel (%p666) target = $region136
        $region135: #{encoder_bn_forward.1} parent=83 // pred_region
          %669 = dma.done [#allocation29], 16
        $region136: #{encoder_bn_forward.1} parent=83 // pred_fallthru
          _
        // Predicated region
        $region137: #{encoder_bn_forward.1} parent=83 // pred_check
          %p670 = pneg %p393
        $region138: #{encoder_bn_forward.1} parent=83 // pred_check_branch
          %672 = sbr.rel (%p670) target = $region140
        $region139: #{encoder_bn_forward.1} parent=83 // pred_region
          %673 = dma.done [#allocation32], 16
        $region140: #{encoder_bn_forward.1} parent=83 // pred_fallthru
          _
        %s674 = smul.u32 16, %s43
        %p675 = scmp.lt.s32.totalorder %s42, 1
        %s676 = scalar_select %p675, %s42, 1
        %p677 = scmp.lt.s32.totalorder %s674, 31
        %s678 = scalar_select %p677, %s674, 31
        %s679 = smul.addr %s676, 32
        %s680 = sadd.s32 %s678, %s679
        %s681 = smul.addr %s680, 8
        %s682 = scalar_lea.vmem %s0, %s681
        %p683 = pneg %p78
        %p684 = pneg %p75
        %p685 = pneg %p99
        %p686 = pneg %p96
        %p687 = pneg %p120
        %p688 = pneg %p117
        %p689 = pneg %p141
        %p690 = pneg %p138
        %p691 = pneg %p162
        %p692 = pneg %p159
        %p693 = pneg %p183
        %p694 = pneg %p180
        %p695 = pneg %p204
        %p696 = pneg %p201
        %p697 = pneg %p225
        %p698 = pneg %p222
        %p699 = pneg %p246
        %p700 = pneg %p243
        %p701 = pneg %p267
        %p702 = pneg %p264
        %p703 = pneg %p288
        %p704 = pneg %p285
        %p705 = pneg %p309
        %p706 = pneg %p306
        %p707 = pneg %p330
        %p708 = pneg %p327
        %p709 = pneg %p351
        %p710 = pneg %p348
        %p711 = pneg %p372
        %p712 = pneg %p369
        %p713 = pneg %p393
        %p714 = pneg %p390
        %p715 = pneg %p414
        %p716 = pneg %p411
        %s717 = smul.u32 16, %s43
        %p718 = scmp.lt.s32.totalorder %s42, 1
        %s719 = scalar_select %p718, %s42, 1
        %p720 = scmp.lt.s32.totalorder %s717, 31
        %s721 = scalar_select %p720, %s717, 31
        %s722 = smul.addr %s719, 32
        %s723 = sadd.s32 %s721, %s722
        %s724 = smul.addr %s723, 8
        %s725 = scalar_lea.vmem %s0, %s724
        %s726 = smul.u32 16, %s43
        %p727 = scmp.eq.s32.totalorder %s41, 0
        %p728 = scmp.eq.s32.totalorder %s42, 0
        %p729 = pnand %p727, %p728
        %p730 = pneg %p729
        %p731 = scmp.eq.s32.totalorder %s43, 0
        %p732 = pnand %p730, %p731
        %p733 = pneg %p732
        // Predicated region
        $region141: #{encoder_bn_forward.1} parent=83 // pred_check
          _
        $region142: #{encoder_bn_forward.1} parent=83 // pred_check_branch
          %735 = sbr.rel (%p732) target = $region144
        $region143: #{encoder_bn_forward.1} parent=83 // pred_region
          %vm736 = vcmask 516096
          %737 = vst.msk [vmem:[#allocation2] sm:$0x1] %vm736, 0.0
          %738 = vst.msk [vmem:[#allocation3] sm:$0x1] %vm736, 0.0
          %739 = vst [vmem:[#allocation4] sm:$0x1] 0.0
          %740 = vst [vmem:[#allocation5] sm:$0x1] 0.0
          %741 = vst [vmem:[#allocation6] sm:$0xff] 0.0
          %742 = vst [vmem:[#allocation7] sm:$0xff] 0.0
          %743 = vst [vmem:[#allocation8] sm:$0xff] -3.4028235e+38
          %744 = vst [vmem:[#allocation8 + $0x8] sm:$0xff] -3.4028235e+38
          %745 = vst [vmem:[#allocation8 + $0x10] sm:$0xff] -3.4028235e+38
          %746 = vst [vmem:[#allocation8 + $0x18] sm:$0xff] -3.4028235e+38
          %747 = vst [vmem:[#allocation8 + $0x20] sm:$0xff] -3.4028235e+38
          %748 = vst [vmem:[#allocation8 + $0x28] sm:$0xff] -3.4028235e+38
          %749 = vst [vmem:[#allocation8 + $0x30] sm:$0xff] -3.4028235e+38
          %750 = vst [vmem:[#allocation8 + $0x38] sm:$0xff] -3.4028235e+38
          %751 = vst [vmem:[#allocation9] sm:$0xff] 3.4028235e+38
          %752 = vst [vmem:[#allocation9 + $0x8] sm:$0xff] 3.4028235e+38
          %753 = vst [vmem:[#allocation9 + $0x10] sm:$0xff] 3.4028235e+38
          %754 = vst [vmem:[#allocation9 + $0x18] sm:$0xff] 3.4028235e+38
          %755 = vst [vmem:[#allocation9 + $0x20] sm:$0xff] 3.4028235e+38
          %756 = vst [vmem:[#allocation9 + $0x28] sm:$0xff] 3.4028235e+38
          %757 = vst [vmem:[#allocation9 + $0x30] sm:$0xff] 3.4028235e+38
          %758 = vst [vmem:[#allocation9 + $0x38] sm:$0xff] 3.4028235e+38
        $region144: #{encoder_bn_forward.1} parent=83 // pred_fallthru
          _
        %s759 = smul.u32 %s43, 128
        %v760 = vlaneseq
        %v761 = vshrl.u32 %v760, 7
        %v762 = vadd.s32 %v761, 8
        %v763 = vadd.s32 %v761, 16
        %v764 = vadd.s32 %v761, 24
        %v765 = vadd.s32 %v761, 32
        %v766 = vadd.s32 %v761, 40
        %v767 = vadd.s32 %v761, 48
        %v768 = vadd.s32 %v761, 56
        %v769 = vadd.s32 %v761, 64
        %v770 = vadd.s32 %v761, 72
        %v771 = vadd.s32 %v761, 80
        %v772 = vadd.s32 %v761, 88
        %v773 = vadd.s32 %v761, 96
        %v774 = vadd.s32 %v761, 104
        %v775 = vadd.s32 %v761, 112
        %v776 = vadd.s32 %v761, 120
        %v777 = vstv %s759
        %v778 = vadd.s32 %v777, %v761
        %v779 = vadd.s32 %v777, %v762
        %v780 = vadd.s32 %v777, %v763
        %v781 = vadd.s32 %v777, %v764
        %v782 = vadd.s32 %v777, %v765
        %v783 = vadd.s32 %v777, %v766
        %v784 = vadd.s32 %v777, %v767
        %v785 = vadd.s32 %v777, %v768
        %v786 = vadd.s32 %v777, %v769
        %v787 = vadd.s32 %v777, %v770
        %v788 = vadd.s32 %v777, %v771
        %v789 = vadd.s32 %v777, %v772
        %v790 = vadd.s32 %v777, %v773
        %v791 = vadd.s32 %v777, %v774
        %v792 = vadd.s32 %v777, %v775
        %v793 = vadd.s32 %v777, %v776
        %vm794 = vcmp.lt.s32.totalorder %v778, 200
        %vm795 = vcmp.lt.s32.totalorder %v779, 200
        %vm796 = vcmp.lt.s32.totalorder %v780, 200
        %vm797 = vcmp.lt.s32.totalorder %v781, 200
        %vm798 = vcmp.lt.s32.totalorder %v782, 200
        %vm799 = vcmp.lt.s32.totalorder %v783, 200
        %vm800 = vcmp.lt.s32.totalorder %v784, 200
        %vm801 = vcmp.lt.s32.totalorder %v785, 200
        %vm802 = vcmp.lt.s32.totalorder %v786, 200
        %vm803 = vcmp.lt.s32.totalorder %v787, 200
        %vm804 = vcmp.lt.s32.totalorder %v788, 200
        %vm805 = vcmp.lt.s32.totalorder %v789, 200
        %vm806 = vcmp.lt.s32.totalorder %v790, 200
        %vm807 = vcmp.lt.s32.totalorder %v791, 200
        %vm808 = vcmp.lt.s32.totalorder %v792, 200
        %vm809 = vcmp.lt.s32.totalorder %v793, 200
        %v810 = vsel %vm794, 1, 0
        %v811 = vsel %vm795, 1, 0
        %v812 = vsel %vm796, 1, 0
        %v813 = vsel %vm797, 1, 0
        %v814 = vsel %vm798, 1, 0
        %v815 = vsel %vm799, 1, 0
        %v816 = vsel %vm800, 1, 0
        %v817 = vsel %vm801, 1, 0
        %v818 = vsel %vm802, 1, 0
        %v819 = vsel %vm803, 1, 0
        %v820 = vsel %vm804, 1, 0
        %v821 = vsel %vm805, 1, 0
        %v822 = vsel %vm806, 1, 0
        %v823 = vsel %vm807, 1, 0
        %v824 = vsel %vm808, 1, 0
        %v825 = vsel %vm809, 1, 0
        %v826 = vcvt.s32.f32 %v810
        %v827 = vcvt.s32.f32 %v811
        %v828 = vcvt.s32.f32 %v812
        %v829 = vcvt.s32.f32 %v813
        %v830 = vcvt.s32.f32 %v814
        %v831 = vcvt.s32.f32 %v815
        %v832 = vcvt.s32.f32 %v816
        %v833 = vcvt.s32.f32 %v817
        %v834 = vcvt.s32.f32 %v818
        %v835 = vcvt.s32.f32 %v819
        %v836 = vcvt.s32.f32 %v820
        %v837 = vcvt.s32.f32 %v821
        %v838 = vcvt.s32.f32 %v822
        %v839 = vcvt.s32.f32 %v823
        %v840 = vcvt.s32.f32 %v824
        %v841 = vcvt.s32.f32 %v825
        %v842 = vld [vmem:[%s725] sm:$0xff]
        %v843 = vld [vmem:[%s725 + $0x8] sm:$0xff]
        %v844 = vld [vmem:[%s725 + $0x10] sm:$0xff]
        %v845 = vld [vmem:[%s725 + $0x18] sm:$0xff]
        %v846 = vld [vmem:[%s725 + $0x20] sm:$0xff]
        %v847 = vld [vmem:[%s725 + $0x28] sm:$0xff]
        %v848 = vld [vmem:[%s725 + $0x30] sm:$0xff]
        %v849 = vld [vmem:[%s725 + $0x38] sm:$0xff]
        %v850 = vld [vmem:[%s725 + $0x40] sm:$0xff]
        %v851 = vld [vmem:[%s725 + $0x48] sm:$0xff]
        %v852 = vld [vmem:[%s725 + $0x50] sm:$0xff]
        %v853 = vld [vmem:[%s725 + $0x58] sm:$0xff]
        %v854 = vld [vmem:[%s725 + $0x60] sm:$0xff]
        %v855 = vld [vmem:[%s725 + $0x68] sm:$0xff]
        %v856 = vld [vmem:[%s725 + $0x70] sm:$0xff]
        %v857 = vld [vmem:[%s725 + $0x78] sm:$0xff]
        %v858 = vld [vmem:[%s1] sm:$0x1]
        %860 = vset.pattern.permute.xlu0 0
        %861 = vperm.xlu0 %860, %v842
        %v862 = vpop.permute.xlu0 %861
        %865 = vset.pattern.permute.xlu0 0
        %866 = vperm.xlu0 %865, %v843
        %v867 = vpop.permute.xlu0 %866
        %870 = vset.pattern.permute.xlu0 0
        %871 = vperm.xlu0 %870, %v844
        %v872 = vpop.permute.xlu0 %871
        %875 = vset.pattern.permute.xlu0 0
        %876 = vperm.xlu0 %875, %v845
        %v877 = vpop.permute.xlu0 %876
        %880 = vset.pattern.permute.xlu0 0
        %881 = vperm.xlu0 %880, %v846
        %v882 = vpop.permute.xlu0 %881
        %885 = vset.pattern.permute.xlu0 0
        %886 = vperm.xlu0 %885, %v847
        %v887 = vpop.permute.xlu0 %886
        %890 = vset.pattern.permute.xlu0 0
        %891 = vperm.xlu0 %890, %v848
        %v892 = vpop.permute.xlu0 %891
        %895 = vset.pattern.permute.xlu0 0
        %896 = vperm.xlu0 %895, %v849
        %v897 = vpop.permute.xlu0 %896
        %900 = vset.pattern.permute.xlu0 0
        %901 = vperm.xlu0 %900, %v850
        %v902 = vpop.permute.xlu0 %901
        %905 = vset.pattern.permute.xlu0 0
        %906 = vperm.xlu0 %905, %v851
        %v907 = vpop.permute.xlu0 %906
        %910 = vset.pattern.permute.xlu0 0
        %911 = vperm.xlu0 %910, %v852
        %v912 = vpop.permute.xlu0 %911
        %915 = vset.pattern.permute.xlu0 0
        %916 = vperm.xlu0 %915, %v853
        %v917 = vpop.permute.xlu0 %916
        %920 = vset.pattern.permute.xlu0 0
        %921 = vperm.xlu0 %920, %v854
        %v922 = vpop.permute.xlu0 %921
        %925 = vset.pattern.permute.xlu0 0
        %926 = vperm.xlu0 %925, %v855
        %v927 = vpop.permute.xlu0 %926
        %930 = vset.pattern.permute.xlu0 0
        %931 = vperm.xlu0 %930, %v856
        %v932 = vpop.permute.xlu0 %931
        %935 = vset.pattern.permute.xlu0 0
        %936 = vperm.xlu0 %935, %v857
        %v937 = vpop.permute.xlu0 %936
        %v939 = vlaneseq
        %v940 = vshrl.u32 %v939, 7
        %v941 = vsub.s32 0, %v940
        %v942 = vrot.slane %v858, %v941
        %v943 = vmul.f32 %v862, %v942
        %v944 = vmul.f32 %v867, %v942
        %v945 = vmul.f32 %v872, %v942
        %v946 = vmul.f32 %v877, %v942
        %v947 = vmul.f32 %v882, %v942
        %v948 = vmul.f32 %v887, %v942
        %v949 = vmul.f32 %v892, %v942
        %v950 = vmul.f32 %v897, %v942
        %v951 = vmul.f32 %v902, %v942
        %v952 = vmul.f32 %v907, %v942
        %v953 = vmul.f32 %v912, %v942
        %v954 = vmul.f32 %v917, %v942
        %v955 = vmul.f32 %v922, %v942
        %v956 = vmul.f32 %v927, %v942
        %v957 = vmul.f32 %v932, %v942
        %v958 = vmul.f32 %v937, %v942
        %v959 = vld [vmem:[%s1 + $0x1] sm:$0x1]
        %960 = vset.pattern.permute.xlu0 1
        %961 = vperm.xlu0 %960, %v842
        %v962 = vpop.permute.xlu0 %961
        %964 = vset.pattern.permute.xlu0 1
        %965 = vperm.xlu0 %964, %v843
        %v966 = vpop.permute.xlu0 %965
        %968 = vset.pattern.permute.xlu0 1
        %969 = vperm.xlu0 %968, %v844
        %v970 = vpop.permute.xlu0 %969
        %972 = vset.pattern.permute.xlu0 1
        %973 = vperm.xlu0 %972, %v845
        %v974 = vpop.permute.xlu0 %973
        %976 = vset.pattern.permute.xlu0 1
        %977 = vperm.xlu0 %976, %v846
        %v978 = vpop.permute.xlu0 %977
        %980 = vset.pattern.permute.xlu0 1
        %981 = vperm.xlu0 %980, %v847
        %v982 = vpop.permute.xlu0 %981
        %984 = vset.pattern.permute.xlu0 1
        %985 = vperm.xlu0 %984, %v848
        %v986 = vpop.permute.xlu0 %985
        %988 = vset.pattern.permute.xlu0 1
        %989 = vperm.xlu0 %988, %v849
        %v990 = vpop.permute.xlu0 %989
        %992 = vset.pattern.permute.xlu0 1
        %993 = vperm.xlu0 %992, %v850
        %v994 = vpop.permute.xlu0 %993
        %996 = vset.pattern.permute.xlu0 1
        %997 = vperm.xlu0 %996, %v851
        %v998 = vpop.permute.xlu0 %997
        %1000 = vset.pattern.permute.xlu0 1
        %1001 = vperm.xlu0 %1000, %v852
        %v1002 = vpop.permute.xlu0 %1001
        %1004 = vset.pattern.permute.xlu0 1
        %1005 = vperm.xlu0 %1004, %v853
        %v1006 = vpop.permute.xlu0 %1005
        %1008 = vset.pattern.permute.xlu0 1
        %1009 = vperm.xlu0 %1008, %v854
        %v1010 = vpop.permute.xlu0 %1009
        %1012 = vset.pattern.permute.xlu0 1
        %1013 = vperm.xlu0 %1012, %v855
        %v1014 = vpop.permute.xlu0 %1013
        %1016 = vset.pattern.permute.xlu0 1
        %1017 = vperm.xlu0 %1016, %v856
        %v1018 = vpop.permute.xlu0 %1017
        %1020 = vset.pattern.permute.xlu0 1
        %1021 = vperm.xlu0 %1020, %v857
        %v1022 = vpop.permute.xlu0 %1021
        %v1024 = vlaneseq
        %v1025 = vshrl.u32 %v1024, 7
        %v1026 = vsub.s32 0, %v1025
        %v1027 = vrot.slane %v959, %v1026
        %v1028 = vmul.f32 %v962, %v1027
        %v1029 = vmul.f32 %v966, %v1027
        %v1030 = vmul.f32 %v970, %v1027
        %v1031 = vmul.f32 %v974, %v1027
        %v1032 = vmul.f32 %v978, %v1027
        %v1033 = vmul.f32 %v982, %v1027
        %v1034 = vmul.f32 %v986, %v1027
        %v1035 = vmul.f32 %v990, %v1027
        %v1036 = vmul.f32 %v994, %v1027
        %v1037 = vmul.f32 %v998, %v1027
        %v1038 = vmul.f32 %v1002, %v1027
        %v1039 = vmul.f32 %v1006, %v1027
        %v1040 = vmul.f32 %v1010, %v1027
        %v1041 = vmul.f32 %v1014, %v1027
        %v1042 = vmul.f32 %v1018, %v1027
        %v1043 = vmul.f32 %v1022, %v1027
        %v1044 = vadd.f32 %v943, %v1028
        %v1045 = vadd.f32 %v944, %v1029
        %v1046 = vadd.f32 %v945, %v1030
        %v1047 = vadd.f32 %v946, %v1031
        %v1048 = vadd.f32 %v947, %v1032
        %v1049 = vadd.f32 %v948, %v1033
        %v1050 = vadd.f32 %v949, %v1034
        %v1051 = vadd.f32 %v950, %v1035
        %v1052 = vadd.f32 %v951, %v1036
        %v1053 = vadd.f32 %v952, %v1037
        %v1054 = vadd.f32 %v953, %v1038
        %v1055 = vadd.f32 %v954, %v1039
        %v1056 = vadd.f32 %v955, %v1040
        %v1057 = vadd.f32 %v956, %v1041
        %v1058 = vadd.f32 %v957, %v1042
        %v1059 = vadd.f32 %v958, %v1043
        %v1060 = vld [vmem:[%s1 + $0x2] sm:$0x1]
        %1061 = vset.pattern.permute.xlu0 2
        %1062 = vperm.xlu0 %1061, %v842
        %v1063 = vpop.permute.xlu0 %1062
        %1065 = vset.pattern.permute.xlu0 2
        %1066 = vperm.xlu0 %1065, %v843
        %v1067 = vpop.permute.xlu0 %1066
        %1069 = vset.pattern.permute.xlu0 2
        %1070 = vperm.xlu0 %1069, %v844
        %v1071 = vpop.permute.xlu0 %1070
        %1073 = vset.pattern.permute.xlu0 2
        %1074 = vperm.xlu0 %1073, %v845
        %v1075 = vpop.permute.xlu0 %1074
        %1077 = vset.pattern.permute.xlu0 2
        %1078 = vperm.xlu0 %1077, %v846
        %v1079 = vpop.permute.xlu0 %1078
        %1081 = vset.pattern.permute.xlu0 2
        %1082 = vperm.xlu0 %1081, %v847
        %v1083 = vpop.permute.xlu0 %1082
        %1085 = vset.pattern.permute.xlu0 2
        %1086 = vperm.xlu0 %1085, %v848
        %v1087 = vpop.permute.xlu0 %1086
        %1089 = vset.pattern.permute.xlu0 2
        %1090 = vperm.xlu0 %1089, %v849
        %v1091 = vpop.permute.xlu0 %1090
        %1093 = vset.pattern.permute.xlu0 2
        %1094 = vperm.xlu0 %1093, %v850
        %v1095 = vpop.permute.xlu0 %1094
        %1097 = vset.pattern.permute.xlu0 2
        %1098 = vperm.xlu0 %1097, %v851
        %v1099 = vpop.permute.xlu0 %1098
        %1101 = vset.pattern.permute.xlu0 2
        %1102 = vperm.xlu0 %1101, %v852
        %v1103 = vpop.permute.xlu0 %1102
        %1105 = vset.pattern.permute.xlu0 2
        %1106 = vperm.xlu0 %1105, %v853
        %v1107 = vpop.permute.xlu0 %1106
        %1109 = vset.pattern.permute.xlu0 2
        %1110 = vperm.xlu0 %1109, %v854
        %v1111 = vpop.permute.xlu0 %1110
        %1113 = vset.pattern.permute.xlu0 2
        %1114 = vperm.xlu0 %1113, %v855
        %v1115 = vpop.permute.xlu0 %1114
        %1117 = vset.pattern.permute.xlu0 2
        %1118 = vperm.xlu0 %1117, %v856
        %v1119 = vpop.permute.xlu0 %1118
        %1121 = vset.pattern.permute.xlu0 2
        %1122 = vperm.xlu0 %1121, %v857
        %v1123 = vpop.permute.xlu0 %1122
        %v1125 = vlaneseq
        %v1126 = vshrl.u32 %v1125, 7
        %v1127 = vsub.s32 0, %v1126
        %v1128 = vrot.slane %v1060, %v1127
        %v1129 = vmul.f32 %v1063, %v1128
        %v1130 = vmul.f32 %v1067, %v1128
        %v1131 = vmul.f32 %v1071, %v1128
        %v1132 = vmul.f32 %v1075, %v1128
        %v1133 = vmul.f32 %v1079, %v1128
        %v1134 = vmul.f32 %v1083, %v1128
        %v1135 = vmul.f32 %v1087, %v1128
        %v1136 = vmul.f32 %v1091, %v1128
        %v1137 = vmul.f32 %v1095, %v1128
        %v1138 = vmul.f32 %v1099, %v1128
        %v1139 = vmul.f32 %v1103, %v1128
        %v1140 = vmul.f32 %v1107, %v1128
        %v1141 = vmul.f32 %v1111, %v1128
        %v1142 = vmul.f32 %v1115, %v1128
        %v1143 = vmul.f32 %v1119, %v1128
        %v1144 = vmul.f32 %v1123, %v1128
        %v1145 = vadd.f32 %v1044, %v1129
        %v1146 = vadd.f32 %v1045, %v1130
        %v1147 = vadd.f32 %v1046, %v1131
        %v1148 = vadd.f32 %v1047, %v1132
        %v1149 = vadd.f32 %v1048, %v1133
        %v1150 = vadd.f32 %v1049, %v1134
        %v1151 = vadd.f32 %v1050, %v1135
        %v1152 = vadd.f32 %v1051, %v1136
        %v1153 = vadd.f32 %v1052, %v1137
        %v1154 = vadd.f32 %v1053, %v1138
        %v1155 = vadd.f32 %v1054, %v1139
        %v1156 = vadd.f32 %v1055, %v1140
        %v1157 = vadd.f32 %v1056, %v1141
        %v1158 = vadd.f32 %v1057, %v1142
        %v1159 = vadd.f32 %v1058, %v1143
        %v1160 = vadd.f32 %v1059, %v1144
        // Predicated region
        $region145: #{encoder_bn_forward.1} parent=83 // pred_check
          %p1161 = pneg %p727
        $region146: #{encoder_bn_forward.1} parent=83 // pred_check_branch
          %1163 = sbr.rel (%p1161) target = $region148
        $region147: #{encoder_bn_forward.1} parent=83 // pred_region
          %v1164 = vmul.f32 %v1145, %v826
          %v1165 = vmul.f32 %v1146, %v827
          %v1166 = vmul.f32 %v1147, %v828
          %v1167 = vmul.f32 %v1148, %v829
          %v1168 = vmul.f32 %v1149, %v830
          %v1169 = vmul.f32 %v1150, %v831
          %v1170 = vmul.f32 %v1151, %v832
          %v1171 = vmul.f32 %v1152, %v833
          %v1172 = vmul.f32 %v1153, %v834
          %v1173 = vmul.f32 %v1154, %v835
          %v1174 = vmul.f32 %v1155, %v836
          %v1175 = vmul.f32 %v1156, %v837
          %v1176 = vmul.f32 %v1157, %v838
          %v1177 = vmul.f32 %v1158, %v839
          %v1178 = vmul.f32 %v1159, %v840
          %v1179 = vmul.f32 %v1160, %v841
          %v1180 = vld [vmem:[#allocation2] sm:$0x1]
          %vm1181 = vcmask 523264
          %v1182 = vsel %vm1181, %v1164, 0.0
          %v1183 = vsel %vm1181, %v1165, 0.0
          %v1184 = vadd.f32 %v1182, %v1183
          %v1185 = vsel %vm1181, %v1166, 0.0
          %v1186 = vadd.f32 %v1184, %v1185
          %v1187 = vsel %vm1181, %v1167, 0.0
          %v1188 = vadd.f32 %v1186, %v1187
          %v1189 = vsel %vm1181, %v1168, 0.0
          %v1190 = vadd.f32 %v1188, %v1189
          %v1191 = vsel %vm1181, %v1169, 0.0
          %v1192 = vadd.f32 %v1190, %v1191
          %v1193 = vsel %vm1181, %v1170, 0.0
          %v1194 = vadd.f32 %v1192, %v1193
          %v1195 = vsel %vm1181, %v1171, 0.0
          %v1196 = vadd.f32 %v1194, %v1195
          %v1197 = vsel %vm1181, %v1172, 0.0
          %v1198 = vadd.f32 %v1196, %v1197
          %v1199 = vsel %vm1181, %v1173, 0.0
          %v1200 = vadd.f32 %v1198, %v1199
          %v1201 = vsel %vm1181, %v1174, 0.0
          %v1202 = vadd.f32 %v1200, %v1201
          %v1203 = vsel %vm1181, %v1175, 0.0
          %v1204 = vadd.f32 %v1202, %v1203
          %v1205 = vsel %vm1181, %v1176, 0.0
          %v1206 = vadd.f32 %v1204, %v1205
          %v1207 = vsel %vm1181, %v1177, 0.0
          %v1208 = vadd.f32 %v1206, %v1207
          %v1209 = vsel %vm1181, %v1178, 0.0
          %v1210 = vadd.f32 %v1208, %v1209
          %v1211 = vsel %vm1181, %v1179, 0.0
          %v1212 = vadd.f32 %v1210, %v1211
          %v1213 = vrot.slane %v1212, 4
          %v1214 = vadd.f32 %v1212, %v1213
          %v1215 = vrot.slane %v1214, 2
          %v1216 = vadd.f32 %v1214, %v1215
          %v1217 = vrot.slane %v1216, 1
          %v1218 = vadd.f32 %v1216, %v1217
          %v1219 = vadd.f32 %v1180, %v1218
          %vm1220 = vcmask 516096
          %1221 = vst.msk [vmem:[#allocation2] sm:$0x1] %vm1220, %v1219
          %v1222 = vld [vmem:[#allocation3] sm:$0x1]
          %v1223 = vmul.f32 %v1164, %v1145
          %v1224 = vmul.f32 %v1165, %v1146
          %v1225 = vmul.f32 %v1166, %v1147
          %v1226 = vmul.f32 %v1167, %v1148
          %v1227 = vmul.f32 %v1168, %v1149
          %v1228 = vmul.f32 %v1169, %v1150
          %v1229 = vmul.f32 %v1170, %v1151
          %v1230 = vmul.f32 %v1171, %v1152
          %v1231 = vmul.f32 %v1172, %v1153
          %v1232 = vmul.f32 %v1173, %v1154
          %v1233 = vmul.f32 %v1174, %v1155
          %v1234 = vmul.f32 %v1175, %v1156
          %v1235 = vmul.f32 %v1176, %v1157
          %v1236 = vmul.f32 %v1177, %v1158
          %v1237 = vmul.f32 %v1178, %v1159
          %v1238 = vmul.f32 %v1179, %v1160
          %v1239 = vsel %vm1181, %v1223, 0.0
          %v1240 = vsel %vm1181, %v1224, 0.0
          %v1241 = vadd.f32 %v1239, %v1240
          %v1242 = vsel %vm1181, %v1225, 0.0
          %v1243 = vadd.f32 %v1241, %v1242
          %v1244 = vsel %vm1181, %v1226, 0.0
          %v1245 = vadd.f32 %v1243, %v1244
          %v1246 = vsel %vm1181, %v1227, 0.0
          %v1247 = vadd.f32 %v1245, %v1246
          %v1248 = vsel %vm1181, %v1228, 0.0
          %v1249 = vadd.f32 %v1247, %v1248
          %v1250 = vsel %vm1181, %v1229, 0.0
          %v1251 = vadd.f32 %v1249, %v1250
          %v1252 = vsel %vm1181, %v1230, 0.0
          %v1253 = vadd.f32 %v1251, %v1252
          %v1254 = vsel %vm1181, %v1231, 0.0
          %v1255 = vadd.f32 %v1253, %v1254
          %v1256 = vsel %vm1181, %v1232, 0.0
          %v1257 = vadd.f32 %v1255, %v1256
          %v1258 = vsel %vm1181, %v1233, 0.0
          %v1259 = vadd.f32 %v1257, %v1258
          %v1260 = vsel %vm1181, %v1234, 0.0
          %v1261 = vadd.f32 %v1259, %v1260
          %v1262 = vsel %vm1181, %v1235, 0.0
          %v1263 = vadd.f32 %v1261, %v1262
          %v1264 = vsel %vm1181, %v1236, 0.0
          %v1265 = vadd.f32 %v1263, %v1264
          %v1266 = vsel %vm1181, %v1237, 0.0
          %v1267 = vadd.f32 %v1265, %v1266
          %v1268 = vsel %vm1181, %v1238, 0.0
          %v1269 = vadd.f32 %v1267, %v1268
          %v1270 = vrot.slane %v1269, 4
          %v1271 = vadd.f32 %v1269, %v1270
          %v1272 = vrot.slane %v1271, 2
          %v1273 = vadd.f32 %v1271, %v1272
          %v1274 = vrot.slane %v1273, 1
          %v1275 = vadd.f32 %v1273, %v1274
          %v1276 = vadd.f32 %v1222, %v1275
          %1277 = vst.msk [vmem:[#allocation3] sm:$0x1] %vm1220, %v1276
        $region148: #{encoder_bn_forward.1} parent=83 // pred_fallthru
          _
        %p1278 = scmp.eq.s32.totalorder %s41, 1
        // Predicated region
        $region149: #{encoder_bn_forward.1} parent=83 // pred_check
          %p1279 = pneg %p1278
        $region150: #{encoder_bn_forward.1} parent=83 // pred_check_branch
          %1281 = sbr.rel (%p1279) target = $region152
        $region151: #{encoder_bn_forward.1} parent=83 // pred_region
          %v1282 = vld [vmem:[#allocation2] sm:$0x1]
          %v1283 = vmul.f32 %v1282, 0.0025
          %v1284 = vld [vmem:[#allocation3] sm:$0x1]
          %v1285 = vmul.f32 %v1284, 0.0025
          %v1286 = vmul.f32 %v1283, %v1283
          %v1287 = vsub.f32 %v1285, %v1286
          %v1288 = vmax.f32 %v1287, 0.0
          %v1289 = vld [vmem:[#allocation10] sm:$0x1]
          %v1290 = vadd.f32 %v1288, 1e-05
          %v1291 = vrsqrt.pop %v1290
          %v1292 = vmul.f32 %v1289, %v1291
          %v1293 = vld [vmem:[#allocation13] sm:$0x1]
          %v1294 = vmul.f32 %v1283, %v1292
          %v1295 = vsub.f32 %v1293, %v1294
          %v1297 = vlaneseq
          %v1298 = vshrl.u32 %v1297, 7
          %v1299 = vsub.s32 0, %v1298
          %v1300 = vrot.slane %v1292, %v1299
          %v1302 = vmul.f32 %v1145, %v1300
          %v1303 = vmul.f32 %v1146, %v1300
          %v1304 = vmul.f32 %v1147, %v1300
          %v1305 = vmul.f32 %v1148, %v1300
          %v1306 = vmul.f32 %v1149, %v1300
          %v1307 = vmul.f32 %v1150, %v1300
          %v1308 = vmul.f32 %v1151, %v1300
          %v1309 = vmul.f32 %v1152, %v1300
          %v1310 = vmul.f32 %v1153, %v1300
          %v1311 = vmul.f32 %v1154, %v1300
          %v1312 = vmul.f32 %v1155, %v1300
          %v1313 = vmul.f32 %v1156, %v1300
          %v1314 = vmul.f32 %v1157, %v1300
          %v1315 = vmul.f32 %v1158, %v1300
          %v1316 = vmul.f32 %v1159, %v1300
          %v1317 = vmul.f32 %v1160, %v1300
          %v1319 = vlaneseq
          %v1320 = vshrl.u32 %v1319, 7
          %v1321 = vsub.s32 0, %v1320
          %v1322 = vrot.slane %v1295, %v1321
          %v1324 = vadd.f32 %v1302, %v1322
          %v1325 = vadd.f32 %v1303, %v1322
          %v1326 = vadd.f32 %v1304, %v1322
          %v1327 = vadd.f32 %v1305, %v1322
          %v1328 = vadd.f32 %v1306, %v1322
          %v1329 = vadd.f32 %v1307, %v1322
          %v1330 = vadd.f32 %v1308, %v1322
          %v1331 = vadd.f32 %v1309, %v1322
          %v1332 = vadd.f32 %v1310, %v1322
          %v1333 = vadd.f32 %v1311, %v1322
          %v1334 = vadd.f32 %v1312, %v1322
          %v1335 = vadd.f32 %v1313, %v1322
          %v1336 = vadd.f32 %v1314, %v1322
          %v1337 = vadd.f32 %v1315, %v1322
          %v1338 = vadd.f32 %v1316, %v1322
          %v1339 = vadd.f32 %v1317, %v1322
          %v1340 = vmax.f32 %v1324, 0.0
          %v1341 = vmax.f32 %v1325, 0.0
          %v1342 = vmax.f32 %v1326, 0.0
          %v1343 = vmax.f32 %v1327, 0.0
          %v1344 = vmax.f32 %v1328, 0.0
          %v1345 = vmax.f32 %v1329, 0.0
          %v1346 = vmax.f32 %v1330, 0.0
          %v1347 = vmax.f32 %v1331, 0.0
          %v1348 = vmax.f32 %v1332, 0.0
          %v1349 = vmax.f32 %v1333, 0.0
          %v1350 = vmax.f32 %v1334, 0.0
          %v1351 = vmax.f32 %v1335, 0.0
          %v1352 = vmax.f32 %v1336, 0.0
          %v1353 = vmax.f32 %v1337, 0.0
          %v1354 = vmax.f32 %v1338, 0.0
          %v1355 = vmax.f32 %v1339, 0.0
          %v1356 = vmul.f32 %v1340, %v826
          %v1357 = vmul.f32 %v1341, %v827
          %v1358 = vmul.f32 %v1342, %v828
          %v1359 = vmul.f32 %v1343, %v829
          %v1360 = vmul.f32 %v1344, %v830
          %v1361 = vmul.f32 %v1345, %v831
          %v1362 = vmul.f32 %v1346, %v832
          %v1363 = vmul.f32 %v1347, %v833
          %v1364 = vmul.f32 %v1348, %v834
          %v1365 = vmul.f32 %v1349, %v835
          %v1366 = vmul.f32 %v1350, %v836
          %v1367 = vmul.f32 %v1351, %v837
          %v1368 = vmul.f32 %v1352, %v838
          %v1369 = vmul.f32 %v1353, %v839
          %v1370 = vmul.f32 %v1354, %v840
          %v1371 = vmul.f32 %v1355, %v841
          %v1372 = vld [vmem:[#allocation15] sm:$0xff]
          %v1373 = vld [vmem:[#allocation15 + $0x8] sm:$0xff]
          %v1374 = vld [vmem:[#allocation15 + $0x10] sm:$0xff]
          %v1375 = vld [vmem:[#allocation15 + $0x18] sm:$0xff]
          %v1376 = vld [vmem:[#allocation15 + $0x20] sm:$0xff]
          %v1377 = vld [vmem:[#allocation15 + $0x28] sm:$0xff]
          %v1378 = vld [vmem:[#allocation15 + $0x30] sm:$0xff]
          %v1379 = vld [vmem:[#allocation15 + $0x38] sm:$0xff]
          %vm1380 = vcmask 523264
          %v1382 = vsel %vm1380, %v1356, 0
          %v1385 = vsel %vm1380, %v1357, 0
          %v1388 = vsel %vm1380, %v1358, 0
          %v1391 = vsel %vm1380, %v1359, 0
          %v1394 = vsel %vm1380, %v1360, 0
          %v1397 = vsel %vm1380, %v1361, 0
          %v1400 = vsel %vm1380, %v1362, 0
          %v1403 = vsel %vm1380, %v1363, 0
          %v1406 = vsel %vm1380, %v1364, 0
          %v1409 = vsel %vm1380, %v1365, 0
          %v1412 = vsel %vm1380, %v1366, 0
          %v1415 = vsel %vm1380, %v1367, 0
          %v1418 = vsel %vm1380, %v1368, 0
          %v1421 = vsel %vm1380, %v1369, 0
          %v1424 = vsel %vm1380, %v1370, 0
          %v1427 = vsel %vm1380, %v1371, 0
          %1429 = vmatprep.subr.mxu0 0.0
          %1430 = vmatpush1.msra.mxu0 0.0
          %1431 = vmatprep.subr.mxu0 0.0
          %1432 = vmatpush1.msra.mxu0 0.0
          %1433 = vmatprep.subr.mxu0 0.0
          %1434 = vmatpush1.msra.mxu0 0.0
          %1435 = vmatprep.subr.mxu0 0.0
          %1436 = vmatpush1.msra.mxu0 0.0
          %1437 = vmatprep.subr.mxu0 0.0
          %1438 = vmatpush1.msra.mxu0 0.0
          %1439 = vmatprep.subr.mxu0 0.0
          %1440 = vmatpush1.msra.mxu0 0.0
          %1441 = vmatprep.subr.mxu0 0.0
          %1442 = vmatpush1.msra.mxu0 0.0
          %1443 = vmatprep.subr.mxu0 0.0
          %1444 = vmatpush1.msra.mxu0 0.0
          %1445 = vmatprep.subr.mxu0 0.0
          %1446 = vmatpush1.msra.mxu0 %v1379
          %1447 = vmatprep.subr.mxu0 0.0
          %1448 = vmatpush1.msra.mxu0 %v1378
          %1449 = vmatprep.subr.mxu0 0.0
          %1450 = vmatpush1.msra.mxu0 %v1377
          %1451 = vmatprep.subr.mxu0 0.0
          %1452 = vmatpush1.msra.mxu0 %v1376
          %1453 = vmatprep.subr.mxu0 0.0
          %1454 = vmatpush1.msra.mxu0 %v1375
          %1455 = vmatprep.subr.mxu0 0.0
          %1456 = vmatpush1.msra.mxu0 %v1374
          %1457 = vmatprep.subr.mxu0 0.0
          %1458 = vmatpush1.msra.mxu0 %v1373
          %1459 = vmatprep.subr.mxu0 0.0
          %1460 = vmatpush1.msra.mxu0 %v1372
          %1461 = vmatprep.subr.mxu0 0.0
          %1462 = vmatpush2.msra.mxu0 0.0
          %1463 = vmatprep.subr.mxu0 0.0
          %1464 = vmatpush2.msra.mxu0 0.0
          %1465 = vmatprep.subr.mxu0 0.0
          %1466 = vmatpush2.msra.mxu0 0.0
          %1467 = vmatprep.subr.mxu0 0.0
          %1468 = vmatpush2.msra.mxu0 0.0
          %1469 = vmatprep.subr.mxu0 0.0
          %1470 = vmatpush2.msra.mxu0 0.0
          %1471 = vmatprep.subr.mxu0 0.0
          %1472 = vmatpush2.msra.mxu0 0.0
          %1473 = vmatprep.subr.mxu0 0.0
          %1474 = vmatpush2.msra.mxu0 0.0
          %1475 = vmatprep.subr.mxu0 0.0
          %1476 = vmatpush2.msra.mxu0 0.0
          %1477 = vmatprep.subr.mxu0 0.0
          %1478 = vmatpush2.msra.mxu0 0.0
          %1479 = vmatprep.subr.mxu0 0.0
          %1480 = vmatpush2.msra.mxu0 0.0
          %1481 = vmatprep.subr.mxu0 0.0
          %1482 = vmatpush2.msra.mxu0 0.0
          %1483 = vmatprep.subr.mxu0 0.0
          %1484 = vmatpush2.msra.mxu0 0.0
          %1485 = vmatprep.subr.mxu0 0.0
          %1486 = vmatpush2.msra.mxu0 0.0
          %1487 = vmatprep.subr.mxu0 0.0
          %1488 = vmatpush2.msra.mxu0 0.0
          %1489 = vmatprep.subr.mxu0 0.0
          %1490 = vmatpush2.msra.mxu0 0.0
          %1491 = vmatprep.subr.mxu0 0.0
          %1492 = vmatpush2.msra.mxu0 0.0
          %1493 = vmatprep.mubr.f32.mxu0 0.0
          %1494 = vmatmul.mubr.f32.gmra.mxu0 %v1382
          %v1495 = vpop.f32.mrf.mxu0
          %v1496 = vadd.f32 0.0, %v1495
          %v1497 = vpop.f32.mrf.mxu0
          %1498 = vmatprep.mubr.f32.mxu0 0.0
          %1499 = vmatmul.mubr.f32.gmra.mxu0 %v1385
          %v1500 = vpop.f32.mrf.mxu0
          %v1501 = vadd.f32 0.0, %v1500
          %v1502 = vpop.f32.mrf.mxu0
          %1503 = vmatprep.mubr.f32.mxu0 0.0
          %1504 = vmatmul.mubr.f32.gmra.mxu0 %v1388
          %v1505 = vpop.f32.mrf.mxu0
          %v1506 = vadd.f32 0.0, %v1505
          %v1507 = vpop.f32.mrf.mxu0
          %1508 = vmatprep.mubr.f32.mxu0 0.0
          %1509 = vmatmul.mubr.f32.gmra.mxu0 %v1391
          %v1510 = vpop.f32.mrf.mxu0
          %v1511 = vadd.f32 0.0, %v1510
          %v1512 = vpop.f32.mrf.mxu0
          %1513 = vmatprep.mubr.f32.mxu0 0.0
          %1514 = vmatmul.mubr.f32.gmra.mxu0 %v1394
          %v1515 = vpop.f32.mrf.mxu0
          %v1516 = vadd.f32 0.0, %v1515
          %v1517 = vpop.f32.mrf.mxu0
          %1518 = vmatprep.mubr.f32.mxu0 0.0
          %1519 = vmatmul.mubr.f32.gmra.mxu0 %v1397
          %v1520 = vpop.f32.mrf.mxu0
          %v1521 = vadd.f32 0.0, %v1520
          %v1522 = vpop.f32.mrf.mxu0
          %1523 = vmatprep.mubr.f32.mxu0 0.0
          %1524 = vmatmul.mubr.f32.gmra.mxu0 %v1400
          %v1525 = vpop.f32.mrf.mxu0
          %v1526 = vadd.f32 0.0, %v1525
          %v1527 = vpop.f32.mrf.mxu0
          %1528 = vmatprep.mubr.f32.mxu0 0.0
          %1529 = vmatmul.mubr.f32.gmra.mxu0 %v1403
          %v1530 = vpop.f32.mrf.mxu0
          %v1531 = vadd.f32 0.0, %v1530
          %v1532 = vpop.f32.mrf.mxu0
          %1533 = vmatprep.mubr.f32.mxu0 0.0
          %1534 = vmatmul.mubr.f32.gmra.mxu0 %v1406
          %v1535 = vpop.f32.mrf.mxu0
          %v1536 = vadd.f32 0.0, %v1535
          %v1537 = vpop.f32.mrf.mxu0
          %1538 = vmatprep.mubr.f32.mxu0 0.0
          %1539 = vmatmul.mubr.f32.gmra.mxu0 %v1409
          %v1540 = vpop.f32.mrf.mxu0
          %v1541 = vadd.f32 0.0, %v1540
          %v1542 = vpop.f32.mrf.mxu0
          %1543 = vmatprep.mubr.f32.mxu0 0.0
          %1544 = vmatmul.mubr.f32.gmra.mxu0 %v1412
          %v1545 = vpop.f32.mrf.mxu0
          %v1546 = vadd.f32 0.0, %v1545
          %v1547 = vpop.f32.mrf.mxu0
          %1548 = vmatprep.mubr.f32.mxu0 0.0
          %1549 = vmatmul.mubr.f32.gmra.mxu0 %v1415
          %v1550 = vpop.f32.mrf.mxu0
          %v1551 = vadd.f32 0.0, %v1550
          %v1552 = vpop.f32.mrf.mxu0
          %1553 = vmatprep.mubr.f32.mxu0 0.0
          %1554 = vmatmul.mubr.f32.gmra.mxu0 %v1418
          %v1555 = vpop.f32.mrf.mxu0
          %v1556 = vadd.f32 0.0, %v1555
          %v1557 = vpop.f32.mrf.mxu0
          %1558 = vmatprep.mubr.f32.mxu0 0.0
          %1559 = vmatmul.mubr.f32.gmra.mxu0 %v1421
          %v1560 = vpop.f32.mrf.mxu0
          %v1561 = vadd.f32 0.0, %v1560
          %v1562 = vpop.f32.mrf.mxu0
          %1563 = vmatprep.mubr.f32.mxu0 0.0
          %1564 = vmatmul.mubr.f32.gmra.mxu0 %v1424
          %v1565 = vpop.f32.mrf.mxu0
          %v1566 = vadd.f32 0.0, %v1565
          %v1567 = vpop.f32.mrf.mxu0
          %1568 = vmatprep.mubr.f32.mxu0 0.0
          %1569 = vmatmul.mubr.f32.gmra.mxu0 %v1427
          %v1570 = vpop.f32.mrf.mxu0
          %v1571 = vadd.f32 0.0, %v1570
          %v1572 = vpop.f32.mrf.mxu0
          %1573 = vdwg.mxu0
          %v1574 = vld [vmem:[#allocation4] sm:$0x1]
          %v1575 = vadd.f32 %v1496, %v1501
          %v1576 = vadd.f32 %v1575, %v1506
          %v1577 = vadd.f32 %v1576, %v1511
          %v1578 = vadd.f32 %v1577, %v1516
          %v1579 = vadd.f32 %v1578, %v1521
          %v1580 = vadd.f32 %v1579, %v1526
          %v1581 = vadd.f32 %v1580, %v1531
          %v1582 = vadd.f32 %v1581, %v1536
          %v1583 = vadd.f32 %v1582, %v1541
          %v1584 = vadd.f32 %v1583, %v1546
          %v1585 = vadd.f32 %v1584, %v1551
          %v1586 = vadd.f32 %v1585, %v1556
          %v1587 = vadd.f32 %v1586, %v1561
          %v1588 = vadd.f32 %v1587, %v1566
          %v1589 = vadd.f32 %v1588, %v1571
          %v1590 = vrot.slane %v1589, 4
          %v1591 = vadd.f32 %v1589, %v1590
          %v1592 = vrot.slane %v1591, 2
          %v1593 = vadd.f32 %v1591, %v1592
          %v1594 = vrot.slane %v1593, 1
          %v1595 = vadd.f32 %v1593, %v1594
          %v1596 = vadd.f32 %v1574, %v1595
          %1597 = vst [vmem:[#allocation4] sm:$0x1] %v1596
          %v1598 = vld [vmem:[#allocation5] sm:$0x1]
          %v1599 = vmul.f32 %v1496, %v1496
          %v1600 = vmul.f32 %v1501, %v1501
          %v1601 = vmul.f32 %v1506, %v1506
          %v1602 = vmul.f32 %v1511, %v1511
          %v1603 = vmul.f32 %v1516, %v1516
          %v1604 = vmul.f32 %v1521, %v1521
          %v1605 = vmul.f32 %v1526, %v1526
          %v1606 = vmul.f32 %v1531, %v1531
          %v1607 = vmul.f32 %v1536, %v1536
          %v1608 = vmul.f32 %v1541, %v1541
          %v1609 = vmul.f32 %v1546, %v1546
          %v1610 = vmul.f32 %v1551, %v1551
          %v1611 = vmul.f32 %v1556, %v1556
          %v1612 = vmul.f32 %v1561, %v1561
          %v1613 = vmul.f32 %v1566, %v1566
          %v1614 = vmul.f32 %v1571, %v1571
          %v1615 = vadd.f32 %v1599, %v1600
          %v1616 = vadd.f32 %v1615, %v1601
          %v1617 = vadd.f32 %v1616, %v1602
          %v1618 = vadd.f32 %v1617, %v1603
          %v1619 = vadd.f32 %v1618, %v1604
          %v1620 = vadd.f32 %v1619, %v1605
          %v1621 = vadd.f32 %v1620, %v1606
          %v1622 = vadd.f32 %v1621, %v1607
          %v1623 = vadd.f32 %v1622, %v1608
          %v1624 = vadd.f32 %v1623, %v1609
          %v1625 = vadd.f32 %v1624, %v1610
          %v1626 = vadd.f32 %v1625, %v1611
          %v1627 = vadd.f32 %v1626, %v1612
          %v1628 = vadd.f32 %v1627, %v1613
          %v1629 = vadd.f32 %v1628, %v1614
          %v1630 = vrot.slane %v1629, 4
          %v1631 = vadd.f32 %v1629, %v1630
          %v1632 = vrot.slane %v1631, 2
          %v1633 = vadd.f32 %v1631, %v1632
          %v1634 = vrot.slane %v1633, 1
          %v1635 = vadd.f32 %v1633, %v1634
          %v1636 = vadd.f32 %v1598, %v1635
          %1637 = vst [vmem:[#allocation5] sm:$0x1] %v1636
        $region152: #{encoder_bn_forward.1} parent=83 // pred_fallthru
          _
        %p1638 = scmp.eq.s32.totalorder %s41, 2
        // Predicated region
        $region153: #{encoder_bn_forward.1} parent=83 // pred_check
          %p1639 = pneg %p1638
        $region154: #{encoder_bn_forward.1} parent=83 // pred_check_branch
          %1641 = sbr.rel (%p1639) target = $region156
        $region155: #{encoder_bn_forward.1} parent=83 // pred_region
          %v1642 = vld [vmem:[#allocation2] sm:$0x1]
          %v1643 = vmul.f32 %v1642, 0.0025
          %v1644 = vld [vmem:[#allocation3] sm:$0x1]
          %v1645 = vmul.f32 %v1644, 0.0025
          %v1646 = vmul.f32 %v1643, %v1643
          %v1647 = vsub.f32 %v1645, %v1646
          %v1648 = vmax.f32 %v1647, 0.0
          %v1649 = vld [vmem:[#allocation10] sm:$0x1]
          %v1650 = vadd.f32 %v1648, 1e-05
          %v1651 = vrsqrt.pop %v1650
          %v1652 = vmul.f32 %v1649, %v1651
          %v1653 = vld [vmem:[#allocation13] sm:$0x1]
          %v1654 = vmul.f32 %v1643, %v1652
          %v1655 = vsub.f32 %v1653, %v1654
          %v1657 = vlaneseq
          %v1658 = vshrl.u32 %v1657, 7
          %v1659 = vsub.s32 0, %v1658
          %v1660 = vrot.slane %v1652, %v1659
          %v1662 = vmul.f32 %v1145, %v1660
          %v1663 = vmul.f32 %v1146, %v1660
          %v1664 = vmul.f32 %v1147, %v1660
          %v1665 = vmul.f32 %v1148, %v1660
          %v1666 = vmul.f32 %v1149, %v1660
          %v1667 = vmul.f32 %v1150, %v1660
          %v1668 = vmul.f32 %v1151, %v1660
          %v1669 = vmul.f32 %v1152, %v1660
          %v1670 = vmul.f32 %v1153, %v1660
          %v1671 = vmul.f32 %v1154, %v1660
          %v1672 = vmul.f32 %v1155, %v1660
          %v1673 = vmul.f32 %v1156, %v1660
          %v1674 = vmul.f32 %v1157, %v1660
          %v1675 = vmul.f32 %v1158, %v1660
          %v1676 = vmul.f32 %v1159, %v1660
          %v1677 = vmul.f32 %v1160, %v1660
          %v1679 = vlaneseq
          %v1680 = vshrl.u32 %v1679, 7
          %v1681 = vsub.s32 0, %v1680
          %v1682 = vrot.slane %v1655, %v1681
          %v1684 = vadd.f32 %v1662, %v1682
          %v1685 = vadd.f32 %v1663, %v1682
          %v1686 = vadd.f32 %v1664, %v1682
          %v1687 = vadd.f32 %v1665, %v1682
          %v1688 = vadd.f32 %v1666, %v1682
          %v1689 = vadd.f32 %v1667, %v1682
          %v1690 = vadd.f32 %v1668, %v1682
          %v1691 = vadd.f32 %v1669, %v1682
          %v1692 = vadd.f32 %v1670, %v1682
          %v1693 = vadd.f32 %v1671, %v1682
          %v1694 = vadd.f32 %v1672, %v1682
          %v1695 = vadd.f32 %v1673, %v1682
          %v1696 = vadd.f32 %v1674, %v1682
          %v1697 = vadd.f32 %v1675, %v1682
          %v1698 = vadd.f32 %v1676, %v1682
          %v1699 = vadd.f32 %v1677, %v1682
          %v1700 = vmax.f32 %v1684, 0.0
          %v1701 = vmax.f32 %v1685, 0.0
          %v1702 = vmax.f32 %v1686, 0.0
          %v1703 = vmax.f32 %v1687, 0.0
          %v1704 = vmax.f32 %v1688, 0.0
          %v1705 = vmax.f32 %v1689, 0.0
          %v1706 = vmax.f32 %v1690, 0.0
          %v1707 = vmax.f32 %v1691, 0.0
          %v1708 = vmax.f32 %v1692, 0.0
          %v1709 = vmax.f32 %v1693, 0.0
          %v1710 = vmax.f32 %v1694, 0.0
          %v1711 = vmax.f32 %v1695, 0.0
          %v1712 = vmax.f32 %v1696, 0.0
          %v1713 = vmax.f32 %v1697, 0.0
          %v1714 = vmax.f32 %v1698, 0.0
          %v1715 = vmax.f32 %v1699, 0.0
          %v1716 = vld [vmem:[#allocation15] sm:$0xff]
          %v1717 = vld [vmem:[#allocation15 + $0x8] sm:$0xff]
          %v1718 = vld [vmem:[#allocation15 + $0x10] sm:$0xff]
          %v1719 = vld [vmem:[#allocation15 + $0x18] sm:$0xff]
          %v1720 = vld [vmem:[#allocation15 + $0x20] sm:$0xff]
          %v1721 = vld [vmem:[#allocation15 + $0x28] sm:$0xff]
          %v1722 = vld [vmem:[#allocation15 + $0x30] sm:$0xff]
          %v1723 = vld [vmem:[#allocation15 + $0x38] sm:$0xff]
          %vm1724 = vcmask 523264
          %v1726 = vsel %vm1724, %v1700, 0
          %v1729 = vsel %vm1724, %v1701, 0
          %v1732 = vsel %vm1724, %v1702, 0
          %v1735 = vsel %vm1724, %v1703, 0
          %v1738 = vsel %vm1724, %v1704, 0
          %v1741 = vsel %vm1724, %v1705, 0
          %v1744 = vsel %vm1724, %v1706, 0
          %v1747 = vsel %vm1724, %v1707, 0
          %v1750 = vsel %vm1724, %v1708, 0
          %v1753 = vsel %vm1724, %v1709, 0
          %v1756 = vsel %vm1724, %v1710, 0
          %v1759 = vsel %vm1724, %v1711, 0
          %v1762 = vsel %vm1724, %v1712, 0
          %v1765 = vsel %vm1724, %v1713, 0
          %v1768 = vsel %vm1724, %v1714, 0
          %v1771 = vsel %vm1724, %v1715, 0
          %1773 = vmatprep.subr.mxu0 0.0
          %1774 = vmatpush1.msra.mxu0 0.0
          %1775 = vmatprep.subr.mxu0 0.0
          %1776 = vmatpush1.msra.mxu0 0.0
          %1777 = vmatprep.subr.mxu0 0.0
          %1778 = vmatpush1.msra.mxu0 0.0
          %1779 = vmatprep.subr.mxu0 0.0
          %1780 = vmatpush1.msra.mxu0 0.0
          %1781 = vmatprep.subr.mxu0 0.0
          %1782 = vmatpush1.msra.mxu0 0.0
          %1783 = vmatprep.subr.mxu0 0.0
          %1784 = vmatpush1.msra.mxu0 0.0
          %1785 = vmatprep.subr.mxu0 0.0
          %1786 = vmatpush1.msra.mxu0 0.0
          %1787 = vmatprep.subr.mxu0 0.0
          %1788 = vmatpush1.msra.mxu0 0.0
          %1789 = vmatprep.subr.mxu0 0.0
          %1790 = vmatpush1.msra.mxu0 %v1723
          %1791 = vmatprep.subr.mxu0 0.0
          %1792 = vmatpush1.msra.mxu0 %v1722
          %1793 = vmatprep.subr.mxu0 0.0
          %1794 = vmatpush1.msra.mxu0 %v1721
          %1795 = vmatprep.subr.mxu0 0.0
          %1796 = vmatpush1.msra.mxu0 %v1720
          %1797 = vmatprep.subr.mxu0 0.0
          %1798 = vmatpush1.msra.mxu0 %v1719
          %1799 = vmatprep.subr.mxu0 0.0
          %1800 = vmatpush1.msra.mxu0 %v1718
          %1801 = vmatprep.subr.mxu0 0.0
          %1802 = vmatpush1.msra.mxu0 %v1717
          %1803 = vmatprep.subr.mxu0 0.0
          %1804 = vmatpush1.msra.mxu0 %v1716
          %1805 = vmatprep.subr.mxu0 0.0
          %1806 = vmatpush2.msra.mxu0 0.0
          %1807 = vmatprep.subr.mxu0 0.0
          %1808 = vmatpush2.msra.mxu0 0.0
          %1809 = vmatprep.subr.mxu0 0.0
          %1810 = vmatpush2.msra.mxu0 0.0
          %1811 = vmatprep.subr.mxu0 0.0
          %1812 = vmatpush2.msra.mxu0 0.0
          %1813 = vmatprep.subr.mxu0 0.0
          %1814 = vmatpush2.msra.mxu0 0.0
          %1815 = vmatprep.subr.mxu0 0.0
          %1816 = vmatpush2.msra.mxu0 0.0
          %1817 = vmatprep.subr.mxu0 0.0
          %1818 = vmatpush2.msra.mxu0 0.0
          %1819 = vmatprep.subr.mxu0 0.0
          %1820 = vmatpush2.msra.mxu0 0.0
          %1821 = vmatprep.subr.mxu0 0.0
          %1822 = vmatpush2.msra.mxu0 0.0
          %1823 = vmatprep.subr.mxu0 0.0
          %1824 = vmatpush2.msra.mxu0 0.0
          %1825 = vmatprep.subr.mxu0 0.0
          %1826 = vmatpush2.msra.mxu0 0.0
          %1827 = vmatprep.subr.mxu0 0.0
          %1828 = vmatpush2.msra.mxu0 0.0
          %1829 = vmatprep.subr.mxu0 0.0
          %1830 = vmatpush2.msra.mxu0 0.0
          %1831 = vmatprep.subr.mxu0 0.0
          %1832 = vmatpush2.msra.mxu0 0.0
          %1833 = vmatprep.subr.mxu0 0.0
          %1834 = vmatpush2.msra.mxu0 0.0
          %1835 = vmatprep.subr.mxu0 0.0
          %1836 = vmatpush2.msra.mxu0 0.0
          %1837 = vmatprep.mubr.f32.mxu0 0.0
          %1838 = vmatmul.mubr.f32.gmra.mxu0 %v1726
          %v1839 = vpop.f32.mrf.mxu0
          %v1840 = vadd.f32 0.0, %v1839
          %v1841 = vpop.f32.mrf.mxu0
          %1842 = vmatprep.mubr.f32.mxu0 0.0
          %1843 = vmatmul.mubr.f32.gmra.mxu0 %v1729
          %v1844 = vpop.f32.mrf.mxu0
          %v1845 = vadd.f32 0.0, %v1844
          %v1846 = vpop.f32.mrf.mxu0
          %1847 = vmatprep.mubr.f32.mxu0 0.0
          %1848 = vmatmul.mubr.f32.gmra.mxu0 %v1732
          %v1849 = vpop.f32.mrf.mxu0
          %v1850 = vadd.f32 0.0, %v1849
          %v1851 = vpop.f32.mrf.mxu0
          %1852 = vmatprep.mubr.f32.mxu0 0.0
          %1853 = vmatmul.mubr.f32.gmra.mxu0 %v1735
          %v1854 = vpop.f32.mrf.mxu0
          %v1855 = vadd.f32 0.0, %v1854
          %v1856 = vpop.f32.mrf.mxu0
          %1857 = vmatprep.mubr.f32.mxu0 0.0
          %1858 = vmatmul.mubr.f32.gmra.mxu0 %v1738
          %v1859 = vpop.f32.mrf.mxu0
          %v1860 = vadd.f32 0.0, %v1859
          %v1861 = vpop.f32.mrf.mxu0
          %1862 = vmatprep.mubr.f32.mxu0 0.0
          %1863 = vmatmul.mubr.f32.gmra.mxu0 %v1741
          %v1864 = vpop.f32.mrf.mxu0
          %v1865 = vadd.f32 0.0, %v1864
          %v1866 = vpop.f32.mrf.mxu0
          %1867 = vmatprep.mubr.f32.mxu0 0.0
          %1868 = vmatmul.mubr.f32.gmra.mxu0 %v1744
          %v1869 = vpop.f32.mrf.mxu0
          %v1870 = vadd.f32 0.0, %v1869
          %v1871 = vpop.f32.mrf.mxu0
          %1872 = vmatprep.mubr.f32.mxu0 0.0
          %1873 = vmatmul.mubr.f32.gmra.mxu0 %v1747
          %v1874 = vpop.f32.mrf.mxu0
          %v1875 = vadd.f32 0.0, %v1874
          %v1876 = vpop.f32.mrf.mxu0
          %1877 = vmatprep.mubr.f32.mxu0 0.0
          %1878 = vmatmul.mubr.f32.gmra.mxu0 %v1750
          %v1879 = vpop.f32.mrf.mxu0
          %v1880 = vadd.f32 0.0, %v1879
          %v1881 = vpop.f32.mrf.mxu0
          %1882 = vmatprep.mubr.f32.mxu0 0.0
          %1883 = vmatmul.mubr.f32.gmra.mxu0 %v1753
          %v1884 = vpop.f32.mrf.mxu0
          %v1885 = vadd.f32 0.0, %v1884
          %v1886 = vpop.f32.mrf.mxu0
          %1887 = vmatprep.mubr.f32.mxu0 0.0
          %1888 = vmatmul.mubr.f32.gmra.mxu0 %v1756
          %v1889 = vpop.f32.mrf.mxu0
          %v1890 = vadd.f32 0.0, %v1889
          %v1891 = vpop.f32.mrf.mxu0
          %1892 = vmatprep.mubr.f32.mxu0 0.0
          %1893 = vmatmul.mubr.f32.gmra.mxu0 %v1759
          %v1894 = vpop.f32.mrf.mxu0
          %v1895 = vadd.f32 0.0, %v1894
          %v1896 = vpop.f32.mrf.mxu0
          %1897 = vmatprep.mubr.f32.mxu0 0.0
          %1898 = vmatmul.mubr.f32.gmra.mxu0 %v1762
          %v1899 = vpop.f32.mrf.mxu0
          %v1900 = vadd.f32 0.0, %v1899
          %v1901 = vpop.f32.mrf.mxu0
          %1902 = vmatprep.mubr.f32.mxu0 0.0
          %1903 = vmatmul.mubr.f32.gmra.mxu0 %v1765
          %v1904 = vpop.f32.mrf.mxu0
          %v1905 = vadd.f32 0.0, %v1904
          %v1906 = vpop.f32.mrf.mxu0
          %1907 = vmatprep.mubr.f32.mxu0 0.0
          %1908 = vmatmul.mubr.f32.gmra.mxu0 %v1768
          %v1909 = vpop.f32.mrf.mxu0
          %v1910 = vadd.f32 0.0, %v1909
          %v1911 = vpop.f32.mrf.mxu0
          %1912 = vmatprep.mubr.f32.mxu0 0.0
          %1913 = vmatmul.mubr.f32.gmra.mxu0 %v1771
          %v1914 = vpop.f32.mrf.mxu0
          %v1915 = vadd.f32 0.0, %v1914
          %v1916 = vpop.f32.mrf.mxu0
          %1917 = vdwg.mxu0
          %v1918 = vld [vmem:[#allocation4] sm:$0x1]
          %v1919 = vmul.f32 %v1918, 0.0025
          %v1920 = vld [vmem:[#allocation5] sm:$0x1]
          %v1921 = vmul.f32 %v1920, 0.0025
          %v1922 = vmul.f32 %v1919, %v1919
          %v1923 = vsub.f32 %v1921, %v1922
          %v1924 = vmax.f32 %v1923, 0.0
          %v1925 = vld [vmem:[#allocation16] sm:$0x1]
          %v1926 = vadd.f32 %v1924, 1e-05
          %v1927 = vrsqrt.pop %v1926
          %v1928 = vmul.f32 %v1925, %v1927
          %v1929 = vld [vmem:[#allocation18] sm:$0x1]
          %v1930 = vmul.f32 %v1919, %v1928
          %v1931 = vsub.f32 %v1929, %v1930
          %v1933 = vlaneseq
          %v1934 = vshrl.u32 %v1933, 7
          %v1935 = vsub.s32 0, %v1934
          %v1936 = vrot.slane %v1928, %v1935
          %v1938 = vmul.f32 %v1840, %v1936
          %v1939 = vmul.f32 %v1845, %v1936
          %v1940 = vmul.f32 %v1850, %v1936
          %v1941 = vmul.f32 %v1855, %v1936
          %v1942 = vmul.f32 %v1860, %v1936
          %v1943 = vmul.f32 %v1865, %v1936
          %v1944 = vmul.f32 %v1870, %v1936
          %v1945 = vmul.f32 %v1875, %v1936
          %v1946 = vmul.f32 %v1880, %v1936
          %v1947 = vmul.f32 %v1885, %v1936
          %v1948 = vmul.f32 %v1890, %v1936
          %v1949 = vmul.f32 %v1895, %v1936
          %v1950 = vmul.f32 %v1900, %v1936
          %v1951 = vmul.f32 %v1905, %v1936
          %v1952 = vmul.f32 %v1910, %v1936
          %v1953 = vmul.f32 %v1915, %v1936
          %v1955 = vlaneseq
          %v1956 = vshrl.u32 %v1955, 7
          %v1957 = vsub.s32 0, %v1956
          %v1958 = vrot.slane %v1931, %v1957
          %v1960 = vadd.f32 %v1938, %v1958
          %v1961 = vadd.f32 %v1939, %v1958
          %v1962 = vadd.f32 %v1940, %v1958
          %v1963 = vadd.f32 %v1941, %v1958
          %v1964 = vadd.f32 %v1942, %v1958
          %v1965 = vadd.f32 %v1943, %v1958
          %v1966 = vadd.f32 %v1944, %v1958
          %v1967 = vadd.f32 %v1945, %v1958
          %v1968 = vadd.f32 %v1946, %v1958
          %v1969 = vadd.f32 %v1947, %v1958
          %v1970 = vadd.f32 %v1948, %v1958
          %v1971 = vadd.f32 %v1949, %v1958
          %v1972 = vadd.f32 %v1950, %v1958
          %v1973 = vadd.f32 %v1951, %v1958
          %v1974 = vadd.f32 %v1952, %v1958
          %v1975 = vadd.f32 %v1953, %v1958
          %v1976 = vmax.f32 %v1960, 0.0
          %v1977 = vmax.f32 %v1961, 0.0
          %v1978 = vmax.f32 %v1962, 0.0
          %v1979 = vmax.f32 %v1963, 0.0
          %v1980 = vmax.f32 %v1964, 0.0
          %v1981 = vmax.f32 %v1965, 0.0
          %v1982 = vmax.f32 %v1966, 0.0
          %v1983 = vmax.f32 %v1967, 0.0
          %v1984 = vmax.f32 %v1968, 0.0
          %v1985 = vmax.f32 %v1969, 0.0
          %v1986 = vmax.f32 %v1970, 0.0
          %v1987 = vmax.f32 %v1971, 0.0
          %v1988 = vmax.f32 %v1972, 0.0
          %v1989 = vmax.f32 %v1973, 0.0
          %v1990 = vmax.f32 %v1974, 0.0
          %v1991 = vmax.f32 %v1975, 0.0
          %v1992 = vmul.f32 %v1976, %v826
          %v1993 = vmul.f32 %v1977, %v827
          %v1994 = vmul.f32 %v1978, %v828
          %v1995 = vmul.f32 %v1979, %v829
          %v1996 = vmul.f32 %v1980, %v830
          %v1997 = vmul.f32 %v1981, %v831
          %v1998 = vmul.f32 %v1982, %v832
          %v1999 = vmul.f32 %v1983, %v833
          %v2000 = vmul.f32 %v1984, %v834
          %v2001 = vmul.f32 %v1985, %v835
          %v2002 = vmul.f32 %v1986, %v836
          %v2003 = vmul.f32 %v1987, %v837
          %v2004 = vmul.f32 %v1988, %v838
          %v2005 = vmul.f32 %v1989, %v839
          %v2006 = vmul.f32 %v1990, %v840
          %v2007 = vmul.f32 %v1991, %v841
          %v2008 = vld [vmem:[#allocation19] sm:$0xff]
          %v2009 = vld [vmem:[#allocation19 + $0x8] sm:$0xff]
          %v2010 = vld [vmem:[#allocation19 + $0x10] sm:$0xff]
          %v2011 = vld [vmem:[#allocation19 + $0x18] sm:$0xff]
          %v2012 = vld [vmem:[#allocation19 + $0x20] sm:$0xff]
          %v2013 = vld [vmem:[#allocation19 + $0x28] sm:$0xff]
          %v2014 = vld [vmem:[#allocation19 + $0x30] sm:$0xff]
          %v2015 = vld [vmem:[#allocation19 + $0x38] sm:$0xff]
          %v2016 = vld [vmem:[#allocation19 + $0x40] sm:$0xff]
          %v2017 = vld [vmem:[#allocation19 + $0x48] sm:$0xff]
          %v2018 = vld [vmem:[#allocation19 + $0x50] sm:$0xff]
          %v2019 = vld [vmem:[#allocation19 + $0x58] sm:$0xff]
          %v2020 = vld [vmem:[#allocation19 + $0x60] sm:$0xff]
          %v2021 = vld [vmem:[#allocation19 + $0x68] sm:$0xff]
          %v2022 = vld [vmem:[#allocation19 + $0x70] sm:$0xff]
          %v2023 = vld [vmem:[#allocation19 + $0x78] sm:$0xff]
          %v2024 = vld [vmem:[#allocation19 + $0x80] sm:$0xff]
          %v2025 = vld [vmem:[#allocation19 + $0x88] sm:$0xff]
          %v2026 = vld [vmem:[#allocation19 + $0x90] sm:$0xff]
          %v2027 = vld [vmem:[#allocation19 + $0x98] sm:$0xff]
          %v2028 = vld [vmem:[#allocation19 + $0xa0] sm:$0xff]
          %v2029 = vld [vmem:[#allocation19 + $0xa8] sm:$0xff]
          %v2030 = vld [vmem:[#allocation19 + $0xb0] sm:$0xff]
          %v2031 = vld [vmem:[#allocation19 + $0xb8] sm:$0xff]
          %v2032 = vld [vmem:[#allocation19 + $0xc0] sm:$0xff]
          %v2033 = vld [vmem:[#allocation19 + $0xc8] sm:$0xff]
          %v2034 = vld [vmem:[#allocation19 + $0xd0] sm:$0xff]
          %v2035 = vld [vmem:[#allocation19 + $0xd8] sm:$0xff]
          %v2036 = vld [vmem:[#allocation19 + $0xe0] sm:$0xff]
          %v2037 = vld [vmem:[#allocation19 + $0xe8] sm:$0xff]
          %v2038 = vld [vmem:[#allocation19 + $0xf0] sm:$0xff]
          %v2039 = vld [vmem:[#allocation19 + $0xf8] sm:$0xff]
          %v2040 = vld [vmem:[#allocation19 + $0x100] sm:$0xff]
          %v2041 = vld [vmem:[#allocation19 + $0x108] sm:$0xff]
          %v2042 = vld [vmem:[#allocation19 + $0x110] sm:$0xff]
          %v2043 = vld [vmem:[#allocation19 + $0x118] sm:$0xff]
          %v2044 = vld [vmem:[#allocation19 + $0x120] sm:$0xff]
          %v2045 = vld [vmem:[#allocation19 + $0x128] sm:$0xff]
          %v2046 = vld [vmem:[#allocation19 + $0x130] sm:$0xff]
          %v2047 = vld [vmem:[#allocation19 + $0x138] sm:$0xff]
          %v2048 = vld [vmem:[#allocation19 + $0x140] sm:$0xff]
          %v2049 = vld [vmem:[#allocation19 + $0x148] sm:$0xff]
          %v2050 = vld [vmem:[#allocation19 + $0x150] sm:$0xff]
          %v2051 = vld [vmem:[#allocation19 + $0x158] sm:$0xff]
          %v2052 = vld [vmem:[#allocation19 + $0x160] sm:$0xff]
          %v2053 = vld [vmem:[#allocation19 + $0x168] sm:$0xff]
          %v2054 = vld [vmem:[#allocation19 + $0x170] sm:$0xff]
          %v2055 = vld [vmem:[#allocation19 + $0x178] sm:$0xff]
          %v2056 = vld [vmem:[#allocation19 + $0x180] sm:$0xff]
          %v2057 = vld [vmem:[#allocation19 + $0x188] sm:$0xff]
          %v2058 = vld [vmem:[#allocation19 + $0x190] sm:$0xff]
          %v2059 = vld [vmem:[#allocation19 + $0x198] sm:$0xff]
          %v2060 = vld [vmem:[#allocation19 + $0x1a0] sm:$0xff]
          %v2061 = vld [vmem:[#allocation19 + $0x1a8] sm:$0xff]
          %v2062 = vld [vmem:[#allocation19 + $0x1b0] sm:$0xff]
          %v2063 = vld [vmem:[#allocation19 + $0x1b8] sm:$0xff]
          %v2064 = vld [vmem:[#allocation19 + $0x1c0] sm:$0xff]
          %v2065 = vld [vmem:[#allocation19 + $0x1c8] sm:$0xff]
          %v2066 = vld [vmem:[#allocation19 + $0x1d0] sm:$0xff]
          %v2067 = vld [vmem:[#allocation19 + $0x1d8] sm:$0xff]
          %v2068 = vld [vmem:[#allocation19 + $0x1e0] sm:$0xff]
          %v2069 = vld [vmem:[#allocation19 + $0x1e8] sm:$0xff]
          %v2070 = vld [vmem:[#allocation19 + $0x1f0] sm:$0xff]
          %v2071 = vld [vmem:[#allocation19 + $0x1f8] sm:$0xff]
          %v2072 = vld [vmem:[#allocation19 + $0x200] sm:$0xff]
          %v2073 = vld [vmem:[#allocation19 + $0x208] sm:$0xff]
          %v2074 = vld [vmem:[#allocation19 + $0x210] sm:$0xff]
          %v2075 = vld [vmem:[#allocation19 + $0x218] sm:$0xff]
          %v2076 = vld [vmem:[#allocation19 + $0x220] sm:$0xff]
          %v2077 = vld [vmem:[#allocation19 + $0x228] sm:$0xff]
          %v2078 = vld [vmem:[#allocation19 + $0x230] sm:$0xff]
          %v2079 = vld [vmem:[#allocation19 + $0x238] sm:$0xff]
          %v2080 = vld [vmem:[#allocation19 + $0x240] sm:$0xff]
          %v2081 = vld [vmem:[#allocation19 + $0x248] sm:$0xff]
          %v2082 = vld [vmem:[#allocation19 + $0x250] sm:$0xff]
          %v2083 = vld [vmem:[#allocation19 + $0x258] sm:$0xff]
          %v2084 = vld [vmem:[#allocation19 + $0x260] sm:$0xff]
          %v2085 = vld [vmem:[#allocation19 + $0x268] sm:$0xff]
          %v2086 = vld [vmem:[#allocation19 + $0x270] sm:$0xff]
          %v2087 = vld [vmem:[#allocation19 + $0x278] sm:$0xff]
          %v2088 = vld [vmem:[#allocation19 + $0x280] sm:$0xff]
          %v2089 = vld [vmem:[#allocation19 + $0x288] sm:$0xff]
          %v2090 = vld [vmem:[#allocation19 + $0x290] sm:$0xff]
          %v2091 = vld [vmem:[#allocation19 + $0x298] sm:$0xff]
          %v2092 = vld [vmem:[#allocation19 + $0x2a0] sm:$0xff]
          %v2093 = vld [vmem:[#allocation19 + $0x2a8] sm:$0xff]
          %v2094 = vld [vmem:[#allocation19 + $0x2b0] sm:$0xff]
          %v2095 = vld [vmem:[#allocation19 + $0x2b8] sm:$0xff]
          %v2096 = vld [vmem:[#allocation19 + $0x2c0] sm:$0xff]
          %v2097 = vld [vmem:[#allocation19 + $0x2c8] sm:$0xff]
          %v2098 = vld [vmem:[#allocation19 + $0x2d0] sm:$0xff]
          %v2099 = vld [vmem:[#allocation19 + $0x2d8] sm:$0xff]
          %v2100 = vld [vmem:[#allocation19 + $0x2e0] sm:$0xff]
          %v2101 = vld [vmem:[#allocation19 + $0x2e8] sm:$0xff]
          %v2102 = vld [vmem:[#allocation19 + $0x2f0] sm:$0xff]
          %v2103 = vld [vmem:[#allocation19 + $0x2f8] sm:$0xff]
          %v2104 = vld [vmem:[#allocation19 + $0x300] sm:$0xff]
          %v2105 = vld [vmem:[#allocation19 + $0x308] sm:$0xff]
          %v2106 = vld [vmem:[#allocation19 + $0x310] sm:$0xff]
          %v2107 = vld [vmem:[#allocation19 + $0x318] sm:$0xff]
          %v2108 = vld [vmem:[#allocation19 + $0x320] sm:$0xff]
          %v2109 = vld [vmem:[#allocation19 + $0x328] sm:$0xff]
          %v2110 = vld [vmem:[#allocation19 + $0x330] sm:$0xff]
          %v2111 = vld [vmem:[#allocation19 + $0x338] sm:$0xff]
          %v2112 = vld [vmem:[#allocation19 + $0x340] sm:$0xff]
          %v2113 = vld [vmem:[#allocation19 + $0x348] sm:$0xff]
          %v2114 = vld [vmem:[#allocation19 + $0x350] sm:$0xff]
          %v2115 = vld [vmem:[#allocation19 + $0x358] sm:$0xff]
          %v2116 = vld [vmem:[#allocation19 + $0x360] sm:$0xff]
          %v2117 = vld [vmem:[#allocation19 + $0x368] sm:$0xff]
          %v2118 = vld [vmem:[#allocation19 + $0x370] sm:$0xff]
          %v2119 = vld [vmem:[#allocation19 + $0x378] sm:$0xff]
          %v2120 = vld [vmem:[#allocation19 + $0x380] sm:$0xff]
          %v2121 = vld [vmem:[#allocation19 + $0x388] sm:$0xff]
          %v2122 = vld [vmem:[#allocation19 + $0x390] sm:$0xff]
          %v2123 = vld [vmem:[#allocation19 + $0x398] sm:$0xff]
          %v2124 = vld [vmem:[#allocation19 + $0x3a0] sm:$0xff]
          %v2125 = vld [vmem:[#allocation19 + $0x3a8] sm:$0xff]
          %v2126 = vld [vmem:[#allocation19 + $0x3b0] sm:$0xff]
          %v2127 = vld [vmem:[#allocation19 + $0x3b8] sm:$0xff]
          %v2128 = vld [vmem:[#allocation19 + $0x3c0] sm:$0xff]
          %v2129 = vld [vmem:[#allocation19 + $0x3c8] sm:$0xff]
          %v2130 = vld [vmem:[#allocation19 + $0x3d0] sm:$0xff]
          %v2131 = vld [vmem:[#allocation19 + $0x3d8] sm:$0xff]
          %v2132 = vld [vmem:[#allocation19 + $0x3e0] sm:$0xff]
          %v2133 = vld [vmem:[#allocation19 + $0x3e8] sm:$0xff]
          %v2134 = vld [vmem:[#allocation19 + $0x3f0] sm:$0xff]
          %v2135 = vld [vmem:[#allocation19 + $0x3f8] sm:$0xff]
          %2136 = vmatprep.subr.mxu0 %v2129
          %2137 = vmatpush1.msra.mxu0 %v2128
          %2138 = vmatprep.subr.mxu0 %v2121
          %2139 = vmatpush1.msra.mxu0 %v2120
          %2140 = vmatprep.subr.mxu0 %v2113
          %2141 = vmatpush1.msra.mxu0 %v2112
          %2142 = vmatprep.subr.mxu0 %v2105
          %2143 = vmatpush1.msra.mxu0 %v2104
          %2144 = vmatprep.subr.mxu0 %v2097
          %2145 = vmatpush1.msra.mxu0 %v2096
          %2146 = vmatprep.subr.mxu0 %v2089
          %2147 = vmatpush1.msra.mxu0 %v2088
          %2148 = vmatprep.subr.mxu0 %v2081
          %2149 = vmatpush1.msra.mxu0 %v2080
          %2150 = vmatprep.subr.mxu0 %v2073
          %2151 = vmatpush1.msra.mxu0 %v2072
          %2152 = vmatprep.subr.mxu0 %v2065
          %2153 = vmatpush1.msra.mxu0 %v2064
          %2154 = vmatprep.subr.mxu0 %v2057
          %2155 = vmatpush1.msra.mxu0 %v2056
          %2156 = vmatprep.subr.mxu0 %v2049
          %2157 = vmatpush1.msra.mxu0 %v2048
          %2158 = vmatprep.subr.mxu0 %v2041
          %2159 = vmatpush1.msra.mxu0 %v2040
          %2160 = vmatprep.subr.mxu0 %v2033
          %2161 = vmatpush1.msra.mxu0 %v2032
          %2162 = vmatprep.subr.mxu0 %v2025
          %2163 = vmatpush1.msra.mxu0 %v2024
          %2164 = vmatprep.subr.mxu0 %v2017
          %2165 = vmatpush1.msra.mxu0 %v2016
          %2166 = vmatprep.subr.mxu0 %v2009
          %2167 = vmatpush1.msra.mxu0 %v2008
          %2168 = vmatprep.subr.mxu0 0.0
          %2169 = vmatpush2.msra.mxu0 0.0
          %2170 = vmatprep.subr.mxu0 0.0
          %2171 = vmatpush2.msra.mxu0 0.0
          %2172 = vmatprep.subr.mxu0 0.0
          %2173 = vmatpush2.msra.mxu0 0.0
          %2174 = vmatprep.subr.mxu0 0.0
          %2175 = vmatpush2.msra.mxu0 0.0
          %2176 = vmatprep.subr.mxu0 0.0
          %2177 = vmatpush2.msra.mxu0 0.0
          %2178 = vmatprep.subr.mxu0 0.0
          %2179 = vmatpush2.msra.mxu0 0.0
          %2180 = vmatprep.subr.mxu0 0.0
          %2181 = vmatpush2.msra.mxu0 0.0
          %2182 = vmatprep.subr.mxu0 0.0
          %2183 = vmatpush2.msra.mxu0 0.0
          %2184 = vmatprep.subr.mxu0 0.0
          %2185 = vmatpush2.msra.mxu0 0.0
          %2186 = vmatprep.subr.mxu0 0.0
          %2187 = vmatpush2.msra.mxu0 0.0
          %2188 = vmatprep.subr.mxu0 0.0
          %2189 = vmatpush2.msra.mxu0 0.0
          %2190 = vmatprep.subr.mxu0 0.0
          %2191 = vmatpush2.msra.mxu0 0.0
          %2192 = vmatprep.subr.mxu0 0.0
          %2193 = vmatpush2.msra.mxu0 0.0
          %2194 = vmatprep.subr.mxu0 0.0
          %2195 = vmatpush2.msra.mxu0 0.0
          %2196 = vmatprep.subr.mxu0 0.0
          %2197 = vmatpush2.msra.mxu0 0.0
          %2198 = vmatprep.subr.mxu0 0.0
          %2199 = vmatpush2.msra.mxu0 0.0
          %2200 = vmatprep.mubr.f32.mxu0 0.0
          %2201 = vmatmul.mubr.f32.gmra.mxu0 %v1992
          %v2202 = vpop.f32.mrf.mxu0
          %v2203 = vadd.f32 0.0, %v2202
          %v2204 = vpop.f32.mrf.mxu0
          %v2205 = vadd.f32 0.0, %v2204
          %2206 = vmatprep.mubr.f32.mxu0 0.0
          %2207 = vmatmul.mubr.f32.gmra.mxu0 %v1993
          %v2208 = vpop.f32.mrf.mxu0
          %v2209 = vadd.f32 0.0, %v2208
          %v2210 = vpop.f32.mrf.mxu0
          %v2211 = vadd.f32 0.0, %v2210
          %2212 = vmatprep.mubr.f32.mxu0 0.0
          %2213 = vmatmul.mubr.f32.gmra.mxu0 %v1994
          %v2214 = vpop.f32.mrf.mxu0
          %v2215 = vadd.f32 0.0, %v2214
          %v2216 = vpop.f32.mrf.mxu0
          %v2217 = vadd.f32 0.0, %v2216
          %2218 = vmatprep.mubr.f32.mxu0 0.0
          %2219 = vmatmul.mubr.f32.gmra.mxu0 %v1995
          %v2220 = vpop.f32.mrf.mxu0
          %v2221 = vadd.f32 0.0, %v2220
          %v2222 = vpop.f32.mrf.mxu0
          %v2223 = vadd.f32 0.0, %v2222
          %2224 = vmatprep.mubr.f32.mxu0 0.0
          %2225 = vmatmul.mubr.f32.gmra.mxu0 %v1996
          %v2226 = vpop.f32.mrf.mxu0
          %v2227 = vadd.f32 0.0, %v2226
          %v2228 = vpop.f32.mrf.mxu0
          %v2229 = vadd.f32 0.0, %v2228
          %2230 = vmatprep.mubr.f32.mxu0 0.0
          %2231 = vmatmul.mubr.f32.gmra.mxu0 %v1997
          %v2232 = vpop.f32.mrf.mxu0
          %v2233 = vadd.f32 0.0, %v2232
          %v2234 = vpop.f32.mrf.mxu0
          %v2235 = vadd.f32 0.0, %v2234
          %2236 = vmatprep.mubr.f32.mxu0 0.0
          %2237 = vmatmul.mubr.f32.gmra.mxu0 %v1998
          %v2238 = vpop.f32.mrf.mxu0
          %v2239 = vadd.f32 0.0, %v2238
          %v2240 = vpop.f32.mrf.mxu0
          %v2241 = vadd.f32 0.0, %v2240
          %2242 = vmatprep.mubr.f32.mxu0 0.0
          %2243 = vmatmul.mubr.f32.gmra.mxu0 %v1999
          %v2244 = vpop.f32.mrf.mxu0
          %v2245 = vadd.f32 0.0, %v2244
          %v2246 = vpop.f32.mrf.mxu0
          %v2247 = vadd.f32 0.0, %v2246
          %2248 = vmatprep.mubr.f32.mxu0 0.0
          %2249 = vmatmul.mubr.f32.gmra.mxu0 %v2000
          %v2250 = vpop.f32.mrf.mxu0
          %v2251 = vadd.f32 0.0, %v2250
          %v2252 = vpop.f32.mrf.mxu0
          %v2253 = vadd.f32 0.0, %v2252
          %2254 = vmatprep.mubr.f32.mxu0 0.0
          %2255 = vmatmul.mubr.f32.gmra.mxu0 %v2001
          %v2256 = vpop.f32.mrf.mxu0
          %v2257 = vadd.f32 0.0, %v2256
          %v2258 = vpop.f32.mrf.mxu0
          %v2259 = vadd.f32 0.0, %v2258
          %2260 = vmatprep.mubr.f32.mxu0 0.0
          %2261 = vmatmul.mubr.f32.gmra.mxu0 %v2002
          %v2262 = vpop.f32.mrf.mxu0
          %v2263 = vadd.f32 0.0, %v2262
          %v2264 = vpop.f32.mrf.mxu0
          %v2265 = vadd.f32 0.0, %v2264
          %2266 = vmatprep.mubr.f32.mxu0 0.0
          %2267 = vmatmul.mubr.f32.gmra.mxu0 %v2003
          %v2268 = vpop.f32.mrf.mxu0
          %v2269 = vadd.f32 0.0, %v2268
          %v2270 = vpop.f32.mrf.mxu0
          %v2271 = vadd.f32 0.0, %v2270
          %2272 = vmatprep.mubr.f32.mxu0 0.0
          %2273 = vmatmul.mubr.f32.gmra.mxu0 %v2004
          %v2274 = vpop.f32.mrf.mxu0
          %v2275 = vadd.f32 0.0, %v2274
          %v2276 = vpop.f32.mrf.mxu0
          %v2277 = vadd.f32 0.0, %v2276
          %2278 = vmatprep.mubr.f32.mxu0 0.0
          %2279 = vmatmul.mubr.f32.gmra.mxu0 %v2005
          %v2280 = vpop.f32.mrf.mxu0
          %v2281 = vadd.f32 0.0, %v2280
          %v2282 = vpop.f32.mrf.mxu0
          %v2283 = vadd.f32 0.0, %v2282
          %2284 = vmatprep.mubr.f32.mxu0 0.0
          %2285 = vmatmul.mubr.f32.gmra.mxu0 %v2006
          %v2286 = vpop.f32.mrf.mxu0
          %v2287 = vadd.f32 0.0, %v2286
          %v2288 = vpop.f32.mrf.mxu0
          %v2289 = vadd.f32 0.0, %v2288
          %2290 = vmatprep.mubr.f32.mxu0 0.0
          %2291 = vmatmul.mubr.f32.gmra.mxu0 %v2007
          %v2292 = vpop.f32.mrf.mxu0
          %v2293 = vadd.f32 0.0, %v2292
          %v2294 = vpop.f32.mrf.mxu0
          %v2295 = vadd.f32 0.0, %v2294
          %2296 = vdwg.mxu0
          %2297 = vmatprep.subr.mxu0 %v2131
          %2298 = vmatpush1.msra.mxu0 %v2130
          %2299 = vmatprep.subr.mxu0 %v2123
          %2300 = vmatpush1.msra.mxu0 %v2122
          %2301 = vmatprep.subr.mxu0 %v2115
          %2302 = vmatpush1.msra.mxu0 %v2114
          %2303 = vmatprep.subr.mxu0 %v2107
          %2304 = vmatpush1.msra.mxu0 %v2106
          %2305 = vmatprep.subr.mxu0 %v2099
          %2306 = vmatpush1.msra.mxu0 %v2098
          %2307 = vmatprep.subr.mxu0 %v2091
          %2308 = vmatpush1.msra.mxu0 %v2090
          %2309 = vmatprep.subr.mxu0 %v2083
          %2310 = vmatpush1.msra.mxu0 %v2082
          %2311 = vmatprep.subr.mxu0 %v2075
          %2312 = vmatpush1.msra.mxu0 %v2074
          %2313 = vmatprep.subr.mxu0 %v2067
          %2314 = vmatpush1.msra.mxu0 %v2066
          %2315 = vmatprep.subr.mxu0 %v2059
          %2316 = vmatpush1.msra.mxu0 %v2058
          %2317 = vmatprep.subr.mxu0 %v2051
          %2318 = vmatpush1.msra.mxu0 %v2050
          %2319 = vmatprep.subr.mxu0 %v2043
          %2320 = vmatpush1.msra.mxu0 %v2042
          %2321 = vmatprep.subr.mxu0 %v2035
          %2322 = vmatpush1.msra.mxu0 %v2034
          %2323 = vmatprep.subr.mxu0 %v2027
          %2324 = vmatpush1.msra.mxu0 %v2026
          %2325 = vmatprep.subr.mxu0 %v2019
          %2326 = vmatpush1.msra.mxu0 %v2018
          %2327 = vmatprep.subr.mxu0 %v2011
          %2328 = vmatpush1.msra.mxu0 %v2010
          %2329 = vmatprep.subr.mxu0 0.0
          %2330 = vmatpush2.msra.mxu0 0.0
          %2331 = vmatprep.subr.mxu0 0.0
          %2332 = vmatpush2.msra.mxu0 0.0
          %2333 = vmatprep.subr.mxu0 0.0
          %2334 = vmatpush2.msra.mxu0 0.0
          %2335 = vmatprep.subr.mxu0 0.0
          %2336 = vmatpush2.msra.mxu0 0.0
          %2337 = vmatprep.subr.mxu0 0.0
          %2338 = vmatpush2.msra.mxu0 0.0
          %2339 = vmatprep.subr.mxu0 0.0
          %2340 = vmatpush2.msra.mxu0 0.0
          %2341 = vmatprep.subr.mxu0 0.0
          %2342 = vmatpush2.msra.mxu0 0.0
          %2343 = vmatprep.subr.mxu0 0.0
          %2344 = vmatpush2.msra.mxu0 0.0
          %2345 = vmatprep.subr.mxu0 0.0
          %2346 = vmatpush2.msra.mxu0 0.0
          %2347 = vmatprep.subr.mxu0 0.0
          %2348 = vmatpush2.msra.mxu0 0.0
          %2349 = vmatprep.subr.mxu0 0.0
          %2350 = vmatpush2.msra.mxu0 0.0
          %2351 = vmatprep.subr.mxu0 0.0
          %2352 = vmatpush2.msra.mxu0 0.0
          %2353 = vmatprep.subr.mxu0 0.0
          %2354 = vmatpush2.msra.mxu0 0.0
          %2355 = vmatprep.subr.mxu0 0.0
          %2356 = vmatpush2.msra.mxu0 0.0
          %2357 = vmatprep.subr.mxu0 0.0
          %2358 = vmatpush2.msra.mxu0 0.0
          %2359 = vmatprep.subr.mxu0 0.0
          %2360 = vmatpush2.msra.mxu0 0.0
          %2361 = vmatprep.mubr.f32.mxu0 0.0
          %2362 = vmatmul.mubr.f32.gmra.mxu0 %v1992
          %v2363 = vpop.f32.mrf.mxu0
          %v2364 = vadd.f32 0.0, %v2363
          %v2365 = vpop.f32.mrf.mxu0
          %v2366 = vadd.f32 0.0, %v2365
          %2367 = vmatprep.mubr.f32.mxu0 0.0
          %2368 = vmatmul.mubr.f32.gmra.mxu0 %v1993
          %v2369 = vpop.f32.mrf.mxu0
          %v2370 = vadd.f32 0.0, %v2369
          %v2371 = vpop.f32.mrf.mxu0
          %v2372 = vadd.f32 0.0, %v2371
          %2373 = vmatprep.mubr.f32.mxu0 0.0
          %2374 = vmatmul.mubr.f32.gmra.mxu0 %v1994
          %v2375 = vpop.f32.mrf.mxu0
          %v2376 = vadd.f32 0.0, %v2375
          %v2377 = vpop.f32.mrf.mxu0
          %v2378 = vadd.f32 0.0, %v2377
          %2379 = vmatprep.mubr.f32.mxu0 0.0
          %2380 = vmatmul.mubr.f32.gmra.mxu0 %v1995
          %v2381 = vpop.f32.mrf.mxu0
          %v2382 = vadd.f32 0.0, %v2381
          %v2383 = vpop.f32.mrf.mxu0
          %v2384 = vadd.f32 0.0, %v2383
          %2385 = vmatprep.mubr.f32.mxu0 0.0
          %2386 = vmatmul.mubr.f32.gmra.mxu0 %v1996
          %v2387 = vpop.f32.mrf.mxu0
          %v2388 = vadd.f32 0.0, %v2387
          %v2389 = vpop.f32.mrf.mxu0
          %v2390 = vadd.f32 0.0, %v2389
          %2391 = vmatprep.mubr.f32.mxu0 0.0
          %2392 = vmatmul.mubr.f32.gmra.mxu0 %v1997
          %v2393 = vpop.f32.mrf.mxu0
          %v2394 = vadd.f32 0.0, %v2393
          %v2395 = vpop.f32.mrf.mxu0
          %v2396 = vadd.f32 0.0, %v2395
          %2397 = vmatprep.mubr.f32.mxu0 0.0
          %2398 = vmatmul.mubr.f32.gmra.mxu0 %v1998
          %v2399 = vpop.f32.mrf.mxu0
          %v2400 = vadd.f32 0.0, %v2399
          %v2401 = vpop.f32.mrf.mxu0
          %v2402 = vadd.f32 0.0, %v2401
          %2403 = vmatprep.mubr.f32.mxu0 0.0
          %2404 = vmatmul.mubr.f32.gmra.mxu0 %v1999
          %v2405 = vpop.f32.mrf.mxu0
          %v2406 = vadd.f32 0.0, %v2405
          %v2407 = vpop.f32.mrf.mxu0
          %v2408 = vadd.f32 0.0, %v2407
          %2409 = vmatprep.mubr.f32.mxu0 0.0
          %2410 = vmatmul.mubr.f32.gmra.mxu0 %v2000
          %v2411 = vpop.f32.mrf.mxu0
          %v2412 = vadd.f32 0.0, %v2411
          %v2413 = vpop.f32.mrf.mxu0
          %v2414 = vadd.f32 0.0, %v2413
          %2415 = vmatprep.mubr.f32.mxu0 0.0
          %2416 = vmatmul.mubr.f32.gmra.mxu0 %v2001
          %v2417 = vpop.f32.mrf.mxu0
          %v2418 = vadd.f32 0.0, %v2417
          %v2419 = vpop.f32.mrf.mxu0
          %v2420 = vadd.f32 0.0, %v2419
          %2421 = vmatprep.mubr.f32.mxu0 0.0
          %2422 = vmatmul.mubr.f32.gmra.mxu0 %v2002
          %v2423 = vpop.f32.mrf.mxu0
          %v2424 = vadd.f32 0.0, %v2423
          %v2425 = vpop.f32.mrf.mxu0
          %v2426 = vadd.f32 0.0, %v2425
          %2427 = vmatprep.mubr.f32.mxu0 0.0
          %2428 = vmatmul.mubr.f32.gmra.mxu0 %v2003
          %v2429 = vpop.f32.mrf.mxu0
          %v2430 = vadd.f32 0.0, %v2429
          %v2431 = vpop.f32.mrf.mxu0
          %v2432 = vadd.f32 0.0, %v2431
          %2433 = vmatprep.mubr.f32.mxu0 0.0
          %2434 = vmatmul.mubr.f32.gmra.mxu0 %v2004
          %v2435 = vpop.f32.mrf.mxu0
          %v2436 = vadd.f32 0.0, %v2435
          %v2437 = vpop.f32.mrf.mxu0
          %v2438 = vadd.f32 0.0, %v2437
          %2439 = vmatprep.mubr.f32.mxu0 0.0
          %2440 = vmatmul.mubr.f32.gmra.mxu0 %v2005
          %v2441 = vpop.f32.mrf.mxu0
          %v2442 = vadd.f32 0.0, %v2441
          %v2443 = vpop.f32.mrf.mxu0
          %v2444 = vadd.f32 0.0, %v2443
          %2445 = vmatprep.mubr.f32.mxu0 0.0
          %2446 = vmatmul.mubr.f32.gmra.mxu0 %v2006
          %v2447 = vpop.f32.mrf.mxu0
          %v2448 = vadd.f32 0.0, %v2447
          %v2449 = vpop.f32.mrf.mxu0
          %v2450 = vadd.f32 0.0, %v2449
          %2451 = vmatprep.mubr.f32.mxu0 0.0
          %2452 = vmatmul.mubr.f32.gmra.mxu0 %v2007
          %v2453 = vpop.f32.mrf.mxu0
          %v2454 = vadd.f32 0.0, %v2453
          %v2455 = vpop.f32.mrf.mxu0
          %v2456 = vadd.f32 0.0, %v2455
          %2457 = vdwg.mxu0
          %2458 = vmatprep.subr.mxu0 %v2133
          %2459 = vmatpush1.msra.mxu0 %v2132
          %2460 = vmatprep.subr.mxu0 %v2125
          %2461 = vmatpush1.msra.mxu0 %v2124
          %2462 = vmatprep.subr.mxu0 %v2117
          %2463 = vmatpush1.msra.mxu0 %v2116
          %2464 = vmatprep.subr.mxu0 %v2109
          %2465 = vmatpush1.msra.mxu0 %v2108
          %2466 = vmatprep.subr.mxu0 %v2101
          %2467 = vmatpush1.msra.mxu0 %v2100
          %2468 = vmatprep.subr.mxu0 %v2093
          %2469 = vmatpush1.msra.mxu0 %v2092
          %2470 = vmatprep.subr.mxu0 %v2085
          %2471 = vmatpush1.msra.mxu0 %v2084
          %2472 = vmatprep.subr.mxu0 %v2077
          %2473 = vmatpush1.msra.mxu0 %v2076
          %2474 = vmatprep.subr.mxu0 %v2069
          %2475 = vmatpush1.msra.mxu0 %v2068
          %2476 = vmatprep.subr.mxu0 %v2061
          %2477 = vmatpush1.msra.mxu0 %v2060
          %2478 = vmatprep.subr.mxu0 %v2053
          %2479 = vmatpush1.msra.mxu0 %v2052
          %2480 = vmatprep.subr.mxu0 %v2045
          %2481 = vmatpush1.msra.mxu0 %v2044
          %2482 = vmatprep.subr.mxu0 %v2037
          %2483 = vmatpush1.msra.mxu0 %v2036
          %2484 = vmatprep.subr.mxu0 %v2029
          %2485 = vmatpush1.msra.mxu0 %v2028
          %2486 = vmatprep.subr.mxu0 %v2021
          %2487 = vmatpush1.msra.mxu0 %v2020
          %2488 = vmatprep.subr.mxu0 %v2013
          %2489 = vmatpush1.msra.mxu0 %v2012
          %2490 = vmatprep.subr.mxu0 0.0
          %2491 = vmatpush2.msra.mxu0 0.0
          %2492 = vmatprep.subr.mxu0 0.0
          %2493 = vmatpush2.msra.mxu0 0.0
          %2494 = vmatprep.subr.mxu0 0.0
          %2495 = vmatpush2.msra.mxu0 0.0
          %2496 = vmatprep.subr.mxu0 0.0
          %2497 = vmatpush2.msra.mxu0 0.0
          %2498 = vmatprep.subr.mxu0 0.0
          %2499 = vmatpush2.msra.mxu0 0.0
          %2500 = vmatprep.subr.mxu0 0.0
          %2501 = vmatpush2.msra.mxu0 0.0
          %2502 = vmatprep.subr.mxu0 0.0
          %2503 = vmatpush2.msra.mxu0 0.0
          %2504 = vmatprep.subr.mxu0 0.0
          %2505 = vmatpush2.msra.mxu0 0.0
          %2506 = vmatprep.subr.mxu0 0.0
          %2507 = vmatpush2.msra.mxu0 0.0
          %2508 = vmatprep.subr.mxu0 0.0
          %2509 = vmatpush2.msra.mxu0 0.0
          %2510 = vmatprep.subr.mxu0 0.0
          %2511 = vmatpush2.msra.mxu0 0.0
          %2512 = vmatprep.subr.mxu0 0.0
          %2513 = vmatpush2.msra.mxu0 0.0
          %2514 = vmatprep.subr.mxu0 0.0
          %2515 = vmatpush2.msra.mxu0 0.0
          %2516 = vmatprep.subr.mxu0 0.0
          %2517 = vmatpush2.msra.mxu0 0.0
          %2518 = vmatprep.subr.mxu0 0.0
          %2519 = vmatpush2.msra.mxu0 0.0
          %2520 = vmatprep.subr.mxu0 0.0
          %2521 = vmatpush2.msra.mxu0 0.0
          %2522 = vmatprep.mubr.f32.mxu0 0.0
          %2523 = vmatmul.mubr.f32.gmra.mxu0 %v1992
          %v2524 = vpop.f32.mrf.mxu0
          %v2525 = vadd.f32 0.0, %v2524
          %v2526 = vpop.f32.mrf.mxu0
          %v2527 = vadd.f32 0.0, %v2526
          %2528 = vmatprep.mubr.f32.mxu0 0.0
          %2529 = vmatmul.mubr.f32.gmra.mxu0 %v1993
          %v2530 = vpop.f32.mrf.mxu0
          %v2531 = vadd.f32 0.0, %v2530
          %v2532 = vpop.f32.mrf.mxu0
          %v2533 = vadd.f32 0.0, %v2532
          %2534 = vmatprep.mubr.f32.mxu0 0.0
          %2535 = vmatmul.mubr.f32.gmra.mxu0 %v1994
          %v2536 = vpop.f32.mrf.mxu0
          %v2537 = vadd.f32 0.0, %v2536
          %v2538 = vpop.f32.mrf.mxu0
          %v2539 = vadd.f32 0.0, %v2538
          %2540 = vmatprep.mubr.f32.mxu0 0.0
          %2541 = vmatmul.mubr.f32.gmra.mxu0 %v1995
          %v2542 = vpop.f32.mrf.mxu0
          %v2543 = vadd.f32 0.0, %v2542
          %v2544 = vpop.f32.mrf.mxu0
          %v2545 = vadd.f32 0.0, %v2544
          %2546 = vmatprep.mubr.f32.mxu0 0.0
          %2547 = vmatmul.mubr.f32.gmra.mxu0 %v1996
          %v2548 = vpop.f32.mrf.mxu0
          %v2549 = vadd.f32 0.0, %v2548
          %v2550 = vpop.f32.mrf.mxu0
          %v2551 = vadd.f32 0.0, %v2550
          %2552 = vmatprep.mubr.f32.mxu0 0.0
          %2553 = vmatmul.mubr.f32.gmra.mxu0 %v1997
          %v2554 = vpop.f32.mrf.mxu0
          %v2555 = vadd.f32 0.0, %v2554
          %v2556 = vpop.f32.mrf.mxu0
          %v2557 = vadd.f32 0.0, %v2556
          %2558 = vmatprep.mubr.f32.mxu0 0.0
          %2559 = vmatmul.mubr.f32.gmra.mxu0 %v1998
          %v2560 = vpop.f32.mrf.mxu0
          %v2561 = vadd.f32 0.0, %v2560
          %v2562 = vpop.f32.mrf.mxu0
          %v2563 = vadd.f32 0.0, %v2562
          %2564 = vmatprep.mubr.f32.mxu0 0.0
          %2565 = vmatmul.mubr.f32.gmra.mxu0 %v1999
          %v2566 = vpop.f32.mrf.mxu0
          %v2567 = vadd.f32 0.0, %v2566
          %v2568 = vpop.f32.mrf.mxu0
          %v2569 = vadd.f32 0.0, %v2568
          %2570 = vmatprep.mubr.f32.mxu0 0.0
          %2571 = vmatmul.mubr.f32.gmra.mxu0 %v2000
          %v2572 = vpop.f32.mrf.mxu0
          %v2573 = vadd.f32 0.0, %v2572
          %v2574 = vpop.f32.mrf.mxu0
          %v2575 = vadd.f32 0.0, %v2574
          %2576 = vmatprep.mubr.f32.mxu0 0.0
          %2577 = vmatmul.mubr.f32.gmra.mxu0 %v2001
          %v2578 = vpop.f32.mrf.mxu0
          %v2579 = vadd.f32 0.0, %v2578
          %v2580 = vpop.f32.mrf.mxu0
          %v2581 = vadd.f32 0.0, %v2580
          %2582 = vmatprep.mubr.f32.mxu0 0.0
          %2583 = vmatmul.mubr.f32.gmra.mxu0 %v2002
          %v2584 = vpop.f32.mrf.mxu0
          %v2585 = vadd.f32 0.0, %v2584
          %v2586 = vpop.f32.mrf.mxu0
          %v2587 = vadd.f32 0.0, %v2586
          %2588 = vmatprep.mubr.f32.mxu0 0.0
          %2589 = vmatmul.mubr.f32.gmra.mxu0 %v2003
          %v2590 = vpop.f32.mrf.mxu0
          %v2591 = vadd.f32 0.0, %v2590
          %v2592 = vpop.f32.mrf.mxu0
          %v2593 = vadd.f32 0.0, %v2592
          %2594 = vmatprep.mubr.f32.mxu0 0.0
          %2595 = vmatmul.mubr.f32.gmra.mxu0 %v2004
          %v2596 = vpop.f32.mrf.mxu0
          %v2597 = vadd.f32 0.0, %v2596
          %v2598 = vpop.f32.mrf.mxu0
          %v2599 = vadd.f32 0.0, %v2598
          %2600 = vmatprep.mubr.f32.mxu0 0.0
          %2601 = vmatmul.mubr.f32.gmra.mxu0 %v2005
          %v2602 = vpop.f32.mrf.mxu0
          %v2603 = vadd.f32 0.0, %v2602
          %v2604 = vpop.f32.mrf.mxu0
          %v2605 = vadd.f32 0.0, %v2604
          %2606 = vmatprep.mubr.f32.mxu0 0.0
          %2607 = vmatmul.mubr.f32.gmra.mxu0 %v2006
          %v2608 = vpop.f32.mrf.mxu0
          %v2609 = vadd.f32 0.0, %v2608
          %v2610 = vpop.f32.mrf.mxu0
          %v2611 = vadd.f32 0.0, %v2610
          %2612 = vmatprep.mubr.f32.mxu0 0.0
          %2613 = vmatmul.mubr.f32.gmra.mxu0 %v2007
          %v2614 = vpop.f32.mrf.mxu0
          %v2615 = vadd.f32 0.0, %v2614
          %v2616 = vpop.f32.mrf.mxu0
          %v2617 = vadd.f32 0.0, %v2616
          %2618 = vdwg.mxu0
          %2619 = vmatprep.subr.mxu0 %v2135
          %2620 = vmatpush1.msra.mxu0 %v2134
          %2621 = vmatprep.subr.mxu0 %v2127
          %2622 = vmatpush1.msra.mxu0 %v2126
          %2623 = vmatprep.subr.mxu0 %v2119
          %2624 = vmatpush1.msra.mxu0 %v2118
          %2625 = vmatprep.subr.mxu0 %v2111
          %2626 = vmatpush1.msra.mxu0 %v2110
          %2627 = vmatprep.subr.mxu0 %v2103
          %2628 = vmatpush1.msra.mxu0 %v2102
          %2629 = vmatprep.subr.mxu0 %v2095
          %2630 = vmatpush1.msra.mxu0 %v2094
          %2631 = vmatprep.subr.mxu0 %v2087
          %2632 = vmatpush1.msra.mxu0 %v2086
          %2633 = vmatprep.subr.mxu0 %v2079
          %2634 = vmatpush1.msra.mxu0 %v2078
          %2635 = vmatprep.subr.mxu0 %v2071
          %2636 = vmatpush1.msra.mxu0 %v2070
          %2637 = vmatprep.subr.mxu0 %v2063
          %2638 = vmatpush1.msra.mxu0 %v2062
          %2639 = vmatprep.subr.mxu0 %v2055
          %2640 = vmatpush1.msra.mxu0 %v2054
          %2641 = vmatprep.subr.mxu0 %v2047
          %2642 = vmatpush1.msra.mxu0 %v2046
          %2643 = vmatprep.subr.mxu0 %v2039
          %2644 = vmatpush1.msra.mxu0 %v2038
          %2645 = vmatprep.subr.mxu0 %v2031
          %2646 = vmatpush1.msra.mxu0 %v2030
          %2647 = vmatprep.subr.mxu0 %v2023
          %2648 = vmatpush1.msra.mxu0 %v2022
          %2649 = vmatprep.subr.mxu0 %v2015
          %2650 = vmatpush1.msra.mxu0 %v2014
          %2651 = vmatprep.subr.mxu0 0.0
          %2652 = vmatpush2.msra.mxu0 0.0
          %2653 = vmatprep.subr.mxu0 0.0
          %2654 = vmatpush2.msra.mxu0 0.0
          %2655 = vmatprep.subr.mxu0 0.0
          %2656 = vmatpush2.msra.mxu0 0.0
          %2657 = vmatprep.subr.mxu0 0.0
          %2658 = vmatpush2.msra.mxu0 0.0
          %2659 = vmatprep.subr.mxu0 0.0
          %2660 = vmatpush2.msra.mxu0 0.0
          %2661 = vmatprep.subr.mxu0 0.0
          %2662 = vmatpush2.msra.mxu0 0.0
          %2663 = vmatprep.subr.mxu0 0.0
          %2664 = vmatpush2.msra.mxu0 0.0
          %2665 = vmatprep.subr.mxu0 0.0
          %2666 = vmatpush2.msra.mxu0 0.0
          %2667 = vmatprep.subr.mxu0 0.0
          %2668 = vmatpush2.msra.mxu0 0.0
          %2669 = vmatprep.subr.mxu0 0.0
          %2670 = vmatpush2.msra.mxu0 0.0
          %2671 = vmatprep.subr.mxu0 0.0
          %2672 = vmatpush2.msra.mxu0 0.0
          %2673 = vmatprep.subr.mxu0 0.0
          %2674 = vmatpush2.msra.mxu0 0.0
          %2675 = vmatprep.subr.mxu0 0.0
          %2676 = vmatpush2.msra.mxu0 0.0
          %2677 = vmatprep.subr.mxu0 0.0
          %2678 = vmatpush2.msra.mxu0 0.0
          %2679 = vmatprep.subr.mxu0 0.0
          %2680 = vmatpush2.msra.mxu0 0.0
          %2681 = vmatprep.subr.mxu0 0.0
          %2682 = vmatpush2.msra.mxu0 0.0
          %2683 = vmatprep.mubr.f32.mxu0 0.0
          %2684 = vmatmul.mubr.f32.gmra.mxu0 %v1992
          %v2685 = vpop.f32.mrf.mxu0
          %v2686 = vadd.f32 0.0, %v2685
          %v2687 = vpop.f32.mrf.mxu0
          %v2688 = vadd.f32 0.0, %v2687
          %2689 = vmatprep.mubr.f32.mxu0 0.0
          %2690 = vmatmul.mubr.f32.gmra.mxu0 %v1993
          %v2691 = vpop.f32.mrf.mxu0
          %v2692 = vadd.f32 0.0, %v2691
          %v2693 = vpop.f32.mrf.mxu0
          %v2694 = vadd.f32 0.0, %v2693
          %2695 = vmatprep.mubr.f32.mxu0 0.0
          %2696 = vmatmul.mubr.f32.gmra.mxu0 %v1994
          %v2697 = vpop.f32.mrf.mxu0
          %v2698 = vadd.f32 0.0, %v2697
          %v2699 = vpop.f32.mrf.mxu0
          %v2700 = vadd.f32 0.0, %v2699
          %2701 = vmatprep.mubr.f32.mxu0 0.0
          %2702 = vmatmul.mubr.f32.gmra.mxu0 %v1995
          %v2703 = vpop.f32.mrf.mxu0
          %v2704 = vadd.f32 0.0, %v2703
          %v2705 = vpop.f32.mrf.mxu0
          %v2706 = vadd.f32 0.0, %v2705
          %2707 = vmatprep.mubr.f32.mxu0 0.0
          %2708 = vmatmul.mubr.f32.gmra.mxu0 %v1996
          %v2709 = vpop.f32.mrf.mxu0
          %v2710 = vadd.f32 0.0, %v2709
          %v2711 = vpop.f32.mrf.mxu0
          %v2712 = vadd.f32 0.0, %v2711
          %2713 = vmatprep.mubr.f32.mxu0 0.0
          %2714 = vmatmul.mubr.f32.gmra.mxu0 %v1997
          %v2715 = vpop.f32.mrf.mxu0
          %v2716 = vadd.f32 0.0, %v2715
          %v2717 = vpop.f32.mrf.mxu0
          %v2718 = vadd.f32 0.0, %v2717
          %2719 = vmatprep.mubr.f32.mxu0 0.0
          %2720 = vmatmul.mubr.f32.gmra.mxu0 %v1998
          %v2721 = vpop.f32.mrf.mxu0
          %v2722 = vadd.f32 0.0, %v2721
          %v2723 = vpop.f32.mrf.mxu0
          %v2724 = vadd.f32 0.0, %v2723
          %2725 = vmatprep.mubr.f32.mxu0 0.0
          %2726 = vmatmul.mubr.f32.gmra.mxu0 %v1999
          %v2727 = vpop.f32.mrf.mxu0
          %v2728 = vadd.f32 0.0, %v2727
          %v2729 = vpop.f32.mrf.mxu0
          %v2730 = vadd.f32 0.0, %v2729
          %2731 = vmatprep.mubr.f32.mxu0 0.0
          %2732 = vmatmul.mubr.f32.gmra.mxu0 %v2000
          %v2733 = vpop.f32.mrf.mxu0
          %v2734 = vadd.f32 0.0, %v2733
          %v2735 = vpop.f32.mrf.mxu0
          %v2736 = vadd.f32 0.0, %v2735
          %2737 = vmatprep.mubr.f32.mxu0 0.0
          %2738 = vmatmul.mubr.f32.gmra.mxu0 %v2001
          %v2739 = vpop.f32.mrf.mxu0
          %v2740 = vadd.f32 0.0, %v2739
          %v2741 = vpop.f32.mrf.mxu0
          %v2742 = vadd.f32 0.0, %v2741
          %2743 = vmatprep.mubr.f32.mxu0 0.0
          %2744 = vmatmul.mubr.f32.gmra.mxu0 %v2002
          %v2745 = vpop.f32.mrf.mxu0
          %v2746 = vadd.f32 0.0, %v2745
          %v2747 = vpop.f32.mrf.mxu0
          %v2748 = vadd.f32 0.0, %v2747
          %2749 = vmatprep.mubr.f32.mxu0 0.0
          %2750 = vmatmul.mubr.f32.gmra.mxu0 %v2003
          %v2751 = vpop.f32.mrf.mxu0
          %v2752 = vadd.f32 0.0, %v2751
          %v2753 = vpop.f32.mrf.mxu0
          %v2754 = vadd.f32 0.0, %v2753
          %2755 = vmatprep.mubr.f32.mxu0 0.0
          %2756 = vmatmul.mubr.f32.gmra.mxu0 %v2004
          %v2757 = vpop.f32.mrf.mxu0
          %v2758 = vadd.f32 0.0, %v2757
          %v2759 = vpop.f32.mrf.mxu0
          %v2760 = vadd.f32 0.0, %v2759
          %2761 = vmatprep.mubr.f32.mxu0 0.0
          %2762 = vmatmul.mubr.f32.gmra.mxu0 %v2005
          %v2763 = vpop.f32.mrf.mxu0
          %v2764 = vadd.f32 0.0, %v2763
          %v2765 = vpop.f32.mrf.mxu0
          %v2766 = vadd.f32 0.0, %v2765
          %2767 = vmatprep.mubr.f32.mxu0 0.0
          %2768 = vmatmul.mubr.f32.gmra.mxu0 %v2006
          %v2769 = vpop.f32.mrf.mxu0
          %v2770 = vadd.f32 0.0, %v2769
          %v2771 = vpop.f32.mrf.mxu0
          %v2772 = vadd.f32 0.0, %v2771
          %2773 = vmatprep.mubr.f32.mxu0 0.0
          %2774 = vmatmul.mubr.f32.gmra.mxu0 %v2007
          %v2775 = vpop.f32.mrf.mxu0
          %v2776 = vadd.f32 0.0, %v2775
          %v2777 = vpop.f32.mrf.mxu0
          %v2778 = vadd.f32 0.0, %v2777
          %2779 = vdwg.mxu0
          %v2780 = vld [vmem:[#allocation6] sm:$0xff]
          %v2781 = vadd.f32 %v2203, %v2209
          %v2782 = vadd.f32 %v2781, %v2215
          %v2783 = vadd.f32 %v2782, %v2221
          %v2784 = vadd.f32 %v2783, %v2227
          %v2785 = vadd.f32 %v2784, %v2233
          %v2786 = vadd.f32 %v2785, %v2239
          %v2787 = vadd.f32 %v2786, %v2245
          %v2788 = vadd.f32 %v2787, %v2251
          %v2789 = vadd.f32 %v2788, %v2257
          %v2790 = vadd.f32 %v2789, %v2263
          %v2791 = vadd.f32 %v2790, %v2269
          %v2792 = vadd.f32 %v2791, %v2275
          %v2793 = vadd.f32 %v2792, %v2281
          %v2794 = vadd.f32 %v2793, %v2287
          %v2795 = vadd.f32 %v2794, %v2293
          %v2796 = vrot.slane %v2795, 4
          %v2797 = vadd.f32 %v2795, %v2796
          %v2798 = vrot.slane %v2797, 2
          %v2799 = vadd.f32 %v2797, %v2798
          %v2800 = vrot.slane %v2799, 1
          %v2801 = vadd.f32 %v2799, %v2800
          %v2802 = vadd.f32 %v2205, %v2211
          %v2803 = vadd.f32 %v2802, %v2217
          %v2804 = vadd.f32 %v2803, %v2223
          %v2805 = vadd.f32 %v2804, %v2229
          %v2806 = vadd.f32 %v2805, %v2235
          %v2807 = vadd.f32 %v2806, %v2241
          %v2808 = vadd.f32 %v2807, %v2247
          %v2809 = vadd.f32 %v2808, %v2253
          %v2810 = vadd.f32 %v2809, %v2259
          %v2811 = vadd.f32 %v2810, %v2265
          %v2812 = vadd.f32 %v2811, %v2271
          %v2813 = vadd.f32 %v2812, %v2277
          %v2814 = vadd.f32 %v2813, %v2283
          %v2815 = vadd.f32 %v2814, %v2289
          %v2816 = vadd.f32 %v2815, %v2295
          %v2817 = vrot.slane %v2816, 4
          %v2818 = vadd.f32 %v2816, %v2817
          %v2819 = vrot.slane %v2818, 2
          %v2820 = vadd.f32 %v2818, %v2819
          %v2821 = vrot.slane %v2820, 1
          %v2822 = vadd.f32 %v2820, %v2821
          %v2823 = vadd.f32 %v2364, %v2370
          %v2824 = vadd.f32 %v2823, %v2376
          %v2825 = vadd.f32 %v2824, %v2382
          %v2826 = vadd.f32 %v2825, %v2388
          %v2827 = vadd.f32 %v2826, %v2394
          %v2828 = vadd.f32 %v2827, %v2400
          %v2829 = vadd.f32 %v2828, %v2406
          %v2830 = vadd.f32 %v2829, %v2412
          %v2831 = vadd.f32 %v2830, %v2418
          %v2832 = vadd.f32 %v2831, %v2424
          %v2833 = vadd.f32 %v2832, %v2430
          %v2834 = vadd.f32 %v2833, %v2436
          %v2835 = vadd.f32 %v2834, %v2442
          %v2836 = vadd.f32 %v2835, %v2448
          %v2837 = vadd.f32 %v2836, %v2454
          %v2838 = vrot.slane %v2837, 4
          %v2839 = vadd.f32 %v2837, %v2838
          %v2840 = vrot.slane %v2839, 2
          %v2841 = vadd.f32 %v2839, %v2840
          %v2842 = vrot.slane %v2841, 1
          %v2843 = vadd.f32 %v2841, %v2842
          %v2844 = vadd.f32 %v2366, %v2372
          %v2845 = vadd.f32 %v2844, %v2378
          %v2846 = vadd.f32 %v2845, %v2384
          %v2847 = vadd.f32 %v2846, %v2390
          %v2848 = vadd.f32 %v2847, %v2396
          %v2849 = vadd.f32 %v2848, %v2402
          %v2850 = vadd.f32 %v2849, %v2408
          %v2851 = vadd.f32 %v2850, %v2414
          %v2852 = vadd.f32 %v2851, %v2420
          %v2853 = vadd.f32 %v2852, %v2426
          %v2854 = vadd.f32 %v2853, %v2432
          %v2855 = vadd.f32 %v2854, %v2438
          %v2856 = vadd.f32 %v2855, %v2444
          %v2857 = vadd.f32 %v2856, %v2450
          %v2858 = vadd.f32 %v2857, %v2456
          %v2859 = vrot.slane %v2858, 4
          %v2860 = vadd.f32 %v2858, %v2859
          %v2861 = vrot.slane %v2860, 2
          %v2862 = vadd.f32 %v2860, %v2861
          %v2863 = vrot.slane %v2862, 1
          %v2864 = vadd.f32 %v2862, %v2863
          %v2865 = vadd.f32 %v2525, %v2531
          %v2866 = vadd.f32 %v2865, %v2537
          %v2867 = vadd.f32 %v2866, %v2543
          %v2868 = vadd.f32 %v2867, %v2549
          %v2869 = vadd.f32 %v2868, %v2555
          %v2870 = vadd.f32 %v2869, %v2561
          %v2871 = vadd.f32 %v2870, %v2567
          %v2872 = vadd.f32 %v2871, %v2573
          %v2873 = vadd.f32 %v2872, %v2579
          %v2874 = vadd.f32 %v2873, %v2585
          %v2875 = vadd.f32 %v2874, %v2591
          %v2876 = vadd.f32 %v2875, %v2597
          %v2877 = vadd.f32 %v2876, %v2603
          %v2878 = vadd.f32 %v2877, %v2609
          %v2879 = vadd.f32 %v2878, %v2615
          %v2880 = vrot.slane %v2879, 4
          %v2881 = vadd.f32 %v2879, %v2880
          %v2882 = vrot.slane %v2881, 2
          %v2883 = vadd.f32 %v2881, %v2882
          %v2884 = vrot.slane %v2883, 1
          %v2885 = vadd.f32 %v2883, %v2884
          %v2886 = vadd.f32 %v2527, %v2533
          %v2887 = vadd.f32 %v2886, %v2539
          %v2888 = vadd.f32 %v2887, %v2545
          %v2889 = vadd.f32 %v2888, %v2551
          %v2890 = vadd.f32 %v2889, %v2557
          %v2891 = vadd.f32 %v2890, %v2563
          %v2892 = vadd.f32 %v2891, %v2569
          %v2893 = vadd.f32 %v2892, %v2575
          %v2894 = vadd.f32 %v2893, %v2581
          %v2895 = vadd.f32 %v2894, %v2587
          %v2896 = vadd.f32 %v2895, %v2593
          %v2897 = vadd.f32 %v2896, %v2599
          %v2898 = vadd.f32 %v2897, %v2605
          %v2899 = vadd.f32 %v2898, %v2611
          %v2900 = vadd.f32 %v2899, %v2617
          %v2901 = vrot.slane %v2900, 4
          %v2902 = vadd.f32 %v2900, %v2901
          %v2903 = vrot.slane %v2902, 2
          %v2904 = vadd.f32 %v2902, %v2903
          %v2905 = vrot.slane %v2904, 1
          %v2906 = vadd.f32 %v2904, %v2905
          %v2907 = vadd.f32 %v2686, %v2692
          %v2908 = vadd.f32 %v2907, %v2698
          %v2909 = vadd.f32 %v2908, %v2704
          %v2910 = vadd.f32 %v2909, %v2710
          %v2911 = vadd.f32 %v2910, %v2716
          %v2912 = vadd.f32 %v2911, %v2722
          %v2913 = vadd.f32 %v2912, %v2728
          %v2914 = vadd.f32 %v2913, %v2734
          %v2915 = vadd.f32 %v2914, %v2740
          %v2916 = vadd.f32 %v2915, %v2746
          %v2917 = vadd.f32 %v2916, %v2752
          %v2918 = vadd.f32 %v2917, %v2758
          %v2919 = vadd.f32 %v2918, %v2764
          %v2920 = vadd.f32 %v2919, %v2770
          %v2921 = vadd.f32 %v2920, %v2776
          %v2922 = vrot.slane %v2921, 4
          %v2923 = vadd.f32 %v2921, %v2922
          %v2924 = vrot.slane %v2923, 2
          %v2925 = vadd.f32 %v2923, %v2924
          %v2926 = vrot.slane %v2925, 1
          %v2927 = vadd.f32 %v2925, %v2926
          %v2928 = vadd.f32 %v2688, %v2694
          %v2929 = vadd.f32 %v2928, %v2700
          %v2930 = vadd.f32 %v2929, %v2706
          %v2931 = vadd.f32 %v2930, %v2712
          %v2932 = vadd.f32 %v2931, %v2718
          %v2933 = vadd.f32 %v2932, %v2724
          %v2934 = vadd.f32 %v2933, %v2730
          %v2935 = vadd.f32 %v2934, %v2736
          %v2936 = vadd.f32 %v2935, %v2742
          %v2937 = vadd.f32 %v2936, %v2748
          %v2938 = vadd.f32 %v2937, %v2754
          %v2939 = vadd.f32 %v2938, %v2760
          %v2940 = vadd.f32 %v2939, %v2766
          %v2941 = vadd.f32 %v2940, %v2772
          %v2942 = vadd.f32 %v2941, %v2778
          %v2943 = vrot.slane %v2942, 4
          %v2944 = vadd.f32 %v2942, %v2943
          %v2945 = vrot.slane %v2944, 2
          %v2946 = vadd.f32 %v2944, %v2945
          %v2947 = vrot.slane %v2946, 1
          %v2948 = vadd.f32 %v2946, %v2947
          %v2957 = vcombine.low %v2801, %v2822
          %v2958 = vcombine.low %v2843, %v2864
          %v2959 = vcombine.low %v2885, %v2906
          %v2960 = vcombine.low %v2927, %v2948
          %v2962 = vunpack.c.l.s4 1966171168
          %v2963 = vunpack.c.0.s8 %v2962
          %v2964 = vlaneseq
          %v2965 = vshrl.u32 %v2964, 7
          %v2966 = vsub.s32 %v2963, %v2965
          %v2967 = vrot.slane %v2957, %v2966
          %v2969 = vunpack.c.l.s4 1966171168
          %v2970 = vunpack.c.0.s8 %v2969
          %v2971 = vlaneseq
          %v2972 = vshrl.u32 %v2971, 7
          %v2973 = vsub.s32 %v2970, %v2972
          %v2974 = vrot.slane %v2958, %v2973
          %v2976 = vunpack.c.l.s4 1966171168
          %v2977 = vunpack.c.0.s8 %v2976
          %v2978 = vlaneseq
          %v2979 = vshrl.u32 %v2978, 7
          %v2980 = vsub.s32 %v2977, %v2979
          %v2981 = vrot.slane %v2959, %v2980
          %v2983 = vunpack.c.l.s4 1966171168
          %v2984 = vunpack.c.0.s8 %v2983
          %v2985 = vlaneseq
          %v2986 = vshrl.u32 %v2985, 7
          %v2987 = vsub.s32 %v2984, %v2986
          %v2988 = vrot.slane %v2960, %v2987
          %v2989 = vcombine.low %v2967, %v2974
          %v2990 = vcombine.low %v2981, %v2988
          %v2992 = vunpack.c.l.s4 1966171168
          %v2993 = vunpack.c.0.s8 %v2992
          %v2994 = vlaneseq
          %v2995 = vshrl.u32 %v2994, 7
          %v2996 = vsub.s32 %v2993, %v2995
          %v2997 = vrot.slane %v2989, %v2996
          %v2999 = vunpack.c.l.s4 1966171168
          %v3000 = vunpack.c.0.s8 %v2999
          %v3001 = vlaneseq
          %v3002 = vshrl.u32 %v3001, 7
          %v3003 = vsub.s32 %v3000, %v3002
          %v3004 = vrot.slane %v2990, %v3003
          %v3005 = vcombine.low %v2997, %v3004
          %v3007 = vadd.f32 %v2780, %v3005
          %3008 = vst [vmem:[#allocation6] sm:$0xff] %v3007
          %v3009 = vld [vmem:[#allocation7] sm:$0xff]
          %v3010 = vmul.f32 %v2203, %v2203
          %v3011 = vmul.f32 %v2205, %v2205
          %v3012 = vmul.f32 %v2364, %v2364
          %v3013 = vmul.f32 %v2366, %v2366
          %v3014 = vmul.f32 %v2525, %v2525
          %v3015 = vmul.f32 %v2527, %v2527
          %v3016 = vmul.f32 %v2686, %v2686
          %v3017 = vmul.f32 %v2688, %v2688
          %v3018 = vmul.f32 %v2209, %v2209
          %v3019 = vmul.f32 %v2211, %v2211
          %v3020 = vmul.f32 %v2370, %v2370
          %v3021 = vmul.f32 %v2372, %v2372
          %v3022 = vmul.f32 %v2531, %v2531
          %v3023 = vmul.f32 %v2533, %v2533
          %v3024 = vmul.f32 %v2692, %v2692
          %v3025 = vmul.f32 %v2694, %v2694
          %v3026 = vmul.f32 %v2215, %v2215
          %v3027 = vmul.f32 %v2217, %v2217
          %v3028 = vmul.f32 %v2376, %v2376
          %v3029 = vmul.f32 %v2378, %v2378
          %v3030 = vmul.f32 %v2537, %v2537
          %v3031 = vmul.f32 %v2539, %v2539
          %v3032 = vmul.f32 %v2698, %v2698
          %v3033 = vmul.f32 %v2700, %v2700
          %v3034 = vmul.f32 %v2221, %v2221
          %v3035 = vmul.f32 %v2223, %v2223
          %v3036 = vmul.f32 %v2382, %v2382
          %v3037 = vmul.f32 %v2384, %v2384
          %v3038 = vmul.f32 %v2543, %v2543
          %v3039 = vmul.f32 %v2545, %v2545
          %v3040 = vmul.f32 %v2704, %v2704
          %v3041 = vmul.f32 %v2706, %v2706
          %v3042 = vmul.f32 %v2227, %v2227
          %v3043 = vmul.f32 %v2229, %v2229
          %v3044 = vmul.f32 %v2388, %v2388
          %v3045 = vmul.f32 %v2390, %v2390
          %v3046 = vmul.f32 %v2549, %v2549
          %v3047 = vmul.f32 %v2551, %v2551
          %v3048 = vmul.f32 %v2710, %v2710
          %v3049 = vmul.f32 %v2712, %v2712
          %v3050 = vmul.f32 %v2233, %v2233
          %v3051 = vmul.f32 %v2235, %v2235
          %v3052 = vmul.f32 %v2394, %v2394
          %v3053 = vmul.f32 %v2396, %v2396
          %v3054 = vmul.f32 %v2555, %v2555
          %v3055 = vmul.f32 %v2557, %v2557
          %v3056 = vmul.f32 %v2716, %v2716
          %v3057 = vmul.f32 %v2718, %v2718
          %v3058 = vmul.f32 %v2239, %v2239
          %v3059 = vmul.f32 %v2241, %v2241
          %v3060 = vmul.f32 %v2400, %v2400
          %v3061 = vmul.f32 %v2402, %v2402
          %v3062 = vmul.f32 %v2561, %v2561
          %v3063 = vmul.f32 %v2563, %v2563
          %v3064 = vmul.f32 %v2722, %v2722
          %v3065 = vmul.f32 %v2724, %v2724
          %v3066 = vmul.f32 %v2245, %v2245
          %v3067 = vmul.f32 %v2247, %v2247
          %v3068 = vmul.f32 %v2406, %v2406
          %v3069 = vmul.f32 %v2408, %v2408
          %v3070 = vmul.f32 %v2567, %v2567
          %v3071 = vmul.f32 %v2569, %v2569
          %v3072 = vmul.f32 %v2728, %v2728
          %v3073 = vmul.f32 %v2730, %v2730
          %v3074 = vmul.f32 %v2251, %v2251
          %v3075 = vmul.f32 %v2253, %v2253
          %v3076 = vmul.f32 %v2412, %v2412
          %v3077 = vmul.f32 %v2414, %v2414
          %v3078 = vmul.f32 %v2573, %v2573
          %v3079 = vmul.f32 %v2575, %v2575
          %v3080 = vmul.f32 %v2734, %v2734
          %v3081 = vmul.f32 %v2736, %v2736
          %v3082 = vmul.f32 %v2257, %v2257
          %v3083 = vmul.f32 %v2259, %v2259
          %v3084 = vmul.f32 %v2418, %v2418
          %v3085 = vmul.f32 %v2420, %v2420
          %v3086 = vmul.f32 %v2579, %v2579
          %v3087 = vmul.f32 %v2581, %v2581
          %v3088 = vmul.f32 %v2740, %v2740
          %v3089 = vmul.f32 %v2742, %v2742
          %v3090 = vmul.f32 %v2263, %v2263
          %v3091 = vmul.f32 %v2265, %v2265
          %v3092 = vmul.f32 %v2424, %v2424
          %v3093 = vmul.f32 %v2426, %v2426
          %v3094 = vmul.f32 %v2585, %v2585
          %v3095 = vmul.f32 %v2587, %v2587
          %v3096 = vmul.f32 %v2746, %v2746
          %v3097 = vmul.f32 %v2748, %v2748
          %v3098 = vmul.f32 %v2269, %v2269
          %v3099 = vmul.f32 %v2271, %v2271
          %v3100 = vmul.f32 %v2430, %v2430
          %v3101 = vmul.f32 %v2432, %v2432
          %v3102 = vmul.f32 %v2591, %v2591
          %v3103 = vmul.f32 %v2593, %v2593
          %v3104 = vmul.f32 %v2752, %v2752
          %v3105 = vmul.f32 %v2754, %v2754
          %v3106 = vmul.f32 %v2275, %v2275
          %v3107 = vmul.f32 %v2277, %v2277
          %v3108 = vmul.f32 %v2436, %v2436
          %v3109 = vmul.f32 %v2438, %v2438
          %v3110 = vmul.f32 %v2597, %v2597
          %v3111 = vmul.f32 %v2599, %v2599
          %v3112 = vmul.f32 %v2758, %v2758
          %v3113 = vmul.f32 %v2760, %v2760
          %v3114 = vmul.f32 %v2281, %v2281
          %v3115 = vmul.f32 %v2283, %v2283
          %v3116 = vmul.f32 %v2442, %v2442
          %v3117 = vmul.f32 %v2444, %v2444
          %v3118 = vmul.f32 %v2603, %v2603
          %v3119 = vmul.f32 %v2605, %v2605
          %v3120 = vmul.f32 %v2764, %v2764
          %v3121 = vmul.f32 %v2766, %v2766
          %v3122 = vmul.f32 %v2287, %v2287
          %v3123 = vmul.f32 %v2289, %v2289
          %v3124 = vmul.f32 %v2448, %v2448
          %v3125 = vmul.f32 %v2450, %v2450
          %v3126 = vmul.f32 %v2609, %v2609
          %v3127 = vmul.f32 %v2611, %v2611
          %v3128 = vmul.f32 %v2770, %v2770
          %v3129 = vmul.f32 %v2772, %v2772
          %v3130 = vmul.f32 %v2293, %v2293
          %v3131 = vmul.f32 %v2295, %v2295
          %v3132 = vmul.f32 %v2454, %v2454
          %v3133 = vmul.f32 %v2456, %v2456
          %v3134 = vmul.f32 %v2615, %v2615
          %v3135 = vmul.f32 %v2617, %v2617
          %v3136 = vmul.f32 %v2776, %v2776
          %v3137 = vmul.f32 %v2778, %v2778
          %v3138 = vadd.f32 %v3010, %v3018
          %v3139 = vadd.f32 %v3138, %v3026
          %v3140 = vadd.f32 %v3139, %v3034
          %v3141 = vadd.f32 %v3140, %v3042
          %v3142 = vadd.f32 %v3141, %v3050
          %v3143 = vadd.f32 %v3142, %v3058
          %v3144 = vadd.f32 %v3143, %v3066
          %v3145 = vadd.f32 %v3144, %v3074
          %v3146 = vadd.f32 %v3145, %v3082
          %v3147 = vadd.f32 %v3146, %v3090
          %v3148 = vadd.f32 %v3147, %v3098
          %v3149 = vadd.f32 %v3148, %v3106
          %v3150 = vadd.f32 %v3149, %v3114
          %v3151 = vadd.f32 %v3150, %v3122
          %v3152 = vadd.f32 %v3151, %v3130
          %v3153 = vrot.slane %v3152, 4
          %v3154 = vadd.f32 %v3152, %v3153
          %v3155 = vrot.slane %v3154, 2
          %v3156 = vadd.f32 %v3154, %v3155
          %v3157 = vrot.slane %v3156, 1
          %v3158 = vadd.f32 %v3156, %v3157
          %v3159 = vadd.f32 %v3011, %v3019
          %v3160 = vadd.f32 %v3159, %v3027
          %v3161 = vadd.f32 %v3160, %v3035
          %v3162 = vadd.f32 %v3161, %v3043
          %v3163 = vadd.f32 %v3162, %v3051
          %v3164 = vadd.f32 %v3163, %v3059
          %v3165 = vadd.f32 %v3164, %v3067
          %v3166 = vadd.f32 %v3165, %v3075
          %v3167 = vadd.f32 %v3166, %v3083
          %v3168 = vadd.f32 %v3167, %v3091
          %v3169 = vadd.f32 %v3168, %v3099
          %v3170 = vadd.f32 %v3169, %v3107
          %v3171 = vadd.f32 %v3170, %v3115
          %v3172 = vadd.f32 %v3171, %v3123
          %v3173 = vadd.f32 %v3172, %v3131
          %v3174 = vrot.slane %v3173, 4
          %v3175 = vadd.f32 %v3173, %v3174
          %v3176 = vrot.slane %v3175, 2
          %v3177 = vadd.f32 %v3175, %v3176
          %v3178 = vrot.slane %v3177, 1
          %v3179 = vadd.f32 %v3177, %v3178
          %v3180 = vadd.f32 %v3012, %v3020
          %v3181 = vadd.f32 %v3180, %v3028
          %v3182 = vadd.f32 %v3181, %v3036
          %v3183 = vadd.f32 %v3182, %v3044
          %v3184 = vadd.f32 %v3183, %v3052
          %v3185 = vadd.f32 %v3184, %v3060
          %v3186 = vadd.f32 %v3185, %v3068
          %v3187 = vadd.f32 %v3186, %v3076
          %v3188 = vadd.f32 %v3187, %v3084
          %v3189 = vadd.f32 %v3188, %v3092
          %v3190 = vadd.f32 %v3189, %v3100
          %v3191 = vadd.f32 %v3190, %v3108
          %v3192 = vadd.f32 %v3191, %v3116
          %v3193 = vadd.f32 %v3192, %v3124
          %v3194 = vadd.f32 %v3193, %v3132
          %v3195 = vrot.slane %v3194, 4
          %v3196 = vadd.f32 %v3194, %v3195
          %v3197 = vrot.slane %v3196, 2
          %v3198 = vadd.f32 %v3196, %v3197
          %v3199 = vrot.slane %v3198, 1
          %v3200 = vadd.f32 %v3198, %v3199
          %v3201 = vadd.f32 %v3013, %v3021
          %v3202 = vadd.f32 %v3201, %v3029
          %v3203 = vadd.f32 %v3202, %v3037
          %v3204 = vadd.f32 %v3203, %v3045
          %v3205 = vadd.f32 %v3204, %v3053
          %v3206 = vadd.f32 %v3205, %v3061
          %v3207 = vadd.f32 %v3206, %v3069
          %v3208 = vadd.f32 %v3207, %v3077
          %v3209 = vadd.f32 %v3208, %v3085
          %v3210 = vadd.f32 %v3209, %v3093
          %v3211 = vadd.f32 %v3210, %v3101
          %v3212 = vadd.f32 %v3211, %v3109
          %v3213 = vadd.f32 %v3212, %v3117
          %v3214 = vadd.f32 %v3213, %v3125
          %v3215 = vadd.f32 %v3214, %v3133
          %v3216 = vrot.slane %v3215, 4
          %v3217 = vadd.f32 %v3215, %v3216
          %v3218 = vrot.slane %v3217, 2
          %v3219 = vadd.f32 %v3217, %v3218
          %v3220 = vrot.slane %v3219, 1
          %v3221 = vadd.f32 %v3219, %v3220
          %v3222 = vadd.f32 %v3014, %v3022
          %v3223 = vadd.f32 %v3222, %v3030
          %v3224 = vadd.f32 %v3223, %v3038
          %v3225 = vadd.f32 %v3224, %v3046
          %v3226 = vadd.f32 %v3225, %v3054
          %v3227 = vadd.f32 %v3226, %v3062
          %v3228 = vadd.f32 %v3227, %v3070
          %v3229 = vadd.f32 %v3228, %v3078
          %v3230 = vadd.f32 %v3229, %v3086
          %v3231 = vadd.f32 %v3230, %v3094
          %v3232 = vadd.f32 %v3231, %v3102
          %v3233 = vadd.f32 %v3232, %v3110
          %v3234 = vadd.f32 %v3233, %v3118
          %v3235 = vadd.f32 %v3234, %v3126
          %v3236 = vadd.f32 %v3235, %v3134
          %v3237 = vrot.slane %v3236, 4
          %v3238 = vadd.f32 %v3236, %v3237
          %v3239 = vrot.slane %v3238, 2
          %v3240 = vadd.f32 %v3238, %v3239
          %v3241 = vrot.slane %v3240, 1
          %v3242 = vadd.f32 %v3240, %v3241
          %v3243 = vadd.f32 %v3015, %v3023
          %v3244 = vadd.f32 %v3243, %v3031
          %v3245 = vadd.f32 %v3244, %v3039
          %v3246 = vadd.f32 %v3245, %v3047
          %v3247 = vadd.f32 %v3246, %v3055
          %v3248 = vadd.f32 %v3247, %v3063
          %v3249 = vadd.f32 %v3248, %v3071
          %v3250 = vadd.f32 %v3249, %v3079
          %v3251 = vadd.f32 %v3250, %v3087
          %v3252 = vadd.f32 %v3251, %v3095
          %v3253 = vadd.f32 %v3252, %v3103
          %v3254 = vadd.f32 %v3253, %v3111
          %v3255 = vadd.f32 %v3254, %v3119
          %v3256 = vadd.f32 %v3255, %v3127
          %v3257 = vadd.f32 %v3256, %v3135
          %v3258 = vrot.slane %v3257, 4
          %v3259 = vadd.f32 %v3257, %v3258
          %v3260 = vrot.slane %v3259, 2
          %v3261 = vadd.f32 %v3259, %v3260
          %v3262 = vrot.slane %v3261, 1
          %v3263 = vadd.f32 %v3261, %v3262
          %v3264 = vadd.f32 %v3016, %v3024
          %v3265 = vadd.f32 %v3264, %v3032
          %v3266 = vadd.f32 %v3265, %v3040
          %v3267 = vadd.f32 %v3266, %v3048
          %v3268 = vadd.f32 %v3267, %v3056
          %v3269 = vadd.f32 %v3268, %v3064
          %v3270 = vadd.f32 %v3269, %v3072
          %v3271 = vadd.f32 %v3270, %v3080
          %v3272 = vadd.f32 %v3271, %v3088
          %v3273 = vadd.f32 %v3272, %v3096
          %v3274 = vadd.f32 %v3273, %v3104
          %v3275 = vadd.f32 %v3274, %v3112
          %v3276 = vadd.f32 %v3275, %v3120
          %v3277 = vadd.f32 %v3276, %v3128
          %v3278 = vadd.f32 %v3277, %v3136
          %v3279 = vrot.slane %v3278, 4
          %v3280 = vadd.f32 %v3278, %v3279
          %v3281 = vrot.slane %v3280, 2
          %v3282 = vadd.f32 %v3280, %v3281
          %v3283 = vrot.slane %v3282, 1
          %v3284 = vadd.f32 %v3282, %v3283
          %v3285 = vadd.f32 %v3017, %v3025
          %v3286 = vadd.f32 %v3285, %v3033
          %v3287 = vadd.f32 %v3286, %v3041
          %v3288 = vadd.f32 %v3287, %v3049
          %v3289 = vadd.f32 %v3288, %v3057
          %v3290 = vadd.f32 %v3289, %v3065
          %v3291 = vadd.f32 %v3290, %v3073
          %v3292 = vadd.f32 %v3291, %v3081
          %v3293 = vadd.f32 %v3292, %v3089
          %v3294 = vadd.f32 %v3293, %v3097
          %v3295 = vadd.f32 %v3294, %v3105
          %v3296 = vadd.f32 %v3295, %v3113
          %v3297 = vadd.f32 %v3296, %v3121
          %v3298 = vadd.f32 %v3297, %v3129
          %v3299 = vadd.f32 %v3298, %v3137
          %v3300 = vrot.slane %v3299, 4
          %v3301 = vadd.f32 %v3299, %v3300
          %v3302 = vrot.slane %v3301, 2
          %v3303 = vadd.f32 %v3301, %v3302
          %v3304 = vrot.slane %v3303, 1
          %v3305 = vadd.f32 %v3303, %v3304
          %v3314 = vcombine.low %v3158, %v3179
          %v3315 = vcombine.low %v3200, %v3221
          %v3316 = vcombine.low %v3242, %v3263
          %v3317 = vcombine.low %v3284, %v3305
          %v3319 = vunpack.c.l.s4 1966171168
          %v3320 = vunpack.c.0.s8 %v3319
          %v3321 = vlaneseq
          %v3322 = vshrl.u32 %v3321, 7
          %v3323 = vsub.s32 %v3320, %v3322
          %v3324 = vrot.slane %v3314, %v3323
          %v3326 = vunpack.c.l.s4 1966171168
          %v3327 = vunpack.c.0.s8 %v3326
          %v3328 = vlaneseq
          %v3329 = vshrl.u32 %v3328, 7
          %v3330 = vsub.s32 %v3327, %v3329
          %v3331 = vrot.slane %v3315, %v3330
          %v3333 = vunpack.c.l.s4 1966171168
          %v3334 = vunpack.c.0.s8 %v3333
          %v3335 = vlaneseq
          %v3336 = vshrl.u32 %v3335, 7
          %v3337 = vsub.s32 %v3334, %v3336
          %v3338 = vrot.slane %v3316, %v3337
          %v3340 = vunpack.c.l.s4 1966171168
          %v3341 = vunpack.c.0.s8 %v3340
          %v3342 = vlaneseq
          %v3343 = vshrl.u32 %v3342, 7
          %v3344 = vsub.s32 %v3341, %v3343
          %v3345 = vrot.slane %v3317, %v3344
          %v3346 = vcombine.low %v3324, %v3331
          %v3347 = vcombine.low %v3338, %v3345
          %v3349 = vunpack.c.l.s4 1966171168
          %v3350 = vunpack.c.0.s8 %v3349
          %v3351 = vlaneseq
          %v3352 = vshrl.u32 %v3351, 7
          %v3353 = vsub.s32 %v3350, %v3352
          %v3354 = vrot.slane %v3346, %v3353
          %v3356 = vunpack.c.l.s4 1966171168
          %v3357 = vunpack.c.0.s8 %v3356
          %v3358 = vlaneseq
          %v3359 = vshrl.u32 %v3358, 7
          %v3360 = vsub.s32 %v3357, %v3359
          %v3361 = vrot.slane %v3347, %v3360
          %v3362 = vcombine.low %v3354, %v3361
          %v3364 = vadd.f32 %v3009, %v3362
          %3365 = vst [vmem:[#allocation7] sm:$0xff] %v3364
          %vm3366 = vcmp.eq.s32.totalorder %v810, 1
          %vm3367 = vcmp.eq.s32.totalorder %v811, 1
          %vm3368 = vcmp.eq.s32.totalorder %v812, 1
          %vm3369 = vcmp.eq.s32.totalorder %v813, 1
          %vm3370 = vcmp.eq.s32.totalorder %v814, 1
          %vm3371 = vcmp.eq.s32.totalorder %v815, 1
          %vm3372 = vcmp.eq.s32.totalorder %v816, 1
          %vm3373 = vcmp.eq.s32.totalorder %v817, 1
          %vm3374 = vcmp.eq.s32.totalorder %v818, 1
          %vm3375 = vcmp.eq.s32.totalorder %v819, 1
          %vm3376 = vcmp.eq.s32.totalorder %v820, 1
          %vm3377 = vcmp.eq.s32.totalorder %v821, 1
          %vm3378 = vcmp.eq.s32.totalorder %v822, 1
          %vm3379 = vcmp.eq.s32.totalorder %v823, 1
          %vm3380 = vcmp.eq.s32.totalorder %v824, 1
          %vm3381 = vcmp.eq.s32.totalorder %v825, 1
          %v3382 = vsel %vm3366, %v2203, -3.4028235e+38
          %v3383 = vsel %vm3366, %v2205, -3.4028235e+38
          %v3384 = vsel %vm3366, %v2364, -3.4028235e+38
          %v3385 = vsel %vm3366, %v2366, -3.4028235e+38
          %v3386 = vsel %vm3366, %v2525, -3.4028235e+38
          %v3387 = vsel %vm3366, %v2527, -3.4028235e+38
          %v3388 = vsel %vm3366, %v2686, -3.4028235e+38
          %v3389 = vsel %vm3366, %v2688, -3.4028235e+38
          %v3390 = vsel %vm3367, %v2209, -3.4028235e+38
          %v3391 = vsel %vm3367, %v2211, -3.4028235e+38
          %v3392 = vsel %vm3367, %v2370, -3.4028235e+38
          %v3393 = vsel %vm3367, %v2372, -3.4028235e+38
          %v3394 = vsel %vm3367, %v2531, -3.4028235e+38
          %v3395 = vsel %vm3367, %v2533, -3.4028235e+38
          %v3396 = vsel %vm3367, %v2692, -3.4028235e+38
          %v3397 = vsel %vm3367, %v2694, -3.4028235e+38
          %v3398 = vsel %vm3368, %v2215, -3.4028235e+38
          %v3399 = vsel %vm3368, %v2217, -3.4028235e+38
          %v3400 = vsel %vm3368, %v2376, -3.4028235e+38
          %v3401 = vsel %vm3368, %v2378, -3.4028235e+38
          %v3402 = vsel %vm3368, %v2537, -3.4028235e+38
          %v3403 = vsel %vm3368, %v2539, -3.4028235e+38
          %v3404 = vsel %vm3368, %v2698, -3.4028235e+38
          %v3405 = vsel %vm3368, %v2700, -3.4028235e+38
          %v3406 = vsel %vm3369, %v2221, -3.4028235e+38
          %v3407 = vsel %vm3369, %v2223, -3.4028235e+38
          %v3408 = vsel %vm3369, %v2382, -3.4028235e+38
          %v3409 = vsel %vm3369, %v2384, -3.4028235e+38
          %v3410 = vsel %vm3369, %v2543, -3.4028235e+38
          %v3411 = vsel %vm3369, %v2545, -3.4028235e+38
          %v3412 = vsel %vm3369, %v2704, -3.4028235e+38
          %v3413 = vsel %vm3369, %v2706, -3.4028235e+38
          %v3414 = vsel %vm3370, %v2227, -3.4028235e+38
          %v3415 = vsel %vm3370, %v2229, -3.4028235e+38
          %v3416 = vsel %vm3370, %v2388, -3.4028235e+38
          %v3417 = vsel %vm3370, %v2390, -3.4028235e+38
          %v3418 = vsel %vm3370, %v2549, -3.4028235e+38
          %v3419 = vsel %vm3370, %v2551, -3.4028235e+38
          %v3420 = vsel %vm3370, %v2710, -3.4028235e+38
          %v3421 = vsel %vm3370, %v2712, -3.4028235e+38
          %v3422 = vsel %vm3371, %v2233, -3.4028235e+38
          %v3423 = vsel %vm3371, %v2235, -3.4028235e+38
          %v3424 = vsel %vm3371, %v2394, -3.4028235e+38
          %v3425 = vsel %vm3371, %v2396, -3.4028235e+38
          %v3426 = vsel %vm3371, %v2555, -3.4028235e+38
          %v3427 = vsel %vm3371, %v2557, -3.4028235e+38
          %v3428 = vsel %vm3371, %v2716, -3.4028235e+38
          %v3429 = vsel %vm3371, %v2718, -3.4028235e+38
          %v3430 = vsel %vm3372, %v2239, -3.4028235e+38
          %v3431 = vsel %vm3372, %v2241, -3.4028235e+38
          %v3432 = vsel %vm3372, %v2400, -3.4028235e+38
          %v3433 = vsel %vm3372, %v2402, -3.4028235e+38
          %v3434 = vsel %vm3372, %v2561, -3.4028235e+38
          %v3435 = vsel %vm3372, %v2563, -3.4028235e+38
          %v3436 = vsel %vm3372, %v2722, -3.4028235e+38
          %v3437 = vsel %vm3372, %v2724, -3.4028235e+38
          %v3438 = vsel %vm3373, %v2245, -3.4028235e+38
          %v3439 = vsel %vm3373, %v2247, -3.4028235e+38
          %v3440 = vsel %vm3373, %v2406, -3.4028235e+38
          %v3441 = vsel %vm3373, %v2408, -3.4028235e+38
          %v3442 = vsel %vm3373, %v2567, -3.4028235e+38
          %v3443 = vsel %vm3373, %v2569, -3.4028235e+38
          %v3444 = vsel %vm3373, %v2728, -3.4028235e+38
          %v3445 = vsel %vm3373, %v2730, -3.4028235e+38
          %v3446 = vsel %vm3374, %v2251, -3.4028235e+38
          %v3447 = vsel %vm3374, %v2253, -3.4028235e+38
          %v3448 = vsel %vm3374, %v2412, -3.4028235e+38
          %v3449 = vsel %vm3374, %v2414, -3.4028235e+38
          %v3450 = vsel %vm3374, %v2573, -3.4028235e+38
          %v3451 = vsel %vm3374, %v2575, -3.4028235e+38
          %v3452 = vsel %vm3374, %v2734, -3.4028235e+38
          %v3453 = vsel %vm3374, %v2736, -3.4028235e+38
          %v3454 = vsel %vm3375, %v2257, -3.4028235e+38
          %v3455 = vsel %vm3375, %v2259, -3.4028235e+38
          %v3456 = vsel %vm3375, %v2418, -3.4028235e+38
          %v3457 = vsel %vm3375, %v2420, -3.4028235e+38
          %v3458 = vsel %vm3375, %v2579, -3.4028235e+38
          %v3459 = vsel %vm3375, %v2581, -3.4028235e+38
          %v3460 = vsel %vm3375, %v2740, -3.4028235e+38
          %v3461 = vsel %vm3375, %v2742, -3.4028235e+38
          %v3462 = vsel %vm3376, %v2263, -3.4028235e+38
          %v3463 = vsel %vm3376, %v2265, -3.4028235e+38
          %v3464 = vsel %vm3376, %v2424, -3.4028235e+38
          %v3465 = vsel %vm3376, %v2426, -3.4028235e+38
          %v3466 = vsel %vm3376, %v2585, -3.4028235e+38
          %v3467 = vsel %vm3376, %v2587, -3.4028235e+38
          %v3468 = vsel %vm3376, %v2746, -3.4028235e+38
          %v3469 = vsel %vm3376, %v2748, -3.4028235e+38
          %v3470 = vsel %vm3377, %v2269, -3.4028235e+38
          %v3471 = vsel %vm3377, %v2271, -3.4028235e+38
          %v3472 = vsel %vm3377, %v2430, -3.4028235e+38
          %v3473 = vsel %vm3377, %v2432, -3.4028235e+38
          %v3474 = vsel %vm3377, %v2591, -3.4028235e+38
          %v3475 = vsel %vm3377, %v2593, -3.4028235e+38
          %v3476 = vsel %vm3377, %v2752, -3.4028235e+38
          %v3477 = vsel %vm3377, %v2754, -3.4028235e+38
          %v3478 = vsel %vm3378, %v2275, -3.4028235e+38
          %v3479 = vsel %vm3378, %v2277, -3.4028235e+38
          %v3480 = vsel %vm3378, %v2436, -3.4028235e+38
          %v3481 = vsel %vm3378, %v2438, -3.4028235e+38
          %v3482 = vsel %vm3378, %v2597, -3.4028235e+38
          %v3483 = vsel %vm3378, %v2599, -3.4028235e+38
          %v3484 = vsel %vm3378, %v2758, -3.4028235e+38
          %v3485 = vsel %vm3378, %v2760, -3.4028235e+38
          %v3486 = vsel %vm3379, %v2281, -3.4028235e+38
          %v3487 = vsel %vm3379, %v2283, -3.4028235e+38
          %v3488 = vsel %vm3379, %v2442, -3.4028235e+38
          %v3489 = vsel %vm3379, %v2444, -3.4028235e+38
          %v3490 = vsel %vm3379, %v2603, -3.4028235e+38
          %v3491 = vsel %vm3379, %v2605, -3.4028235e+38
          %v3492 = vsel %vm3379, %v2764, -3.4028235e+38
          %v3493 = vsel %vm3379, %v2766, -3.4028235e+38
          %v3494 = vsel %vm3380, %v2287, -3.4028235e+38
          %v3495 = vsel %vm3380, %v2289, -3.4028235e+38
          %v3496 = vsel %vm3380, %v2448, -3.4028235e+38
          %v3497 = vsel %vm3380, %v2450, -3.4028235e+38
          %v3498 = vsel %vm3380, %v2609, -3.4028235e+38
          %v3499 = vsel %vm3380, %v2611, -3.4028235e+38
          %v3500 = vsel %vm3380, %v2770, -3.4028235e+38
          %v3501 = vsel %vm3380, %v2772, -3.4028235e+38
          %v3502 = vsel %vm3381, %v2293, -3.4028235e+38
          %v3503 = vsel %vm3381, %v2295, -3.4028235e+38
          %v3504 = vsel %vm3381, %v2454, -3.4028235e+38
          %v3505 = vsel %vm3381, %v2456, -3.4028235e+38
          %v3506 = vsel %vm3381, %v2615, -3.4028235e+38
          %v3507 = vsel %vm3381, %v2617, -3.4028235e+38
          %v3508 = vsel %vm3381, %v2776, -3.4028235e+38
          %v3509 = vsel %vm3381, %v2778, -3.4028235e+38
          %v3510 = vsel %vm3366, %v2203, 3.4028235e+38
          %v3511 = vsel %vm3366, %v2205, 3.4028235e+38
          %v3512 = vsel %vm3366, %v2364, 3.4028235e+38
          %v3513 = vsel %vm3366, %v2366, 3.4028235e+38
          %v3514 = vsel %vm3366, %v2525, 3.4028235e+38
          %v3515 = vsel %vm3366, %v2527, 3.4028235e+38
          %v3516 = vsel %vm3366, %v2686, 3.4028235e+38
          %v3517 = vsel %vm3366, %v2688, 3.4028235e+38
          %v3518 = vsel %vm3367, %v2209, 3.4028235e+38
          %v3519 = vsel %vm3367, %v2211, 3.4028235e+38
          %v3520 = vsel %vm3367, %v2370, 3.4028235e+38
          %v3521 = vsel %vm3367, %v2372, 3.4028235e+38
          %v3522 = vsel %vm3367, %v2531, 3.4028235e+38
          %v3523 = vsel %vm3367, %v2533, 3.4028235e+38
          %v3524 = vsel %vm3367, %v2692, 3.4028235e+38
          %v3525 = vsel %vm3367, %v2694, 3.4028235e+38
          %v3526 = vsel %vm3368, %v2215, 3.4028235e+38
          %v3527 = vsel %vm3368, %v2217, 3.4028235e+38
          %v3528 = vsel %vm3368, %v2376, 3.4028235e+38
          %v3529 = vsel %vm3368, %v2378, 3.4028235e+38
          %v3530 = vsel %vm3368, %v2537, 3.4028235e+38
          %v3531 = vsel %vm3368, %v2539, 3.4028235e+38
          %v3532 = vsel %vm3368, %v2698, 3.4028235e+38
          %v3533 = vsel %vm3368, %v2700, 3.4028235e+38
          %v3534 = vsel %vm3369, %v2221, 3.4028235e+38
          %v3535 = vsel %vm3369, %v2223, 3.4028235e+38
          %v3536 = vsel %vm3369, %v2382, 3.4028235e+38
          %v3537 = vsel %vm3369, %v2384, 3.4028235e+38
          %v3538 = vsel %vm3369, %v2543, 3.4028235e+38
          %v3539 = vsel %vm3369, %v2545, 3.4028235e+38
          %v3540 = vsel %vm3369, %v2704, 3.4028235e+38
          %v3541 = vsel %vm3369, %v2706, 3.4028235e+38
          %v3542 = vsel %vm3370, %v2227, 3.4028235e+38
          %v3543 = vsel %vm3370, %v2229, 3.4028235e+38
          %v3544 = vsel %vm3370, %v2388, 3.4028235e+38
          %v3545 = vsel %vm3370, %v2390, 3.4028235e+38
          %v3546 = vsel %vm3370, %v2549, 3.4028235e+38
          %v3547 = vsel %vm3370, %v2551, 3.4028235e+38
          %v3548 = vsel %vm3370, %v2710, 3.4028235e+38
          %v3549 = vsel %vm3370, %v2712, 3.4028235e+38
          %v3550 = vsel %vm3371, %v2233, 3.4028235e+38
          %v3551 = vsel %vm3371, %v2235, 3.4028235e+38
          %v3552 = vsel %vm3371, %v2394, 3.4028235e+38
          %v3553 = vsel %vm3371, %v2396, 3.4028235e+38
          %v3554 = vsel %vm3371, %v2555, 3.4028235e+38
          %v3555 = vsel %vm3371, %v2557, 3.4028235e+38
          %v3556 = vsel %vm3371, %v2716, 3.4028235e+38
          %v3557 = vsel %vm3371, %v2718, 3.4028235e+38
          %v3558 = vsel %vm3372, %v2239, 3.4028235e+38
          %v3559 = vsel %vm3372, %v2241, 3.4028235e+38
          %v3560 = vsel %vm3372, %v2400, 3.4028235e+38
          %v3561 = vsel %vm3372, %v2402, 3.4028235e+38
          %v3562 = vsel %vm3372, %v2561, 3.4028235e+38
          %v3563 = vsel %vm3372, %v2563, 3.4028235e+38
          %v3564 = vsel %vm3372, %v2722, 3.4028235e+38
          %v3565 = vsel %vm3372, %v2724, 3.4028235e+38
          %v3566 = vsel %vm3373, %v2245, 3.4028235e+38
          %v3567 = vsel %vm3373, %v2247, 3.4028235e+38
          %v3568 = vsel %vm3373, %v2406, 3.4028235e+38
          %v3569 = vsel %vm3373, %v2408, 3.4028235e+38
          %v3570 = vsel %vm3373, %v2567, 3.4028235e+38
          %v3571 = vsel %vm3373, %v2569, 3.4028235e+38
          %v3572 = vsel %vm3373, %v2728, 3.4028235e+38
          %v3573 = vsel %vm3373, %v2730, 3.4028235e+38
          %v3574 = vsel %vm3374, %v2251, 3.4028235e+38
          %v3575 = vsel %vm3374, %v2253, 3.4028235e+38
          %v3576 = vsel %vm3374, %v2412, 3.4028235e+38
          %v3577 = vsel %vm3374, %v2414, 3.4028235e+38
          %v3578 = vsel %vm3374, %v2573, 3.4028235e+38
          %v3579 = vsel %vm3374, %v2575, 3.4028235e+38
          %v3580 = vsel %vm3374, %v2734, 3.4028235e+38
          %v3581 = vsel %vm3374, %v2736, 3.4028235e+38
          %v3582 = vsel %vm3375, %v2257, 3.4028235e+38
          %v3583 = vsel %vm3375, %v2259, 3.4028235e+38
          %v3584 = vsel %vm3375, %v2418, 3.4028235e+38
          %v3585 = vsel %vm3375, %v2420, 3.4028235e+38
          %v3586 = vsel %vm3375, %v2579, 3.4028235e+38
          %v3587 = vsel %vm3375, %v2581, 3.4028235e+38
          %v3588 = vsel %vm3375, %v2740, 3.4028235e+38
          %v3589 = vsel %vm3375, %v2742, 3.4028235e+38
          %v3590 = vsel %vm3376, %v2263, 3.4028235e+38
          %v3591 = vsel %vm3376, %v2265, 3.4028235e+38
          %v3592 = vsel %vm3376, %v2424, 3.4028235e+38
          %v3593 = vsel %vm3376, %v2426, 3.4028235e+38
          %v3594 = vsel %vm3376, %v2585, 3.4028235e+38
          %v3595 = vsel %vm3376, %v2587, 3.4028235e+38
          %v3596 = vsel %vm3376, %v2746, 3.4028235e+38
          %v3597 = vsel %vm3376, %v2748, 3.4028235e+38
          %v3598 = vsel %vm3377, %v2269, 3.4028235e+38
          %v3599 = vsel %vm3377, %v2271, 3.4028235e+38
          %v3600 = vsel %vm3377, %v2430, 3.4028235e+38
          %v3601 = vsel %vm3377, %v2432, 3.4028235e+38
          %v3602 = vsel %vm3377, %v2591, 3.4028235e+38
          %v3603 = vsel %vm3377, %v2593, 3.4028235e+38
          %v3604 = vsel %vm3377, %v2752, 3.4028235e+38
          %v3605 = vsel %vm3377, %v2754, 3.4028235e+38
          %v3606 = vsel %vm3378, %v2275, 3.4028235e+38
          %v3607 = vsel %vm3378, %v2277, 3.4028235e+38
          %v3608 = vsel %vm3378, %v2436, 3.4028235e+38
          %v3609 = vsel %vm3378, %v2438, 3.4028235e+38
          %v3610 = vsel %vm3378, %v2597, 3.4028235e+38
          %v3611 = vsel %vm3378, %v2599, 3.4028235e+38
          %v3612 = vsel %vm3378, %v2758, 3.4028235e+38
          %v3613 = vsel %vm3378, %v2760, 3.4028235e+38
          %v3614 = vsel %vm3379, %v2281, 3.4028235e+38
          %v3615 = vsel %vm3379, %v2283, 3.4028235e+38
          %v3616 = vsel %vm3379, %v2442, 3.4028235e+38
          %v3617 = vsel %vm3379, %v2444, 3.4028235e+38
          %v3618 = vsel %vm3379, %v2603, 3.4028235e+38
          %v3619 = vsel %vm3379, %v2605, 3.4028235e+38
          %v3620 = vsel %vm3379, %v2764, 3.4028235e+38
          %v3621 = vsel %vm3379, %v2766, 3.4028235e+38
          %v3622 = vsel %vm3380, %v2287, 3.4028235e+38
          %v3623 = vsel %vm3380, %v2289, 3.4028235e+38
          %v3624 = vsel %vm3380, %v2448, 3.4028235e+38
          %v3625 = vsel %vm3380, %v2450, 3.4028235e+38
          %v3626 = vsel %vm3380, %v2609, 3.4028235e+38
          %v3627 = vsel %vm3380, %v2611, 3.4028235e+38
          %v3628 = vsel %vm3380, %v2770, 3.4028235e+38
          %v3629 = vsel %vm3380, %v2772, 3.4028235e+38
          %v3630 = vsel %vm3381, %v2293, 3.4028235e+38
          %v3631 = vsel %vm3381, %v2295, 3.4028235e+38
          %v3632 = vsel %vm3381, %v2454, 3.4028235e+38
          %v3633 = vsel %vm3381, %v2456, 3.4028235e+38
          %v3634 = vsel %vm3381, %v2615, 3.4028235e+38
          %v3635 = vsel %vm3381, %v2617, 3.4028235e+38
          %v3636 = vsel %vm3381, %v2776, 3.4028235e+38
          %v3637 = vsel %vm3381, %v2778, 3.4028235e+38
          %v3638 = vmax.f32 %v3382, %v3390
          %v3639 = vmax.f32 %v3638, %v3398
          %v3640 = vmax.f32 %v3639, %v3406
          %v3641 = vmax.f32 %v3640, %v3414
          %v3642 = vmax.f32 %v3641, %v3422
          %v3643 = vmax.f32 %v3642, %v3430
          %v3644 = vmax.f32 %v3643, %v3438
          %v3645 = vmax.f32 %v3644, %v3446
          %v3646 = vmax.f32 %v3645, %v3454
          %v3647 = vmax.f32 %v3646, %v3462
          %v3648 = vmax.f32 %v3647, %v3470
          %v3649 = vmax.f32 %v3648, %v3478
          %v3650 = vmax.f32 %v3649, %v3486
          %v3651 = vmax.f32 %v3650, %v3494
          %v3652 = vmax.f32 %v3651, %v3502
          %v3653 = vrot.slane %v3652, 4
          %v3654 = vmax.f32 %v3652, %v3653
          %v3655 = vrot.slane %v3654, 2
          %v3656 = vmax.f32 %v3654, %v3655
          %v3657 = vrot.slane %v3656, 1
          %v3658 = vmax.f32 %v3656, %v3657
          %v3659 = vmax.f32 %v3383, %v3391
          %v3660 = vmax.f32 %v3659, %v3399
          %v3661 = vmax.f32 %v3660, %v3407
          %v3662 = vmax.f32 %v3661, %v3415
          %v3663 = vmax.f32 %v3662, %v3423
          %v3664 = vmax.f32 %v3663, %v3431
          %v3665 = vmax.f32 %v3664, %v3439
          %v3666 = vmax.f32 %v3665, %v3447
          %v3667 = vmax.f32 %v3666, %v3455
          %v3668 = vmax.f32 %v3667, %v3463
          %v3669 = vmax.f32 %v3668, %v3471
          %v3670 = vmax.f32 %v3669, %v3479
          %v3671 = vmax.f32 %v3670, %v3487
          %v3672 = vmax.f32 %v3671, %v3495
          %v3673 = vmax.f32 %v3672, %v3503
          %v3674 = vrot.slane %v3673, 4
          %v3675 = vmax.f32 %v3673, %v3674
          %v3676 = vrot.slane %v3675, 2
          %v3677 = vmax.f32 %v3675, %v3676
          %v3678 = vrot.slane %v3677, 1
          %v3679 = vmax.f32 %v3677, %v3678
          %v3680 = vmax.f32 %v3384, %v3392
          %v3681 = vmax.f32 %v3680, %v3400
          %v3682 = vmax.f32 %v3681, %v3408
          %v3683 = vmax.f32 %v3682, %v3416
          %v3684 = vmax.f32 %v3683, %v3424
          %v3685 = vmax.f32 %v3684, %v3432
          %v3686 = vmax.f32 %v3685, %v3440
          %v3687 = vmax.f32 %v3686, %v3448
          %v3688 = vmax.f32 %v3687, %v3456
          %v3689 = vmax.f32 %v3688, %v3464
          %v3690 = vmax.f32 %v3689, %v3472
          %v3691 = vmax.f32 %v3690, %v3480
          %v3692 = vmax.f32 %v3691, %v3488
          %v3693 = vmax.f32 %v3692, %v3496
          %v3694 = vmax.f32 %v3693, %v3504
          %v3695 = vrot.slane %v3694, 4
          %v3696 = vmax.f32 %v3694, %v3695
          %v3697 = vrot.slane %v3696, 2
          %v3698 = vmax.f32 %v3696, %v3697
          %v3699 = vrot.slane %v3698, 1
          %v3700 = vmax.f32 %v3698, %v3699
          %v3701 = vmax.f32 %v3385, %v3393
          %v3702 = vmax.f32 %v3701, %v3401
          %v3703 = vmax.f32 %v3702, %v3409
          %v3704 = vmax.f32 %v3703, %v3417
          %v3705 = vmax.f32 %v3704, %v3425
          %v3706 = vmax.f32 %v3705, %v3433
          %v3707 = vmax.f32 %v3706, %v3441
          %v3708 = vmax.f32 %v3707, %v3449
          %v3709 = vmax.f32 %v3708, %v3457
          %v3710 = vmax.f32 %v3709, %v3465
          %v3711 = vmax.f32 %v3710, %v3473
          %v3712 = vmax.f32 %v3711, %v3481
          %v3713 = vmax.f32 %v3712, %v3489
          %v3714 = vmax.f32 %v3713, %v3497
          %v3715 = vmax.f32 %v3714, %v3505
          %v3716 = vrot.slane %v3715, 4
          %v3717 = vmax.f32 %v3715, %v3716
          %v3718 = vrot.slane %v3717, 2
          %v3719 = vmax.f32 %v3717, %v3718
          %v3720 = vrot.slane %v3719, 1
          %v3721 = vmax.f32 %v3719, %v3720
          %v3722 = vmax.f32 %v3386, %v3394
          %v3723 = vmax.f32 %v3722, %v3402
          %v3724 = vmax.f32 %v3723, %v3410
          %v3725 = vmax.f32 %v3724, %v3418
          %v3726 = vmax.f32 %v3725, %v3426
          %v3727 = vmax.f32 %v3726, %v3434
          %v3728 = vmax.f32 %v3727, %v3442
          %v3729 = vmax.f32 %v3728, %v3450
          %v3730 = vmax.f32 %v3729, %v3458
          %v3731 = vmax.f32 %v3730, %v3466
          %v3732 = vmax.f32 %v3731, %v3474
          %v3733 = vmax.f32 %v3732, %v3482
          %v3734 = vmax.f32 %v3733, %v3490
          %v3735 = vmax.f32 %v3734, %v3498
          %v3736 = vmax.f32 %v3735, %v3506
          %v3737 = vrot.slane %v3736, 4
          %v3738 = vmax.f32 %v3736, %v3737
          %v3739 = vrot.slane %v3738, 2
          %v3740 = vmax.f32 %v3738, %v3739
          %v3741 = vrot.slane %v3740, 1
          %v3742 = vmax.f32 %v3740, %v3741
          %v3743 = vmax.f32 %v3387, %v3395
          %v3744 = vmax.f32 %v3743, %v3403
          %v3745 = vmax.f32 %v3744, %v3411
          %v3746 = vmax.f32 %v3745, %v3419
          %v3747 = vmax.f32 %v3746, %v3427
          %v3748 = vmax.f32 %v3747, %v3435
          %v3749 = vmax.f32 %v3748, %v3443
          %v3750 = vmax.f32 %v3749, %v3451
          %v3751 = vmax.f32 %v3750, %v3459
          %v3752 = vmax.f32 %v3751, %v3467
          %v3753 = vmax.f32 %v3752, %v3475
          %v3754 = vmax.f32 %v3753, %v3483
          %v3755 = vmax.f32 %v3754, %v3491
          %v3756 = vmax.f32 %v3755, %v3499
          %v3757 = vmax.f32 %v3756, %v3507
          %v3758 = vrot.slane %v3757, 4
          %v3759 = vmax.f32 %v3757, %v3758
          %v3760 = vrot.slane %v3759, 2
          %v3761 = vmax.f32 %v3759, %v3760
          %v3762 = vrot.slane %v3761, 1
          %v3763 = vmax.f32 %v3761, %v3762
          %v3764 = vmax.f32 %v3388, %v3396
          %v3765 = vmax.f32 %v3764, %v3404
          %v3766 = vmax.f32 %v3765, %v3412
          %v3767 = vmax.f32 %v3766, %v3420
          %v3768 = vmax.f32 %v3767, %v3428
          %v3769 = vmax.f32 %v3768, %v3436
          %v3770 = vmax.f32 %v3769, %v3444
          %v3771 = vmax.f32 %v3770, %v3452
          %v3772 = vmax.f32 %v3771, %v3460
          %v3773 = vmax.f32 %v3772, %v3468
          %v3774 = vmax.f32 %v3773, %v3476
          %v3775 = vmax.f32 %v3774, %v3484
          %v3776 = vmax.f32 %v3775, %v3492
          %v3777 = vmax.f32 %v3776, %v3500
          %v3778 = vmax.f32 %v3777, %v3508
          %v3779 = vrot.slane %v3778, 4
          %v3780 = vmax.f32 %v3778, %v3779
          %v3781 = vrot.slane %v3780, 2
          %v3782 = vmax.f32 %v3780, %v3781
          %v3783 = vrot.slane %v3782, 1
          %v3784 = vmax.f32 %v3782, %v3783
          %v3785 = vmax.f32 %v3389, %v3397
          %v3786 = vmax.f32 %v3785, %v3405
          %v3787 = vmax.f32 %v3786, %v3413
          %v3788 = vmax.f32 %v3787, %v3421
          %v3789 = vmax.f32 %v3788, %v3429
          %v3790 = vmax.f32 %v3789, %v3437
          %v3791 = vmax.f32 %v3790, %v3445
          %v3792 = vmax.f32 %v3791, %v3453
          %v3793 = vmax.f32 %v3792, %v3461
          %v3794 = vmax.f32 %v3793, %v3469
          %v3795 = vmax.f32 %v3794, %v3477
          %v3796 = vmax.f32 %v3795, %v3485
          %v3797 = vmax.f32 %v3796, %v3493
          %v3798 = vmax.f32 %v3797, %v3501
          %v3799 = vmax.f32 %v3798, %v3509
          %v3800 = vrot.slane %v3799, 4
          %v3801 = vmax.f32 %v3799, %v3800
          %v3802 = vrot.slane %v3801, 2
          %v3803 = vmax.f32 %v3801, %v3802
          %v3804 = vrot.slane %v3803, 1
          %v3805 = vmax.f32 %v3803, %v3804
          %v3806 = vmin.f32 %v3510, %v3518
          %v3807 = vmin.f32 %v3806, %v3526
          %v3808 = vmin.f32 %v3807, %v3534
          %v3809 = vmin.f32 %v3808, %v3542
          %v3810 = vmin.f32 %v3809, %v3550
          %v3811 = vmin.f32 %v3810, %v3558
          %v3812 = vmin.f32 %v3811, %v3566
          %v3813 = vmin.f32 %v3812, %v3574
          %v3814 = vmin.f32 %v3813, %v3582
          %v3815 = vmin.f32 %v3814, %v3590
          %v3816 = vmin.f32 %v3815, %v3598
          %v3817 = vmin.f32 %v3816, %v3606
          %v3818 = vmin.f32 %v3817, %v3614
          %v3819 = vmin.f32 %v3818, %v3622
          %v3820 = vmin.f32 %v3819, %v3630
          %v3821 = vrot.slane %v3820, 4
          %v3822 = vmin.f32 %v3820, %v3821
          %v3823 = vrot.slane %v3822, 2
          %v3824 = vmin.f32 %v3822, %v3823
          %v3825 = vrot.slane %v3824, 1
          %v3826 = vmin.f32 %v3824, %v3825
          %v3827 = vmin.f32 %v3511, %v3519
          %v3828 = vmin.f32 %v3827, %v3527
          %v3829 = vmin.f32 %v3828, %v3535
          %v3830 = vmin.f32 %v3829, %v3543
          %v3831 = vmin.f32 %v3830, %v3551
          %v3832 = vmin.f32 %v3831, %v3559
          %v3833 = vmin.f32 %v3832, %v3567
          %v3834 = vmin.f32 %v3833, %v3575
          %v3835 = vmin.f32 %v3834, %v3583
          %v3836 = vmin.f32 %v3835, %v3591
          %v3837 = vmin.f32 %v3836, %v3599
          %v3838 = vmin.f32 %v3837, %v3607
          %v3839 = vmin.f32 %v3838, %v3615
          %v3840 = vmin.f32 %v3839, %v3623
          %v3841 = vmin.f32 %v3840, %v3631
          %v3842 = vrot.slane %v3841, 4
          %v3843 = vmin.f32 %v3841, %v3842
          %v3844 = vrot.slane %v3843, 2
          %v3845 = vmin.f32 %v3843, %v3844
          %v3846 = vrot.slane %v3845, 1
          %v3847 = vmin.f32 %v3845, %v3846
          %v3848 = vmin.f32 %v3512, %v3520
          %v3849 = vmin.f32 %v3848, %v3528
          %v3850 = vmin.f32 %v3849, %v3536
          %v3851 = vmin.f32 %v3850, %v3544
          %v3852 = vmin.f32 %v3851, %v3552
          %v3853 = vmin.f32 %v3852, %v3560
          %v3854 = vmin.f32 %v3853, %v3568
          %v3855 = vmin.f32 %v3854, %v3576
          %v3856 = vmin.f32 %v3855, %v3584
          %v3857 = vmin.f32 %v3856, %v3592
          %v3858 = vmin.f32 %v3857, %v3600
          %v3859 = vmin.f32 %v3858, %v3608
          %v3860 = vmin.f32 %v3859, %v3616
          %v3861 = vmin.f32 %v3860, %v3624
          %v3862 = vmin.f32 %v3861, %v3632
          %v3863 = vrot.slane %v3862, 4
          %v3864 = vmin.f32 %v3862, %v3863
          %v3865 = vrot.slane %v3864, 2
          %v3866 = vmin.f32 %v3864, %v3865
          %v3867 = vrot.slane %v3866, 1
          %v3868 = vmin.f32 %v3866, %v3867
          %v3869 = vmin.f32 %v3513, %v3521
          %v3870 = vmin.f32 %v3869, %v3529
          %v3871 = vmin.f32 %v3870, %v3537
          %v3872 = vmin.f32 %v3871, %v3545
          %v3873 = vmin.f32 %v3872, %v3553
          %v3874 = vmin.f32 %v3873, %v3561
          %v3875 = vmin.f32 %v3874, %v3569
          %v3876 = vmin.f32 %v3875, %v3577
          %v3877 = vmin.f32 %v3876, %v3585
          %v3878 = vmin.f32 %v3877, %v3593
          %v3879 = vmin.f32 %v3878, %v3601
          %v3880 = vmin.f32 %v3879, %v3609
          %v3881 = vmin.f32 %v3880, %v3617
          %v3882 = vmin.f32 %v3881, %v3625
          %v3883 = vmin.f32 %v3882, %v3633
          %v3884 = vrot.slane %v3883, 4
          %v3885 = vmin.f32 %v3883, %v3884
          %v3886 = vrot.slane %v3885, 2
          %v3887 = vmin.f32 %v3885, %v3886
          %v3888 = vrot.slane %v3887, 1
          %v3889 = vmin.f32 %v3887, %v3888
          %v3890 = vmin.f32 %v3514, %v3522
          %v3891 = vmin.f32 %v3890, %v3530
          %v3892 = vmin.f32 %v3891, %v3538
          %v3893 = vmin.f32 %v3892, %v3546
          %v3894 = vmin.f32 %v3893, %v3554
          %v3895 = vmin.f32 %v3894, %v3562
          %v3896 = vmin.f32 %v3895, %v3570
          %v3897 = vmin.f32 %v3896, %v3578
          %v3898 = vmin.f32 %v3897, %v3586
          %v3899 = vmin.f32 %v3898, %v3594
          %v3900 = vmin.f32 %v3899, %v3602
          %v3901 = vmin.f32 %v3900, %v3610
          %v3902 = vmin.f32 %v3901, %v3618
          %v3903 = vmin.f32 %v3902, %v3626
          %v3904 = vmin.f32 %v3903, %v3634
          %v3905 = vrot.slane %v3904, 4
          %v3906 = vmin.f32 %v3904, %v3905
          %v3907 = vrot.slane %v3906, 2
          %v3908 = vmin.f32 %v3906, %v3907
          %v3909 = vrot.slane %v3908, 1
          %v3910 = vmin.f32 %v3908, %v3909
          %v3911 = vmin.f32 %v3515, %v3523
          %v3912 = vmin.f32 %v3911, %v3531
          %v3913 = vmin.f32 %v3912, %v3539
          %v3914 = vmin.f32 %v3913, %v3547
          %v3915 = vmin.f32 %v3914, %v3555
          %v3916 = vmin.f32 %v3915, %v3563
          %v3917 = vmin.f32 %v3916, %v3571
          %v3918 = vmin.f32 %v3917, %v3579
          %v3919 = vmin.f32 %v3918, %v3587
          %v3920 = vmin.f32 %v3919, %v3595
          %v3921 = vmin.f32 %v3920, %v3603
          %v3922 = vmin.f32 %v3921, %v3611
          %v3923 = vmin.f32 %v3922, %v3619
          %v3924 = vmin.f32 %v3923, %v3627
          %v3925 = vmin.f32 %v3924, %v3635
          %v3926 = vrot.slane %v3925, 4
          %v3927 = vmin.f32 %v3925, %v3926
          %v3928 = vrot.slane %v3927, 2
          %v3929 = vmin.f32 %v3927, %v3928
          %v3930 = vrot.slane %v3929, 1
          %v3931 = vmin.f32 %v3929, %v3930
          %v3932 = vmin.f32 %v3516, %v3524
          %v3933 = vmin.f32 %v3932, %v3532
          %v3934 = vmin.f32 %v3933, %v3540
          %v3935 = vmin.f32 %v3934, %v3548
          %v3936 = vmin.f32 %v3935, %v3556
          %v3937 = vmin.f32 %v3936, %v3564
          %v3938 = vmin.f32 %v3937, %v3572
          %v3939 = vmin.f32 %v3938, %v3580
          %v3940 = vmin.f32 %v3939, %v3588
          %v3941 = vmin.f32 %v3940, %v3596
          %v3942 = vmin.f32 %v3941, %v3604
          %v3943 = vmin.f32 %v3942, %v3612
          %v3944 = vmin.f32 %v3943, %v3620
          %v3945 = vmin.f32 %v3944, %v3628
          %v3946 = vmin.f32 %v3945, %v3636
          %v3947 = vrot.slane %v3946, 4
          %v3948 = vmin.f32 %v3946, %v3947
          %v3949 = vrot.slane %v3948, 2
          %v3950 = vmin.f32 %v3948, %v3949
          %v3951 = vrot.slane %v3950, 1
          %v3952 = vmin.f32 %v3950, %v3951
          %v3953 = vmin.f32 %v3517, %v3525
          %v3954 = vmin.f32 %v3953, %v3533
          %v3955 = vmin.f32 %v3954, %v3541
          %v3956 = vmin.f32 %v3955, %v3549
          %v3957 = vmin.f32 %v3956, %v3557
          %v3958 = vmin.f32 %v3957, %v3565
          %v3959 = vmin.f32 %v3958, %v3573
          %v3960 = vmin.f32 %v3959, %v3581
          %v3961 = vmin.f32 %v3960, %v3589
          %v3962 = vmin.f32 %v3961, %v3597
          %v3963 = vmin.f32 %v3962, %v3605
          %v3964 = vmin.f32 %v3963, %v3613
          %v3965 = vmin.f32 %v3964, %v3621
          %v3966 = vmin.f32 %v3965, %v3629
          %v3967 = vmin.f32 %v3966, %v3637
          %v3968 = vrot.slane %v3967, 4
          %v3969 = vmin.f32 %v3967, %v3968
          %v3970 = vrot.slane %v3969, 2
          %v3971 = vmin.f32 %v3969, %v3970
          %v3972 = vrot.slane %v3971, 1
          %v3973 = vmin.f32 %v3971, %v3972
          %v3974 = vstv %s42
          %vm3975 = vcmp.eq.s32.totalorder %v761, %v3974
          %v3976 = vld [vmem:[#allocation8] sm:$0xff]
          %v3977 = vld [vmem:[#allocation8 + $0x8] sm:$0xff]
          %v3978 = vld [vmem:[#allocation8 + $0x10] sm:$0xff]
          %v3979 = vld [vmem:[#allocation8 + $0x18] sm:$0xff]
          %v3980 = vld [vmem:[#allocation8 + $0x20] sm:$0xff]
          %v3981 = vld [vmem:[#allocation8 + $0x28] sm:$0xff]
          %v3982 = vld [vmem:[#allocation8 + $0x30] sm:$0xff]
          %v3983 = vld [vmem:[#allocation8 + $0x38] sm:$0xff]
          %v3984 = vmax.f32 %v3976, %v3658
          %v3985 = vmax.f32 %v3977, %v3679
          %v3986 = vmax.f32 %v3978, %v3700
          %v3987 = vmax.f32 %v3979, %v3721
          %v3988 = vmax.f32 %v3980, %v3742
          %v3989 = vmax.f32 %v3981, %v3763
          %v3990 = vmax.f32 %v3982, %v3784
          %v3991 = vmax.f32 %v3983, %v3805
          %v3992 = vsel %vm3975, 1, 0
          %vm3993 = vcmp.eq.s32.totalorder %v3992, 1
          %v3994 = vsel %vm3993, %v3984, %v3976
          %v3995 = vsel %vm3993, %v3985, %v3977
          %v3996 = vsel %vm3993, %v3986, %v3978
          %v3997 = vsel %vm3993, %v3987, %v3979
          %v3998 = vsel %vm3993, %v3988, %v3980
          %v3999 = vsel %vm3993, %v3989, %v3981
          %v4000 = vsel %vm3993, %v3990, %v3982
          %v4001 = vsel %vm3993, %v3991, %v3983
          %4002 = vst [vmem:[#allocation8] sm:$0xff] %v3994
          %4003 = vst [vmem:[#allocation8 + $0x8] sm:$0xff] %v3995
          %4004 = vst [vmem:[#allocation8 + $0x10] sm:$0xff] %v3996
          %4005 = vst [vmem:[#allocation8 + $0x18] sm:$0xff] %v3997
          %4006 = vst [vmem:[#allocation8 + $0x20] sm:$0xff] %v3998
          %4007 = vst [vmem:[#allocation8 + $0x28] sm:$0xff] %v3999
          %4008 = vst [vmem:[#allocation8 + $0x30] sm:$0xff] %v4000
          %4009 = vst [vmem:[#allocation8 + $0x38] sm:$0xff] %v4001
          %v4010 = vld [vmem:[#allocation9] sm:$0xff]
          %v4011 = vld [vmem:[#allocation9 + $0x8] sm:$0xff]
          %v4012 = vld [vmem:[#allocation9 + $0x10] sm:$0xff]
          %v4013 = vld [vmem:[#allocation9 + $0x18] sm:$0xff]
          %v4014 = vld [vmem:[#allocation9 + $0x20] sm:$0xff]
          %v4015 = vld [vmem:[#allocation9 + $0x28] sm:$0xff]
          %v4016 = vld [vmem:[#allocation9 + $0x30] sm:$0xff]
          %v4017 = vld [vmem:[#allocation9 + $0x38] sm:$0xff]
          %v4018 = vmin.f32 %v4010, %v3826
          %v4019 = vmin.f32 %v4011, %v3847
          %v4020 = vmin.f32 %v4012, %v3868
          %v4021 = vmin.f32 %v4013, %v3889
          %v4022 = vmin.f32 %v4014, %v3910
          %v4023 = vmin.f32 %v4015, %v3931
          %v4024 = vmin.f32 %v4016, %v3952
          %v4025 = vmin.f32 %v4017, %v3973
          %v4026 = vsel %vm3993, %v4018, %v4010
          %v4027 = vsel %vm3993, %v4019, %v4011
          %v4028 = vsel %vm3993, %v4020, %v4012
          %v4029 = vsel %vm3993, %v4021, %v4013
          %v4030 = vsel %vm3993, %v4022, %v4014
          %v4031 = vsel %vm3993, %v4023, %v4015
          %v4032 = vsel %vm3993, %v4024, %v4016
          %v4033 = vsel %vm3993, %v4025, %v4017
          %4034 = vst [vmem:[#allocation9] sm:$0xff] %v4026
          %4035 = vst [vmem:[#allocation9 + $0x8] sm:$0xff] %v4027
          %4036 = vst [vmem:[#allocation9 + $0x10] sm:$0xff] %v4028
          %4037 = vst [vmem:[#allocation9 + $0x18] sm:$0xff] %v4029
          %4038 = vst [vmem:[#allocation9 + $0x20] sm:$0xff] %v4030
          %4039 = vst [vmem:[#allocation9 + $0x28] sm:$0xff] %v4031
          %4040 = vst [vmem:[#allocation9 + $0x30] sm:$0xff] %v4032
          %4041 = vst [vmem:[#allocation9 + $0x38] sm:$0xff] %v4033
        $region156: #{encoder_bn_forward.1} parent=83 // pred_fallthru
          _
        %p4042 = scmp.eq.s32.totalorder %s42, 1
        %p4043 = pnand %p1638, %p4042
        %p4044 = pneg %p4043
        %p4045 = scmp.eq.s32.totalorder %s43, 1
        %p4046 = pnand %p4044, %p4045
        %p4047 = pneg %p4046
        // Predicated region
        $region157: #{encoder_bn_forward.1} parent=83 // pred_check
          _
        $region158: #{encoder_bn_forward.1} parent=83 // pred_check_branch
          %4049 = sbr.rel (%p4046) target = $region160
        $region159: #{encoder_bn_forward.1} parent=83 // pred_region
          %v4050 = vld [vmem:[#allocation6] sm:$0xff]
          %v4051 = vmul.f32 %v4050, 0.0025
          %v4052 = vld [vmem:[#allocation7] sm:$0xff]
          %v4053 = vmul.f32 %v4052, 0.0025
          %v4054 = vmul.f32 %v4051, %v4051
          %v4055 = vsub.f32 %v4053, %v4054
          %v4056 = vmax.f32 %v4055, 0.0
          %v4057 = vld [vmem:[#allocation21] sm:$0xff]
          %v4058 = vadd.f32 %v4056, 1e-05
          %v4059 = vrsqrt.pop %v4058
          %v4060 = vmul.f32 %v4057, %v4059
          %v4061 = vld [vmem:[#allocation22] sm:$0xff]
          %v4062 = vmul.f32 %v4051, %v4060
          %v4063 = vsub.f32 %v4061, %v4062
          %vm4064 = vcmp.gt.f32.partialorder %v4060, 0.0
          %v4065 = vld [vmem:[#allocation8] sm:$0xff]
          %v4066 = vld [vmem:[#allocation8 + $0x8] sm:$0xff]
          %v4067 = vld [vmem:[#allocation8 + $0x10] sm:$0xff]
          %v4068 = vld [vmem:[#allocation8 + $0x18] sm:$0xff]
          %v4069 = vld [vmem:[#allocation8 + $0x20] sm:$0xff]
          %v4070 = vld [vmem:[#allocation8 + $0x28] sm:$0xff]
          %v4071 = vld [vmem:[#allocation8 + $0x30] sm:$0xff]
          %v4072 = vld [vmem:[#allocation8 + $0x38] sm:$0xff]
          %v4074 = vlaneseq
          %v4075 = vshrl.u32 %v4074, 7
          %v4076 = vsub.s32 0, %v4075
          %v4077 = vrot.slane %v4060, %v4076
          %v4078 = vlaneseq
          %v4079 = vshrl.u32 %v4078, 7
          %v4080 = vsub.s32 1, %v4079
          %v4081 = vrot.slane %v4060, %v4080
          %v4082 = vlaneseq
          %v4083 = vshrl.u32 %v4082, 7
          %v4084 = vsub.s32 2, %v4083
          %v4085 = vrot.slane %v4060, %v4084
          %v4086 = vlaneseq
          %v4087 = vshrl.u32 %v4086, 7
          %v4088 = vsub.s32 3, %v4087
          %v4089 = vrot.slane %v4060, %v4088
          %v4090 = vlaneseq
          %v4091 = vshrl.u32 %v4090, 7
          %v4092 = vsub.s32 4, %v4091
          %v4093 = vrot.slane %v4060, %v4092
          %v4094 = vlaneseq
          %v4095 = vshrl.u32 %v4094, 7
          %v4096 = vsub.s32 5, %v4095
          %v4097 = vrot.slane %v4060, %v4096
          %v4098 = vlaneseq
          %v4099 = vshrl.u32 %v4098, 7
          %v4100 = vsub.s32 6, %v4099
          %v4101 = vrot.slane %v4060, %v4100
          %v4102 = vlaneseq
          %v4103 = vshrl.u32 %v4102, 7
          %v4104 = vsub.s32 7, %v4103
          %v4105 = vrot.slane %v4060, %v4104
          %v4114 = vmul.f32 %v4077, %v4065
          %v4115 = vmul.f32 %v4081, %v4066
          %v4116 = vmul.f32 %v4085, %v4067
          %v4117 = vmul.f32 %v4089, %v4068
          %v4118 = vmul.f32 %v4093, %v4069
          %v4119 = vmul.f32 %v4097, %v4070
          %v4120 = vmul.f32 %v4101, %v4071
          %v4121 = vmul.f32 %v4105, %v4072
          %v4123 = vlaneseq
          %v4124 = vshrl.u32 %v4123, 7
          %v4125 = vsub.s32 0, %v4124
          %v4126 = vrot.slane %v4063, %v4125
          %v4127 = vlaneseq
          %v4128 = vshrl.u32 %v4127, 7
          %v4129 = vsub.s32 1, %v4128
          %v4130 = vrot.slane %v4063, %v4129
          %v4131 = vlaneseq
          %v4132 = vshrl.u32 %v4131, 7
          %v4133 = vsub.s32 2, %v4132
          %v4134 = vrot.slane %v4063, %v4133
          %v4135 = vlaneseq
          %v4136 = vshrl.u32 %v4135, 7
          %v4137 = vsub.s32 3, %v4136
          %v4138 = vrot.slane %v4063, %v4137
          %v4139 = vlaneseq
          %v4140 = vshrl.u32 %v4139, 7
          %v4141 = vsub.s32 4, %v4140
          %v4142 = vrot.slane %v4063, %v4141
          %v4143 = vlaneseq
          %v4144 = vshrl.u32 %v4143, 7
          %v4145 = vsub.s32 5, %v4144
          %v4146 = vrot.slane %v4063, %v4145
          %v4147 = vlaneseq
          %v4148 = vshrl.u32 %v4147, 7
          %v4149 = vsub.s32 6, %v4148
          %v4150 = vrot.slane %v4063, %v4149
          %v4151 = vlaneseq
          %v4152 = vshrl.u32 %v4151, 7
          %v4153 = vsub.s32 7, %v4152
          %v4154 = vrot.slane %v4063, %v4153
          %v4163 = vadd.f32 %v4114, %v4126
          %v4164 = vadd.f32 %v4115, %v4130
          %v4165 = vadd.f32 %v4116, %v4134
          %v4166 = vadd.f32 %v4117, %v4138
          %v4167 = vadd.f32 %v4118, %v4142
          %v4168 = vadd.f32 %v4119, %v4146
          %v4169 = vadd.f32 %v4120, %v4150
          %v4170 = vadd.f32 %v4121, %v4154
          %v4171 = vld [vmem:[#allocation9] sm:$0xff]
          %v4172 = vld [vmem:[#allocation9 + $0x8] sm:$0xff]
          %v4173 = vld [vmem:[#allocation9 + $0x10] sm:$0xff]
          %v4174 = vld [vmem:[#allocation9 + $0x18] sm:$0xff]
          %v4175 = vld [vmem:[#allocation9 + $0x20] sm:$0xff]
          %v4176 = vld [vmem:[#allocation9 + $0x28] sm:$0xff]
          %v4177 = vld [vmem:[#allocation9 + $0x30] sm:$0xff]
          %v4178 = vld [vmem:[#allocation9 + $0x38] sm:$0xff]
          %v4179 = vmul.f32 %v4077, %v4171
          %v4180 = vmul.f32 %v4081, %v4172
          %v4181 = vmul.f32 %v4085, %v4173
          %v4182 = vmul.f32 %v4089, %v4174
          %v4183 = vmul.f32 %v4093, %v4175
          %v4184 = vmul.f32 %v4097, %v4176
          %v4185 = vmul.f32 %v4101, %v4177
          %v4186 = vmul.f32 %v4105, %v4178
          %v4187 = vadd.f32 %v4179, %v4126
          %v4188 = vadd.f32 %v4180, %v4130
          %v4189 = vadd.f32 %v4181, %v4134
          %v4190 = vadd.f32 %v4182, %v4138
          %v4191 = vadd.f32 %v4183, %v4142
          %v4192 = vadd.f32 %v4184, %v4146
          %v4193 = vadd.f32 %v4185, %v4150
          %v4194 = vadd.f32 %v4186, %v4154
          %v4195 = vsel %vm4064, 1, 0
          %v4196 = vlaneseq
          %v4197 = vshrl.u32 %v4196, 7
          %v4198 = vsub.s32 0, %v4197
          %v4199 = vrot.slane %v4195, %v4198
          %v4200 = vlaneseq
          %v4201 = vshrl.u32 %v4200, 7
          %v4202 = vsub.s32 1, %v4201
          %v4203 = vrot.slane %v4195, %v4202
          %v4204 = vlaneseq
          %v4205 = vshrl.u32 %v4204, 7
          %v4206 = vsub.s32 2, %v4205
          %v4207 = vrot.slane %v4195, %v4206
          %v4208 = vlaneseq
          %v4209 = vshrl.u32 %v4208, 7
          %v4210 = vsub.s32 3, %v4209
          %v4211 = vrot.slane %v4195, %v4210
          %v4212 = vlaneseq
          %v4213 = vshrl.u32 %v4212, 7
          %v4214 = vsub.s32 4, %v4213
          %v4215 = vrot.slane %v4195, %v4214
          %v4216 = vlaneseq
          %v4217 = vshrl.u32 %v4216, 7
          %v4218 = vsub.s32 5, %v4217
          %v4219 = vrot.slane %v4195, %v4218
          %v4220 = vlaneseq
          %v4221 = vshrl.u32 %v4220, 7
          %v4222 = vsub.s32 6, %v4221
          %v4223 = vrot.slane %v4195, %v4222
          %v4224 = vlaneseq
          %v4225 = vshrl.u32 %v4224, 7
          %v4226 = vsub.s32 7, %v4225
          %v4227 = vrot.slane %v4195, %v4226
          %vm4228 = vcmp.eq.s32.totalorder %v4199, 1
          %vm4229 = vcmp.eq.s32.totalorder %v4203, 1
          %vm4230 = vcmp.eq.s32.totalorder %v4207, 1
          %vm4231 = vcmp.eq.s32.totalorder %v4211, 1
          %vm4232 = vcmp.eq.s32.totalorder %v4215, 1
          %vm4233 = vcmp.eq.s32.totalorder %v4219, 1
          %vm4234 = vcmp.eq.s32.totalorder %v4223, 1
          %vm4235 = vcmp.eq.s32.totalorder %v4227, 1
          %v4236 = vsel %vm4228, %v4163, %v4187
          %v4237 = vsel %vm4229, %v4164, %v4188
          %v4238 = vsel %vm4230, %v4165, %v4189
          %v4239 = vsel %vm4231, %v4166, %v4190
          %v4240 = vsel %vm4232, %v4167, %v4191
          %v4241 = vsel %vm4233, %v4168, %v4192
          %v4242 = vsel %vm4234, %v4169, %v4193
          %v4243 = vsel %vm4235, %v4170, %v4194
          %v4244 = vmax.f32 %v4236, 0.0
          %v4245 = vmax.f32 %v4237, 0.0
          %v4246 = vmax.f32 %v4238, 0.0
          %v4247 = vmax.f32 %v4239, 0.0
          %v4248 = vmax.f32 %v4240, 0.0
          %v4249 = vmax.f32 %v4241, 0.0
          %v4250 = vmax.f32 %v4242, 0.0
          %v4251 = vmax.f32 %v4243, 0.0
          %v4252 = vld [vmem:[#allocation24] sm:$0xff]
          %v4253 = vld [vmem:[#allocation24 + $0x8] sm:$0xff]
          %v4254 = vld [vmem:[#allocation24 + $0x10] sm:$0xff]
          %v4255 = vld [vmem:[#allocation24 + $0x18] sm:$0xff]
          %v4256 = vld [vmem:[#allocation24 + $0x20] sm:$0xff]
          %v4257 = vld [vmem:[#allocation24 + $0x28] sm:$0xff]
          %v4258 = vld [vmem:[#allocation24 + $0x30] sm:$0xff]
          %v4259 = vld [vmem:[#allocation24 + $0x38] sm:$0xff]
          %v4260 = vld [vmem:[#allocation24 + $0x40] sm:$0xff]
          %v4261 = vld [vmem:[#allocation24 + $0x48] sm:$0xff]
          %v4262 = vld [vmem:[#allocation24 + $0x50] sm:$0xff]
          %v4263 = vld [vmem:[#allocation24 + $0x58] sm:$0xff]
          %v4264 = vld [vmem:[#allocation24 + $0x60] sm:$0xff]
          %v4265 = vld [vmem:[#allocation24 + $0x68] sm:$0xff]
          %v4266 = vld [vmem:[#allocation24 + $0x70] sm:$0xff]
          %v4267 = vld [vmem:[#allocation24 + $0x78] sm:$0xff]
          %v4268 = vld [vmem:[#allocation24 + $0x80] sm:$0xff]
          %v4269 = vld [vmem:[#allocation24 + $0x88] sm:$0xff]
          %v4270 = vld [vmem:[#allocation24 + $0x90] sm:$0xff]
          %v4271 = vld [vmem:[#allocation24 + $0x98] sm:$0xff]
          %v4272 = vld [vmem:[#allocation24 + $0xa0] sm:$0xff]
          %v4273 = vld [vmem:[#allocation24 + $0xa8] sm:$0xff]
          %v4274 = vld [vmem:[#allocation24 + $0xb0] sm:$0xff]
          %v4275 = vld [vmem:[#allocation24 + $0xb8] sm:$0xff]
          %v4276 = vld [vmem:[#allocation24 + $0xc0] sm:$0xff]
          %v4277 = vld [vmem:[#allocation24 + $0xc8] sm:$0xff]
          %v4278 = vld [vmem:[#allocation24 + $0xd0] sm:$0xff]
          %v4279 = vld [vmem:[#allocation24 + $0xd8] sm:$0xff]
          %v4280 = vld [vmem:[#allocation24 + $0xe0] sm:$0xff]
          %v4281 = vld [vmem:[#allocation24 + $0xe8] sm:$0xff]
          %v4282 = vld [vmem:[#allocation24 + $0xf0] sm:$0xff]
          %v4283 = vld [vmem:[#allocation24 + $0xf8] sm:$0xff]
          %v4284 = vld [vmem:[#allocation24 + $0x100] sm:$0xff]
          %v4285 = vld [vmem:[#allocation24 + $0x108] sm:$0xff]
          %v4286 = vld [vmem:[#allocation24 + $0x110] sm:$0xff]
          %v4287 = vld [vmem:[#allocation24 + $0x118] sm:$0xff]
          %v4288 = vld [vmem:[#allocation24 + $0x120] sm:$0xff]
          %v4289 = vld [vmem:[#allocation24 + $0x128] sm:$0xff]
          %v4290 = vld [vmem:[#allocation24 + $0x130] sm:$0xff]
          %v4291 = vld [vmem:[#allocation24 + $0x138] sm:$0xff]
          %v4292 = vld [vmem:[#allocation24 + $0x140] sm:$0xff]
          %v4293 = vld [vmem:[#allocation24 + $0x148] sm:$0xff]
          %v4294 = vld [vmem:[#allocation24 + $0x150] sm:$0xff]
          %v4295 = vld [vmem:[#allocation24 + $0x158] sm:$0xff]
          %v4296 = vld [vmem:[#allocation24 + $0x160] sm:$0xff]
          %v4297 = vld [vmem:[#allocation24 + $0x168] sm:$0xff]
          %v4298 = vld [vmem:[#allocation24 + $0x170] sm:$0xff]
          %v4299 = vld [vmem:[#allocation24 + $0x178] sm:$0xff]
          %v4300 = vld [vmem:[#allocation24 + $0x180] sm:$0xff]
          %v4301 = vld [vmem:[#allocation24 + $0x188] sm:$0xff]
          %v4302 = vld [vmem:[#allocation24 + $0x190] sm:$0xff]
          %v4303 = vld [vmem:[#allocation24 + $0x198] sm:$0xff]
          %v4304 = vld [vmem:[#allocation24 + $0x1a0] sm:$0xff]
          %v4305 = vld [vmem:[#allocation24 + $0x1a8] sm:$0xff]
          %v4306 = vld [vmem:[#allocation24 + $0x1b0] sm:$0xff]
          %v4307 = vld [vmem:[#allocation24 + $0x1b8] sm:$0xff]
          %v4308 = vld [vmem:[#allocation24 + $0x1c0] sm:$0xff]
          %v4309 = vld [vmem:[#allocation24 + $0x1c8] sm:$0xff]
          %v4310 = vld [vmem:[#allocation24 + $0x1d0] sm:$0xff]
          %v4311 = vld [vmem:[#allocation24 + $0x1d8] sm:$0xff]
          %v4312 = vld [vmem:[#allocation24 + $0x1e0] sm:$0xff]
          %v4313 = vld [vmem:[#allocation24 + $0x1e8] sm:$0xff]
          %v4314 = vld [vmem:[#allocation24 + $0x1f0] sm:$0xff]
          %v4315 = vld [vmem:[#allocation24 + $0x1f8] sm:$0xff]
          %v4316 = vld [vmem:[#allocation24 + $0x200] sm:$0xff]
          %v4317 = vld [vmem:[#allocation24 + $0x208] sm:$0xff]
          %v4318 = vld [vmem:[#allocation24 + $0x210] sm:$0xff]
          %v4319 = vld [vmem:[#allocation24 + $0x218] sm:$0xff]
          %v4320 = vld [vmem:[#allocation24 + $0x220] sm:$0xff]
          %v4321 = vld [vmem:[#allocation24 + $0x228] sm:$0xff]
          %v4322 = vld [vmem:[#allocation24 + $0x230] sm:$0xff]
          %v4323 = vld [vmem:[#allocation24 + $0x238] sm:$0xff]
          %v4324 = vld [vmem:[#allocation24 + $0x240] sm:$0xff]
          %v4325 = vld [vmem:[#allocation24 + $0x248] sm:$0xff]
          %v4326 = vld [vmem:[#allocation24 + $0x250] sm:$0xff]
          %v4327 = vld [vmem:[#allocation24 + $0x258] sm:$0xff]
          %v4328 = vld [vmem:[#allocation24 + $0x260] sm:$0xff]
          %v4329 = vld [vmem:[#allocation24 + $0x268] sm:$0xff]
          %v4330 = vld [vmem:[#allocation24 + $0x270] sm:$0xff]
          %v4331 = vld [vmem:[#allocation24 + $0x278] sm:$0xff]
          %v4332 = vld [vmem:[#allocation24 + $0x280] sm:$0xff]
          %v4333 = vld [vmem:[#allocation24 + $0x288] sm:$0xff]
          %v4334 = vld [vmem:[#allocation24 + $0x290] sm:$0xff]
          %v4335 = vld [vmem:[#allocation24 + $0x298] sm:$0xff]
          %v4336 = vld [vmem:[#allocation24 + $0x2a0] sm:$0xff]
          %v4337 = vld [vmem:[#allocation24 + $0x2a8] sm:$0xff]
          %v4338 = vld [vmem:[#allocation24 + $0x2b0] sm:$0xff]
          %v4339 = vld [vmem:[#allocation24 + $0x2b8] sm:$0xff]
          %v4340 = vld [vmem:[#allocation24 + $0x2c0] sm:$0xff]
          %v4341 = vld [vmem:[#allocation24 + $0x2c8] sm:$0xff]
          %v4342 = vld [vmem:[#allocation24 + $0x2d0] sm:$0xff]
          %v4343 = vld [vmem:[#allocation24 + $0x2d8] sm:$0xff]
          %v4344 = vld [vmem:[#allocation24 + $0x2e0] sm:$0xff]
          %v4345 = vld [vmem:[#allocation24 + $0x2e8] sm:$0xff]
          %v4346 = vld [vmem:[#allocation24 + $0x2f0] sm:$0xff]
          %v4347 = vld [vmem:[#allocation24 + $0x2f8] sm:$0xff]
          %v4348 = vld [vmem:[#allocation24 + $0x300] sm:$0xff]
          %v4349 = vld [vmem:[#allocation24 + $0x308] sm:$0xff]
          %v4350 = vld [vmem:[#allocation24 + $0x310] sm:$0xff]
          %v4351 = vld [vmem:[#allocation24 + $0x318] sm:$0xff]
          %v4352 = vld [vmem:[#allocation24 + $0x320] sm:$0xff]
          %v4353 = vld [vmem:[#allocation24 + $0x328] sm:$0xff]
          %v4354 = vld [vmem:[#allocation24 + $0x330] sm:$0xff]
          %v4355 = vld [vmem:[#allocation24 + $0x338] sm:$0xff]
          %v4356 = vld [vmem:[#allocation24 + $0x340] sm:$0xff]
          %v4357 = vld [vmem:[#allocation24 + $0x348] sm:$0xff]
          %v4358 = vld [vmem:[#allocation24 + $0x350] sm:$0xff]
          %v4359 = vld [vmem:[#allocation24 + $0x358] sm:$0xff]
          %v4360 = vld [vmem:[#allocation24 + $0x360] sm:$0xff]
          %v4361 = vld [vmem:[#allocation24 + $0x368] sm:$0xff]
          %v4362 = vld [vmem:[#allocation24 + $0x370] sm:$0xff]
          %v4363 = vld [vmem:[#allocation24 + $0x378] sm:$0xff]
          %v4364 = vld [vmem:[#allocation24 + $0x380] sm:$0xff]
          %v4365 = vld [vmem:[#allocation24 + $0x388] sm:$0xff]
          %v4366 = vld [vmem:[#allocation24 + $0x390] sm:$0xff]
          %v4367 = vld [vmem:[#allocation24 + $0x398] sm:$0xff]
          %v4368 = vld [vmem:[#allocation24 + $0x3a0] sm:$0xff]
          %v4369 = vld [vmem:[#allocation24 + $0x3a8] sm:$0xff]
          %v4370 = vld [vmem:[#allocation24 + $0x3b0] sm:$0xff]
          %v4371 = vld [vmem:[#allocation24 + $0x3b8] sm:$0xff]
          %v4372 = vld [vmem:[#allocation24 + $0x3c0] sm:$0xff]
          %v4373 = vld [vmem:[#allocation24 + $0x3c8] sm:$0xff]
          %v4374 = vld [vmem:[#allocation24 + $0x3d0] sm:$0xff]
          %v4375 = vld [vmem:[#allocation24 + $0x3d8] sm:$0xff]
          %v4376 = vld [vmem:[#allocation24 + $0x3e0] sm:$0xff]
          %v4377 = vld [vmem:[#allocation24 + $0x3e8] sm:$0xff]
          %v4378 = vld [vmem:[#allocation24 + $0x3f0] sm:$0xff]
          %v4379 = vld [vmem:[#allocation24 + $0x3f8] sm:$0xff]
          %v4380 = vld [vmem:[#allocation24 + $0x400] sm:$0xff]
          %v4381 = vld [vmem:[#allocation24 + $0x408] sm:$0xff]
          %v4382 = vld [vmem:[#allocation24 + $0x410] sm:$0xff]
          %v4383 = vld [vmem:[#allocation24 + $0x418] sm:$0xff]
          %v4384 = vld [vmem:[#allocation24 + $0x420] sm:$0xff]
          %v4385 = vld [vmem:[#allocation24 + $0x428] sm:$0xff]
          %v4386 = vld [vmem:[#allocation24 + $0x430] sm:$0xff]
          %v4387 = vld [vmem:[#allocation24 + $0x438] sm:$0xff]
          %v4388 = vld [vmem:[#allocation24 + $0x440] sm:$0xff]
          %v4389 = vld [vmem:[#allocation24 + $0x448] sm:$0xff]
          %v4390 = vld [vmem:[#allocation24 + $0x450] sm:$0xff]
          %v4391 = vld [vmem:[#allocation24 + $0x458] sm:$0xff]
          %v4392 = vld [vmem:[#allocation24 + $0x460] sm:$0xff]
          %v4393 = vld [vmem:[#allocation24 + $0x468] sm:$0xff]
          %v4394 = vld [vmem:[#allocation24 + $0x470] sm:$0xff]
          %v4395 = vld [vmem:[#allocation24 + $0x478] sm:$0xff]
          %v4396 = vld [vmem:[#allocation24 + $0x480] sm:$0xff]
          %v4397 = vld [vmem:[#allocation24 + $0x488] sm:$0xff]
          %v4398 = vld [vmem:[#allocation24 + $0x490] sm:$0xff]
          %v4399 = vld [vmem:[#allocation24 + $0x498] sm:$0xff]
          %v4400 = vld [vmem:[#allocation24 + $0x4a0] sm:$0xff]
          %v4401 = vld [vmem:[#allocation24 + $0x4a8] sm:$0xff]
          %v4402 = vld [vmem:[#allocation24 + $0x4b0] sm:$0xff]
          %v4403 = vld [vmem:[#allocation24 + $0x4b8] sm:$0xff]
          %v4404 = vld [vmem:[#allocation24 + $0x4c0] sm:$0xff]
          %v4405 = vld [vmem:[#allocation24 + $0x4c8] sm:$0xff]
          %v4406 = vld [vmem:[#allocation24 + $0x4d0] sm:$0xff]
          %v4407 = vld [vmem:[#allocation24 + $0x4d8] sm:$0xff]
          %v4408 = vld [vmem:[#allocation24 + $0x4e0] sm:$0xff]
          %v4409 = vld [vmem:[#allocation24 + $0x4e8] sm:$0xff]
          %v4410 = vld [vmem:[#allocation24 + $0x4f0] sm:$0xff]
          %v4411 = vld [vmem:[#allocation24 + $0x4f8] sm:$0xff]
          %v4412 = vld [vmem:[#allocation24 + $0x500] sm:$0xff]
          %v4413 = vld [vmem:[#allocation24 + $0x508] sm:$0xff]
          %v4414 = vld [vmem:[#allocation24 + $0x510] sm:$0xff]
          %v4415 = vld [vmem:[#allocation24 + $0x518] sm:$0xff]
          %v4416 = vld [vmem:[#allocation24 + $0x520] sm:$0xff]
          %v4417 = vld [vmem:[#allocation24 + $0x528] sm:$0xff]
          %v4418 = vld [vmem:[#allocation24 + $0x530] sm:$0xff]
          %v4419 = vld [vmem:[#allocation24 + $0x538] sm:$0xff]
          %v4420 = vld [vmem:[#allocation24 + $0x540] sm:$0xff]
          %v4421 = vld [vmem:[#allocation24 + $0x548] sm:$0xff]
          %v4422 = vld [vmem:[#allocation24 + $0x550] sm:$0xff]
          %v4423 = vld [vmem:[#allocation24 + $0x558] sm:$0xff]
          %v4424 = vld [vmem:[#allocation24 + $0x560] sm:$0xff]
          %v4425 = vld [vmem:[#allocation24 + $0x568] sm:$0xff]
          %v4426 = vld [vmem:[#allocation24 + $0x570] sm:$0xff]
          %v4427 = vld [vmem:[#allocation24 + $0x578] sm:$0xff]
          %v4428 = vld [vmem:[#allocation24 + $0x580] sm:$0xff]
          %v4429 = vld [vmem:[#allocation24 + $0x588] sm:$0xff]
          %v4430 = vld [vmem:[#allocation24 + $0x590] sm:$0xff]
          %v4431 = vld [vmem:[#allocation24 + $0x598] sm:$0xff]
          %v4432 = vld [vmem:[#allocation24 + $0x5a0] sm:$0xff]
          %v4433 = vld [vmem:[#allocation24 + $0x5a8] sm:$0xff]
          %v4434 = vld [vmem:[#allocation24 + $0x5b0] sm:$0xff]
          %v4435 = vld [vmem:[#allocation24 + $0x5b8] sm:$0xff]
          %v4436 = vld [vmem:[#allocation24 + $0x5c0] sm:$0xff]
          %v4437 = vld [vmem:[#allocation24 + $0x5c8] sm:$0xff]
          %v4438 = vld [vmem:[#allocation24 + $0x5d0] sm:$0xff]
          %v4439 = vld [vmem:[#allocation24 + $0x5d8] sm:$0xff]
          %v4440 = vld [vmem:[#allocation24 + $0x5e0] sm:$0xff]
          %v4441 = vld [vmem:[#allocation24 + $0x5e8] sm:$0xff]
          %v4442 = vld [vmem:[#allocation24 + $0x5f0] sm:$0xff]
          %v4443 = vld [vmem:[#allocation24 + $0x5f8] sm:$0xff]
          %v4444 = vld [vmem:[#allocation24 + $0x600] sm:$0xff]
          %v4445 = vld [vmem:[#allocation24 + $0x608] sm:$0xff]
          %v4446 = vld [vmem:[#allocation24 + $0x610] sm:$0xff]
          %v4447 = vld [vmem:[#allocation24 + $0x618] sm:$0xff]
          %v4448 = vld [vmem:[#allocation24 + $0x620] sm:$0xff]
          %v4449 = vld [vmem:[#allocation24 + $0x628] sm:$0xff]
          %v4450 = vld [vmem:[#allocation24 + $0x630] sm:$0xff]
          %v4451 = vld [vmem:[#allocation24 + $0x638] sm:$0xff]
          %v4452 = vld [vmem:[#allocation24 + $0x640] sm:$0xff]
          %v4453 = vld [vmem:[#allocation24 + $0x648] sm:$0xff]
          %v4454 = vld [vmem:[#allocation24 + $0x650] sm:$0xff]
          %v4455 = vld [vmem:[#allocation24 + $0x658] sm:$0xff]
          %v4456 = vld [vmem:[#allocation24 + $0x660] sm:$0xff]
          %v4457 = vld [vmem:[#allocation24 + $0x668] sm:$0xff]
          %v4458 = vld [vmem:[#allocation24 + $0x670] sm:$0xff]
          %v4459 = vld [vmem:[#allocation24 + $0x678] sm:$0xff]
          %v4460 = vld [vmem:[#allocation24 + $0x680] sm:$0xff]
          %v4461 = vld [vmem:[#allocation24 + $0x688] sm:$0xff]
          %v4462 = vld [vmem:[#allocation24 + $0x690] sm:$0xff]
          %v4463 = vld [vmem:[#allocation24 + $0x698] sm:$0xff]
          %v4464 = vld [vmem:[#allocation24 + $0x6a0] sm:$0xff]
          %v4465 = vld [vmem:[#allocation24 + $0x6a8] sm:$0xff]
          %v4466 = vld [vmem:[#allocation24 + $0x6b0] sm:$0xff]
          %v4467 = vld [vmem:[#allocation24 + $0x6b8] sm:$0xff]
          %v4468 = vld [vmem:[#allocation24 + $0x6c0] sm:$0xff]
          %v4469 = vld [vmem:[#allocation24 + $0x6c8] sm:$0xff]
          %v4470 = vld [vmem:[#allocation24 + $0x6d0] sm:$0xff]
          %v4471 = vld [vmem:[#allocation24 + $0x6d8] sm:$0xff]
          %v4472 = vld [vmem:[#allocation24 + $0x6e0] sm:$0xff]
          %v4473 = vld [vmem:[#allocation24 + $0x6e8] sm:$0xff]
          %v4474 = vld [vmem:[#allocation24 + $0x6f0] sm:$0xff]
          %v4475 = vld [vmem:[#allocation24 + $0x6f8] sm:$0xff]
          %v4476 = vld [vmem:[#allocation24 + $0x700] sm:$0xff]
          %v4477 = vld [vmem:[#allocation24 + $0x708] sm:$0xff]
          %v4478 = vld [vmem:[#allocation24 + $0x710] sm:$0xff]
          %v4479 = vld [vmem:[#allocation24 + $0x718] sm:$0xff]
          %v4480 = vld [vmem:[#allocation24 + $0x720] sm:$0xff]
          %v4481 = vld [vmem:[#allocation24 + $0x728] sm:$0xff]
          %v4482 = vld [vmem:[#allocation24 + $0x730] sm:$0xff]
          %v4483 = vld [vmem:[#allocation24 + $0x738] sm:$0xff]
          %v4484 = vld [vmem:[#allocation24 + $0x740] sm:$0xff]
          %v4485 = vld [vmem:[#allocation24 + $0x748] sm:$0xff]
          %v4486 = vld [vmem:[#allocation24 + $0x750] sm:$0xff]
          %v4487 = vld [vmem:[#allocation24 + $0x758] sm:$0xff]
          %v4488 = vld [vmem:[#allocation24 + $0x760] sm:$0xff]
          %v4489 = vld [vmem:[#allocation24 + $0x768] sm:$0xff]
          %v4490 = vld [vmem:[#allocation24 + $0x770] sm:$0xff]
          %v4491 = vld [vmem:[#allocation24 + $0x778] sm:$0xff]
          %v4492 = vld [vmem:[#allocation24 + $0x780] sm:$0xff]
          %v4493 = vld [vmem:[#allocation24 + $0x788] sm:$0xff]
          %v4494 = vld [vmem:[#allocation24 + $0x790] sm:$0xff]
          %v4495 = vld [vmem:[#allocation24 + $0x798] sm:$0xff]
          %v4496 = vld [vmem:[#allocation24 + $0x7a0] sm:$0xff]
          %v4497 = vld [vmem:[#allocation24 + $0x7a8] sm:$0xff]
          %v4498 = vld [vmem:[#allocation24 + $0x7b0] sm:$0xff]
          %v4499 = vld [vmem:[#allocation24 + $0x7b8] sm:$0xff]
          %v4500 = vld [vmem:[#allocation24 + $0x7c0] sm:$0xff]
          %v4501 = vld [vmem:[#allocation24 + $0x7c8] sm:$0xff]
          %v4502 = vld [vmem:[#allocation24 + $0x7d0] sm:$0xff]
          %v4503 = vld [vmem:[#allocation24 + $0x7d8] sm:$0xff]
          %v4504 = vld [vmem:[#allocation24 + $0x7e0] sm:$0xff]
          %v4505 = vld [vmem:[#allocation24 + $0x7e8] sm:$0xff]
          %v4506 = vld [vmem:[#allocation24 + $0x7f0] sm:$0xff]
          %v4507 = vld [vmem:[#allocation24 + $0x7f8] sm:$0xff]
          %v4508 = vld [vmem:[#allocation24 + $0x800] sm:$0xff]
          %v4509 = vld [vmem:[#allocation24 + $0x808] sm:$0xff]
          %v4510 = vld [vmem:[#allocation24 + $0x810] sm:$0xff]
          %v4511 = vld [vmem:[#allocation24 + $0x818] sm:$0xff]
          %v4512 = vld [vmem:[#allocation24 + $0x820] sm:$0xff]
          %v4513 = vld [vmem:[#allocation24 + $0x828] sm:$0xff]
          %v4514 = vld [vmem:[#allocation24 + $0x830] sm:$0xff]
          %v4515 = vld [vmem:[#allocation24 + $0x838] sm:$0xff]
          %v4516 = vld [vmem:[#allocation24 + $0x840] sm:$0xff]
          %v4517 = vld [vmem:[#allocation24 + $0x848] sm:$0xff]
          %v4518 = vld [vmem:[#allocation24 + $0x850] sm:$0xff]
          %v4519 = vld [vmem:[#allocation24 + $0x858] sm:$0xff]
          %v4520 = vld [vmem:[#allocation24 + $0x860] sm:$0xff]
          %v4521 = vld [vmem:[#allocation24 + $0x868] sm:$0xff]
          %v4522 = vld [vmem:[#allocation24 + $0x870] sm:$0xff]
          %v4523 = vld [vmem:[#allocation24 + $0x878] sm:$0xff]
          %v4524 = vld [vmem:[#allocation24 + $0x880] sm:$0xff]
          %v4525 = vld [vmem:[#allocation24 + $0x888] sm:$0xff]
          %v4526 = vld [vmem:[#allocation24 + $0x890] sm:$0xff]
          %v4527 = vld [vmem:[#allocation24 + $0x898] sm:$0xff]
          %v4528 = vld [vmem:[#allocation24 + $0x8a0] sm:$0xff]
          %v4529 = vld [vmem:[#allocation24 + $0x8a8] sm:$0xff]
          %v4530 = vld [vmem:[#allocation24 + $0x8b0] sm:$0xff]
          %v4531 = vld [vmem:[#allocation24 + $0x8b8] sm:$0xff]
          %v4532 = vld [vmem:[#allocation24 + $0x8c0] sm:$0xff]
          %v4533 = vld [vmem:[#allocation24 + $0x8c8] sm:$0xff]
          %v4534 = vld [vmem:[#allocation24 + $0x8d0] sm:$0xff]
          %v4535 = vld [vmem:[#allocation24 + $0x8d8] sm:$0xff]
          %v4536 = vld [vmem:[#allocation24 + $0x8e0] sm:$0xff]
          %v4537 = vld [vmem:[#allocation24 + $0x8e8] sm:$0xff]
          %v4538 = vld [vmem:[#allocation24 + $0x8f0] sm:$0xff]
          %v4539 = vld [vmem:[#allocation24 + $0x8f8] sm:$0xff]
          %v4540 = vld [vmem:[#allocation24 + $0x900] sm:$0xff]
          %v4541 = vld [vmem:[#allocation24 + $0x908] sm:$0xff]
          %v4542 = vld [vmem:[#allocation24 + $0x910] sm:$0xff]
          %v4543 = vld [vmem:[#allocation24 + $0x918] sm:$0xff]
          %v4544 = vld [vmem:[#allocation24 + $0x920] sm:$0xff]
          %v4545 = vld [vmem:[#allocation24 + $0x928] sm:$0xff]
          %v4546 = vld [vmem:[#allocation24 + $0x930] sm:$0xff]
          %v4547 = vld [vmem:[#allocation24 + $0x938] sm:$0xff]
          %v4548 = vld [vmem:[#allocation24 + $0x940] sm:$0xff]
          %v4549 = vld [vmem:[#allocation24 + $0x948] sm:$0xff]
          %v4550 = vld [vmem:[#allocation24 + $0x950] sm:$0xff]
          %v4551 = vld [vmem:[#allocation24 + $0x958] sm:$0xff]
          %v4552 = vld [vmem:[#allocation24 + $0x960] sm:$0xff]
          %v4553 = vld [vmem:[#allocation24 + $0x968] sm:$0xff]
          %v4554 = vld [vmem:[#allocation24 + $0x970] sm:$0xff]
          %v4555 = vld [vmem:[#allocation24 + $0x978] sm:$0xff]
          %v4556 = vld [vmem:[#allocation24 + $0x980] sm:$0xff]
          %v4557 = vld [vmem:[#allocation24 + $0x988] sm:$0xff]
          %v4558 = vld [vmem:[#allocation24 + $0x990] sm:$0xff]
          %v4559 = vld [vmem:[#allocation24 + $0x998] sm:$0xff]
          %v4560 = vld [vmem:[#allocation24 + $0x9a0] sm:$0xff]
          %v4561 = vld [vmem:[#allocation24 + $0x9a8] sm:$0xff]
          %v4562 = vld [vmem:[#allocation24 + $0x9b0] sm:$0xff]
          %v4563 = vld [vmem:[#allocation24 + $0x9b8] sm:$0xff]
          %v4564 = vld [vmem:[#allocation24 + $0x9c0] sm:$0xff]
          %v4565 = vld [vmem:[#allocation24 + $0x9c8] sm:$0xff]
          %v4566 = vld [vmem:[#allocation24 + $0x9d0] sm:$0xff]
          %v4567 = vld [vmem:[#allocation24 + $0x9d8] sm:$0xff]
          %v4568 = vld [vmem:[#allocation24 + $0x9e0] sm:$0xff]
          %v4569 = vld [vmem:[#allocation24 + $0x9e8] sm:$0xff]
          %v4570 = vld [vmem:[#allocation24 + $0x9f0] sm:$0xff]
          %v4571 = vld [vmem:[#allocation24 + $0x9f8] sm:$0xff]
          %v4572 = vld [vmem:[#allocation24 + $0xa00] sm:$0xff]
          %v4573 = vld [vmem:[#allocation24 + $0xa08] sm:$0xff]
          %v4574 = vld [vmem:[#allocation24 + $0xa10] sm:$0xff]
          %v4575 = vld [vmem:[#allocation24 + $0xa18] sm:$0xff]
          %v4576 = vld [vmem:[#allocation24 + $0xa20] sm:$0xff]
          %v4577 = vld [vmem:[#allocation24 + $0xa28] sm:$0xff]
          %v4578 = vld [vmem:[#allocation24 + $0xa30] sm:$0xff]
          %v4579 = vld [vmem:[#allocation24 + $0xa38] sm:$0xff]
          %v4580 = vld [vmem:[#allocation24 + $0xa40] sm:$0xff]
          %v4581 = vld [vmem:[#allocation24 + $0xa48] sm:$0xff]
          %v4582 = vld [vmem:[#allocation24 + $0xa50] sm:$0xff]
          %v4583 = vld [vmem:[#allocation24 + $0xa58] sm:$0xff]
          %v4584 = vld [vmem:[#allocation24 + $0xa60] sm:$0xff]
          %v4585 = vld [vmem:[#allocation24 + $0xa68] sm:$0xff]
          %v4586 = vld [vmem:[#allocation24 + $0xa70] sm:$0xff]
          %v4587 = vld [vmem:[#allocation24 + $0xa78] sm:$0xff]
          %v4588 = vld [vmem:[#allocation24 + $0xa80] sm:$0xff]
          %v4589 = vld [vmem:[#allocation24 + $0xa88] sm:$0xff]
          %v4590 = vld [vmem:[#allocation24 + $0xa90] sm:$0xff]
          %v4591 = vld [vmem:[#allocation24 + $0xa98] sm:$0xff]
          %v4592 = vld [vmem:[#allocation24 + $0xaa0] sm:$0xff]
          %v4593 = vld [vmem:[#allocation24 + $0xaa8] sm:$0xff]
          %v4594 = vld [vmem:[#allocation24 + $0xab0] sm:$0xff]
          %v4595 = vld [vmem:[#allocation24 + $0xab8] sm:$0xff]
          %v4596 = vld [vmem:[#allocation24 + $0xac0] sm:$0xff]
          %v4597 = vld [vmem:[#allocation24 + $0xac8] sm:$0xff]
          %v4598 = vld [vmem:[#allocation24 + $0xad0] sm:$0xff]
          %v4599 = vld [vmem:[#allocation24 + $0xad8] sm:$0xff]
          %v4600 = vld [vmem:[#allocation24 + $0xae0] sm:$0xff]
          %v4601 = vld [vmem:[#allocation24 + $0xae8] sm:$0xff]
          %v4602 = vld [vmem:[#allocation24 + $0xaf0] sm:$0xff]
          %v4603 = vld [vmem:[#allocation24 + $0xaf8] sm:$0xff]
          %v4604 = vld [vmem:[#allocation24 + $0xb00] sm:$0xff]
          %v4605 = vld [vmem:[#allocation24 + $0xb08] sm:$0xff]
          %v4606 = vld [vmem:[#allocation24 + $0xb10] sm:$0xff]
          %v4607 = vld [vmem:[#allocation24 + $0xb18] sm:$0xff]
          %v4608 = vld [vmem:[#allocation24 + $0xb20] sm:$0xff]
          %v4609 = vld [vmem:[#allocation24 + $0xb28] sm:$0xff]
          %v4610 = vld [vmem:[#allocation24 + $0xb30] sm:$0xff]
          %v4611 = vld [vmem:[#allocation24 + $0xb38] sm:$0xff]
          %v4612 = vld [vmem:[#allocation24 + $0xb40] sm:$0xff]
          %v4613 = vld [vmem:[#allocation24 + $0xb48] sm:$0xff]
          %v4614 = vld [vmem:[#allocation24 + $0xb50] sm:$0xff]
          %v4615 = vld [vmem:[#allocation24 + $0xb58] sm:$0xff]
          %v4616 = vld [vmem:[#allocation24 + $0xb60] sm:$0xff]
          %v4617 = vld [vmem:[#allocation24 + $0xb68] sm:$0xff]
          %v4618 = vld [vmem:[#allocation24 + $0xb70] sm:$0xff]
          %v4619 = vld [vmem:[#allocation24 + $0xb78] sm:$0xff]
          %v4620 = vld [vmem:[#allocation24 + $0xb80] sm:$0xff]
          %v4621 = vld [vmem:[#allocation24 + $0xb88] sm:$0xff]
          %v4622 = vld [vmem:[#allocation24 + $0xb90] sm:$0xff]
          %v4623 = vld [vmem:[#allocation24 + $0xb98] sm:$0xff]
          %v4624 = vld [vmem:[#allocation24 + $0xba0] sm:$0xff]
          %v4625 = vld [vmem:[#allocation24 + $0xba8] sm:$0xff]
          %v4626 = vld [vmem:[#allocation24 + $0xbb0] sm:$0xff]
          %v4627 = vld [vmem:[#allocation24 + $0xbb8] sm:$0xff]
          %v4628 = vld [vmem:[#allocation24 + $0xbc0] sm:$0xff]
          %v4629 = vld [vmem:[#allocation24 + $0xbc8] sm:$0xff]
          %v4630 = vld [vmem:[#allocation24 + $0xbd0] sm:$0xff]
          %v4631 = vld [vmem:[#allocation24 + $0xbd8] sm:$0xff]
          %v4632 = vld [vmem:[#allocation24 + $0xbe0] sm:$0xff]
          %v4633 = vld [vmem:[#allocation24 + $0xbe8] sm:$0xff]
          %v4634 = vld [vmem:[#allocation24 + $0xbf0] sm:$0xff]
          %v4635 = vld [vmem:[#allocation24 + $0xbf8] sm:$0xff]
          %v4636 = vld [vmem:[#allocation24 + $0xc00] sm:$0xff]
          %v4637 = vld [vmem:[#allocation24 + $0xc08] sm:$0xff]
          %v4638 = vld [vmem:[#allocation24 + $0xc10] sm:$0xff]
          %v4639 = vld [vmem:[#allocation24 + $0xc18] sm:$0xff]
          %v4640 = vld [vmem:[#allocation24 + $0xc20] sm:$0xff]
          %v4641 = vld [vmem:[#allocation24 + $0xc28] sm:$0xff]
          %v4642 = vld [vmem:[#allocation24 + $0xc30] sm:$0xff]
          %v4643 = vld [vmem:[#allocation24 + $0xc38] sm:$0xff]
          %v4644 = vld [vmem:[#allocation24 + $0xc40] sm:$0xff]
          %v4645 = vld [vmem:[#allocation24 + $0xc48] sm:$0xff]
          %v4646 = vld [vmem:[#allocation24 + $0xc50] sm:$0xff]
          %v4647 = vld [vmem:[#allocation24 + $0xc58] sm:$0xff]
          %v4648 = vld [vmem:[#allocation24 + $0xc60] sm:$0xff]
          %v4649 = vld [vmem:[#allocation24 + $0xc68] sm:$0xff]
          %v4650 = vld [vmem:[#allocation24 + $0xc70] sm:$0xff]
          %v4651 = vld [vmem:[#allocation24 + $0xc78] sm:$0xff]
          %v4652 = vld [vmem:[#allocation24 + $0xc80] sm:$0xff]
          %v4653 = vld [vmem:[#allocation24 + $0xc88] sm:$0xff]
          %v4654 = vld [vmem:[#allocation24 + $0xc90] sm:$0xff]
          %v4655 = vld [vmem:[#allocation24 + $0xc98] sm:$0xff]
          %v4656 = vld [vmem:[#allocation24 + $0xca0] sm:$0xff]
          %v4657 = vld [vmem:[#allocation24 + $0xca8] sm:$0xff]
          %v4658 = vld [vmem:[#allocation24 + $0xcb0] sm:$0xff]
          %v4659 = vld [vmem:[#allocation24 + $0xcb8] sm:$0xff]
          %v4660 = vld [vmem:[#allocation24 + $0xcc0] sm:$0xff]
          %v4661 = vld [vmem:[#allocation24 + $0xcc8] sm:$0xff]
          %v4662 = vld [vmem:[#allocation24 + $0xcd0] sm:$0xff]
          %v4663 = vld [vmem:[#allocation24 + $0xcd8] sm:$0xff]
          %v4664 = vld [vmem:[#allocation24 + $0xce0] sm:$0xff]
          %v4665 = vld [vmem:[#allocation24 + $0xce8] sm:$0xff]
          %v4666 = vld [vmem:[#allocation24 + $0xcf0] sm:$0xff]
          %v4667 = vld [vmem:[#allocation24 + $0xcf8] sm:$0xff]
          %v4668 = vld [vmem:[#allocation24 + $0xd00] sm:$0xff]
          %v4669 = vld [vmem:[#allocation24 + $0xd08] sm:$0xff]
          %v4670 = vld [vmem:[#allocation24 + $0xd10] sm:$0xff]
          %v4671 = vld [vmem:[#allocation24 + $0xd18] sm:$0xff]
          %v4672 = vld [vmem:[#allocation24 + $0xd20] sm:$0xff]
          %v4673 = vld [vmem:[#allocation24 + $0xd28] sm:$0xff]
          %v4674 = vld [vmem:[#allocation24 + $0xd30] sm:$0xff]
          %v4675 = vld [vmem:[#allocation24 + $0xd38] sm:$0xff]
          %v4676 = vld [vmem:[#allocation24 + $0xd40] sm:$0xff]
          %v4677 = vld [vmem:[#allocation24 + $0xd48] sm:$0xff]
          %v4678 = vld [vmem:[#allocation24 + $0xd50] sm:$0xff]
          %v4679 = vld [vmem:[#allocation24 + $0xd58] sm:$0xff]
          %v4680 = vld [vmem:[#allocation24 + $0xd60] sm:$0xff]
          %v4681 = vld [vmem:[#allocation24 + $0xd68] sm:$0xff]
          %v4682 = vld [vmem:[#allocation24 + $0xd70] sm:$0xff]
          %v4683 = vld [vmem:[#allocation24 + $0xd78] sm:$0xff]
          %v4684 = vld [vmem:[#allocation24 + $0xd80] sm:$0xff]
          %v4685 = vld [vmem:[#allocation24 + $0xd88] sm:$0xff]
          %v4686 = vld [vmem:[#allocation24 + $0xd90] sm:$0xff]
          %v4687 = vld [vmem:[#allocation24 + $0xd98] sm:$0xff]
          %v4688 = vld [vmem:[#allocation24 + $0xda0] sm:$0xff]
          %v4689 = vld [vmem:[#allocation24 + $0xda8] sm:$0xff]
          %v4690 = vld [vmem:[#allocation24 + $0xdb0] sm:$0xff]
          %v4691 = vld [vmem:[#allocation24 + $0xdb8] sm:$0xff]
          %v4692 = vld [vmem:[#allocation24 + $0xdc0] sm:$0xff]
          %v4693 = vld [vmem:[#allocation24 + $0xdc8] sm:$0xff]
          %v4694 = vld [vmem:[#allocation24 + $0xdd0] sm:$0xff]
          %v4695 = vld [vmem:[#allocation24 + $0xdd8] sm:$0xff]
          %v4696 = vld [vmem:[#allocation24 + $0xde0] sm:$0xff]
          %v4697 = vld [vmem:[#allocation24 + $0xde8] sm:$0xff]
          %v4698 = vld [vmem:[#allocation24 + $0xdf0] sm:$0xff]
          %v4699 = vld [vmem:[#allocation24 + $0xdf8] sm:$0xff]
          %v4700 = vld [vmem:[#allocation24 + $0xe00] sm:$0xff]
          %v4701 = vld [vmem:[#allocation24 + $0xe08] sm:$0xff]
          %v4702 = vld [vmem:[#allocation24 + $0xe10] sm:$0xff]
          %v4703 = vld [vmem:[#allocation24 + $0xe18] sm:$0xff]
          %v4704 = vld [vmem:[#allocation24 + $0xe20] sm:$0xff]
          %v4705 = vld [vmem:[#allocation24 + $0xe28] sm:$0xff]
          %v4706 = vld [vmem:[#allocation24 + $0xe30] sm:$0xff]
          %v4707 = vld [vmem:[#allocation24 + $0xe38] sm:$0xff]
          %v4708 = vld [vmem:[#allocation24 + $0xe40] sm:$0xff]
          %v4709 = vld [vmem:[#allocation24 + $0xe48] sm:$0xff]
          %v4710 = vld [vmem:[#allocation24 + $0xe50] sm:$0xff]
          %v4711 = vld [vmem:[#allocation24 + $0xe58] sm:$0xff]
          %v4712 = vld [vmem:[#allocation24 + $0xe60] sm:$0xff]
          %v4713 = vld [vmem:[#allocation24 + $0xe68] sm:$0xff]
          %v4714 = vld [vmem:[#allocation24 + $0xe70] sm:$0xff]
          %v4715 = vld [vmem:[#allocation24 + $0xe78] sm:$0xff]
          %v4716 = vld [vmem:[#allocation24 + $0xe80] sm:$0xff]
          %v4717 = vld [vmem:[#allocation24 + $0xe88] sm:$0xff]
          %v4718 = vld [vmem:[#allocation24 + $0xe90] sm:$0xff]
          %v4719 = vld [vmem:[#allocation24 + $0xe98] sm:$0xff]
          %v4720 = vld [vmem:[#allocation24 + $0xea0] sm:$0xff]
          %v4721 = vld [vmem:[#allocation24 + $0xea8] sm:$0xff]
          %v4722 = vld [vmem:[#allocation24 + $0xeb0] sm:$0xff]
          %v4723 = vld [vmem:[#allocation24 + $0xeb8] sm:$0xff]
          %v4724 = vld [vmem:[#allocation24 + $0xec0] sm:$0xff]
          %v4725 = vld [vmem:[#allocation24 + $0xec8] sm:$0xff]
          %v4726 = vld [vmem:[#allocation24 + $0xed0] sm:$0xff]
          %v4727 = vld [vmem:[#allocation24 + $0xed8] sm:$0xff]
          %v4728 = vld [vmem:[#allocation24 + $0xee0] sm:$0xff]
          %v4729 = vld [vmem:[#allocation24 + $0xee8] sm:$0xff]
          %v4730 = vld [vmem:[#allocation24 + $0xef0] sm:$0xff]
          %v4731 = vld [vmem:[#allocation24 + $0xef8] sm:$0xff]
          %v4732 = vld [vmem:[#allocation24 + $0xf00] sm:$0xff]
          %v4733 = vld [vmem:[#allocation24 + $0xf08] sm:$0xff]
          %v4734 = vld [vmem:[#allocation24 + $0xf10] sm:$0xff]
          %v4735 = vld [vmem:[#allocation24 + $0xf18] sm:$0xff]
          %v4736 = vld [vmem:[#allocation24 + $0xf20] sm:$0xff]
          %v4737 = vld [vmem:[#allocation24 + $0xf28] sm:$0xff]
          %v4738 = vld [vmem:[#allocation24 + $0xf30] sm:$0xff]
          %v4739 = vld [vmem:[#allocation24 + $0xf38] sm:$0xff]
          %v4740 = vld [vmem:[#allocation24 + $0xf40] sm:$0xff]
          %v4741 = vld [vmem:[#allocation24 + $0xf48] sm:$0xff]
          %v4742 = vld [vmem:[#allocation24 + $0xf50] sm:$0xff]
          %v4743 = vld [vmem:[#allocation24 + $0xf58] sm:$0xff]
          %v4744 = vld [vmem:[#allocation24 + $0xf60] sm:$0xff]
          %v4745 = vld [vmem:[#allocation24 + $0xf68] sm:$0xff]
          %v4746 = vld [vmem:[#allocation24 + $0xf70] sm:$0xff]
          %v4747 = vld [vmem:[#allocation24 + $0xf78] sm:$0xff]
          %v4748 = vld [vmem:[#allocation24 + $0xf80] sm:$0xff]
          %v4749 = vld [vmem:[#allocation24 + $0xf88] sm:$0xff]
          %v4750 = vld [vmem:[#allocation24 + $0xf90] sm:$0xff]
          %v4751 = vld [vmem:[#allocation24 + $0xf98] sm:$0xff]
          %v4752 = vld [vmem:[#allocation24 + $0xfa0] sm:$0xff]
          %v4753 = vld [vmem:[#allocation24 + $0xfa8] sm:$0xff]
          %v4754 = vld [vmem:[#allocation24 + $0xfb0] sm:$0xff]
          %v4755 = vld [vmem:[#allocation24 + $0xfb8] sm:$0xff]
          %v4756 = vld [vmem:[#allocation24 + $0xfc0] sm:$0xff]
          %v4757 = vld [vmem:[#allocation24 + $0xfc8] sm:$0xff]
          %v4758 = vld [vmem:[#allocation24 + $0xfd0] sm:$0xff]
          %v4759 = vld [vmem:[#allocation24 + $0xfd8] sm:$0xff]
          %v4760 = vld [vmem:[#allocation24 + $0xfe0] sm:$0xff]
          %v4761 = vld [vmem:[#allocation24 + $0xfe8] sm:$0xff]
          %v4762 = vld [vmem:[#allocation24 + $0xff0] sm:$0xff]
          %v4763 = vld [vmem:[#allocation24 + $0xff8] sm:$0xff]
          %4764 = vmatprep.subr.mxu0 %v4313
          %4765 = vmatpush1.msra.mxu0 %v4312
          %4766 = vmatprep.subr.mxu0 %v4309
          %4767 = vmatpush1.msra.mxu0 %v4308
          %4768 = vmatprep.subr.mxu0 %v4305
          %4769 = vmatpush1.msra.mxu0 %v4304
          %4770 = vmatprep.subr.mxu0 %v4301
          %4771 = vmatpush1.msra.mxu0 %v4300
          %4772 = vmatprep.subr.mxu0 %v4297
          %4773 = vmatpush1.msra.mxu0 %v4296
          %4774 = vmatprep.subr.mxu0 %v4293
          %4775 = vmatpush1.msra.mxu0 %v4292
          %4776 = vmatprep.subr.mxu0 %v4289
          %4777 = vmatpush1.msra.mxu0 %v4288
          %4778 = vmatprep.subr.mxu0 %v4285
          %4779 = vmatpush1.msra.mxu0 %v4284
          %4780 = vmatprep.subr.mxu0 %v4281
          %4781 = vmatpush1.msra.mxu0 %v4280
          %4782 = vmatprep.subr.mxu0 %v4277
          %4783 = vmatpush1.msra.mxu0 %v4276
          %4784 = vmatprep.subr.mxu0 %v4273
          %4785 = vmatpush1.msra.mxu0 %v4272
          %4786 = vmatprep.subr.mxu0 %v4269
          %4787 = vmatpush1.msra.mxu0 %v4268
          %4788 = vmatprep.subr.mxu0 %v4265
          %4789 = vmatpush1.msra.mxu0 %v4264
          %4790 = vmatprep.subr.mxu0 %v4261
          %4791 = vmatpush1.msra.mxu0 %v4260
          %4792 = vmatprep.subr.mxu0 %v4257
          %4793 = vmatpush1.msra.mxu0 %v4256
          %4794 = vmatprep.subr.mxu0 %v4253
          %4795 = vmatpush1.msra.mxu0 %v4252
          %4796 = vmatprep.subr.mxu0 %v4377
          %4797 = vmatpush2.msra.mxu0 %v4376
          %4798 = vmatprep.subr.mxu0 %v4373
          %4799 = vmatpush2.msra.mxu0 %v4372
          %4800 = vmatprep.subr.mxu0 %v4369
          %4801 = vmatpush2.msra.mxu0 %v4368
          %4802 = vmatprep.subr.mxu0 %v4365
          %4803 = vmatpush2.msra.mxu0 %v4364
          %4804 = vmatprep.subr.mxu0 %v4361
          %4805 = vmatpush2.msra.mxu0 %v4360
          %4806 = vmatprep.subr.mxu0 %v4357
          %4807 = vmatpush2.msra.mxu0 %v4356
          %4808 = vmatprep.subr.mxu0 %v4353
          %4809 = vmatpush2.msra.mxu0 %v4352
          %4810 = vmatprep.subr.mxu0 %v4349
          %4811 = vmatpush2.msra.mxu0 %v4348
          %4812 = vmatprep.subr.mxu0 %v4345
          %4813 = vmatpush2.msra.mxu0 %v4344
          %4814 = vmatprep.subr.mxu0 %v4341
          %4815 = vmatpush2.msra.mxu0 %v4340
          %4816 = vmatprep.subr.mxu0 %v4337
          %4817 = vmatpush2.msra.mxu0 %v4336
          %4818 = vmatprep.subr.mxu0 %v4333
          %4819 = vmatpush2.msra.mxu0 %v4332
          %4820 = vmatprep.subr.mxu0 %v4329
          %4821 = vmatpush2.msra.mxu0 %v4328
          %4822 = vmatprep.subr.mxu0 %v4325
          %4823 = vmatpush2.msra.mxu0 %v4324
          %4824 = vmatprep.subr.mxu0 %v4321
          %4825 = vmatpush2.msra.mxu0 %v4320
          %4826 = vmatprep.subr.mxu0 %v4317
          %4827 = vmatpush2.msra.mxu0 %v4316
          %4828 = vmatprep.mubr.f32.mxu0 %v4245
          %4829 = vmatmul.mubr.f32.gmra.mxu0 %v4244
          %v4830 = vpop.f32.mrf.mxu0
          %v4831 = vadd.f32 0.0, %v4830
          %v4832 = vpop.f32.mrf.mxu0
          %v4833 = vadd.f32 0.0, %v4832
          %4834 = vdwg.mxu0
          %4835 = vmatprep.subr.mxu0 %v4441
          %4836 = vmatpush1.msra.mxu0 %v4440
          %4837 = vmatprep.subr.mxu0 %v4437
          %4838 = vmatpush1.msra.mxu0 %v4436
          %4839 = vmatprep.subr.mxu0 %v4433
          %4840 = vmatpush1.msra.mxu0 %v4432
          %4841 = vmatprep.subr.mxu0 %v4429
          %4842 = vmatpush1.msra.mxu0 %v4428
          %4843 = vmatprep.subr.mxu0 %v4425
          %4844 = vmatpush1.msra.mxu0 %v4424
          %4845 = vmatprep.subr.mxu0 %v4421
          %4846 = vmatpush1.msra.mxu0 %v4420
          %4847 = vmatprep.subr.mxu0 %v4417
          %4848 = vmatpush1.msra.mxu0 %v4416
          %4849 = vmatprep.subr.mxu0 %v4413
          %4850 = vmatpush1.msra.mxu0 %v4412
          %4851 = vmatprep.subr.mxu0 %v4409
          %4852 = vmatpush1.msra.mxu0 %v4408
          %4853 = vmatprep.subr.mxu0 %v4405
          %4854 = vmatpush1.msra.mxu0 %v4404
          %4855 = vmatprep.subr.mxu0 %v4401
          %4856 = vmatpush1.msra.mxu0 %v4400
          %4857 = vmatprep.subr.mxu0 %v4397
          %4858 = vmatpush1.msra.mxu0 %v4396
          %4859 = vmatprep.subr.mxu0 %v4393
          %4860 = vmatpush1.msra.mxu0 %v4392
          %4861 = vmatprep.subr.mxu0 %v4389
          %4862 = vmatpush1.msra.mxu0 %v4388
          %4863 = vmatprep.subr.mxu0 %v4385
          %4864 = vmatpush1.msra.mxu0 %v4384
          %4865 = vmatprep.subr.mxu0 %v4381
          %4866 = vmatpush1.msra.mxu0 %v4380
          %4867 = vmatprep.subr.mxu0 %v4505
          %4868 = vmatpush2.msra.mxu0 %v4504
          %4869 = vmatprep.subr.mxu0 %v4501
          %4870 = vmatpush2.msra.mxu0 %v4500
          %4871 = vmatprep.subr.mxu0 %v4497
          %4872 = vmatpush2.msra.mxu0 %v4496
          %4873 = vmatprep.subr.mxu0 %v4493
          %4874 = vmatpush2.msra.mxu0 %v4492
          %4875 = vmatprep.subr.mxu0 %v4489
          %4876 = vmatpush2.msra.mxu0 %v4488
          %4877 = vmatprep.subr.mxu0 %v4485
          %4878 = vmatpush2.msra.mxu0 %v4484
          %4879 = vmatprep.subr.mxu0 %v4481
          %4880 = vmatpush2.msra.mxu0 %v4480
          %4881 = vmatprep.subr.mxu0 %v4477
          %4882 = vmatpush2.msra.mxu0 %v4476
          %4883 = vmatprep.subr.mxu0 %v4473
          %4884 = vmatpush2.msra.mxu0 %v4472
          %4885 = vmatprep.subr.mxu0 %v4469
          %4886 = vmatpush2.msra.mxu0 %v4468
          %4887 = vmatprep.subr.mxu0 %v4465
          %4888 = vmatpush2.msra.mxu0 %v4464
          %4889 = vmatprep.subr.mxu0 %v4461
          %4890 = vmatpush2.msra.mxu0 %v4460
          %4891 = vmatprep.subr.mxu0 %v4457
          %4892 = vmatpush2.msra.mxu0 %v4456
          %4893 = vmatprep.subr.mxu0 %v4453
          %4894 = vmatpush2.msra.mxu0 %v4452
          %4895 = vmatprep.subr.mxu0 %v4449
          %4896 = vmatpush2.msra.mxu0 %v4448
          %4897 = vmatprep.subr.mxu0 %v4445
          %4898 = vmatpush2.msra.mxu0 %v4444
          %4899 = vmatprep.mubr.f32.mxu0 %v4247
          %4900 = vmatmul.mubr.f32.gmra.mxu0 %v4246
          %v4901 = vpop.f32.mrf.mxu0
          %v4902 = vadd.f32 %v4831, %v4901
          %v4903 = vpop.f32.mrf.mxu0
          %v4904 = vadd.f32 %v4833, %v4903
          %4905 = vdwg.mxu0
          %4906 = vmatprep.subr.mxu0 %v4569
          %4907 = vmatpush1.msra.mxu0 %v4568
          %4908 = vmatprep.subr.mxu0 %v4565
          %4909 = vmatpush1.msra.mxu0 %v4564
          %4910 = vmatprep.subr.mxu0 %v4561
          %4911 = vmatpush1.msra.mxu0 %v4560
          %4912 = vmatprep.subr.mxu0 %v4557
          %4913 = vmatpush1.msra.mxu0 %v4556
          %4914 = vmatprep.subr.mxu0 %v4553
          %4915 = vmatpush1.msra.mxu0 %v4552
          %4916 = vmatprep.subr.mxu0 %v4549
          %4917 = vmatpush1.msra.mxu0 %v4548
          %4918 = vmatprep.subr.mxu0 %v4545
          %4919 = vmatpush1.msra.mxu0 %v4544
          %4920 = vmatprep.subr.mxu0 %v4541
          %4921 = vmatpush1.msra.mxu0 %v4540
          %4922 = vmatprep.subr.mxu0 %v4537
          %4923 = vmatpush1.msra.mxu0 %v4536
          %4924 = vmatprep.subr.mxu0 %v4533
          %4925 = vmatpush1.msra.mxu0 %v4532
          %4926 = vmatprep.subr.mxu0 %v4529
          %4927 = vmatpush1.msra.mxu0 %v4528
          %4928 = vmatprep.subr.mxu0 %v4525
          %4929 = vmatpush1.msra.mxu0 %v4524
          %4930 = vmatprep.subr.mxu0 %v4521
          %4931 = vmatpush1.msra.mxu0 %v4520
          %4932 = vmatprep.subr.mxu0 %v4517
          %4933 = vmatpush1.msra.mxu0 %v4516
          %4934 = vmatprep.subr.mxu0 %v4513
          %4935 = vmatpush1.msra.mxu0 %v4512
          %4936 = vmatprep.subr.mxu0 %v4509
          %4937 = vmatpush1.msra.mxu0 %v4508
          %4938 = vmatprep.subr.mxu0 %v4633
          %4939 = vmatpush2.msra.mxu0 %v4632
          %4940 = vmatprep.subr.mxu0 %v4629
          %4941 = vmatpush2.msra.mxu0 %v4628
          %4942 = vmatprep.subr.mxu0 %v4625
          %4943 = vmatpush2.msra.mxu0 %v4624
          %4944 = vmatprep.subr.mxu0 %v4621
          %4945 = vmatpush2.msra.mxu0 %v4620
          %4946 = vmatprep.subr.mxu0 %v4617
          %4947 = vmatpush2.msra.mxu0 %v4616
          %4948 = vmatprep.subr.mxu0 %v4613
          %4949 = vmatpush2.msra.mxu0 %v4612
          %4950 = vmatprep.subr.mxu0 %v4609
          %4951 = vmatpush2.msra.mxu0 %v4608
          %4952 = vmatprep.subr.mxu0 %v4605
          %4953 = vmatpush2.msra.mxu0 %v4604
          %4954 = vmatprep.subr.mxu0 %v4601
          %4955 = vmatpush2.msra.mxu0 %v4600
          %4956 = vmatprep.subr.mxu0 %v4597
          %4957 = vmatpush2.msra.mxu0 %v4596
          %4958 = vmatprep.subr.mxu0 %v4593
          %4959 = vmatpush2.msra.mxu0 %v4592
          %4960 = vmatprep.subr.mxu0 %v4589
          %4961 = vmatpush2.msra.mxu0 %v4588
          %4962 = vmatprep.subr.mxu0 %v4585
          %4963 = vmatpush2.msra.mxu0 %v4584
          %4964 = vmatprep.subr.mxu0 %v4581
          %4965 = vmatpush2.msra.mxu0 %v4580
          %4966 = vmatprep.subr.mxu0 %v4577
          %4967 = vmatpush2.msra.mxu0 %v4576
          %4968 = vmatprep.subr.mxu0 %v4573
          %4969 = vmatpush2.msra.mxu0 %v4572
          %4970 = vmatprep.mubr.f32.mxu0 %v4249
          %4971 = vmatmul.mubr.f32.gmra.mxu0 %v4248
          %v4972 = vpop.f32.mrf.mxu0
          %v4973 = vadd.f32 %v4902, %v4972
          %v4974 = vpop.f32.mrf.mxu0
          %v4975 = vadd.f32 %v4904, %v4974
          %4976 = vdwg.mxu0
          %4977 = vmatprep.subr.mxu0 %v4697
          %4978 = vmatpush1.msra.mxu0 %v4696
          %4979 = vmatprep.subr.mxu0 %v4693
          %4980 = vmatpush1.msra.mxu0 %v4692
          %4981 = vmatprep.subr.mxu0 %v4689
          %4982 = vmatpush1.msra.mxu0 %v4688
          %4983 = vmatprep.subr.mxu0 %v4685
          %4984 = vmatpush1.msra.mxu0 %v4684
          %4985 = vmatprep.subr.mxu0 %v4681
          %4986 = vmatpush1.msra.mxu0 %v4680
          %4987 = vmatprep.subr.mxu0 %v4677
          %4988 = vmatpush1.msra.mxu0 %v4676
          %4989 = vmatprep.subr.mxu0 %v4673
          %4990 = vmatpush1.msra.mxu0 %v4672
          %4991 = vmatprep.subr.mxu0 %v4669
          %4992 = vmatpush1.msra.mxu0 %v4668
          %4993 = vmatprep.subr.mxu0 %v4665
          %4994 = vmatpush1.msra.mxu0 %v4664
          %4995 = vmatprep.subr.mxu0 %v4661
          %4996 = vmatpush1.msra.mxu0 %v4660
          %4997 = vmatprep.subr.mxu0 %v4657
          %4998 = vmatpush1.msra.mxu0 %v4656
          %4999 = vmatprep.subr.mxu0 %v4653
          %5000 = vmatpush1.msra.mxu0 %v4652
          %5001 = vmatprep.subr.mxu0 %v4649
          %5002 = vmatpush1.msra.mxu0 %v4648
          %5003 = vmatprep.subr.mxu0 %v4645
          %5004 = vmatpush1.msra.mxu0 %v4644
          %5005 = vmatprep.subr.mxu0 %v4641
          %5006 = vmatpush1.msra.mxu0 %v4640
          %5007 = vmatprep.subr.mxu0 %v4637
          %5008 = vmatpush1.msra.mxu0 %v4636
          %5009 = vmatprep.subr.mxu0 %v4761
          %5010 = vmatpush2.msra.mxu0 %v4760
          %5011 = vmatprep.subr.mxu0 %v4757
          %5012 = vmatpush2.msra.mxu0 %v4756
          %5013 = vmatprep.subr.mxu0 %v4753
          %5014 = vmatpush2.msra.mxu0 %v4752
          %5015 = vmatprep.subr.mxu0 %v4749
          %5016 = vmatpush2.msra.mxu0 %v4748
          %5017 = vmatprep.subr.mxu0 %v4745
          %5018 = vmatpush2.msra.mxu0 %v4744
          %5019 = vmatprep.subr.mxu0 %v4741
          %5020 = vmatpush2.msra.mxu0 %v4740
          %5021 = vmatprep.subr.mxu0 %v4737
          %5022 = vmatpush2.msra.mxu0 %v4736
          %5023 = vmatprep.subr.mxu0 %v4733
          %5024 = vmatpush2.msra.mxu0 %v4732
          %5025 = vmatprep.subr.mxu0 %v4729
          %5026 = vmatpush2.msra.mxu0 %v4728
          %5027 = vmatprep.subr.mxu0 %v4725
          %5028 = vmatpush2.msra.mxu0 %v4724
          %5029 = vmatprep.subr.mxu0 %v4721
          %5030 = vmatpush2.msra.mxu0 %v4720
          %5031 = vmatprep.subr.mxu0 %v4717
          %5032 = vmatpush2.msra.mxu0 %v4716
          %5033 = vmatprep.subr.mxu0 %v4713
          %5034 = vmatpush2.msra.mxu0 %v4712
          %5035 = vmatprep.subr.mxu0 %v4709
          %5036 = vmatpush2.msra.mxu0 %v4708
          %5037 = vmatprep.subr.mxu0 %v4705
          %5038 = vmatpush2.msra.mxu0 %v4704
          %5039 = vmatprep.subr.mxu0 %v4701
          %5040 = vmatpush2.msra.mxu0 %v4700
          %5041 = vmatprep.mubr.f32.mxu0 %v4251
          %5042 = vmatmul.mubr.f32.gmra.mxu0 %v4250
          %v5043 = vpop.f32.mrf.mxu0
          %v5044 = vadd.f32 %v4973, %v5043
          %v5045 = vpop.f32.mrf.mxu0
          %v5046 = vadd.f32 %v4975, %v5045
          %5047 = vdwg.mxu0
          %5048 = vmatprep.subr.mxu0 %v4315
          %5049 = vmatpush1.msra.mxu0 %v4314
          %5050 = vmatprep.subr.mxu0 %v4311
          %5051 = vmatpush1.msra.mxu0 %v4310
          %5052 = vmatprep.subr.mxu0 %v4307
          %5053 = vmatpush1.msra.mxu0 %v4306
          %5054 = vmatprep.subr.mxu0 %v4303
          %5055 = vmatpush1.msra.mxu0 %v4302
          %5056 = vmatprep.subr.mxu0 %v4299
          %5057 = vmatpush1.msra.mxu0 %v4298
          %5058 = vmatprep.subr.mxu0 %v4295
          %5059 = vmatpush1.msra.mxu0 %v4294
          %5060 = vmatprep.subr.mxu0 %v4291
          %5061 = vmatpush1.msra.mxu0 %v4290
          %5062 = vmatprep.subr.mxu0 %v4287
          %5063 = vmatpush1.msra.mxu0 %v4286
          %5064 = vmatprep.subr.mxu0 %v4283
          %5065 = vmatpush1.msra.mxu0 %v4282
          %5066 = vmatprep.subr.mxu0 %v4279
          %5067 = vmatpush1.msra.mxu0 %v4278
          %5068 = vmatprep.subr.mxu0 %v4275
          %5069 = vmatpush1.msra.mxu0 %v4274
          %5070 = vmatprep.subr.mxu0 %v4271
          %5071 = vmatpush1.msra.mxu0 %v4270
          %5072 = vmatprep.subr.mxu0 %v4267
          %5073 = vmatpush1.msra.mxu0 %v4266
          %5074 = vmatprep.subr.mxu0 %v4263
          %5075 = vmatpush1.msra.mxu0 %v4262
          %5076 = vmatprep.subr.mxu0 %v4259
          %5077 = vmatpush1.msra.mxu0 %v4258
          %5078 = vmatprep.subr.mxu0 %v4255
          %5079 = vmatpush1.msra.mxu0 %v4254
          %5080 = vmatprep.subr.mxu0 %v4379
          %5081 = vmatpush2.msra.mxu0 %v4378
          %5082 = vmatprep.subr.mxu0 %v4375
          %5083 = vmatpush2.msra.mxu0 %v4374
          %5084 = vmatprep.subr.mxu0 %v4371
          %5085 = vmatpush2.msra.mxu0 %v4370
          %5086 = vmatprep.subr.mxu0 %v4367
          %5087 = vmatpush2.msra.mxu0 %v4366
          %5088 = vmatprep.subr.mxu0 %v4363
          %5089 = vmatpush2.msra.mxu0 %v4362
          %5090 = vmatprep.subr.mxu0 %v4359
          %5091 = vmatpush2.msra.mxu0 %v4358
          %5092 = vmatprep.subr.mxu0 %v4355
          %5093 = vmatpush2.msra.mxu0 %v4354
          %5094 = vmatprep.subr.mxu0 %v4351
          %5095 = vmatpush2.msra.mxu0 %v4350
          %5096 = vmatprep.subr.mxu0 %v4347
          %5097 = vmatpush2.msra.mxu0 %v4346
          %5098 = vmatprep.subr.mxu0 %v4343
          %5099 = vmatpush2.msra.mxu0 %v4342
          %5100 = vmatprep.subr.mxu0 %v4339
          %5101 = vmatpush2.msra.mxu0 %v4338
          %5102 = vmatprep.subr.mxu0 %v4335
          %5103 = vmatpush2.msra.mxu0 %v4334
          %5104 = vmatprep.subr.mxu0 %v4331
          %5105 = vmatpush2.msra.mxu0 %v4330
          %5106 = vmatprep.subr.mxu0 %v4327
          %5107 = vmatpush2.msra.mxu0 %v4326
          %5108 = vmatprep.subr.mxu0 %v4323
          %5109 = vmatpush2.msra.mxu0 %v4322
          %5110 = vmatprep.subr.mxu0 %v4319
          %5111 = vmatpush2.msra.mxu0 %v4318
          %5112 = vmatprep.mubr.f32.mxu0 %v4245
          %5113 = vmatmul.mubr.f32.gmra.mxu0 %v4244
          %v5114 = vpop.f32.mrf.mxu0
          %v5115 = vadd.f32 0.0, %v5114
          %v5116 = vpop.f32.mrf.mxu0
          %v5117 = vadd.f32 0.0, %v5116
          %5118 = vdwg.mxu0
          %5119 = vmatprep.subr.mxu0 %v4443
          %5120 = vmatpush1.msra.mxu0 %v4442
          %5121 = vmatprep.subr.mxu0 %v4439
          %5122 = vmatpush1.msra.mxu0 %v4438
          %5123 = vmatprep.subr.mxu0 %v4435
          %5124 = vmatpush1.msra.mxu0 %v4434
          %5125 = vmatprep.subr.mxu0 %v4431
          %5126 = vmatpush1.msra.mxu0 %v4430
          %5127 = vmatprep.subr.mxu0 %v4427
          %5128 = vmatpush1.msra.mxu0 %v4426
          %5129 = vmatprep.subr.mxu0 %v4423
          %5130 = vmatpush1.msra.mxu0 %v4422
          %5131 = vmatprep.subr.mxu0 %v4419
          %5132 = vmatpush1.msra.mxu0 %v4418
          %5133 = vmatprep.subr.mxu0 %v4415
          %5134 = vmatpush1.msra.mxu0 %v4414
          %5135 = vmatprep.subr.mxu0 %v4411
          %5136 = vmatpush1.msra.mxu0 %v4410
          %5137 = vmatprep.subr.mxu0 %v4407
          %5138 = vmatpush1.msra.mxu0 %v4406
          %5139 = vmatprep.subr.mxu0 %v4403
          %5140 = vmatpush1.msra.mxu0 %v4402
          %5141 = vmatprep.subr.mxu0 %v4399
          %5142 = vmatpush1.msra.mxu0 %v4398
          %5143 = vmatprep.subr.mxu0 %v4395
          %5144 = vmatpush1.msra.mxu0 %v4394
          %5145 = vmatprep.subr.mxu0 %v4391
          %5146 = vmatpush1.msra.mxu0 %v4390
          %5147 = vmatprep.subr.mxu0 %v4387
          %5148 = vmatpush1.msra.mxu0 %v4386
          %5149 = vmatprep.subr.mxu0 %v4383
          %5150 = vmatpush1.msra.mxu0 %v4382
          %5151 = vmatprep.subr.mxu0 %v4507
          %5152 = vmatpush2.msra.mxu0 %v4506
          %5153 = vmatprep.subr.mxu0 %v4503
          %5154 = vmatpush2.msra.mxu0 %v4502
          %5155 = vmatprep.subr.mxu0 %v4499
          %5156 = vmatpush2.msra.mxu0 %v4498
          %5157 = vmatprep.subr.mxu0 %v4495
          %5158 = vmatpush2.msra.mxu0 %v4494
          %5159 = vmatprep.subr.mxu0 %v4491
          %5160 = vmatpush2.msra.mxu0 %v4490
          %5161 = vmatprep.subr.mxu0 %v4487
          %5162 = vmatpush2.msra.mxu0 %v4486
          %5163 = vmatprep.subr.mxu0 %v4483
          %5164 = vmatpush2.msra.mxu0 %v4482
          %5165 = vmatprep.subr.mxu0 %v4479
          %5166 = vmatpush2.msra.mxu0 %v4478
          %5167 = vmatprep.subr.mxu0 %v4475
          %5168 = vmatpush2.msra.mxu0 %v4474
          %5169 = vmatprep.subr.mxu0 %v4471
          %5170 = vmatpush2.msra.mxu0 %v4470
          %5171 = vmatprep.subr.mxu0 %v4467
          %5172 = vmatpush2.msra.mxu0 %v4466
          %5173 = vmatprep.subr.mxu0 %v4463
          %5174 = vmatpush2.msra.mxu0 %v4462
          %5175 = vmatprep.subr.mxu0 %v4459
          %5176 = vmatpush2.msra.mxu0 %v4458
          %5177 = vmatprep.subr.mxu0 %v4455
          %5178 = vmatpush2.msra.mxu0 %v4454
          %5179 = vmatprep.subr.mxu0 %v4451
          %5180 = vmatpush2.msra.mxu0 %v4450
          %5181 = vmatprep.subr.mxu0 %v4447
          %5182 = vmatpush2.msra.mxu0 %v4446
          %5183 = vmatprep.mubr.f32.mxu0 %v4247
          %5184 = vmatmul.mubr.f32.gmra.mxu0 %v4246
          %v5185 = vpop.f32.mrf.mxu0
          %v5186 = vadd.f32 %v5115, %v5185
          %v5187 = vpop.f32.mrf.mxu0
          %v5188 = vadd.f32 %v5117, %v5187
          %5189 = vdwg.mxu0
          %5190 = vmatprep.subr.mxu0 %v4571
          %5191 = vmatpush1.msra.mxu0 %v4570
          %5192 = vmatprep.subr.mxu0 %v4567
          %5193 = vmatpush1.msra.mxu0 %v4566
          %5194 = vmatprep.subr.mxu0 %v4563
          %5195 = vmatpush1.msra.mxu0 %v4562
          %5196 = vmatprep.subr.mxu0 %v4559
          %5197 = vmatpush1.msra.mxu0 %v4558
          %5198 = vmatprep.subr.mxu0 %v4555
          %5199 = vmatpush1.msra.mxu0 %v4554
          %5200 = vmatprep.subr.mxu0 %v4551
          %5201 = vmatpush1.msra.mxu0 %v4550
          %5202 = vmatprep.subr.mxu0 %v4547
          %5203 = vmatpush1.msra.mxu0 %v4546
          %5204 = vmatprep.subr.mxu0 %v4543
          %5205 = vmatpush1.msra.mxu0 %v4542
          %5206 = vmatprep.subr.mxu0 %v4539
          %5207 = vmatpush1.msra.mxu0 %v4538
          %5208 = vmatprep.subr.mxu0 %v4535
          %5209 = vmatpush1.msra.mxu0 %v4534
          %5210 = vmatprep.subr.mxu0 %v4531
          %5211 = vmatpush1.msra.mxu0 %v4530
          %5212 = vmatprep.subr.mxu0 %v4527
          %5213 = vmatpush1.msra.mxu0 %v4526
          %5214 = vmatprep.subr.mxu0 %v4523
          %5215 = vmatpush1.msra.mxu0 %v4522
          %5216 = vmatprep.subr.mxu0 %v4519
          %5217 = vmatpush1.msra.mxu0 %v4518
          %5218 = vmatprep.subr.mxu0 %v4515
          %5219 = vmatpush1.msra.mxu0 %v4514
          %5220 = vmatprep.subr.mxu0 %v4511
          %5221 = vmatpush1.msra.mxu0 %v4510
          %5222 = vmatprep.subr.mxu0 %v4635
          %5223 = vmatpush2.msra.mxu0 %v4634
          %5224 = vmatprep.subr.mxu0 %v4631
          %5225 = vmatpush2.msra.mxu0 %v4630
          %5226 = vmatprep.subr.mxu0 %v4627
          %5227 = vmatpush2.msra.mxu0 %v4626
          %5228 = vmatprep.subr.mxu0 %v4623
          %5229 = vmatpush2.msra.mxu0 %v4622
          %5230 = vmatprep.subr.mxu0 %v4619
          %5231 = vmatpush2.msra.mxu0 %v4618
          %5232 = vmatprep.subr.mxu0 %v4615
          %5233 = vmatpush2.msra.mxu0 %v4614
          %5234 = vmatprep.subr.mxu0 %v4611
          %5235 = vmatpush2.msra.mxu0 %v4610
          %5236 = vmatprep.subr.mxu0 %v4607
          %5237 = vmatpush2.msra.mxu0 %v4606
          %5238 = vmatprep.subr.mxu0 %v4603
          %5239 = vmatpush2.msra.mxu0 %v4602
          %5240 = vmatprep.subr.mxu0 %v4599
          %5241 = vmatpush2.msra.mxu0 %v4598
          %5242 = vmatprep.subr.mxu0 %v4595
          %5243 = vmatpush2.msra.mxu0 %v4594
          %5244 = vmatprep.subr.mxu0 %v4591
          %5245 = vmatpush2.msra.mxu0 %v4590
          %5246 = vmatprep.subr.mxu0 %v4587
          %5247 = vmatpush2.msra.mxu0 %v4586
          %5248 = vmatprep.subr.mxu0 %v4583
          %5249 = vmatpush2.msra.mxu0 %v4582
          %5250 = vmatprep.subr.mxu0 %v4579
          %5251 = vmatpush2.msra.mxu0 %v4578
          %5252 = vmatprep.subr.mxu0 %v4575
          %5253 = vmatpush2.msra.mxu0 %v4574
          %5254 = vmatprep.mubr.f32.mxu0 %v4249
          %5255 = vmatmul.mubr.f32.gmra.mxu0 %v4248
          %v5256 = vpop.f32.mrf.mxu0
          %v5257 = vadd.f32 %v5186, %v5256
          %v5258 = vpop.f32.mrf.mxu0
          %v5259 = vadd.f32 %v5188, %v5258
          %5260 = vdwg.mxu0
          %5261 = vmatprep.subr.mxu0 %v4699
          %5262 = vmatpush1.msra.mxu0 %v4698
          %5263 = vmatprep.subr.mxu0 %v4695
          %5264 = vmatpush1.msra.mxu0 %v4694
          %5265 = vmatprep.subr.mxu0 %v4691
          %5266 = vmatpush1.msra.mxu0 %v4690
          %5267 = vmatprep.subr.mxu0 %v4687
          %5268 = vmatpush1.msra.mxu0 %v4686
          %5269 = vmatprep.subr.mxu0 %v4683
          %5270 = vmatpush1.msra.mxu0 %v4682
          %5271 = vmatprep.subr.mxu0 %v4679
          %5272 = vmatpush1.msra.mxu0 %v4678
          %5273 = vmatprep.subr.mxu0 %v4675
          %5274 = vmatpush1.msra.mxu0 %v4674
          %5275 = vmatprep.subr.mxu0 %v4671
          %5276 = vmatpush1.msra.mxu0 %v4670
          %5277 = vmatprep.subr.mxu0 %v4667
          %5278 = vmatpush1.msra.mxu0 %v4666
          %5279 = vmatprep.subr.mxu0 %v4663
          %5280 = vmatpush1.msra.mxu0 %v4662
          %5281 = vmatprep.subr.mxu0 %v4659
          %5282 = vmatpush1.msra.mxu0 %v4658
          %5283 = vmatprep.subr.mxu0 %v4655
          %5284 = vmatpush1.msra.mxu0 %v4654
          %5285 = vmatprep.subr.mxu0 %v4651
          %5286 = vmatpush1.msra.mxu0 %v4650
          %5287 = vmatprep.subr.mxu0 %v4647
          %5288 = vmatpush1.msra.mxu0 %v4646
          %5289 = vmatprep.subr.mxu0 %v4643
          %5290 = vmatpush1.msra.mxu0 %v4642
          %5291 = vmatprep.subr.mxu0 %v4639
          %5292 = vmatpush1.msra.mxu0 %v4638
          %5293 = vmatprep.subr.mxu0 %v4763
          %5294 = vmatpush2.msra.mxu0 %v4762
          %5295 = vmatprep.subr.mxu0 %v4759
          %5296 = vmatpush2.msra.mxu0 %v4758
          %5297 = vmatprep.subr.mxu0 %v4755
          %5298 = vmatpush2.msra.mxu0 %v4754
          %5299 = vmatprep.subr.mxu0 %v4751
          %5300 = vmatpush2.msra.mxu0 %v4750
          %5301 = vmatprep.subr.mxu0 %v4747
          %5302 = vmatpush2.msra.mxu0 %v4746
          %5303 = vmatprep.subr.mxu0 %v4743
          %5304 = vmatpush2.msra.mxu0 %v4742
          %5305 = vmatprep.subr.mxu0 %v4739
          %5306 = vmatpush2.msra.mxu0 %v4738
          %5307 = vmatprep.subr.mxu0 %v4735
          %5308 = vmatpush2.msra.mxu0 %v4734
          %5309 = vmatprep.subr.mxu0 %v4731
          %5310 = vmatpush2.msra.mxu0 %v4730
          %5311 = vmatprep.subr.mxu0 %v4727
          %5312 = vmatpush2.msra.mxu0 %v4726
          %5313 = vmatprep.subr.mxu0 %v4723
          %5314 = vmatpush2.msra.mxu0 %v4722
          %5315 = vmatprep.subr.mxu0 %v4719
          %5316 = vmatpush2.msra.mxu0 %v4718
          %5317 = vmatprep.subr.mxu0 %v4715
          %5318 = vmatpush2.msra.mxu0 %v4714
          %5319 = vmatprep.subr.mxu0 %v4711
          %5320 = vmatpush2.msra.mxu0 %v4710
          %5321 = vmatprep.subr.mxu0 %v4707
          %5322 = vmatpush2.msra.mxu0 %v4706
          %5323 = vmatprep.subr.mxu0 %v4703
          %5324 = vmatpush2.msra.mxu0 %v4702
          %5325 = vmatprep.mubr.f32.mxu0 %v4251
          %5326 = vmatmul.mubr.f32.gmra.mxu0 %v4250
          %v5327 = vpop.f32.mrf.mxu0
          %v5328 = vadd.f32 %v5257, %v5327
          %v5329 = vpop.f32.mrf.mxu0
          %v5330 = vadd.f32 %v5259, %v5329
          %5331 = vdwg.mxu0
          %v5332 = vld [vmem:[#allocation25] sm:$0xf]
          %v5333 = vld [vmem:[#allocation27] sm:$0xf]
          %vm5334 = vcmask 1041408
          %v5335 = vsel %vm5334, %v5044, 0.0
          %v5336 = vrot.slane %v5335, 4
          %v5337 = vadd.f32 %v5335, %v5336
          %v5338 = vrot.slane %v5337, 2
          %v5339 = vadd.f32 %v5337, %v5338
          %v5340 = vrot.slane %v5339, 1
          %v5341 = vadd.f32 %v5339, %v5340
          %v5342 = vsel %vm5334, %v5046, 0.0
          %v5343 = vrot.slane %v5342, 4
          %v5344 = vadd.f32 %v5342, %v5343
          %v5345 = vrot.slane %v5344, 2
          %v5346 = vadd.f32 %v5344, %v5345
          %v5347 = vrot.slane %v5346, 1
          %v5348 = vadd.f32 %v5346, %v5347
          %v5349 = vsel %vm5334, %v5328, 0.0
          %v5350 = vrot.slane %v5349, 4
          %v5351 = vadd.f32 %v5349, %v5350
          %v5352 = vrot.slane %v5351, 2
          %v5353 = vadd.f32 %v5351, %v5352
          %v5354 = vrot.slane %v5353, 1
          %v5355 = vadd.f32 %v5353, %v5354
          %v5356 = vsel %vm5334, %v5330, 0.0
          %v5357 = vrot.slane %v5356, 4
          %v5358 = vadd.f32 %v5356, %v5357
          %v5359 = vrot.slane %v5358, 2
          %v5360 = vadd.f32 %v5358, %v5359
          %v5361 = vrot.slane %v5360, 1
          %v5362 = vadd.f32 %v5360, %v5361
          %v5363 = vrcp.pop 2.0
          %v5364 = vmul.f32 %v5341, %v5363
          %v5365 = vmul.f32 %v5348, %v5363
          %v5366 = vmul.f32 %v5355, %v5363
          %v5367 = vmul.f32 %v5362, %v5363
          %v5368 = vsub.f32 %v5044, %v5364
          %v5369 = vsub.f32 %v5046, %v5365
          %v5370 = vsub.f32 %v5328, %v5366
          %v5371 = vsub.f32 %v5330, %v5367
          %v5372 = vmul.f32 %v5368, %v5368
          %v5373 = vmul.f32 %v5369, %v5369
          %v5374 = vmul.f32 %v5370, %v5370
          %v5375 = vmul.f32 %v5371, %v5371
          %v5376 = vsel %vm5334, %v5372, 0.0
          %v5377 = vrot.slane %v5376, 4
          %v5378 = vadd.f32 %v5376, %v5377
          %v5379 = vrot.slane %v5378, 2
          %v5380 = vadd.f32 %v5378, %v5379
          %v5381 = vrot.slane %v5380, 1
          %v5382 = vadd.f32 %v5380, %v5381
          %v5383 = vsel %vm5334, %v5373, 0.0
          %v5384 = vrot.slane %v5383, 4
          %v5385 = vadd.f32 %v5383, %v5384
          %v5386 = vrot.slane %v5385, 2
          %v5387 = vadd.f32 %v5385, %v5386
          %v5388 = vrot.slane %v5387, 1
          %v5389 = vadd.f32 %v5387, %v5388
          %v5390 = vsel %vm5334, %v5374, 0.0
          %v5391 = vrot.slane %v5390, 4
          %v5392 = vadd.f32 %v5390, %v5391
          %v5393 = vrot.slane %v5392, 2
          %v5394 = vadd.f32 %v5392, %v5393
          %v5395 = vrot.slane %v5394, 1
          %v5396 = vadd.f32 %v5394, %v5395
          %v5397 = vsel %vm5334, %v5375, 0.0
          %v5398 = vrot.slane %v5397, 4
          %v5399 = vadd.f32 %v5397, %v5398
          %v5400 = vrot.slane %v5399, 2
          %v5401 = vadd.f32 %v5399, %v5400
          %v5402 = vrot.slane %v5401, 1
          %v5403 = vadd.f32 %v5401, %v5402
          %v5404 = vmul.f32 %v5382, %v5363
          %v5405 = vmul.f32 %v5389, %v5363
          %v5406 = vmul.f32 %v5396, %v5363
          %v5407 = vmul.f32 %v5403, %v5363
          %v5408 = vadd.f32 %v5404, 1e-05
          %v5409 = vadd.f32 %v5405, 1e-05
          %v5410 = vadd.f32 %v5406, 1e-05
          %v5411 = vadd.f32 %v5407, 1e-05
          %v5412 = vrsqrt.pop %v5408
          %v5413 = vrsqrt.pop %v5409
          %v5414 = vrsqrt.pop %v5410
          %v5415 = vrsqrt.pop %v5411
          %v5420 = vcombine.low %v5412, %v5413
          %v5421 = vcombine.low %v5414, %v5415
          %v5423 = vunpack.c.l.s4 1966171168
          %v5424 = vunpack.c.0.s8 %v5423
          %v5425 = vlaneseq
          %v5426 = vshrl.u32 %v5425, 7
          %v5427 = vsub.s32 %v5424, %v5426
          %v5428 = vrot.slane %v5420, %v5427
          %v5430 = vunpack.c.l.s4 1966171168
          %v5431 = vunpack.c.0.s8 %v5430
          %v5432 = vlaneseq
          %v5433 = vshrl.u32 %v5432, 7
          %v5434 = vsub.s32 %v5431, %v5433
          %v5435 = vrot.slane %v5421, %v5434
          %v5436 = vcombine.low %v5428, %v5435
          %v5438 = vunpack.c.l.s4 1966171168
          %v5439 = vunpack.c.0.s8 %v5438
          %v5440 = vlaneseq
          %v5441 = vshrl.u32 %v5440, 7
          %v5442 = vsub.s32 %v5439, %v5441
          %v5443 = vrot.slane %v5436, %v5442
          %v5445 = vmul.f32 %v5332, %v5443
          %v5447 = vlaneseq
          %v5448 = vshrl.u32 %v5447, 7
          %v5449 = vsub.s32 0, %v5448
          %v5450 = vrot.slane %v5445, %v5449
          %v5451 = vlaneseq
          %v5452 = vshrl.u32 %v5451, 7
          %v5453 = vsub.s32 1, %v5452
          %v5454 = vrot.slane %v5445, %v5453
          %v5455 = vlaneseq
          %v5456 = vshrl.u32 %v5455, 7
          %v5457 = vsub.s32 2, %v5456
          %v5458 = vrot.slane %v5445, %v5457
          %v5459 = vlaneseq
          %v5460 = vshrl.u32 %v5459, 7
          %v5461 = vsub.s32 3, %v5460
          %v5462 = vrot.slane %v5445, %v5461
          %v5467 = vmul.f32 %v5368, %v5450
          %v5468 = vmul.f32 %v5369, %v5454
          %v5469 = vmul.f32 %v5370, %v5458
          %v5470 = vmul.f32 %v5371, %v5462
          %v5472 = vlaneseq
          %v5473 = vshrl.u32 %v5472, 7
          %v5474 = vsub.s32 0, %v5473
          %v5475 = vrot.slane %v5333, %v5474
          %v5476 = vlaneseq
          %v5477 = vshrl.u32 %v5476, 7
          %v5478 = vsub.s32 1, %v5477
          %v5479 = vrot.slane %v5333, %v5478
          %v5480 = vlaneseq
          %v5481 = vshrl.u32 %v5480, 7
          %v5482 = vsub.s32 2, %v5481
          %v5483 = vrot.slane %v5333, %v5482
          %v5484 = vlaneseq
          %v5485 = vshrl.u32 %v5484, 7
          %v5486 = vsub.s32 3, %v5485
          %v5487 = vrot.slane %v5333, %v5486
          %v5492 = vadd.f32 %v5467, %v5475
          %v5493 = vadd.f32 %v5468, %v5479
          %v5494 = vadd.f32 %v5469, %v5483
          %v5495 = vadd.f32 %v5470, %v5487
          %v5496 = vmax.f32 %v5492, 0.0
          %v5497 = vmax.f32 %v5493, 0.0
          %v5498 = vmax.f32 %v5494, 0.0
          %v5499 = vmax.f32 %v5495, 0.0
          %v5500 = vld [vmem:[#allocation28] sm:$0xff]
          %v5501 = vld [vmem:[#allocation28 + $0x8] sm:$0xff]
          %v5502 = vld [vmem:[#allocation28 + $0x10] sm:$0xff]
          %v5503 = vld [vmem:[#allocation28 + $0x18] sm:$0xff]
          %v5504 = vld [vmem:[#allocation28 + $0x20] sm:$0xff]
          %v5505 = vld [vmem:[#allocation28 + $0x28] sm:$0xff]
          %v5506 = vld [vmem:[#allocation28 + $0x30] sm:$0xff]
          %v5507 = vld [vmem:[#allocation28 + $0x38] sm:$0xff]
          %v5508 = vld [vmem:[#allocation28 + $0x40] sm:$0xff]
          %v5509 = vld [vmem:[#allocation28 + $0x48] sm:$0xff]
          %v5510 = vld [vmem:[#allocation28 + $0x50] sm:$0xff]
          %v5511 = vld [vmem:[#allocation28 + $0x58] sm:$0xff]
          %v5512 = vld [vmem:[#allocation28 + $0x60] sm:$0xff]
          %v5513 = vld [vmem:[#allocation28 + $0x68] sm:$0xff]
          %v5514 = vld [vmem:[#allocation28 + $0x70] sm:$0xff]
          %v5515 = vld [vmem:[#allocation28 + $0x78] sm:$0xff]
          %v5516 = vld [vmem:[#allocation28 + $0x80] sm:$0xff]
          %v5517 = vld [vmem:[#allocation28 + $0x88] sm:$0xff]
          %v5518 = vld [vmem:[#allocation28 + $0x90] sm:$0xff]
          %v5519 = vld [vmem:[#allocation28 + $0x98] sm:$0xff]
          %v5520 = vld [vmem:[#allocation28 + $0xa0] sm:$0xff]
          %v5521 = vld [vmem:[#allocation28 + $0xa8] sm:$0xff]
          %v5522 = vld [vmem:[#allocation28 + $0xb0] sm:$0xff]
          %v5523 = vld [vmem:[#allocation28 + $0xb8] sm:$0xff]
          %v5524 = vld [vmem:[#allocation28 + $0xc0] sm:$0xff]
          %v5525 = vld [vmem:[#allocation28 + $0xc8] sm:$0xff]
          %v5526 = vld [vmem:[#allocation28 + $0xd0] sm:$0xff]
          %v5527 = vld [vmem:[#allocation28 + $0xd8] sm:$0xff]
          %v5528 = vld [vmem:[#allocation28 + $0xe0] sm:$0xff]
          %v5529 = vld [vmem:[#allocation28 + $0xe8] sm:$0xff]
          %v5530 = vld [vmem:[#allocation28 + $0xf0] sm:$0xff]
          %v5531 = vld [vmem:[#allocation28 + $0xf8] sm:$0xff]
          %v5532 = vld [vmem:[#allocation28 + $0x100] sm:$0xff]
          %v5533 = vld [vmem:[#allocation28 + $0x108] sm:$0xff]
          %v5534 = vld [vmem:[#allocation28 + $0x110] sm:$0xff]
          %v5535 = vld [vmem:[#allocation28 + $0x118] sm:$0xff]
          %v5536 = vld [vmem:[#allocation28 + $0x120] sm:$0xff]
          %v5537 = vld [vmem:[#allocation28 + $0x128] sm:$0xff]
          %v5538 = vld [vmem:[#allocation28 + $0x130] sm:$0xff]
          %v5539 = vld [vmem:[#allocation28 + $0x138] sm:$0xff]
          %v5540 = vld [vmem:[#allocation28 + $0x140] sm:$0xff]
          %v5541 = vld [vmem:[#allocation28 + $0x148] sm:$0xff]
          %v5542 = vld [vmem:[#allocation28 + $0x150] sm:$0xff]
          %v5543 = vld [vmem:[#allocation28 + $0x158] sm:$0xff]
          %v5544 = vld [vmem:[#allocation28 + $0x160] sm:$0xff]
          %v5545 = vld [vmem:[#allocation28 + $0x168] sm:$0xff]
          %v5546 = vld [vmem:[#allocation28 + $0x170] sm:$0xff]
          %v5547 = vld [vmem:[#allocation28 + $0x178] sm:$0xff]
          %v5548 = vld [vmem:[#allocation28 + $0x180] sm:$0xff]
          %v5549 = vld [vmem:[#allocation28 + $0x188] sm:$0xff]
          %v5550 = vld [vmem:[#allocation28 + $0x190] sm:$0xff]
          %v5551 = vld [vmem:[#allocation28 + $0x198] sm:$0xff]
          %v5552 = vld [vmem:[#allocation28 + $0x1a0] sm:$0xff]
          %v5553 = vld [vmem:[#allocation28 + $0x1a8] sm:$0xff]
          %v5554 = vld [vmem:[#allocation28 + $0x1b0] sm:$0xff]
          %v5555 = vld [vmem:[#allocation28 + $0x1b8] sm:$0xff]
          %v5556 = vld [vmem:[#allocation28 + $0x1c0] sm:$0xff]
          %v5557 = vld [vmem:[#allocation28 + $0x1c8] sm:$0xff]
          %v5558 = vld [vmem:[#allocation28 + $0x1d0] sm:$0xff]
          %v5559 = vld [vmem:[#allocation28 + $0x1d8] sm:$0xff]
          %v5560 = vld [vmem:[#allocation28 + $0x1e0] sm:$0xff]
          %v5561 = vld [vmem:[#allocation28 + $0x1e8] sm:$0xff]
          %v5562 = vld [vmem:[#allocation28 + $0x1f0] sm:$0xff]
          %v5563 = vld [vmem:[#allocation28 + $0x1f8] sm:$0xff]
          %5564 = vmatprep.subr.mxu0 0.0
          %5565 = vmatpush1.msra.mxu0 %v5515
          %5566 = vmatprep.subr.mxu0 0.0
          %5567 = vmatpush1.msra.mxu0 %v5514
          %5568 = vmatprep.subr.mxu0 0.0
          %5569 = vmatpush1.msra.mxu0 %v5513
          %5570 = vmatprep.subr.mxu0 0.0
          %5571 = vmatpush1.msra.mxu0 %v5512
          %5572 = vmatprep.subr.mxu0 0.0
          %5573 = vmatpush1.msra.mxu0 %v5511
          %5574 = vmatprep.subr.mxu0 0.0
          %5575 = vmatpush1.msra.mxu0 %v5510
          %5576 = vmatprep.subr.mxu0 0.0
          %5577 = vmatpush1.msra.mxu0 %v5509
          %5578 = vmatprep.subr.mxu0 0.0
          %5579 = vmatpush1.msra.mxu0 %v5508
          %5580 = vmatprep.subr.mxu0 0.0
          %5581 = vmatpush1.msra.mxu0 %v5507
          %5582 = vmatprep.subr.mxu0 0.0
          %5583 = vmatpush1.msra.mxu0 %v5506
          %5584 = vmatprep.subr.mxu0 0.0
          %5585 = vmatpush1.msra.mxu0 %v5505
          %5586 = vmatprep.subr.mxu0 0.0
          %5587 = vmatpush1.msra.mxu0 %v5504
          %5588 = vmatprep.subr.mxu0 0.0
          %5589 = vmatpush1.msra.mxu0 %v5503
          %5590 = vmatprep.subr.mxu0 0.0
          %5591 = vmatpush1.msra.mxu0 %v5502
          %5592 = vmatprep.subr.mxu0 0.0
          %5593 = vmatpush1.msra.mxu0 %v5501
          %5594 = vmatprep.subr.mxu0 0.0
          %5595 = vmatpush1.msra.mxu0 %v5500
          %5596 = vmatprep.subr.mxu0 0.0
          %5597 = vmatpush2.msra.mxu0 %v5531
          %5598 = vmatprep.subr.mxu0 0.0
          %5599 = vmatpush2.msra.mxu0 %v5530
          %5600 = vmatprep.subr.mxu0 0.0
          %5601 = vmatpush2.msra.mxu0 %v5529
          %5602 = vmatprep.subr.mxu0 0.0
          %5603 = vmatpush2.msra.mxu0 %v5528
          %5604 = vmatprep.subr.mxu0 0.0
          %5605 = vmatpush2.msra.mxu0 %v5527
          %5606 = vmatprep.subr.mxu0 0.0
          %5607 = vmatpush2.msra.mxu0 %v5526
          %5608 = vmatprep.subr.mxu0 0.0
          %5609 = vmatpush2.msra.mxu0 %v5525
          %5610 = vmatprep.subr.mxu0 0.0
          %5611 = vmatpush2.msra.mxu0 %v5524
          %5612 = vmatprep.subr.mxu0 0.0
          %5613 = vmatpush2.msra.mxu0 %v5523
          %5614 = vmatprep.subr.mxu0 0.0
          %5615 = vmatpush2.msra.mxu0 %v5522
          %5616 = vmatprep.subr.mxu0 0.0
          %5617 = vmatpush2.msra.mxu0 %v5521
          %5618 = vmatprep.subr.mxu0 0.0
          %5619 = vmatpush2.msra.mxu0 %v5520
          %5620 = vmatprep.subr.mxu0 0.0
          %5621 = vmatpush2.msra.mxu0 %v5519
          %5622 = vmatprep.subr.mxu0 0.0
          %5623 = vmatpush2.msra.mxu0 %v5518
          %5624 = vmatprep.subr.mxu0 0.0
          %5625 = vmatpush2.msra.mxu0 %v5517
          %5626 = vmatprep.subr.mxu0 0.0
          %5627 = vmatpush2.msra.mxu0 %v5516
          %5628 = vmatprep.mubr.f32.mxu0 %v5497
          %5629 = vmatmul.mubr.f32.gmra.mxu0 %v5496
          %v5630 = vpop.f32.mrf.mxu0
          %v5631 = vadd.f32 0.0, %v5630
          %v5632 = vpop.f32.mrf.mxu0
          %5633 = vdwg.mxu0
          %5634 = vmatprep.subr.mxu0 0.0
          %5635 = vmatpush1.msra.mxu0 %v5547
          %5636 = vmatprep.subr.mxu0 0.0
          %5637 = vmatpush1.msra.mxu0 %v5546
          %5638 = vmatprep.subr.mxu0 0.0
          %5639 = vmatpush1.msra.mxu0 %v5545
          %5640 = vmatprep.subr.mxu0 0.0
          %5641 = vmatpush1.msra.mxu0 %v5544
          %5642 = vmatprep.subr.mxu0 0.0
          %5643 = vmatpush1.msra.mxu0 %v5543
          %5644 = vmatprep.subr.mxu0 0.0
          %5645 = vmatpush1.msra.mxu0 %v5542
          %5646 = vmatprep.subr.mxu0 0.0
          %5647 = vmatpush1.msra.mxu0 %v5541
          %5648 = vmatprep.subr.mxu0 0.0
          %5649 = vmatpush1.msra.mxu0 %v5540
          %5650 = vmatprep.subr.mxu0 0.0
          %5651 = vmatpush1.msra.mxu0 %v5539
          %5652 = vmatprep.subr.mxu0 0.0
          %5653 = vmatpush1.msra.mxu0 %v5538
          %5654 = vmatprep.subr.mxu0 0.0
          %5655 = vmatpush1.msra.mxu0 %v5537
          %5656 = vmatprep.subr.mxu0 0.0
          %5657 = vmatpush1.msra.mxu0 %v5536
          %5658 = vmatprep.subr.mxu0 0.0
          %5659 = vmatpush1.msra.mxu0 %v5535
          %5660 = vmatprep.subr.mxu0 0.0
          %5661 = vmatpush1.msra.mxu0 %v5534
          %5662 = vmatprep.subr.mxu0 0.0
          %5663 = vmatpush1.msra.mxu0 %v5533
          %5664 = vmatprep.subr.mxu0 0.0
          %5665 = vmatpush1.msra.mxu0 %v5532
          %5666 = vmatprep.subr.mxu0 0.0
          %5667 = vmatpush2.msra.mxu0 %v5563
          %5668 = vmatprep.subr.mxu0 0.0
          %5669 = vmatpush2.msra.mxu0 %v5562
          %5670 = vmatprep.subr.mxu0 0.0
          %5671 = vmatpush2.msra.mxu0 %v5561
          %5672 = vmatprep.subr.mxu0 0.0
          %5673 = vmatpush2.msra.mxu0 %v5560
          %5674 = vmatprep.subr.mxu0 0.0
          %5675 = vmatpush2.msra.mxu0 %v5559
          %5676 = vmatprep.subr.mxu0 0.0
          %5677 = vmatpush2.msra.mxu0 %v5558
          %5678 = vmatprep.subr.mxu0 0.0
          %5679 = vmatpush2.msra.mxu0 %v5557
          %5680 = vmatprep.subr.mxu0 0.0
          %5681 = vmatpush2.msra.mxu0 %v5556
          %5682 = vmatprep.subr.mxu0 0.0
          %5683 = vmatpush2.msra.mxu0 %v5555
          %5684 = vmatprep.subr.mxu0 0.0
          %5685 = vmatpush2.msra.mxu0 %v5554
          %5686 = vmatprep.subr.mxu0 0.0
          %5687 = vmatpush2.msra.mxu0 %v5553
          %5688 = vmatprep.subr.mxu0 0.0
          %5689 = vmatpush2.msra.mxu0 %v5552
          %5690 = vmatprep.subr.mxu0 0.0
          %5691 = vmatpush2.msra.mxu0 %v5551
          %5692 = vmatprep.subr.mxu0 0.0
          %5693 = vmatpush2.msra.mxu0 %v5550
          %5694 = vmatprep.subr.mxu0 0.0
          %5695 = vmatpush2.msra.mxu0 %v5549
          %5696 = vmatprep.subr.mxu0 0.0
          %5697 = vmatpush2.msra.mxu0 %v5548
          %5698 = vmatprep.mubr.f32.mxu0 %v5499
          %5699 = vmatmul.mubr.f32.gmra.mxu0 %v5498
          %v5700 = vpop.f32.mrf.mxu0
          %v5701 = vadd.f32 %v5631, %v5700
          %v5702 = vpop.f32.mrf.mxu0
          %5703 = vdwg.mxu0
          %v5704 = vld [vmem:[#allocation30] sm:$0x1]
          %v5705 = vld [vmem:[#allocation31] sm:$0x1]
          %v5706 = vsel %vm5334, %v5701, 0.0
          %v5707 = vrot.slane %v5706, 4
          %v5708 = vadd.f32 %v5706, %v5707
          %v5709 = vrot.slane %v5708, 2
          %v5710 = vadd.f32 %v5708, %v5709
          %v5711 = vrot.slane %v5710, 1
          %v5712 = vadd.f32 %v5710, %v5711
          %v5713 = vmul.f32 %v5712, %v5363
          %v5714 = vsub.f32 %v5701, %v5713
          %v5715 = vmul.f32 %v5714, %v5714
          %v5716 = vsel %vm5334, %v5715, 0.0
          %v5717 = vrot.slane %v5716, 4
          %v5718 = vadd.f32 %v5716, %v5717
          %v5719 = vrot.slane %v5718, 2
          %v5720 = vadd.f32 %v5718, %v5719
          %v5721 = vrot.slane %v5720, 1
          %v5722 = vadd.f32 %v5720, %v5721
          %v5723 = vmul.f32 %v5722, %v5363
          %v5724 = vadd.f32 %v5723, 1e-05
          %v5725 = vrsqrt.pop %v5724
          %v5726 = vmul.f32 %v5704, %v5725
          %v5728 = vlaneseq
          %v5729 = vshrl.u32 %v5728, 7
          %v5730 = vsub.s32 0, %v5729
          %v5731 = vrot.slane %v5726, %v5730
          %v5733 = vmul.f32 %v5714, %v5731
          %v5735 = vlaneseq
          %v5736 = vshrl.u32 %v5735, 7
          %v5737 = vsub.s32 0, %v5736
          %v5738 = vrot.slane %v5705, %v5737
          %v5740 = vadd.f32 %v5733, %v5738
          %v5741 = vmax.f32 %v5740, 0.0
          %5742 = vst [vmem:[#allocation33] sm:$0x3] %v5741
        $region160: #{encoder_bn_forward.1} parent=83 // pred_fallthru
          _
        // Predicated region
        $region161: #{encoder_bn_forward.1} parent=83 // pred_check
          %p5743 = pneg %p411
        $region162: #{encoder_bn_forward.1} parent=83 // pred_check_branch
          %5745 = sbr.rel (%p5743) target = $region164
        $region163: #{encoder_bn_forward.1} parent=83 // pred_region
          %s5747 = ssub.s32 32, 32
          %5748 = vsyncadd [#allocation12], %s5747
          %s5750 = sshll.u32 [#allocation33], 4
          %s5751 = int_to_ptr.vmem [resolvable:$true] %s5750
          %5753 = dma.vmem_to_hbm [thread:$0]  %s5751, 32, %s16, [#allocation12]
        $region164: #{encoder_bn_forward.1} parent=83 // pred_fallthru
          _
        // Predicated region
        $region165: #{encoder_bn_forward.1} parent=83 // pred_check
          %p5754 = pneg %p411
        $region166: #{encoder_bn_forward.1} parent=83 // pred_check_branch
          %5756 = sbr.rel (%p5754) target = $region168
        $region167: #{encoder_bn_forward.1} parent=83 // pred_region
          %5757 = dma.done [#allocation12], 32
        $region168: #{encoder_bn_forward.1} parent=83 // pred_fallthru
          _
      $region84: #{encoder_bn_forward.1} parent=5 // pred_fallthru
        _
      %p5758 = scmp.le.s32.totalorder 2, %s31
      // Predicated region
      $region169: #{encoder_bn_forward.1} parent=5 // pred_check
        %p5759 = pneg %p5758
      $region170: #{encoder_bn_forward.1} parent=5 // pred_check_branch
        %5761 = sbr.rel (%p5759) target = $region172
      $region171: #{encoder_bn_forward.1} parent=5 // pred_region
        %s5762 = ssub.s32 %s31, 2
      $region172: #{encoder_bn_forward.1} parent=5 // pred_fallthru
        _
    $region6: #{encoder_bn_forward.1} parent=1 // loop_footer
      %s35 = sadd.s32 1, %s31
    $region7: #{encoder_bn_forward.1} parent=1 // loop_footer_branch
      %30 = sbr.rel target = $region3
    $region8: #{encoder_bn_forward.1} parent=1 // loop_exit
      _
    %5763 = vsyncpa [#allocation11], 1
    %s5764 = scalar_lea.sflag [#allocation11], 1
    %5765 = vsyncpa %s5764, 1
    %5766 = vsyncpa [#allocation14], 1
    %5767 = vsyncpa [#allocation17], 1
    %5768 = vsyncpa [#allocation20], 1
    %5769 = vsyncpa [#allocation23], 1
    %5770 = vsyncpa [#allocation26], 1
    %5771 = vsyncpa [#allocation29], 1
    %5772 = vsyncpa [#allocation32], 1
    %5773 = vsyncpa [#allocation12], 1
    %s5774 = scalar_lea.sflag [#allocation12], 1
    %5775 = vsyncpa %s5774, 1

</llo_original>
